<compile_context>
chip_gen: v6e
topology: v6e:2x2x1
jax: 0.10.0
libtpu: 0.0.40
codegen_flags: <defaults>
</compile_context>

<pallas_src>
import jax
import jax.numpy as jnp
from jax.experimental import pallas as pl
from jax.experimental.pallas import tpu as pltpu


# ---------------- Pallas kernels ----------------

def conv_pool_kernel(p_ref, w_ref, b_ref, o_ref):
    # p_ref: (4, TR, 25) im2col patches, pool-window position on the leading
    #        axis; w_ref: (25, 16); b_ref: (1, 16); o_ref: (TR, 16).
    w = w_ref[...]
    z0 = jnp.dot(p_ref[0], w, preferred_element_type=jnp.float32)
    z1 = jnp.dot(p_ref[1], w, preferred_element_type=jnp.float32)
    z2 = jnp.dot(p_ref[2], w, preferred_element_type=jnp.float32)
    z3 = jnp.dot(p_ref[3], w, preferred_element_type=jnp.float32)
    # max-pool BEFORE bias+sigmoid (exactly equivalent, 4x less post-matmul work)
    m = jnp.maximum(jnp.maximum(z0, z1), jnp.maximum(z2, z3))
    o_ref[...] = jax.nn.sigmoid(m + b_ref[...]).astype(o_ref.dtype)


def fc_fused_kernel(x_ref, w1_ref, b1_ref, w2_ref, b2_ref, o_ref):
    # x_ref: (TM, 3136) f32; w1: (3136, 512) bf16; w2: (512, 128) bf16
    # biases f32; o_ref: (TM, 128) f32.  Hidden activations stay in VMEM/vregs.
    x = x_ref[...].astype(jnp.bfloat16)
    h = jnp.dot(x, w1_ref[...], preferred_element_type=jnp.float32)
    h = jax.nn.sigmoid(h + b1_ref[...])
    z = jnp.dot(h.astype(jnp.bfloat16), w2_ref[...],
                preferred_element_type=jnp.float32)
    o_ref[...] = jax.nn.sigmoid(z + b2_ref[...]).astype(o_ref.dtype)


# ---------------- pallas_call wrappers ----------------

def conv_pool(patches4, w, b):
    # patches4: (4, R, 25) f32 -> pooled features (R, 16) f32
    _, R, _ = patches4.shape
    TR = R if R <= 8192 else 3136        # 3136 = 196*16, divisible by 8
    grid = (pl.cdiv(R, TR),)
    return pl.pallas_call(
        conv_pool_kernel,
        out_shape=jax.ShapeDtypeStruct((R, 16), jnp.float32),
        grid_spec=pltpu.PrefetchScalarGridSpec(
            num_scalar_prefetch=0,
            grid=grid,
            in_specs=[
                pl.BlockSpec((4, TR, 25), lambda i: (0, i, 0)),
                pl.BlockSpec((25, 16), lambda i: (0, 0)),
                pl.BlockSpec((1, 16), lambda i: (0, 0)),
            ],
            out_specs=pl.BlockSpec((TR, 16), lambda i: (i, 0)),
        ),
        compiler_params=pltpu.CompilerParams(
            dimension_semantics=("parallel",)),
    )(patches4, w, b)


def fc_fused(feat, w1, b1, w2, b2):
    # feat: (B, 3136) f32 -> (B, 128) f32 (columns >= 65 are padding)
    B = feat.shape[0]
    TM = B if B <= 512 else 512
    grid = (pl.cdiv(B, TM),)
    return pl.pallas_call(
        fc_fused_kernel,
        out_shape=jax.ShapeDtypeStruct((B, 128), jnp.float32),
        grid_spec=pltpu.PrefetchScalarGridSpec(
            num_scalar_prefetch=0,
            grid=grid,
            in_specs=[
                pl.BlockSpec((TM, 3136), lambda i: (i, 0)),
                pl.BlockSpec((3136, 512), lambda i: (0, 0)),
                pl.BlockSpec((1, 512), lambda i: (0, 0)),
                pl.BlockSpec((512, 128), lambda i: (0, 0)),
                pl.BlockSpec((1, 128), lambda i: (0, 0)),
            ],
            out_specs=pl.BlockSpec((TM, 128), lambda i: (i, 0)),
        ),
        compiler_params=pltpu.CompilerParams(
            dimension_semantics=("parallel",)),
    )(feat, w1, b1, w2, b2)


# ---------------- plain-JAX glue ----------------

def im2col_pool_grouped(x):
    # x: (B, 1, 32, 32) NCHW  ->  (4, B*14*14, 25)
    # leading axis = 2x2 pool-window position, last axis ordered kh*5+kw
    B = x.shape[0]
    x2 = x[:, 0]                                           # (B, 32, 32)
    patches = jnp.stack(
        [x2[:, kh:kh + 28, kw:kw + 28] for kh in range(5) for kw in range(5)],
        axis=-1)                                           # (B, 28, 28, 25)
    p = patches.reshape(B, 14, 2, 14, 2, 25)
    p = p.transpose(2, 4, 0, 1, 3, 5)                      # (2, 2, B, 14, 14, 25)
    return p.reshape(4, B * 14 * 14, 25)


def cnn_forward(x, params):
    B = x.shape[0]
    patches4 = im2col_pool_grouped(x)                      # (4, R, 25)
    pooled = conv_pool(patches4, params["w_conv"], params["b_conv"])  # (R, 16)
    # free row-major bitcast (no transpose): feat[b, s*16 + c]
    feat = pooled.reshape(B, 14 * 14 * 16)                 # (B, 3136)
    out = fc_fused(feat, params["w_fc1"], params["b_fc1"],
                   params["w_fc2"], params["b_fc2"])       # (B, 128)
    return out[:, :65]


def init_params(key):
    k1, k2, k3, k4, k5, k6 = jax.random.split(key, 6)
    # conv1: torch weight (16, 1, 5, 5), bias (16,)
    w_conv_t = jax.random.normal(k1, (16, 1, 5, 5), jnp.float32) * 0.1
    w_conv = w_conv_t.reshape(16, 25).T                    # (25, 16), k = kh*5+kw
    b_conv = jax.random.normal(k2, (1, 16), jnp.float32) * 0.1

    # fc1: torch weight (512, 3136) with columns ordered (c, h, w) = c*196 + s.
    # Permute ONCE to the kernel's feat order (s*16 + c), transpose, cast bf16.
    w_fc1_t = jax.random.normal(k3, (512, 3136), jnp.float32) * 0.02
    w_fc1 = (w_fc1_t.reshape(512, 16, 196)                 # (out, c, s)
                    .transpose(2, 1, 0)                    # (s, c, out)
                    .reshape(3136, 512)
                    .astype(jnp.bfloat16))
    b_fc1 = jax.random.normal(k4, (1, 512), jnp.float32) * 0.02

    # fc2: torch weight (65, 512), bias (65,); zero-pad outputs to 128 lanes.
    w_fc2_t = jax.random.normal(k5, (65, 512), jnp.float32) * 0.05
    w_fc2 = jnp.pad(w_fc2_t.T, ((0, 0), (0, 128 - 65))).astype(jnp.bfloat16)
    b_fc2_t = jax.random.normal(k6, (1, 65), jnp.float32) * 0.05
    b_fc2 = jnp.pad(b_fc2_t, ((0, 0), (0, 128 - 65)))

    return dict(w_conv=w_conv, b_conv=b_conv,
                w_fc1=w_fc1, b_fc1=b_fc1,
                w_fc2=w_fc2, b_fc2=b_fc2)


if __name__ == "__main__":
    key = jax.random.PRNGKey(0)
    kx, kp = jax.random.split(key)
    # 32x32 input so that (32-5+1)/2 = 14 matches fc1's 14*14*16
    x = jax.random.normal(kx, (2, 1, 32, 32), jnp.float32)
    params = init_params(kp)
    out = jax.jit(cnn_forward)(x, params)
    out = jax.block_until_ready(out)
    assert out.shape == (2, 65) and out.dtype == jnp.float32
    print("KERNEL_OK")
</pallas_src>

<mosaic_0001>
module attributes {stable_mosaic.version = 11 : i64} {
  func.func @conv_pool_kernel(%arg0: i32, %arg1: memref<4x392x25xf32, #tpu.memory_space<vmem>>, %arg2: memref<25x16xf32, #tpu.memory_space<vmem>>, %arg3: memref<1x16xf32, #tpu.memory_space<vmem>>, %arg4: memref<392x16xf32, #tpu.memory_space<vmem>>) attributes {dimension_semantics = [#tpu.dimension_semantics<parallel>], iteration_bounds = array<i64: 1>, scalar_prefetch = 0 : i64, scratch_operands = 0 : i64, tpu.core_type = #tpu.core_type<tc>, window_params = [{transform_indices = @transform_0, window_bounds = array<i64: 4, 392, 25>}, {pipeline_mode = #tpu.pipeline_mode<synchronous>, transform_indices = @transform_1, window_bounds = array<i64: 25, 16>}, {pipeline_mode = #tpu.pipeline_mode<synchronous>, transform_indices = @transform_2, window_bounds = array<i64: 1, 16>}, {transform_indices = @transform_3, window_bounds = array<i64: 392, 16>}]} {
    %c0 = arith.constant 0 : index
    %c0_0 = arith.constant 0 : index
    %0 = vector.load %arg2[%c0, %c0_0] : memref<25x16xf32, #tpu.memory_space<vmem>>, vector<25x16xf32>
    %c0_1 = arith.constant 0 : index
    %c0_2 = arith.constant 0 : index
    %c0_3 = arith.constant 0 : index
    %1 = vector.load %arg1[%c0_1, %c0_2, %c0_3] : memref<4x392x25xf32, #tpu.memory_space<vmem>>, vector<1x392x25xf32>
    %2 = vector.shape_cast %1 : vector<1x392x25xf32> to vector<392x25xf32>
    %cst = arith.constant dense<0.000000e+00> : vector<392x16xf32>
    %3 = tpu.matmul %2, %0, %cst {dimension_numbers = #tpu.dot_dimension_numbers<[1], [0], [0], [1], [0, 0, 1, 1], [], []>} : vector<392x25xf32>, vector<25x16xf32>, vector<392x16xf32> -> vector<392x16xf32>
    %c1 = arith.constant 1 : index
    %c0_4 = arith.constant 0 : index
    %c0_5 = arith.constant 0 : index
    %4 = vector.load %arg1[%c1, %c0_4, %c0_5] : memref<4x392x25xf32, #tpu.memory_space<vmem>>, vector<1x392x25xf32>
    %5 = vector.shape_cast %4 : vector<1x392x25xf32> to vector<392x25xf32>
    %cst_6 = arith.constant dense<0.000000e+00> : vector<392x16xf32>
    %6 = tpu.matmul %5, %0, %cst_6 {dimension_numbers = #tpu.dot_dimension_numbers<[1], [0], [0], [1], [0, 0, 1, 1], [], []>} : vector<392x25xf32>, vector<25x16xf32>, vector<392x16xf32> -> vector<392x16xf32>
    %c2 = arith.constant 2 : index
    %c0_7 = arith.constant 0 : index
    %c0_8 = arith.constant 0 : index
    %7 = vector.load %arg1[%c2, %c0_7, %c0_8] : memref<4x392x25xf32, #tpu.memory_space<vmem>>, vector<1x392x25xf32>
    %8 = vector.shape_cast %7 : vector<1x392x25xf32> to vector<392x25xf32>
    %cst_9 = arith.constant dense<0.000000e+00> : vector<392x16xf32>
    %9 = tpu.matmul %8, %0, %cst_9 {dimension_numbers = #tpu.dot_dimension_numbers<[1], [0], [0], [1], [0, 0, 1, 1], [], []>} : vector<392x25xf32>, vector<25x16xf32>, vector<392x16xf32> -> vector<392x16xf32>
    %c3 = arith.constant 3 : index
    %c0_10 = arith.constant 0 : index
    %c0_11 = arith.constant 0 : index
    %10 = vector.load %arg1[%c3, %c0_10, %c0_11] : memref<4x392x25xf32, #tpu.memory_space<vmem>>, vector<1x392x25xf32>
    %11 = vector.shape_cast %10 : vector<1x392x25xf32> to vector<392x25xf32>
    %cst_12 = arith.constant dense<0.000000e+00> : vector<392x16xf32>
    %12 = tpu.matmul %11, %0, %cst_12 {dimension_numbers = #tpu.dot_dimension_numbers<[1], [0], [0], [1], [0, 0, 1, 1], [], []>} : vector<392x25xf32>, vector<25x16xf32>, vector<392x16xf32> -> vector<392x16xf32>
    %13 = arith.maximumf %3, %6 : vector<392x16xf32>
    %14 = arith.maximumf %9, %12 : vector<392x16xf32>
    %15 = arith.maximumf %13, %14 : vector<392x16xf32>
    %c0_13 = arith.constant 0 : index
    %c0_14 = arith.constant 0 : index
    %16 = vector.load %arg3[%c0_13, %c0_14] : memref<1x16xf32, #tpu.memory_space<vmem>>, vector<1x16xf32>
    %17 = vector.broadcast %16 : vector<1x16xf32> to vector<392x16xf32>
    %18 = arith.addf %15, %17 : vector<392x16xf32>
    %19 = arith.negf %18 : vector<392x16xf32>
    %20 = math.exp %19 : vector<392x16xf32>
    %cst_15 = arith.constant 1.000000e+00 : f32
    %21 = vector.broadcast %cst_15 : f32 to vector<392x16xf32>
    %22 = arith.addf %21, %20 : vector<392x16xf32>
    %23 = arith.divf %21, %22 : vector<392x16xf32>
    %c0_16 = arith.constant 0 : index
    %c0_17 = arith.constant 0 : index
    %24 = vector.load %arg4[%c0_16, %c0_17] : memref<392x16xf32, #tpu.memory_space<vmem>>, vector<392x16xf32>
    tpu.vector_store %arg4[%c0_16, %c0_17], %23 {strides = array<i32>} : memref<392x16xf32, #tpu.memory_space<vmem>>, vector<392x16xf32>,
    return
  }
  func.func @transform_0(%arg0: i32) -> (i32, i32, i32) {
    %c0_i32 = arith.constant 0 : i32
    %c0_i32_0 = arith.constant 0 : i32
    %c0_i32_1 = arith.constant 0 : i32
    return %c0_i32, %arg0, %c0_i32_0 : i32, i32, i32
  }
  func.func @transform_1(%arg0: i32) -> (i32, i32) {
    %c0_i32 = arith.constant 0 : i32
    %c0_i32_0 = arith.constant 0 : i32
    %c0_i32_1 = arith.constant 0 : i32
    return %c0_i32, %c0_i32_0 : i32, i32
  }
  func.func @transform_2(%arg0: i32) -> (i32, i32) {
    %c0_i32 = arith.constant 0 : i32
    %c0_i32_0 = arith.constant 0 : i32
    %c0_i32_1 = arith.constant 0 : i32
    return %c0_i32, %c0_i32_0 : i32, i32
  }
  func.func @transform_3(%arg0: i32) -> (i32, i32) {
    %c0_i32 = arith.constant 0 : i32
    %c0_i32_0 = arith.constant 0 : i32
    return %arg0, %c0_i32 : i32, i32
  }
}

module attributes {stable_mosaic.version = 11 : i64} {
  func.func @fc_fused_kernel(%arg0: i32, %arg1: memref<2x3136xf32, #tpu.memory_space<vmem>>, %arg2: memref<3136x512xbf16, #tpu.memory_space<vmem>>, %arg3: memref<1x512xf32, #tpu.memory_space<vmem>>, %arg4: memref<512x128xbf16, #tpu.memory_space<vmem>>, %arg5: memref<1x128xf32, #tpu.memory_space<vmem>>, %arg6: memref<2x128xf32, #tpu.memory_space<vmem>>) attributes {dimension_semantics = [#tpu.dimension_semantics<parallel>], iteration_bounds = array<i64: 1>, scalar_prefetch = 0 : i64, scratch_operands = 0 : i64, tpu.core_type = #tpu.core_type<tc>, window_params = [{transform_indices = @transform_0, window_bounds = array<i64: 2, 3136>}, {pipeline_mode = #tpu.pipeline_mode<synchronous>, transform_indices = @transform_1, window_bounds = array<i64: 3136, 512>}, {pipeline_mode = #tpu.pipeline_mode<synchronous>, transform_indices = @transform_2, window_bounds = array<i64: 1, 512>}, {pipeline_mode = #tpu.pipeline_mode<synchronous>, transform_indices = @transform_3, window_bounds = array<i64: 512, 128>}, {pipeline_mode = #tpu.pipeline_mode<synchronous>, transform_indices = @transform_4, window_bounds = array<i64: 1, 128>}, {transform_indices = @transform_5, window_bounds = array<i64: 2, 128>}]} {
    %c0 = arith.constant 0 : index
    %c0_0 = arith.constant 0 : index
    %0 = vector.load %arg1[%c0, %c0_0] : memref<2x3136xf32, #tpu.memory_space<vmem>>, vector<2x3136xf32>
    %1 = arith.truncf %0 : vector<2x3136xf32> to vector<2x3136xbf16>
    %c0_1 = arith.constant 0 : index
    %c0_2 = arith.constant 0 : index
    %2 = vector.load %arg2[%c0_1, %c0_2] : memref<3136x512xbf16, #tpu.memory_space<vmem>>, vector<3136x512xbf16>
    %cst = arith.constant dense<0.000000e+00> : vector<2x512xf32>
    %3 = tpu.matmul %1, %2, %cst {dimension_numbers = #tpu.dot_dimension_numbers<[1], [0], [0], [1], [0, 0, 1, 1], [], []>} : vector<2x3136xbf16>, vector<3136x512xbf16>, vector<2x512xf32> -> vector<2x512xf32>
    %c0_3 = arith.constant 0 : index
    %c0_4 = arith.constant 0 : index
    %4 = vector.load %arg3[%c0_3, %c0_4] : memref<1x512xf32, #tpu.memory_space<vmem>>, vector<1x512xf32>
    %5 = vector.broadcast %4 : vector<1x512xf32> to vector<2x512xf32>
    %6 = arith.addf %3, %5 : vector<2x512xf32>
    %7 = arith.negf %6 : vector<2x512xf32>
    %8 = math.exp %7 : vector<2x512xf32>
    %cst_5 = arith.constant 1.000000e+00 : f32
    %9 = vector.broadcast %cst_5 : f32 to vector<2x512xf32>
    %10 = arith.addf %9, %8 : vector<2x512xf32>
    %11 = arith.divf %9, %10 : vector<2x512xf32>
    %12 = arith.truncf %11 : vector<2x512xf32> to vector<2x512xbf16>
    %c0_6 = arith.constant 0 : index
    %c0_7 = arith.constant 0 : index
    %13 = vector.load %arg4[%c0_6, %c0_7] : memref<512x128xbf16, #tpu.memory_space<vmem>>, vector<512x128xbf16>
    %cst_8 = arith.constant dense<0.000000e+00> : vector<2x128xf32>
    %14 = tpu.matmul %12, %13, %cst_8 {dimension_numbers = #tpu.dot_dimension_numbers<[1], [0], [0], [1], [0, 0, 1, 1], [], []>} : vector<2x512xbf16>, vector<512x128xbf16>, vector<2x128xf32> -> vector<2x128xf32>
    %c0_9 = arith.constant 0 : index
    %c0_10 = arith.constant 0 : index
    %15 = vector.load %arg5[%c0_9, %c0_10] : memref<1x128xf32, #tpu.memory_space<vmem>>, vector<1x128xf32>
    %16 = vector.broadcast %15 : vector<1x128xf32> to vector<2x128xf32>
    %17 = arith.addf %14, %16 : vector<2x128xf32>
    %18 = arith.negf %17 : vector<2x128xf32>
    %19 = math.exp %18 : vector<2x128xf32>
    %cst_11 = arith.constant 1.000000e+00 : f32
    %20 = vector.broadcast %cst_11 : f32 to vector<2x128xf32>
    %21 = arith.addf %20, %19 : vector<2x128xf32>
    %22 = arith.divf %20, %21 : vector<2x128xf32>
    %c0_12 = arith.constant 0 : index
    %c0_13 = arith.constant 0 : index
    %23 = vector.load %arg6[%c0_12, %c0_13] : memref<2x128xf32, #tpu.memory_space<vmem>>, vector<2x128xf32>
    tpu.vector_store %arg6[%c0_12, %c0_13], %22 {strides = array<i32>} : memref<2x128xf32, #tpu.memory_space<vmem>>, vector<2x128xf32>,
    return
  }
  func.func @transform_0(%arg0: i32) -> (i32, i32) {
    %c0_i32 = arith.constant 0 : i32
    %c0_i32_0 = arith.constant 0 : i32
    return %arg0, %c0_i32 : i32, i32
  }
  func.func @transform_1(%arg0: i32) -> (i32, i32) {
    %c0_i32 = arith.constant 0 : i32
    %c0_i32_0 = arith.constant 0 : i32
    %c0_i32_1 = arith.constant 0 : i32
    return %c0_i32, %c0_i32_0 : i32, i32
  }
  func.func @transform_2(%arg0: i32) -> (i32, i32) {
    %c0_i32 = arith.constant 0 : i32
    %c0_i32_0 = arith.constant 0 : i32
    %c0_i32_1 = arith.constant 0 : i32
    return %c0_i32, %c0_i32_0 : i32, i32
  }
  func.func @transform_3(%arg0: i32) -> (i32, i32) {
    %c0_i32 = arith.constant 0 : i32
    %c0_i32_0 = arith.constant 0 : i32
    %c0_i32_1 = arith.constant 0 : i32
    return %c0_i32, %c0_i32_0 : i32, i32
  }
  func.func @transform_4(%arg0: i32) -> (i32, i32) {
    %c0_i32 = arith.constant 0 : i32
    %c0_i32_0 = arith.constant 0 : i32
    %c0_i32_1 = arith.constant 0 : i32
    return %c0_i32, %c0_i32_0 : i32, i32
  }
  func.func @transform_5(%arg0: i32) -> (i32, i32) {
    %c0_i32 = arith.constant 0 : i32
    %c0_i32_0 = arith.constant 0 : i32
    return %arg0, %c0_i32 : i32, i32
  }
}

</mosaic_0001>

<llo_original>
// kernel: cnn_forward.2
$region0: #{cnn_forward.2}
  #allocation0 [shape = 'u32[]', space=smem, size = 0x4, offset = 0x4, fixed_abs, tag = 'smem constant byte address 0x4 - core index']
  #allocation1 [shape = 'u32[144,128]{1,0:T(1,128)}', space=vmem, size = 0x12000, scoped, tag = 'internal scratch']
  %s0 = inlined_call_operand.vmem [shape: f32[4,392,25], index: 0, kind: input, shape index: {}]
  %s1 = inlined_call_operand.vmem [shape: f32[25,16], index: 1, kind: input, shape index: {}]
  %s2 = inlined_call_operand.vmem [shape: f32[1,16], index: 2, kind: input, shape index: {}]
  %s3 = inlined_call_operand.vmem [shape: f32[392,16], index: 3, kind: output, shape index: {}]
  %s4 = sld [smem:[#allocation0]]
  $region22: #{cnn_forward.2} parent=0
    _
  %s6 = ssub.s32 1, %s4
  %s7 = scalar_select 0, %s6, %s4
  // Predicated region
  $region2: #{cnn_forward.2} parent=0 // pred_check
    _
  $region3: #{cnn_forward.2} parent=0 // pred_check_branch
    %9 = sbr.rel (0) target = $region5
  $region4: #{cnn_forward.2} parent=0 // pred_region
    _
  $region5: #{cnn_forward.2} parent=0 // pred_fallthru
    _
  // Predicated region
  $region6: #{cnn_forward.2} parent=0 // pred_check
    _
  $region7: #{cnn_forward.2} parent=0 // pred_check_branch
    %11 = sbr.rel (0) target = $region9
  $region8: #{cnn_forward.2} parent=0 // pred_region
    _
  $region9: #{cnn_forward.2} parent=0 // pred_fallthru
    _
  // Predicated region
  $region10: #{cnn_forward.2} parent=0 // pred_check
    _
  $region11: #{cnn_forward.2} parent=0 // pred_check_branch
    %13 = sbr.rel (0) target = $region13
  $region12: #{cnn_forward.2} parent=0 // pred_region
    _
  $region13: #{cnn_forward.2} parent=0 // pred_fallthru
    _
  %v14 = vld [vmem:[%s1] sm:$0xff]
  %v15 = vld [vmem:[%s1 + $0x8] sm:$0xff]
  %v16 = vld [vmem:[%s1 + $0x10] sm:$0xff]
  %v17 = vld [vmem:[%s1 + $0x18] sm:$0x1]
  %v18 = vld [vmem:[%s0] sm:$0xff]
  %v19 = vld [vmem:[%s0 + $0x8] sm:$0xff]
  %v20 = vld [vmem:[%s0 + $0x10] sm:$0xff]
  %v21 = vld [vmem:[%s0 + $0x18] sm:$0xff]
  %v22 = vld [vmem:[%s0 + $0x20] sm:$0xff]
  %v23 = vld [vmem:[%s0 + $0x28] sm:$0xff]
  %v24 = vld [vmem:[%s0 + $0x30] sm:$0xff]
  %v25 = vld [vmem:[%s0 + $0x38] sm:$0xff]
  %v26 = vld [vmem:[%s0 + $0x40] sm:$0xff]
  %v27 = vld [vmem:[%s0 + $0x48] sm:$0xff]
  %v28 = vld [vmem:[%s0 + $0x50] sm:$0xff]
  %v29 = vld [vmem:[%s0 + $0x58] sm:$0xff]
  %v30 = vld [vmem:[%s0 + $0x60] sm:$0xff]
  %v31 = vld [vmem:[%s0 + $0x68] sm:$0xff]
  %v32 = vld [vmem:[%s0 + $0x70] sm:$0xff]
  %v33 = vld [vmem:[%s0 + $0x78] sm:$0xff]
  %v34 = vld [vmem:[%s0 + $0x80] sm:$0xff]
  %v35 = vld [vmem:[%s0 + $0x88] sm:$0xff]
  %v36 = vld [vmem:[%s0 + $0x90] sm:$0xff]
  %v37 = vld [vmem:[%s0 + $0x98] sm:$0xff]
  %v38 = vld [vmem:[%s0 + $0xa0] sm:$0xff]
  %v39 = vld [vmem:[%s0 + $0xa8] sm:$0xff]
  %v40 = vld [vmem:[%s0 + $0xb0] sm:$0xff]
  %v41 = vld [vmem:[%s0 + $0xb8] sm:$0xff]
  %v42 = vld [vmem:[%s0 + $0xc0] sm:$0xff]
  %v43 = vld [vmem:[%s0 + $0xc8] sm:$0xff]
  %v44 = vld [vmem:[%s0 + $0xd0] sm:$0xff]
  %v45 = vld [vmem:[%s0 + $0xd8] sm:$0xff]
  %v46 = vld [vmem:[%s0 + $0xe0] sm:$0xff]
  %v47 = vld [vmem:[%s0 + $0xe8] sm:$0xff]
  %v48 = vld [vmem:[%s0 + $0xf0] sm:$0xff]
  %v49 = vld [vmem:[%s0 + $0xf8] sm:$0xff]
  %v50 = vld [vmem:[%s0 + $0x100] sm:$0xff]
  %v51 = vld [vmem:[%s0 + $0x108] sm:$0xff]
  %v52 = vld [vmem:[%s0 + $0x110] sm:$0xff]
  %v53 = vld [vmem:[%s0 + $0x118] sm:$0xff]
  %v54 = vld [vmem:[%s0 + $0x120] sm:$0xff]
  %v55 = vld [vmem:[%s0 + $0x128] sm:$0xff]
  %v56 = vld [vmem:[%s0 + $0x130] sm:$0xff]
  %v57 = vld [vmem:[%s0 + $0x138] sm:$0xff]
  %v58 = vld [vmem:[%s0 + $0x140] sm:$0xff]
  %v59 = vld [vmem:[%s0 + $0x148] sm:$0xff]
  %v60 = vld [vmem:[%s0 + $0x150] sm:$0xff]
  %v61 = vld [vmem:[%s0 + $0x158] sm:$0xff]
  %v62 = vld [vmem:[%s0 + $0x160] sm:$0xff]
  %v63 = vld [vmem:[%s0 + $0x168] sm:$0xff]
  %v64 = vld [vmem:[%s0 + $0x170] sm:$0xff]
  %v65 = vld [vmem:[%s0 + $0x178] sm:$0xff]
  %v66 = vld [vmem:[%s0 + $0x180] sm:$0xff]
  %vm67 = vcmask 203776
  %v69 = vsel %vm67, %v18, 0
  %v72 = vsel %vm67, %v19, 0
  %v75 = vsel %vm67, %v20, 0
  %v78 = vsel %vm67, %v21, 0
  %v81 = vsel %vm67, %v22, 0
  %v84 = vsel %vm67, %v23, 0
  %v87 = vsel %vm67, %v24, 0
  %v90 = vsel %vm67, %v25, 0
  %v93 = vsel %vm67, %v26, 0
  %v96 = vsel %vm67, %v27, 0
  %v99 = vsel %vm67, %v28, 0
  %v102 = vsel %vm67, %v29, 0
  %v105 = vsel %vm67, %v30, 0
  %v108 = vsel %vm67, %v31, 0
  %v111 = vsel %vm67, %v32, 0
  %v114 = vsel %vm67, %v33, 0
  %v117 = vsel %vm67, %v34, 0
  %v120 = vsel %vm67, %v35, 0
  %v123 = vsel %vm67, %v36, 0
  %v126 = vsel %vm67, %v37, 0
  %v129 = vsel %vm67, %v38, 0
  %v132 = vsel %vm67, %v39, 0
  %v135 = vsel %vm67, %v40, 0
  %v138 = vsel %vm67, %v41, 0
  %v141 = vsel %vm67, %v42, 0
  %v144 = vsel %vm67, %v43, 0
  %v147 = vsel %vm67, %v44, 0
  %v150 = vsel %vm67, %v45, 0
  %v153 = vsel %vm67, %v46, 0
  %v156 = vsel %vm67, %v47, 0
  %v159 = vsel %vm67, %v48, 0
  %v162 = vsel %vm67, %v49, 0
  %v165 = vsel %vm67, %v50, 0
  %v168 = vsel %vm67, %v51, 0
  %v171 = vsel %vm67, %v52, 0
  %v174 = vsel %vm67, %v53, 0
  %v177 = vsel %vm67, %v54, 0
  %v180 = vsel %vm67, %v55, 0
  %v183 = vsel %vm67, %v56, 0
  %v186 = vsel %vm67, %v57, 0
  %v189 = vsel %vm67, %v58, 0
  %v192 = vsel %vm67, %v59, 0
  %v195 = vsel %vm67, %v60, 0
  %v198 = vsel %vm67, %v61, 0
  %v201 = vsel %vm67, %v62, 0
  %v204 = vsel %vm67, %v63, 0
  %v207 = vsel %vm67, %v64, 0
  %v210 = vsel %vm67, %v65, 0
  %v213 = vsel %vm67, %v66, 0
  %vm215 = vcmask 1040384
  %v217 = vsel %vm215, %v17, 0
  %219 = vmatprep.subr.mxu0 0.0
  %220 = vmatpush1.msra.mxu0 0.0
  %221 = vmatprep.subr.mxu0 0.0
  %222 = vmatpush1.msra.mxu0 0.0
  %223 = vmatprep.subr.mxu0 0.0
  %224 = vmatpush1.msra.mxu0 0.0
  %225 = vmatprep.subr.mxu0 0.0
  %226 = vmatpush1.msra.mxu0 0.0
  %227 = vmatprep.subr.mxu0 0.0
  %228 = vmatpush1.msra.mxu0 0.0
  %229 = vmatprep.subr.mxu0 0.0
  %230 = vmatpush1.msra.mxu0 0.0
  %231 = vmatprep.subr.mxu0 0.0
  %232 = vmatpush1.msra.mxu0 0.0
  %233 = vmatprep.subr.mxu0 0.0
  %234 = vmatpush1.msra.mxu0 0.0
  %235 = vmatprep.subr.mxu0 0.0
  %236 = vmatpush1.msra.mxu0 0.0
  %237 = vmatprep.subr.mxu0 0.0
  %238 = vmatpush1.msra.mxu0 0.0
  %239 = vmatprep.subr.mxu0 0.0
  %240 = vmatpush1.msra.mxu0 0.0
  %241 = vmatprep.subr.mxu0 0.0
  %242 = vmatpush1.msra.mxu0 0.0
  %243 = vmatprep.subr.mxu0 0.0
  %244 = vmatpush1.msra.mxu0 %v217
  %245 = vmatprep.subr.mxu0 0.0
  %246 = vmatpush1.msra.mxu0 %v16
  %247 = vmatprep.subr.mxu0 0.0
  %248 = vmatpush1.msra.mxu0 %v15
  %249 = vmatprep.subr.mxu0 0.0
  %250 = vmatpush1.msra.mxu0 %v14
  %251 = vmatprep.subr.mxu0 0.0
  %252 = vmatpush2.msra.mxu0 0.0
  %253 = vmatprep.subr.mxu0 0.0
  %254 = vmatpush2.msra.mxu0 0.0
  %255 = vmatprep.subr.mxu0 0.0
  %256 = vmatpush2.msra.mxu0 0.0
  %257 = vmatprep.subr.mxu0 0.0
  %258 = vmatpush2.msra.mxu0 0.0
  %259 = vmatprep.subr.mxu0 0.0
  %260 = vmatpush2.msra.mxu0 0.0
  %261 = vmatprep.subr.mxu0 0.0
  %262 = vmatpush2.msra.mxu0 0.0
  %263 = vmatprep.subr.mxu0 0.0
  %264 = vmatpush2.msra.mxu0 0.0
  %265 = vmatprep.subr.mxu0 0.0
  %266 = vmatpush2.msra.mxu0 0.0
  %267 = vmatprep.subr.mxu0 0.0
  %268 = vmatpush2.msra.mxu0 0.0
  %269 = vmatprep.subr.mxu0 0.0
  %270 = vmatpush2.msra.mxu0 0.0
  %271 = vmatprep.subr.mxu0 0.0
  %272 = vmatpush2.msra.mxu0 0.0
  %273 = vmatprep.subr.mxu0 0.0
  %274 = vmatpush2.msra.mxu0 0.0
  %275 = vmatprep.subr.mxu0 0.0
  %276 = vmatpush2.msra.mxu0 0.0
  %277 = vmatprep.subr.mxu0 0.0
  %278 = vmatpush2.msra.mxu0 0.0
  %279 = vmatprep.subr.mxu0 0.0
  %280 = vmatpush2.msra.mxu0 0.0
  %281 = vmatprep.subr.mxu0 0.0
  %282 = vmatpush2.msra.mxu0 0.0
  %283 = vmatprep.mubr.f32.mxu0 0.0
  %284 = vmatmul.mubr.f32.gmra.mxu0 %v69
  %v285 = vpop.f32.mrf.mxu0
  %v286 = vadd.f32 0.0, %v285
  %v287 = vpop.f32.mrf.mxu0
  %288 = vmatprep.mubr.f32.mxu0 0.0
  %289 = vmatmul.mubr.f32.gmra.mxu0 %v72
  %v290 = vpop.f32.mrf.mxu0
  %v291 = vadd.f32 0.0, %v290
  %v292 = vpop.f32.mrf.mxu0
  %293 = vmatprep.mubr.f32.mxu0 0.0
  %294 = vmatmul.mubr.f32.gmra.mxu0 %v75
  %v295 = vpop.f32.mrf.mxu0
  %v296 = vadd.f32 0.0, %v295
  %v297 = vpop.f32.mrf.mxu0
  %298 = vmatprep.mubr.f32.mxu0 0.0
  %299 = vmatmul.mubr.f32.gmra.mxu0 %v78
  %v300 = vpop.f32.mrf.mxu0
  %v301 = vadd.f32 0.0, %v300
  %v302 = vpop.f32.mrf.mxu0
  %303 = vmatprep.mubr.f32.mxu0 0.0
  %304 = vmatmul.mubr.f32.gmra.mxu0 %v81
  %v305 = vpop.f32.mrf.mxu0
  %v306 = vadd.f32 0.0, %v305
  %v307 = vpop.f32.mrf.mxu0
  %308 = vmatprep.mubr.f32.mxu0 0.0
  %309 = vmatmul.mubr.f32.gmra.mxu0 %v84
  %v310 = vpop.f32.mrf.mxu0
  %v311 = vadd.f32 0.0, %v310
  %v312 = vpop.f32.mrf.mxu0
  %313 = vmatprep.mubr.f32.mxu0 0.0
  %314 = vmatmul.mubr.f32.gmra.mxu0 %v87
  %v315 = vpop.f32.mrf.mxu0
  %v316 = vadd.f32 0.0, %v315
  %v317 = vpop.f32.mrf.mxu0
  %318 = vmatprep.mubr.f32.mxu0 0.0
  %319 = vmatmul.mubr.f32.gmra.mxu0 %v90
  %v320 = vpop.f32.mrf.mxu0
  %v321 = vadd.f32 0.0, %v320
  %v322 = vpop.f32.mrf.mxu0
  %323 = vmatprep.mubr.f32.mxu0 0.0
  %324 = vmatmul.mubr.f32.gmra.mxu0 %v93
  %v325 = vpop.f32.mrf.mxu0
  %v326 = vadd.f32 0.0, %v325
  %v327 = vpop.f32.mrf.mxu0
  %328 = vmatprep.mubr.f32.mxu0 0.0
  %329 = vmatmul.mubr.f32.gmra.mxu0 %v96
  %v330 = vpop.f32.mrf.mxu0
  %v331 = vadd.f32 0.0, %v330
  %v332 = vpop.f32.mrf.mxu0
  %333 = vmatprep.mubr.f32.mxu0 0.0
  %334 = vmatmul.mubr.f32.gmra.mxu0 %v99
  %v335 = vpop.f32.mrf.mxu0
  %v336 = vadd.f32 0.0, %v335
  %v337 = vpop.f32.mrf.mxu0
  %338 = vmatprep.mubr.f32.mxu0 0.0
  %339 = vmatmul.mubr.f32.gmra.mxu0 %v102
  %v340 = vpop.f32.mrf.mxu0
  %v341 = vadd.f32 0.0, %v340
  %v342 = vpop.f32.mrf.mxu0
  %343 = vmatprep.mubr.f32.mxu0 0.0
  %344 = vmatmul.mubr.f32.gmra.mxu0 %v105
  %v345 = vpop.f32.mrf.mxu0
  %v346 = vadd.f32 0.0, %v345
  %v347 = vpop.f32.mrf.mxu0
  %348 = vmatprep.mubr.f32.mxu0 0.0
  %349 = vmatmul.mubr.f32.gmra.mxu0 %v108
  %v350 = vpop.f32.mrf.mxu0
  %v351 = vadd.f32 0.0, %v350
  %v352 = vpop.f32.mrf.mxu0
  %353 = vmatprep.mubr.f32.mxu0 0.0
  %354 = vmatmul.mubr.f32.gmra.mxu0 %v111
  %v355 = vpop.f32.mrf.mxu0
  %v356 = vadd.f32 0.0, %v355
  %v357 = vpop.f32.mrf.mxu0
  %358 = vmatprep.mubr.f32.mxu0 0.0
  %359 = vmatmul.mubr.f32.gmra.mxu0 %v114
  %v360 = vpop.f32.mrf.mxu0
  %v361 = vadd.f32 0.0, %v360
  %v362 = vpop.f32.mrf.mxu0
  %363 = vmatprep.mubr.f32.mxu0 0.0
  %364 = vmatmul.mubr.f32.gmra.mxu0 %v117
  %v365 = vpop.f32.mrf.mxu0
  %v366 = vadd.f32 0.0, %v365
  %v367 = vpop.f32.mrf.mxu0
  %368 = vmatprep.mubr.f32.mxu0 0.0
  %369 = vmatmul.mubr.f32.gmra.mxu0 %v120
  %v370 = vpop.f32.mrf.mxu0
  %v371 = vadd.f32 0.0, %v370
  %v372 = vpop.f32.mrf.mxu0
  %373 = vmatprep.mubr.f32.mxu0 0.0
  %374 = vmatmul.mubr.f32.gmra.mxu0 %v123
  %v375 = vpop.f32.mrf.mxu0
  %v376 = vadd.f32 0.0, %v375
  %v377 = vpop.f32.mrf.mxu0
  %378 = vmatprep.mubr.f32.mxu0 0.0
  %379 = vmatmul.mubr.f32.gmra.mxu0 %v126
  %v380 = vpop.f32.mrf.mxu0
  %v381 = vadd.f32 0.0, %v380
  %v382 = vpop.f32.mrf.mxu0
  %383 = vmatprep.mubr.f32.mxu0 0.0
  %384 = vmatmul.mubr.f32.gmra.mxu0 %v129
  %v385 = vpop.f32.mrf.mxu0
  %v386 = vadd.f32 0.0, %v385
  %v387 = vpop.f32.mrf.mxu0
  %388 = vmatprep.mubr.f32.mxu0 0.0
  %389 = vmatmul.mubr.f32.gmra.mxu0 %v132
  %v390 = vpop.f32.mrf.mxu0
  %v391 = vadd.f32 0.0, %v390
  %v392 = vpop.f32.mrf.mxu0
  %393 = vmatprep.mubr.f32.mxu0 0.0
  %394 = vmatmul.mubr.f32.gmra.mxu0 %v135
  %v395 = vpop.f32.mrf.mxu0
  %v396 = vadd.f32 0.0, %v395
  %v397 = vpop.f32.mrf.mxu0
  %398 = vmatprep.mubr.f32.mxu0 0.0
  %399 = vmatmul.mubr.f32.gmra.mxu0 %v138
  %v400 = vpop.f32.mrf.mxu0
  %v401 = vadd.f32 0.0, %v400
  %v402 = vpop.f32.mrf.mxu0
  %403 = vmatprep.mubr.f32.mxu0 0.0
  %404 = vmatmul.mubr.f32.gmra.mxu0 %v141
  %v405 = vpop.f32.mrf.mxu0
  %v406 = vadd.f32 0.0, %v405
  %v407 = vpop.f32.mrf.mxu0
  %408 = vmatprep.mubr.f32.mxu0 0.0
  %409 = vmatmul.mubr.f32.gmra.mxu0 %v144
  %v410 = vpop.f32.mrf.mxu0
  %v411 = vadd.f32 0.0, %v410
  %v412 = vpop.f32.mrf.mxu0
  %413 = vmatprep.mubr.f32.mxu0 0.0
  %414 = vmatmul.mubr.f32.gmra.mxu0 %v147
  %v415 = vpop.f32.mrf.mxu0
  %v416 = vadd.f32 0.0, %v415
  %v417 = vpop.f32.mrf.mxu0
  %418 = vmatprep.mubr.f32.mxu0 0.0
  %419 = vmatmul.mubr.f32.gmra.mxu0 %v150
  %v420 = vpop.f32.mrf.mxu0
  %v421 = vadd.f32 0.0, %v420
  %v422 = vpop.f32.mrf.mxu0
  %423 = vmatprep.mubr.f32.mxu0 0.0
  %424 = vmatmul.mubr.f32.gmra.mxu0 %v153
  %v425 = vpop.f32.mrf.mxu0
  %v426 = vadd.f32 0.0, %v425
  %v427 = vpop.f32.mrf.mxu0
  %428 = vmatprep.mubr.f32.mxu0 0.0
  %429 = vmatmul.mubr.f32.gmra.mxu0 %v156
  %v430 = vpop.f32.mrf.mxu0
  %v431 = vadd.f32 0.0, %v430
  %v432 = vpop.f32.mrf.mxu0
  %433 = vmatprep.mubr.f32.mxu0 0.0
  %434 = vmatmul.mubr.f32.gmra.mxu0 %v159
  %v435 = vpop.f32.mrf.mxu0
  %v436 = vadd.f32 0.0, %v435
  %v437 = vpop.f32.mrf.mxu0
  %438 = vmatprep.mubr.f32.mxu0 0.0
  %439 = vmatmul.mubr.f32.gmra.mxu0 %v162
  %v440 = vpop.f32.mrf.mxu0
  %v441 = vadd.f32 0.0, %v440
  %v442 = vpop.f32.mrf.mxu0
  %443 = vmatprep.mubr.f32.mxu0 0.0
  %444 = vmatmul.mubr.f32.gmra.mxu0 %v165
  %v445 = vpop.f32.mrf.mxu0
  %v446 = vadd.f32 0.0, %v445
  %v447 = vpop.f32.mrf.mxu0
  %448 = vmatprep.mubr.f32.mxu0 0.0
  %449 = vmatmul.mubr.f32.gmra.mxu0 %v168
  %v450 = vpop.f32.mrf.mxu0
  %v451 = vadd.f32 0.0, %v450
  %v452 = vpop.f32.mrf.mxu0
  %453 = vmatprep.mubr.f32.mxu0 0.0
  %454 = vmatmul.mubr.f32.gmra.mxu0 %v171
  %v455 = vpop.f32.mrf.mxu0
  %v456 = vadd.f32 0.0, %v455
  %v457 = vpop.f32.mrf.mxu0
  %458 = vmatprep.mubr.f32.mxu0 0.0
  %459 = vmatmul.mubr.f32.gmra.mxu0 %v174
  %v460 = vpop.f32.mrf.mxu0
  %v461 = vadd.f32 0.0, %v460
  %v462 = vpop.f32.mrf.mxu0
  %463 = vmatprep.mubr.f32.mxu0 0.0
  %464 = vmatmul.mubr.f32.gmra.mxu0 %v177
  %v465 = vpop.f32.mrf.mxu0
  %v466 = vadd.f32 0.0, %v465
  %v467 = vpop.f32.mrf.mxu0
  %468 = vmatprep.mubr.f32.mxu0 0.0
  %469 = vmatmul.mubr.f32.gmra.mxu0 %v180
  %v470 = vpop.f32.mrf.mxu0
  %v471 = vadd.f32 0.0, %v470
  %v472 = vpop.f32.mrf.mxu0
  %473 = vmatprep.mubr.f32.mxu0 0.0
  %474 = vmatmul.mubr.f32.gmra.mxu0 %v183
  %v475 = vpop.f32.mrf.mxu0
  %v476 = vadd.f32 0.0, %v475
  %v477 = vpop.f32.mrf.mxu0
  %478 = vmatprep.mubr.f32.mxu0 0.0
  %479 = vmatmul.mubr.f32.gmra.mxu0 %v186
  %v480 = vpop.f32.mrf.mxu0
  %v481 = vadd.f32 0.0, %v480
  %v482 = vpop.f32.mrf.mxu0
  %483 = vmatprep.mubr.f32.mxu0 0.0
  %484 = vmatmul.mubr.f32.gmra.mxu0 %v189
  %v485 = vpop.f32.mrf.mxu0
  %v486 = vadd.f32 0.0, %v485
  %v487 = vpop.f32.mrf.mxu0
  %488 = vmatprep.mubr.f32.mxu0 0.0
  %489 = vmatmul.mubr.f32.gmra.mxu0 %v192
  %v490 = vpop.f32.mrf.mxu0
  %v491 = vadd.f32 0.0, %v490
  %v492 = vpop.f32.mrf.mxu0
  %493 = vmatprep.mubr.f32.mxu0 0.0
  %494 = vmatmul.mubr.f32.gmra.mxu0 %v195
  %v495 = vpop.f32.mrf.mxu0
  %v496 = vadd.f32 0.0, %v495
  %v497 = vpop.f32.mrf.mxu0
  %498 = vmatprep.mubr.f32.mxu0 0.0
  %499 = vmatmul.mubr.f32.gmra.mxu0 %v198
  %v500 = vpop.f32.mrf.mxu0
  %v501 = vadd.f32 0.0, %v500
  %v502 = vpop.f32.mrf.mxu0
  %503 = vmatprep.mubr.f32.mxu0 0.0
  %504 = vmatmul.mubr.f32.gmra.mxu0 %v201
  %v505 = vpop.f32.mrf.mxu0
  %v506 = vadd.f32 0.0, %v505
  %v507 = vpop.f32.mrf.mxu0
  %508 = vmatprep.mubr.f32.mxu0 0.0
  %509 = vmatmul.mubr.f32.gmra.mxu0 %v204
  %v510 = vpop.f32.mrf.mxu0
  %v511 = vadd.f32 0.0, %v510
  %v512 = vpop.f32.mrf.mxu0
  %513 = vmatprep.mubr.f32.mxu0 0.0
  %514 = vmatmul.mubr.f32.gmra.mxu0 %v207
  %v515 = vpop.f32.mrf.mxu0
  %v516 = vadd.f32 0.0, %v515
  %v517 = vpop.f32.mrf.mxu0
  %518 = vmatprep.mubr.f32.mxu0 0.0
  %519 = vmatmul.mubr.f32.gmra.mxu0 %v210
  %v520 = vpop.f32.mrf.mxu0
  %v521 = vadd.f32 0.0, %v520
  %v522 = vpop.f32.mrf.mxu0
  %523 = vmatprep.mubr.f32.mxu0 0.0
  %524 = vmatmul.mubr.f32.gmra.mxu0 %v213
  %v525 = vpop.f32.mrf.mxu0
  %v526 = vadd.f32 0.0, %v525
  %v527 = vpop.f32.mrf.mxu0
  %528 = vdwg.mxu0
  %s529 = scalar_lea.vmem %s0, 392
  %v530 = vld [vmem:[%s529] sm:$0xff]
  %v531 = vld [vmem:[%s529 + $0x8] sm:$0xff]
  %v532 = vld [vmem:[%s529 + $0x10] sm:$0xff]
  %v533 = vld [vmem:[%s529 + $0x18] sm:$0xff]
  %v534 = vld [vmem:[%s529 + $0x20] sm:$0xff]
  %v535 = vld [vmem:[%s529 + $0x28] sm:$0xff]
  %v536 = vld [vmem:[%s529 + $0x30] sm:$0xff]
  %v537 = vld [vmem:[%s529 + $0x38] sm:$0xff]
  %v538 = vld [vmem:[%s529 + $0x40] sm:$0xff]
  %v539 = vld [vmem:[%s529 + $0x48] sm:$0xff]
  %v540 = vld [vmem:[%s529 + $0x50] sm:$0xff]
  %v541 = vld [vmem:[%s529 + $0x58] sm:$0xff]
  %v542 = vld [vmem:[%s529 + $0x60] sm:$0xff]
  %v543 = vld [vmem:[%s529 + $0x68] sm:$0xff]
  %v544 = vld [vmem:[%s529 + $0x70] sm:$0xff]
  %v545 = vld [vmem:[%s529 + $0x78] sm:$0xff]
  %v546 = vld [vmem:[%s529 + $0x80] sm:$0xff]
  %v547 = vld [vmem:[%s529 + $0x88] sm:$0xff]
  %v548 = vld [vmem:[%s529 + $0x90] sm:$0xff]
  %v549 = vld [vmem:[%s529 + $0x98] sm:$0xff]
  %v550 = vld [vmem:[%s529 + $0xa0] sm:$0xff]
  %v551 = vld [vmem:[%s529 + $0xa8] sm:$0xff]
  %v552 = vld [vmem:[%s529 + $0xb0] sm:$0xff]
  %v553 = vld [vmem:[%s529 + $0xb8] sm:$0xff]
  %v554 = vld [vmem:[%s529 + $0xc0] sm:$0xff]
  %v555 = vld [vmem:[%s529 + $0xc8] sm:$0xff]
  %v556 = vld [vmem:[%s529 + $0xd0] sm:$0xff]
  %v557 = vld [vmem:[%s529 + $0xd8] sm:$0xff]
  %v558 = vld [vmem:[%s529 + $0xe0] sm:$0xff]
  %v559 = vld [vmem:[%s529 + $0xe8] sm:$0xff]
  %v560 = vld [vmem:[%s529 + $0xf0] sm:$0xff]
  %v561 = vld [vmem:[%s529 + $0xf8] sm:$0xff]
  %v562 = vld [vmem:[%s529 + $0x100] sm:$0xff]
  %v563 = vld [vmem:[%s529 + $0x108] sm:$0xff]
  %v564 = vld [vmem:[%s529 + $0x110] sm:$0xff]
  %v565 = vld [vmem:[%s529 + $0x118] sm:$0xff]
  %v566 = vld [vmem:[%s529 + $0x120] sm:$0xff]
  %v567 = vld [vmem:[%s529 + $0x128] sm:$0xff]
  %v568 = vld [vmem:[%s529 + $0x130] sm:$0xff]
  %v569 = vld [vmem:[%s529 + $0x138] sm:$0xff]
  %v570 = vld [vmem:[%s529 + $0x140] sm:$0xff]
  %v571 = vld [vmem:[%s529 + $0x148] sm:$0xff]
  %v572 = vld [vmem:[%s529 + $0x150] sm:$0xff]
  %v573 = vld [vmem:[%s529 + $0x158] sm:$0xff]
  %v574 = vld [vmem:[%s529 + $0x160] sm:$0xff]
  %v575 = vld [vmem:[%s529 + $0x168] sm:$0xff]
  %v576 = vld [vmem:[%s529 + $0x170] sm:$0xff]
  %v577 = vld [vmem:[%s529 + $0x178] sm:$0xff]
  %v578 = vld [vmem:[%s529 + $0x180] sm:$0xff]
  %v580 = vsel %vm67, %v530, 0
  %v583 = vsel %vm67, %v531, 0
  %v586 = vsel %vm67, %v532, 0
  %v589 = vsel %vm67, %v533, 0
  %v592 = vsel %vm67, %v534, 0
  %v595 = vsel %vm67, %v535, 0
  %v598 = vsel %vm67, %v536, 0
  %v601 = vsel %vm67, %v537, 0
  %v604 = vsel %vm67, %v538, 0
  %v607 = vsel %vm67, %v539, 0
  %v610 = vsel %vm67, %v540, 0
  %v613 = vsel %vm67, %v541, 0
  %v616 = vsel %vm67, %v542, 0
  %v619 = vsel %vm67, %v543, 0
  %v622 = vsel %vm67, %v544, 0
  %v625 = vsel %vm67, %v545, 0
  %v628 = vsel %vm67, %v546, 0
  %v631 = vsel %vm67, %v547, 0
  %v634 = vsel %vm67, %v548, 0
  %v637 = vsel %vm67, %v549, 0
  %v640 = vsel %vm67, %v550, 0
  %v643 = vsel %vm67, %v551, 0
  %v646 = vsel %vm67, %v552, 0
  %v649 = vsel %vm67, %v553, 0
  %v652 = vsel %vm67, %v554, 0
  %v655 = vsel %vm67, %v555, 0
  %v658 = vsel %vm67, %v556, 0
  %v661 = vsel %vm67, %v557, 0
  %v664 = vsel %vm67, %v558, 0
  %v667 = vsel %vm67, %v559, 0
  %v670 = vsel %vm67, %v560, 0
  %v673 = vsel %vm67, %v561, 0
  %v676 = vsel %vm67, %v562, 0
  %v679 = vsel %vm67, %v563, 0
  %v682 = vsel %vm67, %v564, 0
  %v685 = vsel %vm67, %v565, 0
  %v688 = vsel %vm67, %v566, 0
  %v691 = vsel %vm67, %v567, 0
  %v694 = vsel %vm67, %v568, 0
  %v697 = vsel %vm67, %v569, 0
  %v700 = vsel %vm67, %v570, 0
  %v703 = vsel %vm67, %v571, 0
  %v706 = vsel %vm67, %v572, 0
  %v709 = vsel %vm67, %v573, 0
  %v712 = vsel %vm67, %v574, 0
  %v715 = vsel %vm67, %v575, 0
  %v718 = vsel %vm67, %v576, 0
  %v721 = vsel %vm67, %v577, 0
  %v724 = vsel %vm67, %v578, 0
  %726 = vmatprep.subr.mxu0 0.0
  %727 = vmatpush1.msra.mxu0 0.0
  %728 = vmatprep.subr.mxu0 0.0
  %729 = vmatpush1.msra.mxu0 0.0
  %730 = vmatprep.subr.mxu0 0.0
  %731 = vmatpush1.msra.mxu0 0.0
  %732 = vmatprep.subr.mxu0 0.0
  %733 = vmatpush1.msra.mxu0 0.0
  %734 = vmatprep.subr.mxu0 0.0
  %735 = vmatpush1.msra.mxu0 0.0
  %736 = vmatprep.subr.mxu0 0.0
  %737 = vmatpush1.msra.mxu0 0.0
  %738 = vmatprep.subr.mxu0 0.0
  %739 = vmatpush1.msra.mxu0 0.0
  %740 = vmatprep.subr.mxu0 0.0
  %741 = vmatpush1.msra.mxu0 0.0
  %742 = vmatprep.subr.mxu0 0.0
  %743 = vmatpush1.msra.mxu0 0.0
  %744 = vmatprep.subr.mxu0 0.0
  %745 = vmatpush1.msra.mxu0 0.0
  %746 = vmatprep.subr.mxu0 0.0
  %747 = vmatpush1.msra.mxu0 0.0
  %748 = vmatprep.subr.mxu0 0.0
  %749 = vmatpush1.msra.mxu0 0.0
  %750 = vmatprep.subr.mxu0 0.0
  %751 = vmatpush1.msra.mxu0 %v217
  %752 = vmatprep.subr.mxu0 0.0
  %753 = vmatpush1.msra.mxu0 %v16
  %754 = vmatprep.subr.mxu0 0.0
  %755 = vmatpush1.msra.mxu0 %v15
  %756 = vmatprep.subr.mxu0 0.0
  %757 = vmatpush1.msra.mxu0 %v14
  %758 = vmatprep.subr.mxu0 0.0
  %759 = vmatpush2.msra.mxu0 0.0
  %760 = vmatprep.subr.mxu0 0.0
  %761 = vmatpush2.msra.mxu0 0.0
  %762 = vmatprep.subr.mxu0 0.0
  %763 = vmatpush2.msra.mxu0 0.0
  %764 = vmatprep.subr.mxu0 0.0
  %765 = vmatpush2.msra.mxu0 0.0
  %766 = vmatprep.subr.mxu0 0.0
  %767 = vmatpush2.msra.mxu0 0.0
  %768 = vmatprep.subr.mxu0 0.0
  %769 = vmatpush2.msra.mxu0 0.0
  %770 = vmatprep.subr.mxu0 0.0
  %771 = vmatpush2.msra.mxu0 0.0
  %772 = vmatprep.subr.mxu0 0.0
  %773 = vmatpush2.msra.mxu0 0.0
  %774 = vmatprep.subr.mxu0 0.0
  %775 = vmatpush2.msra.mxu0 0.0
  %776 = vmatprep.subr.mxu0 0.0
  %777 = vmatpush2.msra.mxu0 0.0
  %778 = vmatprep.subr.mxu0 0.0
  %779 = vmatpush2.msra.mxu0 0.0
  %780 = vmatprep.subr.mxu0 0.0
  %781 = vmatpush2.msra.mxu0 0.0
  %782 = vmatprep.subr.mxu0 0.0
  %783 = vmatpush2.msra.mxu0 0.0
  %784 = vmatprep.subr.mxu0 0.0
  %785 = vmatpush2.msra.mxu0 0.0
  %786 = vmatprep.subr.mxu0 0.0
  %787 = vmatpush2.msra.mxu0 0.0
  %788 = vmatprep.subr.mxu0 0.0
  %789 = vmatpush2.msra.mxu0 0.0
  %790 = vmatprep.mubr.f32.mxu0 0.0
  %791 = vmatmul.mubr.f32.gmra.mxu0 %v580
  %v792 = vpop.f32.mrf.mxu0
  %v793 = vadd.f32 0.0, %v792
  %v794 = vpop.f32.mrf.mxu0
  %795 = vmatprep.mubr.f32.mxu0 0.0
  %796 = vmatmul.mubr.f32.gmra.mxu0 %v583
  %v797 = vpop.f32.mrf.mxu0
  %v798 = vadd.f32 0.0, %v797
  %v799 = vpop.f32.mrf.mxu0
  %800 = vmatprep.mubr.f32.mxu0 0.0
  %801 = vmatmul.mubr.f32.gmra.mxu0 %v586
  %v802 = vpop.f32.mrf.mxu0
  %v803 = vadd.f32 0.0, %v802
  %v804 = vpop.f32.mrf.mxu0
  %805 = vmatprep.mubr.f32.mxu0 0.0
  %806 = vmatmul.mubr.f32.gmra.mxu0 %v589
  %v807 = vpop.f32.mrf.mxu0
  %v808 = vadd.f32 0.0, %v807
  %v809 = vpop.f32.mrf.mxu0
  %810 = vmatprep.mubr.f32.mxu0 0.0
  %811 = vmatmul.mubr.f32.gmra.mxu0 %v592
  %v812 = vpop.f32.mrf.mxu0
  %v813 = vadd.f32 0.0, %v812
  %v814 = vpop.f32.mrf.mxu0
  %815 = vmatprep.mubr.f32.mxu0 0.0
  %816 = vmatmul.mubr.f32.gmra.mxu0 %v595
  %v817 = vpop.f32.mrf.mxu0
  %v818 = vadd.f32 0.0, %v817
  %v819 = vpop.f32.mrf.mxu0
  %820 = vmatprep.mubr.f32.mxu0 0.0
  %821 = vmatmul.mubr.f32.gmra.mxu0 %v598
  %v822 = vpop.f32.mrf.mxu0
  %v823 = vadd.f32 0.0, %v822
  %v824 = vpop.f32.mrf.mxu0
  %825 = vmatprep.mubr.f32.mxu0 0.0
  %826 = vmatmul.mubr.f32.gmra.mxu0 %v601
  %v827 = vpop.f32.mrf.mxu0
  %v828 = vadd.f32 0.0, %v827
  %v829 = vpop.f32.mrf.mxu0
  %830 = vmatprep.mubr.f32.mxu0 0.0
  %831 = vmatmul.mubr.f32.gmra.mxu0 %v604
  %v832 = vpop.f32.mrf.mxu0
  %v833 = vadd.f32 0.0, %v832
  %v834 = vpop.f32.mrf.mxu0
  %835 = vmatprep.mubr.f32.mxu0 0.0
  %836 = vmatmul.mubr.f32.gmra.mxu0 %v607
  %v837 = vpop.f32.mrf.mxu0
  %v838 = vadd.f32 0.0, %v837
  %v839 = vpop.f32.mrf.mxu0
  %840 = vmatprep.mubr.f32.mxu0 0.0
  %841 = vmatmul.mubr.f32.gmra.mxu0 %v610
  %v842 = vpop.f32.mrf.mxu0
  %v843 = vadd.f32 0.0, %v842
  %v844 = vpop.f32.mrf.mxu0
  %845 = vmatprep.mubr.f32.mxu0 0.0
  %846 = vmatmul.mubr.f32.gmra.mxu0 %v613
  %v847 = vpop.f32.mrf.mxu0
  %v848 = vadd.f32 0.0, %v847
  %v849 = vpop.f32.mrf.mxu0
  %850 = vmatprep.mubr.f32.mxu0 0.0
  %851 = vmatmul.mubr.f32.gmra.mxu0 %v616
  %v852 = vpop.f32.mrf.mxu0
  %v853 = vadd.f32 0.0, %v852
  %v854 = vpop.f32.mrf.mxu0
  %855 = vmatprep.mubr.f32.mxu0 0.0
  %856 = vmatmul.mubr.f32.gmra.mxu0 %v619
  %v857 = vpop.f32.mrf.mxu0
  %v858 = vadd.f32 0.0, %v857
  %v859 = vpop.f32.mrf.mxu0
  %860 = vmatprep.mubr.f32.mxu0 0.0
  %861 = vmatmul.mubr.f32.gmra.mxu0 %v622
  %v862 = vpop.f32.mrf.mxu0
  %v863 = vadd.f32 0.0, %v862
  %v864 = vpop.f32.mrf.mxu0
  %865 = vmatprep.mubr.f32.mxu0 0.0
  %866 = vmatmul.mubr.f32.gmra.mxu0 %v625
  %v867 = vpop.f32.mrf.mxu0
  %v868 = vadd.f32 0.0, %v867
  %v869 = vpop.f32.mrf.mxu0
  %870 = vmatprep.mubr.f32.mxu0 0.0
  %871 = vmatmul.mubr.f32.gmra.mxu0 %v628
  %v872 = vpop.f32.mrf.mxu0
  %v873 = vadd.f32 0.0, %v872
  %v874 = vpop.f32.mrf.mxu0
  %875 = vmatprep.mubr.f32.mxu0 0.0
  %876 = vmatmul.mubr.f32.gmra.mxu0 %v631
  %v877 = vpop.f32.mrf.mxu0
  %v878 = vadd.f32 0.0, %v877
  %v879 = vpop.f32.mrf.mxu0
  %880 = vmatprep.mubr.f32.mxu0 0.0
  %881 = vmatmul.mubr.f32.gmra.mxu0 %v634
  %v882 = vpop.f32.mrf.mxu0
  %v883 = vadd.f32 0.0, %v882
  %v884 = vpop.f32.mrf.mxu0
  %885 = vmatprep.mubr.f32.mxu0 0.0
  %886 = vmatmul.mubr.f32.gmra.mxu0 %v637
  %v887 = vpop.f32.mrf.mxu0
  %v888 = vadd.f32 0.0, %v887
  %v889 = vpop.f32.mrf.mxu0
  %890 = vmatprep.mubr.f32.mxu0 0.0
  %891 = vmatmul.mubr.f32.gmra.mxu0 %v640
  %v892 = vpop.f32.mrf.mxu0
  %v893 = vadd.f32 0.0, %v892
  %v894 = vpop.f32.mrf.mxu0
  %895 = vmatprep.mubr.f32.mxu0 0.0
  %896 = vmatmul.mubr.f32.gmra.mxu0 %v643
  %v897 = vpop.f32.mrf.mxu0
  %v898 = vadd.f32 0.0, %v897
  %v899 = vpop.f32.mrf.mxu0
  %900 = vmatprep.mubr.f32.mxu0 0.0
  %901 = vmatmul.mubr.f32.gmra.mxu0 %v646
  %v902 = vpop.f32.mrf.mxu0
  %v903 = vadd.f32 0.0, %v902
  %v904 = vpop.f32.mrf.mxu0
  %905 = vmatprep.mubr.f32.mxu0 0.0
  %906 = vmatmul.mubr.f32.gmra.mxu0 %v649
  %v907 = vpop.f32.mrf.mxu0
  %v908 = vadd.f32 0.0, %v907
  %v909 = vpop.f32.mrf.mxu0
  %910 = vmatprep.mubr.f32.mxu0 0.0
  %911 = vmatmul.mubr.f32.gmra.mxu0 %v652
  %v912 = vpop.f32.mrf.mxu0
  %v913 = vadd.f32 0.0, %v912
  %v914 = vpop.f32.mrf.mxu0
  %915 = vmatprep.mubr.f32.mxu0 0.0
  %916 = vmatmul.mubr.f32.gmra.mxu0 %v655
  %v917 = vpop.f32.mrf.mxu0
  %v918 = vadd.f32 0.0, %v917
  %v919 = vpop.f32.mrf.mxu0
  %920 = vmatprep.mubr.f32.mxu0 0.0
  %921 = vmatmul.mubr.f32.gmra.mxu0 %v658
  %v922 = vpop.f32.mrf.mxu0
  %v923 = vadd.f32 0.0, %v922
  %v924 = vpop.f32.mrf.mxu0
  %925 = vmatprep.mubr.f32.mxu0 0.0
  %926 = vmatmul.mubr.f32.gmra.mxu0 %v661
  %v927 = vpop.f32.mrf.mxu0
  %v928 = vadd.f32 0.0, %v927
  %v929 = vpop.f32.mrf.mxu0
  %930 = vmatprep.mubr.f32.mxu0 0.0
  %931 = vmatmul.mubr.f32.gmra.mxu0 %v664
  %v932 = vpop.f32.mrf.mxu0
  %v933 = vadd.f32 0.0, %v932
  %v934 = vpop.f32.mrf.mxu0
  %935 = vmatprep.mubr.f32.mxu0 0.0
  %936 = vmatmul.mubr.f32.gmra.mxu0 %v667
  %v937 = vpop.f32.mrf.mxu0
  %v938 = vadd.f32 0.0, %v937
  %v939 = vpop.f32.mrf.mxu0
  %940 = vmatprep.mubr.f32.mxu0 0.0
  %941 = vmatmul.mubr.f32.gmra.mxu0 %v670
  %v942 = vpop.f32.mrf.mxu0
  %v943 = vadd.f32 0.0, %v942
  %v944 = vpop.f32.mrf.mxu0
  %945 = vmatprep.mubr.f32.mxu0 0.0
  %946 = vmatmul.mubr.f32.gmra.mxu0 %v673
  %v947 = vpop.f32.mrf.mxu0
  %v948 = vadd.f32 0.0, %v947
  %v949 = vpop.f32.mrf.mxu0
  %950 = vmatprep.mubr.f32.mxu0 0.0
  %951 = vmatmul.mubr.f32.gmra.mxu0 %v676
  %v952 = vpop.f32.mrf.mxu0
  %v953 = vadd.f32 0.0, %v952
  %v954 = vpop.f32.mrf.mxu0
  %955 = vmatprep.mubr.f32.mxu0 0.0
  %956 = vmatmul.mubr.f32.gmra.mxu0 %v679
  %v957 = vpop.f32.mrf.mxu0
  %v958 = vadd.f32 0.0, %v957
  %v959 = vpop.f32.mrf.mxu0
  %960 = vmatprep.mubr.f32.mxu0 0.0
  %961 = vmatmul.mubr.f32.gmra.mxu0 %v682
  %v962 = vpop.f32.mrf.mxu0
  %v963 = vadd.f32 0.0, %v962
  %v964 = vpop.f32.mrf.mxu0
  %965 = vmatprep.mubr.f32.mxu0 0.0
  %966 = vmatmul.mubr.f32.gmra.mxu0 %v685
  %v967 = vpop.f32.mrf.mxu0
  %v968 = vadd.f32 0.0, %v967
  %v969 = vpop.f32.mrf.mxu0
  %970 = vmatprep.mubr.f32.mxu0 0.0
  %971 = vmatmul.mubr.f32.gmra.mxu0 %v688
  %v972 = vpop.f32.mrf.mxu0
  %v973 = vadd.f32 0.0, %v972
  %v974 = vpop.f32.mrf.mxu0
  %975 = vmatprep.mubr.f32.mxu0 0.0
  %976 = vmatmul.mubr.f32.gmra.mxu0 %v691
  %v977 = vpop.f32.mrf.mxu0
  %v978 = vadd.f32 0.0, %v977
  %v979 = vpop.f32.mrf.mxu0
  %980 = vmatprep.mubr.f32.mxu0 0.0
  %981 = vmatmul.mubr.f32.gmra.mxu0 %v694
  %v982 = vpop.f32.mrf.mxu0
  %v983 = vadd.f32 0.0, %v982
  %v984 = vpop.f32.mrf.mxu0
  %985 = vmatprep.mubr.f32.mxu0 0.0
  %986 = vmatmul.mubr.f32.gmra.mxu0 %v697
  %v987 = vpop.f32.mrf.mxu0
  %v988 = vadd.f32 0.0, %v987
  %v989 = vpop.f32.mrf.mxu0
  %990 = vmatprep.mubr.f32.mxu0 0.0
  %991 = vmatmul.mubr.f32.gmra.mxu0 %v700
  %v992 = vpop.f32.mrf.mxu0
  %v993 = vadd.f32 0.0, %v992
  %v994 = vpop.f32.mrf.mxu0
  %995 = vmatprep.mubr.f32.mxu0 0.0
  %996 = vmatmul.mubr.f32.gmra.mxu0 %v703
  %v997 = vpop.f32.mrf.mxu0
  %v998 = vadd.f32 0.0, %v997
  %v999 = vpop.f32.mrf.mxu0
  %1000 = vmatprep.mubr.f32.mxu0 0.0
  %1001 = vmatmul.mubr.f32.gmra.mxu0 %v706
  %v1002 = vpop.f32.mrf.mxu0
  %v1003 = vadd.f32 0.0, %v1002
  %v1004 = vpop.f32.mrf.mxu0
  %1005 = vmatprep.mubr.f32.mxu0 0.0
  %1006 = vmatmul.mubr.f32.gmra.mxu0 %v709
  %v1007 = vpop.f32.mrf.mxu0
  %v1008 = vadd.f32 0.0, %v1007
  %v1009 = vpop.f32.mrf.mxu0
  %1010 = vmatprep.mubr.f32.mxu0 0.0
  %1011 = vmatmul.mubr.f32.gmra.mxu0 %v712
  %v1012 = vpop.f32.mrf.mxu0
  %v1013 = vadd.f32 0.0, %v1012
  %v1014 = vpop.f32.mrf.mxu0
  %1015 = vmatprep.mubr.f32.mxu0 0.0
  %1016 = vmatmul.mubr.f32.gmra.mxu0 %v715
  %v1017 = vpop.f32.mrf.mxu0
  %v1018 = vadd.f32 0.0, %v1017
  %v1019 = vpop.f32.mrf.mxu0
  %1020 = vmatprep.mubr.f32.mxu0 0.0
  %1021 = vmatmul.mubr.f32.gmra.mxu0 %v718
  %v1022 = vpop.f32.mrf.mxu0
  %v1023 = vadd.f32 0.0, %v1022
  %v1024 = vpop.f32.mrf.mxu0
  %1025 = vmatprep.mubr.f32.mxu0 0.0
  %1026 = vmatmul.mubr.f32.gmra.mxu0 %v721
  %v1027 = vpop.f32.mrf.mxu0
  %v1028 = vadd.f32 0.0, %v1027
  %v1029 = vpop.f32.mrf.mxu0
  %1030 = vmatprep.mubr.f32.mxu0 0.0
  %1031 = vmatmul.mubr.f32.gmra.mxu0 %v724
  %v1032 = vpop.f32.mrf.mxu0
  %v1033 = vadd.f32 0.0, %v1032
  %v1034 = vpop.f32.mrf.mxu0
  %1035 = vdwg.mxu0
  %s1036 = scalar_lea.vmem %s0, 784
  %v1037 = vld [vmem:[%s1036] sm:$0xff]
  %v1038 = vld [vmem:[%s1036 + $0x8] sm:$0xff]
  %v1039 = vld [vmem:[%s1036 + $0x10] sm:$0xff]
  %v1040 = vld [vmem:[%s1036 + $0x18] sm:$0xff]
  %v1041 = vld [vmem:[%s1036 + $0x20] sm:$0xff]
  %v1042 = vld [vmem:[%s1036 + $0x28] sm:$0xff]
  %v1043 = vld [vmem:[%s1036 + $0x30] sm:$0xff]
  %v1044 = vld [vmem:[%s1036 + $0x38] sm:$0xff]
  %v1045 = vld [vmem:[%s1036 + $0x40] sm:$0xff]
  %v1046 = vld [vmem:[%s1036 + $0x48] sm:$0xff]
  %v1047 = vld [vmem:[%s1036 + $0x50] sm:$0xff]
  %v1048 = vld [vmem:[%s1036 + $0x58] sm:$0xff]
  %v1049 = vld [vmem:[%s1036 + $0x60] sm:$0xff]
  %v1050 = vld [vmem:[%s1036 + $0x68] sm:$0xff]
  %v1051 = vld [vmem:[%s1036 + $0x70] sm:$0xff]
  %v1052 = vld [vmem:[%s1036 + $0x78] sm:$0xff]
  %v1053 = vld [vmem:[%s1036 + $0x80] sm:$0xff]
  %v1054 = vld [vmem:[%s1036 + $0x88] sm:$0xff]
  %v1055 = vld [vmem:[%s1036 + $0x90] sm:$0xff]
  %v1056 = vld [vmem:[%s1036 + $0x98] sm:$0xff]
  %v1057 = vld [vmem:[%s1036 + $0xa0] sm:$0xff]
  %v1058 = vld [vmem:[%s1036 + $0xa8] sm:$0xff]
  %v1059 = vld [vmem:[%s1036 + $0xb0] sm:$0xff]
  %v1060 = vld [vmem:[%s1036 + $0xb8] sm:$0xff]
  %v1061 = vld [vmem:[%s1036 + $0xc0] sm:$0xff]
  %v1062 = vld [vmem:[%s1036 + $0xc8] sm:$0xff]
  %v1063 = vld [vmem:[%s1036 + $0xd0] sm:$0xff]
  %v1064 = vld [vmem:[%s1036 + $0xd8] sm:$0xff]
  %v1065 = vld [vmem:[%s1036 + $0xe0] sm:$0xff]
  %v1066 = vld [vmem:[%s1036 + $0xe8] sm:$0xff]
  %v1067 = vld [vmem:[%s1036 + $0xf0] sm:$0xff]
  %v1068 = vld [vmem:[%s1036 + $0xf8] sm:$0xff]
  %v1069 = vld [vmem:[%s1036 + $0x100] sm:$0xff]
  %v1070 = vld [vmem:[%s1036 + $0x108] sm:$0xff]
  %v1071 = vld [vmem:[%s1036 + $0x110] sm:$0xff]
  %v1072 = vld [vmem:[%s1036 + $0x118] sm:$0xff]
  %v1073 = vld [vmem:[%s1036 + $0x120] sm:$0xff]
  %v1074 = vld [vmem:[%s1036 + $0x128] sm:$0xff]
  %v1075 = vld [vmem:[%s1036 + $0x130] sm:$0xff]
  %v1076 = vld [vmem:[%s1036 + $0x138] sm:$0xff]
  %v1077 = vld [vmem:[%s1036 + $0x140] sm:$0xff]
  %v1078 = vld [vmem:[%s1036 + $0x148] sm:$0xff]
  %v1079 = vld [vmem:[%s1036 + $0x150] sm:$0xff]
  %v1080 = vld [vmem:[%s1036 + $0x158] sm:$0xff]
  %v1081 = vld [vmem:[%s1036 + $0x160] sm:$0xff]
  %v1082 = vld [vmem:[%s1036 + $0x168] sm:$0xff]
  %v1083 = vld [vmem:[%s1036 + $0x170] sm:$0xff]
  %v1084 = vld [vmem:[%s1036 + $0x178] sm:$0xff]
  %v1085 = vld [vmem:[%s1036 + $0x180] sm:$0xff]
  %v1087 = vsel %vm67, %v1037, 0
  %v1090 = vsel %vm67, %v1038, 0
  %v1093 = vsel %vm67, %v1039, 0
  %v1096 = vsel %vm67, %v1040, 0
  %v1099 = vsel %vm67, %v1041, 0
  %v1102 = vsel %vm67, %v1042, 0
  %v1105 = vsel %vm67, %v1043, 0
  %v1108 = vsel %vm67, %v1044, 0
  %v1111 = vsel %vm67, %v1045, 0
  %v1114 = vsel %vm67, %v1046, 0
  %v1117 = vsel %vm67, %v1047, 0
  %v1120 = vsel %vm67, %v1048, 0
  %v1123 = vsel %vm67, %v1049, 0
  %v1126 = vsel %vm67, %v1050, 0
  %v1129 = vsel %vm67, %v1051, 0
  %v1132 = vsel %vm67, %v1052, 0
  %v1135 = vsel %vm67, %v1053, 0
  %v1138 = vsel %vm67, %v1054, 0
  %v1141 = vsel %vm67, %v1055, 0
  %v1144 = vsel %vm67, %v1056, 0
  %v1147 = vsel %vm67, %v1057, 0
  %v1150 = vsel %vm67, %v1058, 0
  %v1153 = vsel %vm67, %v1059, 0
  %v1156 = vsel %vm67, %v1060, 0
  %v1159 = vsel %vm67, %v1061, 0
  %v1162 = vsel %vm67, %v1062, 0
  %v1165 = vsel %vm67, %v1063, 0
  %v1168 = vsel %vm67, %v1064, 0
  %v1171 = vsel %vm67, %v1065, 0
  %v1174 = vsel %vm67, %v1066, 0
  %v1177 = vsel %vm67, %v1067, 0
  %v1180 = vsel %vm67, %v1068, 0
  %v1183 = vsel %vm67, %v1069, 0
  %v1186 = vsel %vm67, %v1070, 0
  %v1189 = vsel %vm67, %v1071, 0
  %v1192 = vsel %vm67, %v1072, 0
  %v1195 = vsel %vm67, %v1073, 0
  %v1198 = vsel %vm67, %v1074, 0
  %v1201 = vsel %vm67, %v1075, 0
  %v1204 = vsel %vm67, %v1076, 0
  %v1207 = vsel %vm67, %v1077, 0
  %v1210 = vsel %vm67, %v1078, 0
  %v1213 = vsel %vm67, %v1079, 0
  %v1216 = vsel %vm67, %v1080, 0
  %v1219 = vsel %vm67, %v1081, 0
  %v1222 = vsel %vm67, %v1082, 0
  %v1225 = vsel %vm67, %v1083, 0
  %v1228 = vsel %vm67, %v1084, 0
  %v1231 = vsel %vm67, %v1085, 0
  %1233 = vmatprep.subr.mxu0 0.0
  %1234 = vmatpush1.msra.mxu0 0.0
  %1235 = vmatprep.subr.mxu0 0.0
  %1236 = vmatpush1.msra.mxu0 0.0
  %1237 = vmatprep.subr.mxu0 0.0
  %1238 = vmatpush1.msra.mxu0 0.0
  %1239 = vmatprep.subr.mxu0 0.0
  %1240 = vmatpush1.msra.mxu0 0.0
  %1241 = vmatprep.subr.mxu0 0.0
  %1242 = vmatpush1.msra.mxu0 0.0
  %1243 = vmatprep.subr.mxu0 0.0
  %1244 = vmatpush1.msra.mxu0 0.0
  %1245 = vmatprep.subr.mxu0 0.0
  %1246 = vmatpush1.msra.mxu0 0.0
  %1247 = vmatprep.subr.mxu0 0.0
  %1248 = vmatpush1.msra.mxu0 0.0
  %1249 = vmatprep.subr.mxu0 0.0
  %1250 = vmatpush1.msra.mxu0 0.0
  %1251 = vmatprep.subr.mxu0 0.0
  %1252 = vmatpush1.msra.mxu0 0.0
  %1253 = vmatprep.subr.mxu0 0.0
  %1254 = vmatpush1.msra.mxu0 0.0
  %1255 = vmatprep.subr.mxu0 0.0
  %1256 = vmatpush1.msra.mxu0 0.0
  %1257 = vmatprep.subr.mxu0 0.0
  %1258 = vmatpush1.msra.mxu0 %v217
  %1259 = vmatprep.subr.mxu0 0.0
  %1260 = vmatpush1.msra.mxu0 %v16
  %1261 = vmatprep.subr.mxu0 0.0
  %1262 = vmatpush1.msra.mxu0 %v15
  %1263 = vmatprep.subr.mxu0 0.0
  %1264 = vmatpush1.msra.mxu0 %v14
  %1265 = vmatprep.subr.mxu0 0.0
  %1266 = vmatpush2.msra.mxu0 0.0
  %1267 = vmatprep.subr.mxu0 0.0
  %1268 = vmatpush2.msra.mxu0 0.0
  %1269 = vmatprep.subr.mxu0 0.0
  %1270 = vmatpush2.msra.mxu0 0.0
  %1271 = vmatprep.subr.mxu0 0.0
  %1272 = vmatpush2.msra.mxu0 0.0
  %1273 = vmatprep.subr.mxu0 0.0
  %1274 = vmatpush2.msra.mxu0 0.0
  %1275 = vmatprep.subr.mxu0 0.0
  %1276 = vmatpush2.msra.mxu0 0.0
  %1277 = vmatprep.subr.mxu0 0.0
  %1278 = vmatpush2.msra.mxu0 0.0
  %1279 = vmatprep.subr.mxu0 0.0
  %1280 = vmatpush2.msra.mxu0 0.0
  %1281 = vmatprep.subr.mxu0 0.0
  %1282 = vmatpush2.msra.mxu0 0.0
  %1283 = vmatprep.subr.mxu0 0.0
  %1284 = vmatpush2.msra.mxu0 0.0
  %1285 = vmatprep.subr.mxu0 0.0
  %1286 = vmatpush2.msra.mxu0 0.0
  %1287 = vmatprep.subr.mxu0 0.0
  %1288 = vmatpush2.msra.mxu0 0.0
  %1289 = vmatprep.subr.mxu0 0.0
  %1290 = vmatpush2.msra.mxu0 0.0
  %1291 = vmatprep.subr.mxu0 0.0
  %1292 = vmatpush2.msra.mxu0 0.0
  %1293 = vmatprep.subr.mxu0 0.0
  %1294 = vmatpush2.msra.mxu0 0.0
  %1295 = vmatprep.subr.mxu0 0.0
  %1296 = vmatpush2.msra.mxu0 0.0
  %1297 = vmatprep.mubr.f32.mxu0 0.0
  %1298 = vmatmul.mubr.f32.gmra.mxu0 %v1087
  %v1299 = vpop.f32.mrf.mxu0
  %v1300 = vadd.f32 0.0, %v1299
  %v1301 = vpop.f32.mrf.mxu0
  %1302 = vmatprep.mubr.f32.mxu0 0.0
  %1303 = vmatmul.mubr.f32.gmra.mxu0 %v1090
  %v1304 = vpop.f32.mrf.mxu0
  %v1305 = vadd.f32 0.0, %v1304
  %v1306 = vpop.f32.mrf.mxu0
  %1307 = vmatprep.mubr.f32.mxu0 0.0
  %1308 = vmatmul.mubr.f32.gmra.mxu0 %v1093
  %v1309 = vpop.f32.mrf.mxu0
  %v1310 = vadd.f32 0.0, %v1309
  %v1311 = vpop.f32.mrf.mxu0
  %1312 = vmatprep.mubr.f32.mxu0 0.0
  %1313 = vmatmul.mubr.f32.gmra.mxu0 %v1096
  %v1314 = vpop.f32.mrf.mxu0
  %v1315 = vadd.f32 0.0, %v1314
  %v1316 = vpop.f32.mrf.mxu0
  %1317 = vmatprep.mubr.f32.mxu0 0.0
  %1318 = vmatmul.mubr.f32.gmra.mxu0 %v1099
  %v1319 = vpop.f32.mrf.mxu0
  %v1320 = vadd.f32 0.0, %v1319
  %v1321 = vpop.f32.mrf.mxu0
  %1322 = vmatprep.mubr.f32.mxu0 0.0
  %1323 = vmatmul.mubr.f32.gmra.mxu0 %v1102
  %v1324 = vpop.f32.mrf.mxu0
  %v1325 = vadd.f32 0.0, %v1324
  %v1326 = vpop.f32.mrf.mxu0
  %1327 = vmatprep.mubr.f32.mxu0 0.0
  %1328 = vmatmul.mubr.f32.gmra.mxu0 %v1105
  %v1329 = vpop.f32.mrf.mxu0
  %v1330 = vadd.f32 0.0, %v1329
  %v1331 = vpop.f32.mrf.mxu0
  %1332 = vmatprep.mubr.f32.mxu0 0.0
  %1333 = vmatmul.mubr.f32.gmra.mxu0 %v1108
  %v1334 = vpop.f32.mrf.mxu0
  %v1335 = vadd.f32 0.0, %v1334
  %v1336 = vpop.f32.mrf.mxu0
  %1337 = vmatprep.mubr.f32.mxu0 0.0
  %1338 = vmatmul.mubr.f32.gmra.mxu0 %v1111
  %v1339 = vpop.f32.mrf.mxu0
  %v1340 = vadd.f32 0.0, %v1339
  %v1341 = vpop.f32.mrf.mxu0
  %1342 = vmatprep.mubr.f32.mxu0 0.0
  %1343 = vmatmul.mubr.f32.gmra.mxu0 %v1114
  %v1344 = vpop.f32.mrf.mxu0
  %v1345 = vadd.f32 0.0, %v1344
  %v1346 = vpop.f32.mrf.mxu0
  %1347 = vmatprep.mubr.f32.mxu0 0.0
  %1348 = vmatmul.mubr.f32.gmra.mxu0 %v1117
  %v1349 = vpop.f32.mrf.mxu0
  %v1350 = vadd.f32 0.0, %v1349
  %v1351 = vpop.f32.mrf.mxu0
  %1352 = vmatprep.mubr.f32.mxu0 0.0
  %1353 = vmatmul.mubr.f32.gmra.mxu0 %v1120
  %v1354 = vpop.f32.mrf.mxu0
  %v1355 = vadd.f32 0.0, %v1354
  %v1356 = vpop.f32.mrf.mxu0
  %1357 = vmatprep.mubr.f32.mxu0 0.0
  %1358 = vmatmul.mubr.f32.gmra.mxu0 %v1123
  %v1359 = vpop.f32.mrf.mxu0
  %v1360 = vadd.f32 0.0, %v1359
  %v1361 = vpop.f32.mrf.mxu0
  %1362 = vmatprep.mubr.f32.mxu0 0.0
  %1363 = vmatmul.mubr.f32.gmra.mxu0 %v1126
  %v1364 = vpop.f32.mrf.mxu0
  %v1365 = vadd.f32 0.0, %v1364
  %v1366 = vpop.f32.mrf.mxu0
  %1367 = vmatprep.mubr.f32.mxu0 0.0
  %1368 = vmatmul.mubr.f32.gmra.mxu0 %v1129
  %v1369 = vpop.f32.mrf.mxu0
  %v1370 = vadd.f32 0.0, %v1369
  %v1371 = vpop.f32.mrf.mxu0
  %1372 = vmatprep.mubr.f32.mxu0 0.0
  %1373 = vmatmul.mubr.f32.gmra.mxu0 %v1132
  %v1374 = vpop.f32.mrf.mxu0
  %v1375 = vadd.f32 0.0, %v1374
  %v1376 = vpop.f32.mrf.mxu0
  %1377 = vmatprep.mubr.f32.mxu0 0.0
  %1378 = vmatmul.mubr.f32.gmra.mxu0 %v1135
  %v1379 = vpop.f32.mrf.mxu0
  %v1380 = vadd.f32 0.0, %v1379
  %v1381 = vpop.f32.mrf.mxu0
  %1382 = vmatprep.mubr.f32.mxu0 0.0
  %1383 = vmatmul.mubr.f32.gmra.mxu0 %v1138
  %v1384 = vpop.f32.mrf.mxu0
  %v1385 = vadd.f32 0.0, %v1384
  %v1386 = vpop.f32.mrf.mxu0
  %1387 = vmatprep.mubr.f32.mxu0 0.0
  %1388 = vmatmul.mubr.f32.gmra.mxu0 %v1141
  %v1389 = vpop.f32.mrf.mxu0
  %v1390 = vadd.f32 0.0, %v1389
  %v1391 = vpop.f32.mrf.mxu0
  %1392 = vmatprep.mubr.f32.mxu0 0.0
  %1393 = vmatmul.mubr.f32.gmra.mxu0 %v1144
  %v1394 = vpop.f32.mrf.mxu0
  %v1395 = vadd.f32 0.0, %v1394
  %v1396 = vpop.f32.mrf.mxu0
  %1397 = vmatprep.mubr.f32.mxu0 0.0
  %1398 = vmatmul.mubr.f32.gmra.mxu0 %v1147
  %v1399 = vpop.f32.mrf.mxu0
  %v1400 = vadd.f32 0.0, %v1399
  %v1401 = vpop.f32.mrf.mxu0
  %1402 = vmatprep.mubr.f32.mxu0 0.0
  %1403 = vmatmul.mubr.f32.gmra.mxu0 %v1150
  %v1404 = vpop.f32.mrf.mxu0
  %v1405 = vadd.f32 0.0, %v1404
  %v1406 = vpop.f32.mrf.mxu0
  %1407 = vmatprep.mubr.f32.mxu0 0.0
  %1408 = vmatmul.mubr.f32.gmra.mxu0 %v1153
  %v1409 = vpop.f32.mrf.mxu0
  %v1410 = vadd.f32 0.0, %v1409
  %v1411 = vpop.f32.mrf.mxu0
  %1412 = vmatprep.mubr.f32.mxu0 0.0
  %1413 = vmatmul.mubr.f32.gmra.mxu0 %v1156
  %v1414 = vpop.f32.mrf.mxu0
  %v1415 = vadd.f32 0.0, %v1414
  %v1416 = vpop.f32.mrf.mxu0
  %1417 = vmatprep.mubr.f32.mxu0 0.0
  %1418 = vmatmul.mubr.f32.gmra.mxu0 %v1159
  %v1419 = vpop.f32.mrf.mxu0
  %v1420 = vadd.f32 0.0, %v1419
  %v1421 = vpop.f32.mrf.mxu0
  %1422 = vmatprep.mubr.f32.mxu0 0.0
  %1423 = vmatmul.mubr.f32.gmra.mxu0 %v1162
  %v1424 = vpop.f32.mrf.mxu0
  %v1425 = vadd.f32 0.0, %v1424
  %v1426 = vpop.f32.mrf.mxu0
  %1427 = vmatprep.mubr.f32.mxu0 0.0
  %1428 = vmatmul.mubr.f32.gmra.mxu0 %v1165
  %v1429 = vpop.f32.mrf.mxu0
  %v1430 = vadd.f32 0.0, %v1429
  %v1431 = vpop.f32.mrf.mxu0
  %1432 = vmatprep.mubr.f32.mxu0 0.0
  %1433 = vmatmul.mubr.f32.gmra.mxu0 %v1168
  %v1434 = vpop.f32.mrf.mxu0
  %v1435 = vadd.f32 0.0, %v1434
  %v1436 = vpop.f32.mrf.mxu0
  %1437 = vmatprep.mubr.f32.mxu0 0.0
  %1438 = vmatmul.mubr.f32.gmra.mxu0 %v1171
  %v1439 = vpop.f32.mrf.mxu0
  %v1440 = vadd.f32 0.0, %v1439
  %v1441 = vpop.f32.mrf.mxu0
  %1442 = vmatprep.mubr.f32.mxu0 0.0
  %1443 = vmatmul.mubr.f32.gmra.mxu0 %v1174
  %v1444 = vpop.f32.mrf.mxu0
  %v1445 = vadd.f32 0.0, %v1444
  %v1446 = vpop.f32.mrf.mxu0
  %1447 = vmatprep.mubr.f32.mxu0 0.0
  %1448 = vmatmul.mubr.f32.gmra.mxu0 %v1177
  %v1449 = vpop.f32.mrf.mxu0
  %v1450 = vadd.f32 0.0, %v1449
  %v1451 = vpop.f32.mrf.mxu0
  %1452 = vmatprep.mubr.f32.mxu0 0.0
  %1453 = vmatmul.mubr.f32.gmra.mxu0 %v1180
  %v1454 = vpop.f32.mrf.mxu0
  %v1455 = vadd.f32 0.0, %v1454
  %v1456 = vpop.f32.mrf.mxu0
  %1457 = vmatprep.mubr.f32.mxu0 0.0
  %1458 = vmatmul.mubr.f32.gmra.mxu0 %v1183
  %v1459 = vpop.f32.mrf.mxu0
  %v1460 = vadd.f32 0.0, %v1459
  %v1461 = vpop.f32.mrf.mxu0
  %1462 = vmatprep.mubr.f32.mxu0 0.0
  %1463 = vmatmul.mubr.f32.gmra.mxu0 %v1186
  %v1464 = vpop.f32.mrf.mxu0
  %v1465 = vadd.f32 0.0, %v1464
  %v1466 = vpop.f32.mrf.mxu0
  %1467 = vmatprep.mubr.f32.mxu0 0.0
  %1468 = vmatmul.mubr.f32.gmra.mxu0 %v1189
  %v1469 = vpop.f32.mrf.mxu0
  %v1470 = vadd.f32 0.0, %v1469
  %v1471 = vpop.f32.mrf.mxu0
  %1472 = vmatprep.mubr.f32.mxu0 0.0
  %1473 = vmatmul.mubr.f32.gmra.mxu0 %v1192
  %v1474 = vpop.f32.mrf.mxu0
  %v1475 = vadd.f32 0.0, %v1474
  %v1476 = vpop.f32.mrf.mxu0
  %1477 = vmatprep.mubr.f32.mxu0 0.0
  %1478 = vmatmul.mubr.f32.gmra.mxu0 %v1195
  %v1479 = vpop.f32.mrf.mxu0
  %v1480 = vadd.f32 0.0, %v1479
  %v1481 = vpop.f32.mrf.mxu0
  %1482 = vmatprep.mubr.f32.mxu0 0.0
  %1483 = vmatmul.mubr.f32.gmra.mxu0 %v1198
  %v1484 = vpop.f32.mrf.mxu0
  %v1485 = vadd.f32 0.0, %v1484
  %v1486 = vpop.f32.mrf.mxu0
  %1487 = vmatprep.mubr.f32.mxu0 0.0
  %1488 = vmatmul.mubr.f32.gmra.mxu0 %v1201
  %v1489 = vpop.f32.mrf.mxu0
  %v1490 = vadd.f32 0.0, %v1489
  %v1491 = vpop.f32.mrf.mxu0
  %1492 = vmatprep.mubr.f32.mxu0 0.0
  %1493 = vmatmul.mubr.f32.gmra.mxu0 %v1204
  %v1494 = vpop.f32.mrf.mxu0
  %v1495 = vadd.f32 0.0, %v1494
  %v1496 = vpop.f32.mrf.mxu0
  %1497 = vmatprep.mubr.f32.mxu0 0.0
  %1498 = vmatmul.mubr.f32.gmra.mxu0 %v1207
  %v1499 = vpop.f32.mrf.mxu0
  %v1500 = vadd.f32 0.0, %v1499
  %v1501 = vpop.f32.mrf.mxu0
  %1502 = vmatprep.mubr.f32.mxu0 0.0
  %1503 = vmatmul.mubr.f32.gmra.mxu0 %v1210
  %v1504 = vpop.f32.mrf.mxu0
  %v1505 = vadd.f32 0.0, %v1504
  %v1506 = vpop.f32.mrf.mxu0
  %1507 = vmatprep.mubr.f32.mxu0 0.0
  %1508 = vmatmul.mubr.f32.gmra.mxu0 %v1213
  %v1509 = vpop.f32.mrf.mxu0
  %v1510 = vadd.f32 0.0, %v1509
  %v1511 = vpop.f32.mrf.mxu0
  %1512 = vmatprep.mubr.f32.mxu0 0.0
  %1513 = vmatmul.mubr.f32.gmra.mxu0 %v1216
  %v1514 = vpop.f32.mrf.mxu0
  %v1515 = vadd.f32 0.0, %v1514
  %v1516 = vpop.f32.mrf.mxu0
  %1517 = vmatprep.mubr.f32.mxu0 0.0
  %1518 = vmatmul.mubr.f32.gmra.mxu0 %v1219
  %v1519 = vpop.f32.mrf.mxu0
  %v1520 = vadd.f32 0.0, %v1519
  %v1521 = vpop.f32.mrf.mxu0
  %1522 = vmatprep.mubr.f32.mxu0 0.0
  %1523 = vmatmul.mubr.f32.gmra.mxu0 %v1222
  %v1524 = vpop.f32.mrf.mxu0
  %v1525 = vadd.f32 0.0, %v1524
  %v1526 = vpop.f32.mrf.mxu0
  %1527 = vmatprep.mubr.f32.mxu0 0.0
  %1528 = vmatmul.mubr.f32.gmra.mxu0 %v1225
  %v1529 = vpop.f32.mrf.mxu0
  %v1530 = vadd.f32 0.0, %v1529
  %v1531 = vpop.f32.mrf.mxu0
  %1532 = vmatprep.mubr.f32.mxu0 0.0
  %1533 = vmatmul.mubr.f32.gmra.mxu0 %v1228
  %v1534 = vpop.f32.mrf.mxu0
  %v1535 = vadd.f32 0.0, %v1534
  %v1536 = vpop.f32.mrf.mxu0
  %1537 = vmatprep.mubr.f32.mxu0 0.0
  %1538 = vmatmul.mubr.f32.gmra.mxu0 %v1231
  %v1539 = vpop.f32.mrf.mxu0
  %v1540 = vadd.f32 0.0, %v1539
  %v1541 = vpop.f32.mrf.mxu0
  %1542 = vdwg.mxu0
  %s1543 = scalar_lea.vmem %s0, 1176
  %v1544 = vld [vmem:[%s1543] sm:$0xff]
  %v1545 = vld [vmem:[%s1543 + $0x8] sm:$0xff]
  %v1546 = vld [vmem:[%s1543 + $0x10] sm:$0xff]
  %v1547 = vld [vmem:[%s1543 + $0x18] sm:$0xff]
  %v1548 = vld [vmem:[%s1543 + $0x20] sm:$0xff]
  %v1549 = vld [vmem:[%s1543 + $0x28] sm:$0xff]
  %v1550 = vld [vmem:[%s1543 + $0x30] sm:$0xff]
  %v1551 = vld [vmem:[%s1543 + $0x38] sm:$0xff]
  %v1552 = vld [vmem:[%s1543 + $0x40] sm:$0xff]
  %v1553 = vld [vmem:[%s1543 + $0x48] sm:$0xff]
  %v1554 = vld [vmem:[%s1543 + $0x50] sm:$0xff]
  %v1555 = vld [vmem:[%s1543 + $0x58] sm:$0xff]
  %v1556 = vld [vmem:[%s1543 + $0x60] sm:$0xff]
  %v1557 = vld [vmem:[%s1543 + $0x68] sm:$0xff]
  %v1558 = vld [vmem:[%s1543 + $0x70] sm:$0xff]
  %v1559 = vld [vmem:[%s1543 + $0x78] sm:$0xff]
  %v1560 = vld [vmem:[%s1543 + $0x80] sm:$0xff]
  %v1561 = vld [vmem:[%s1543 + $0x88] sm:$0xff]
  %v1562 = vld [vmem:[%s1543 + $0x90] sm:$0xff]
  %v1563 = vld [vmem:[%s1543 + $0x98] sm:$0xff]
  %v1564 = vld [vmem:[%s1543 + $0xa0] sm:$0xff]
  %v1565 = vld [vmem:[%s1543 + $0xa8] sm:$0xff]
  %v1566 = vld [vmem:[%s1543 + $0xb0] sm:$0xff]
  %v1567 = vld [vmem:[%s1543 + $0xb8] sm:$0xff]
  %v1568 = vld [vmem:[%s1543 + $0xc0] sm:$0xff]
  %v1569 = vld [vmem:[%s1543 + $0xc8] sm:$0xff]
  %v1570 = vld [vmem:[%s1543 + $0xd0] sm:$0xff]
  %v1571 = vld [vmem:[%s1543 + $0xd8] sm:$0xff]
  %v1572 = vld [vmem:[%s1543 + $0xe0] sm:$0xff]
  %v1573 = vld [vmem:[%s1543 + $0xe8] sm:$0xff]
  %v1574 = vld [vmem:[%s1543 + $0xf0] sm:$0xff]
  %v1575 = vld [vmem:[%s1543 + $0xf8] sm:$0xff]
  %v1576 = vld [vmem:[%s1543 + $0x100] sm:$0xff]
  %v1577 = vld [vmem:[%s1543 + $0x108] sm:$0xff]
  %v1578 = vld [vmem:[%s1543 + $0x110] sm:$0xff]
  %v1579 = vld [vmem:[%s1543 + $0x118] sm:$0xff]
  %v1580 = vld [vmem:[%s1543 + $0x120] sm:$0xff]
  %v1581 = vld [vmem:[%s1543 + $0x128] sm:$0xff]
  %v1582 = vld [vmem:[%s1543 + $0x130] sm:$0xff]
  %v1583 = vld [vmem:[%s1543 + $0x138] sm:$0xff]
  %v1584 = vld [vmem:[%s1543 + $0x140] sm:$0xff]
  %v1585 = vld [vmem:[%s1543 + $0x148] sm:$0xff]
  %v1586 = vld [vmem:[%s1543 + $0x150] sm:$0xff]
  %v1587 = vld [vmem:[%s1543 + $0x158] sm:$0xff]
  %v1588 = vld [vmem:[%s1543 + $0x160] sm:$0xff]
  %v1589 = vld [vmem:[%s1543 + $0x168] sm:$0xff]
  %v1590 = vld [vmem:[%s1543 + $0x170] sm:$0xff]
  %v1591 = vld [vmem:[%s1543 + $0x178] sm:$0xff]
  %v1592 = vld [vmem:[%s1543 + $0x180] sm:$0xff]
  %v1594 = vsel %vm67, %v1544, 0
  %v1597 = vsel %vm67, %v1545, 0
  %v1600 = vsel %vm67, %v1546, 0
  %v1603 = vsel %vm67, %v1547, 0
  %v1606 = vsel %vm67, %v1548, 0
  %v1609 = vsel %vm67, %v1549, 0
  %v1612 = vsel %vm67, %v1550, 0
  %v1615 = vsel %vm67, %v1551, 0
  %v1618 = vsel %vm67, %v1552, 0
  %v1621 = vsel %vm67, %v1553, 0
  %v1624 = vsel %vm67, %v1554, 0
  %v1627 = vsel %vm67, %v1555, 0
  %v1630 = vsel %vm67, %v1556, 0
  %v1633 = vsel %vm67, %v1557, 0
  %v1636 = vsel %vm67, %v1558, 0
  %v1639 = vsel %vm67, %v1559, 0
  %v1642 = vsel %vm67, %v1560, 0
  %v1645 = vsel %vm67, %v1561, 0
  %v1648 = vsel %vm67, %v1562, 0
  %v1651 = vsel %vm67, %v1563, 0
  %v1654 = vsel %vm67, %v1564, 0
  %v1657 = vsel %vm67, %v1565, 0
  %v1660 = vsel %vm67, %v1566, 0
  %v1663 = vsel %vm67, %v1567, 0
  %v1666 = vsel %vm67, %v1568, 0
  %v1669 = vsel %vm67, %v1569, 0
  %v1672 = vsel %vm67, %v1570, 0
  %v1675 = vsel %vm67, %v1571, 0
  %v1678 = vsel %vm67, %v1572, 0
  %v1681 = vsel %vm67, %v1573, 0
  %v1684 = vsel %vm67, %v1574, 0
  %v1687 = vsel %vm67, %v1575, 0
  %v1690 = vsel %vm67, %v1576, 0
  %v1693 = vsel %vm67, %v1577, 0
  %v1696 = vsel %vm67, %v1578, 0
  %v1699 = vsel %vm67, %v1579, 0
  %v1702 = vsel %vm67, %v1580, 0
  %v1705 = vsel %vm67, %v1581, 0
  %v1708 = vsel %vm67, %v1582, 0
  %v1711 = vsel %vm67, %v1583, 0
  %v1714 = vsel %vm67, %v1584, 0
  %v1717 = vsel %vm67, %v1585, 0
  %v1720 = vsel %vm67, %v1586, 0
  %v1723 = vsel %vm67, %v1587, 0
  %v1726 = vsel %vm67, %v1588, 0
  %v1729 = vsel %vm67, %v1589, 0
  %v1732 = vsel %vm67, %v1590, 0
  %v1735 = vsel %vm67, %v1591, 0
  %v1738 = vsel %vm67, %v1592, 0
  %1740 = vmatprep.subr.mxu0 0.0
  %1741 = vmatpush1.msra.mxu0 0.0
  %1742 = vmatprep.subr.mxu0 0.0
  %1743 = vmatpush1.msra.mxu0 0.0
  %1744 = vmatprep.subr.mxu0 0.0
  %1745 = vmatpush1.msra.mxu0 0.0
  %1746 = vmatprep.subr.mxu0 0.0
  %1747 = vmatpush1.msra.mxu0 0.0
  %1748 = vmatprep.subr.mxu0 0.0
  %1749 = vmatpush1.msra.mxu0 0.0
  %1750 = vmatprep.subr.mxu0 0.0
  %1751 = vmatpush1.msra.mxu0 0.0
  %1752 = vmatprep.subr.mxu0 0.0
  %1753 = vmatpush1.msra.mxu0 0.0
  %1754 = vmatprep.subr.mxu0 0.0
  %1755 = vmatpush1.msra.mxu0 0.0
  %1756 = vmatprep.subr.mxu0 0.0
  %1757 = vmatpush1.msra.mxu0 0.0
  %1758 = vmatprep.subr.mxu0 0.0
  %1759 = vmatpush1.msra.mxu0 0.0
  %1760 = vmatprep.subr.mxu0 0.0
  %1761 = vmatpush1.msra.mxu0 0.0
  %1762 = vmatprep.subr.mxu0 0.0
  %1763 = vmatpush1.msra.mxu0 0.0
  %1764 = vmatprep.subr.mxu0 0.0
  %1765 = vmatpush1.msra.mxu0 %v217
  %1766 = vmatprep.subr.mxu0 0.0
  %1767 = vmatpush1.msra.mxu0 %v16
  %1768 = vmatprep.subr.mxu0 0.0
  %1769 = vmatpush1.msra.mxu0 %v15
  %1770 = vmatprep.subr.mxu0 0.0
  %1771 = vmatpush1.msra.mxu0 %v14
  %1772 = vmatprep.subr.mxu0 0.0
  %1773 = vmatpush2.msra.mxu0 0.0
  %1774 = vmatprep.subr.mxu0 0.0
  %1775 = vmatpush2.msra.mxu0 0.0
  %1776 = vmatprep.subr.mxu0 0.0
  %1777 = vmatpush2.msra.mxu0 0.0
  %1778 = vmatprep.subr.mxu0 0.0
  %1779 = vmatpush2.msra.mxu0 0.0
  %1780 = vmatprep.subr.mxu0 0.0
  %1781 = vmatpush2.msra.mxu0 0.0
  %1782 = vmatprep.subr.mxu0 0.0
  %1783 = vmatpush2.msra.mxu0 0.0
  %1784 = vmatprep.subr.mxu0 0.0
  %1785 = vmatpush2.msra.mxu0 0.0
  %1786 = vmatprep.subr.mxu0 0.0
  %1787 = vmatpush2.msra.mxu0 0.0
  %1788 = vmatprep.subr.mxu0 0.0
  %1789 = vmatpush2.msra.mxu0 0.0
  %1790 = vmatprep.subr.mxu0 0.0
  %1791 = vmatpush2.msra.mxu0 0.0
  %1792 = vmatprep.subr.mxu0 0.0
  %1793 = vmatpush2.msra.mxu0 0.0
  %1794 = vmatprep.subr.mxu0 0.0
  %1795 = vmatpush2.msra.mxu0 0.0
  %1796 = vmatprep.subr.mxu0 0.0
  %1797 = vmatpush2.msra.mxu0 0.0
  %1798 = vmatprep.subr.mxu0 0.0
  %1799 = vmatpush2.msra.mxu0 0.0
  %1800 = vmatprep.subr.mxu0 0.0
  %1801 = vmatpush2.msra.mxu0 0.0
  %1802 = vmatprep.subr.mxu0 0.0
  %1803 = vmatpush2.msra.mxu0 0.0
  %1804 = vmatprep.mubr.f32.mxu0 0.0
  %1805 = vmatmul.mubr.f32.gmra.mxu0 %v1594
  %v1806 = vpop.f32.mrf.mxu0
  %v1807 = vadd.f32 0.0, %v1806
  %v1808 = vpop.f32.mrf.mxu0
  %1809 = vmatprep.mubr.f32.mxu0 0.0
  %1810 = vmatmul.mubr.f32.gmra.mxu0 %v1597
  %v1811 = vpop.f32.mrf.mxu0
  %v1812 = vadd.f32 0.0, %v1811
  %v1813 = vpop.f32.mrf.mxu0
  %1814 = vmatprep.mubr.f32.mxu0 0.0
  %1815 = vmatmul.mubr.f32.gmra.mxu0 %v1600
  %v1816 = vpop.f32.mrf.mxu0
  %v1817 = vadd.f32 0.0, %v1816
  %v1818 = vpop.f32.mrf.mxu0
  %1819 = vmatprep.mubr.f32.mxu0 0.0
  %1820 = vmatmul.mubr.f32.gmra.mxu0 %v1603
  %v1821 = vpop.f32.mrf.mxu0
  %v1822 = vadd.f32 0.0, %v1821
  %v1823 = vpop.f32.mrf.mxu0
  %1824 = vmatprep.mubr.f32.mxu0 0.0
  %1825 = vmatmul.mubr.f32.gmra.mxu0 %v1606
  %v1826 = vpop.f32.mrf.mxu0
  %v1827 = vadd.f32 0.0, %v1826
  %v1828 = vpop.f32.mrf.mxu0
  %1829 = vmatprep.mubr.f32.mxu0 0.0
  %1830 = vmatmul.mubr.f32.gmra.mxu0 %v1609
  %v1831 = vpop.f32.mrf.mxu0
  %v1832 = vadd.f32 0.0, %v1831
  %v1833 = vpop.f32.mrf.mxu0
  %1834 = vmatprep.mubr.f32.mxu0 0.0
  %1835 = vmatmul.mubr.f32.gmra.mxu0 %v1612
  %v1836 = vpop.f32.mrf.mxu0
  %v1837 = vadd.f32 0.0, %v1836
  %v1838 = vpop.f32.mrf.mxu0
  %1839 = vmatprep.mubr.f32.mxu0 0.0
  %1840 = vmatmul.mubr.f32.gmra.mxu0 %v1615
  %v1841 = vpop.f32.mrf.mxu0
  %v1842 = vadd.f32 0.0, %v1841
  %v1843 = vpop.f32.mrf.mxu0
  %1844 = vmatprep.mubr.f32.mxu0 0.0
  %1845 = vmatmul.mubr.f32.gmra.mxu0 %v1618
  %v1846 = vpop.f32.mrf.mxu0
  %v1847 = vadd.f32 0.0, %v1846
  %v1848 = vpop.f32.mrf.mxu0
  %1849 = vmatprep.mubr.f32.mxu0 0.0
  %1850 = vmatmul.mubr.f32.gmra.mxu0 %v1621
  %v1851 = vpop.f32.mrf.mxu0
  %v1852 = vadd.f32 0.0, %v1851
  %v1853 = vpop.f32.mrf.mxu0
  %1854 = vmatprep.mubr.f32.mxu0 0.0
  %1855 = vmatmul.mubr.f32.gmra.mxu0 %v1624
  %v1856 = vpop.f32.mrf.mxu0
  %v1857 = vadd.f32 0.0, %v1856
  %v1858 = vpop.f32.mrf.mxu0
  %1859 = vmatprep.mubr.f32.mxu0 0.0
  %1860 = vmatmul.mubr.f32.gmra.mxu0 %v1627
  %v1861 = vpop.f32.mrf.mxu0
  %v1862 = vadd.f32 0.0, %v1861
  %v1863 = vpop.f32.mrf.mxu0
  %1864 = vmatprep.mubr.f32.mxu0 0.0
  %1865 = vmatmul.mubr.f32.gmra.mxu0 %v1630
  %v1866 = vpop.f32.mrf.mxu0
  %v1867 = vadd.f32 0.0, %v1866
  %v1868 = vpop.f32.mrf.mxu0
  %1869 = vmatprep.mubr.f32.mxu0 0.0
  %1870 = vmatmul.mubr.f32.gmra.mxu0 %v1633
  %v1871 = vpop.f32.mrf.mxu0
  %v1872 = vadd.f32 0.0, %v1871
  %v1873 = vpop.f32.mrf.mxu0
  %1874 = vmatprep.mubr.f32.mxu0 0.0
  %1875 = vmatmul.mubr.f32.gmra.mxu0 %v1636
  %v1876 = vpop.f32.mrf.mxu0
  %v1877 = vadd.f32 0.0, %v1876
  %v1878 = vpop.f32.mrf.mxu0
  %1879 = vmatprep.mubr.f32.mxu0 0.0
  %1880 = vmatmul.mubr.f32.gmra.mxu0 %v1639
  %v1881 = vpop.f32.mrf.mxu0
  %v1882 = vadd.f32 0.0, %v1881
  %v1883 = vpop.f32.mrf.mxu0
  %1884 = vmatprep.mubr.f32.mxu0 0.0
  %1885 = vmatmul.mubr.f32.gmra.mxu0 %v1642
  %v1886 = vpop.f32.mrf.mxu0
  %v1887 = vadd.f32 0.0, %v1886
  %v1888 = vpop.f32.mrf.mxu0
  %1889 = vmatprep.mubr.f32.mxu0 0.0
  %1890 = vmatmul.mubr.f32.gmra.mxu0 %v1645
  %v1891 = vpop.f32.mrf.mxu0
  %v1892 = vadd.f32 0.0, %v1891
  %v1893 = vpop.f32.mrf.mxu0
  %1894 = vmatprep.mubr.f32.mxu0 0.0
  %1895 = vmatmul.mubr.f32.gmra.mxu0 %v1648
  %v1896 = vpop.f32.mrf.mxu0
  %v1897 = vadd.f32 0.0, %v1896
  %v1898 = vpop.f32.mrf.mxu0
  %1899 = vmatprep.mubr.f32.mxu0 0.0
  %1900 = vmatmul.mubr.f32.gmra.mxu0 %v1651
  %v1901 = vpop.f32.mrf.mxu0
  %v1902 = vadd.f32 0.0, %v1901
  %v1903 = vpop.f32.mrf.mxu0
  %1904 = vmatprep.mubr.f32.mxu0 0.0
  %1905 = vmatmul.mubr.f32.gmra.mxu0 %v1654
  %v1906 = vpop.f32.mrf.mxu0
  %v1907 = vadd.f32 0.0, %v1906
  %v1908 = vpop.f32.mrf.mxu0
  %1909 = vmatprep.mubr.f32.mxu0 0.0
  %1910 = vmatmul.mubr.f32.gmra.mxu0 %v1657
  %v1911 = vpop.f32.mrf.mxu0
  %v1912 = vadd.f32 0.0, %v1911
  %v1913 = vpop.f32.mrf.mxu0
  %1914 = vmatprep.mubr.f32.mxu0 0.0
  %1915 = vmatmul.mubr.f32.gmra.mxu0 %v1660
  %v1916 = vpop.f32.mrf.mxu0
  %v1917 = vadd.f32 0.0, %v1916
  %v1918 = vpop.f32.mrf.mxu0
  %1919 = vmatprep.mubr.f32.mxu0 0.0
  %1920 = vmatmul.mubr.f32.gmra.mxu0 %v1663
  %v1921 = vpop.f32.mrf.mxu0
  %v1922 = vadd.f32 0.0, %v1921
  %v1923 = vpop.f32.mrf.mxu0
  %1924 = vmatprep.mubr.f32.mxu0 0.0
  %1925 = vmatmul.mubr.f32.gmra.mxu0 %v1666
  %v1926 = vpop.f32.mrf.mxu0
  %v1927 = vadd.f32 0.0, %v1926
  %v1928 = vpop.f32.mrf.mxu0
  %1929 = vmatprep.mubr.f32.mxu0 0.0
  %1930 = vmatmul.mubr.f32.gmra.mxu0 %v1669
  %v1931 = vpop.f32.mrf.mxu0
  %v1932 = vadd.f32 0.0, %v1931
  %v1933 = vpop.f32.mrf.mxu0
  %1934 = vmatprep.mubr.f32.mxu0 0.0
  %1935 = vmatmul.mubr.f32.gmra.mxu0 %v1672
  %v1936 = vpop.f32.mrf.mxu0
  %v1937 = vadd.f32 0.0, %v1936
  %v1938 = vpop.f32.mrf.mxu0
  %1939 = vmatprep.mubr.f32.mxu0 0.0
  %1940 = vmatmul.mubr.f32.gmra.mxu0 %v1675
  %v1941 = vpop.f32.mrf.mxu0
  %v1942 = vadd.f32 0.0, %v1941
  %v1943 = vpop.f32.mrf.mxu0
  %1944 = vmatprep.mubr.f32.mxu0 0.0
  %1945 = vmatmul.mubr.f32.gmra.mxu0 %v1678
  %v1946 = vpop.f32.mrf.mxu0
  %v1947 = vadd.f32 0.0, %v1946
  %v1948 = vpop.f32.mrf.mxu0
  %1949 = vmatprep.mubr.f32.mxu0 0.0
  %1950 = vmatmul.mubr.f32.gmra.mxu0 %v1681
  %v1951 = vpop.f32.mrf.mxu0
  %v1952 = vadd.f32 0.0, %v1951
  %v1953 = vpop.f32.mrf.mxu0
  %1954 = vmatprep.mubr.f32.mxu0 0.0
  %1955 = vmatmul.mubr.f32.gmra.mxu0 %v1684
  %v1956 = vpop.f32.mrf.mxu0
  %v1957 = vadd.f32 0.0, %v1956
  %v1958 = vpop.f32.mrf.mxu0
  %1959 = vmatprep.mubr.f32.mxu0 0.0
  %1960 = vmatmul.mubr.f32.gmra.mxu0 %v1687
  %v1961 = vpop.f32.mrf.mxu0
  %v1962 = vadd.f32 0.0, %v1961
  %v1963 = vpop.f32.mrf.mxu0
  %1964 = vmatprep.mubr.f32.mxu0 0.0
  %1965 = vmatmul.mubr.f32.gmra.mxu0 %v1690
  %v1966 = vpop.f32.mrf.mxu0
  %v1967 = vadd.f32 0.0, %v1966
  %v1968 = vpop.f32.mrf.mxu0
  %1969 = vmatprep.mubr.f32.mxu0 0.0
  %1970 = vmatmul.mubr.f32.gmra.mxu0 %v1693
  %v1971 = vpop.f32.mrf.mxu0
  %v1972 = vadd.f32 0.0, %v1971
  %v1973 = vpop.f32.mrf.mxu0
  %1974 = vmatprep.mubr.f32.mxu0 0.0
  %1975 = vmatmul.mubr.f32.gmra.mxu0 %v1696
  %v1976 = vpop.f32.mrf.mxu0
  %v1977 = vadd.f32 0.0, %v1976
  %v1978 = vpop.f32.mrf.mxu0
  %1979 = vmatprep.mubr.f32.mxu0 0.0
  %1980 = vmatmul.mubr.f32.gmra.mxu0 %v1699
  %v1981 = vpop.f32.mrf.mxu0
  %v1982 = vadd.f32 0.0, %v1981
  %v1983 = vpop.f32.mrf.mxu0
  %1984 = vmatprep.mubr.f32.mxu0 0.0
  %1985 = vmatmul.mubr.f32.gmra.mxu0 %v1702
  %v1986 = vpop.f32.mrf.mxu0
  %v1987 = vadd.f32 0.0, %v1986
  %v1988 = vpop.f32.mrf.mxu0
  %1989 = vmatprep.mubr.f32.mxu0 0.0
  %1990 = vmatmul.mubr.f32.gmra.mxu0 %v1705
  %v1991 = vpop.f32.mrf.mxu0
  %v1992 = vadd.f32 0.0, %v1991
  %v1993 = vpop.f32.mrf.mxu0
  %1994 = vmatprep.mubr.f32.mxu0 0.0
  %1995 = vmatmul.mubr.f32.gmra.mxu0 %v1708
  %v1996 = vpop.f32.mrf.mxu0
  %v1997 = vadd.f32 0.0, %v1996
  %v1998 = vpop.f32.mrf.mxu0
  %1999 = vmatprep.mubr.f32.mxu0 0.0
  %2000 = vmatmul.mubr.f32.gmra.mxu0 %v1711
  %v2001 = vpop.f32.mrf.mxu0
  %v2002 = vadd.f32 0.0, %v2001
  %v2003 = vpop.f32.mrf.mxu0
  %2004 = vmatprep.mubr.f32.mxu0 0.0
  %2005 = vmatmul.mubr.f32.gmra.mxu0 %v1714
  %v2006 = vpop.f32.mrf.mxu0
  %v2007 = vadd.f32 0.0, %v2006
  %v2008 = vpop.f32.mrf.mxu0
  %2009 = vmatprep.mubr.f32.mxu0 0.0
  %2010 = vmatmul.mubr.f32.gmra.mxu0 %v1717
  %v2011 = vpop.f32.mrf.mxu0
  %v2012 = vadd.f32 0.0, %v2011
  %v2013 = vpop.f32.mrf.mxu0
  %2014 = vmatprep.mubr.f32.mxu0 0.0
  %2015 = vmatmul.mubr.f32.gmra.mxu0 %v1720
  %v2016 = vpop.f32.mrf.mxu0
  %v2017 = vadd.f32 0.0, %v2016
  %v2018 = vpop.f32.mrf.mxu0
  %2019 = vmatprep.mubr.f32.mxu0 0.0
  %2020 = vmatmul.mubr.f32.gmra.mxu0 %v1723
  %v2021 = vpop.f32.mrf.mxu0
  %v2022 = vadd.f32 0.0, %v2021
  %v2023 = vpop.f32.mrf.mxu0
  %2024 = vmatprep.mubr.f32.mxu0 0.0
  %2025 = vmatmul.mubr.f32.gmra.mxu0 %v1726
  %v2026 = vpop.f32.mrf.mxu0
  %v2027 = vadd.f32 0.0, %v2026
  %v2028 = vpop.f32.mrf.mxu0
  %2029 = vmatprep.mubr.f32.mxu0 0.0
  %2030 = vmatmul.mubr.f32.gmra.mxu0 %v1729
  %v2031 = vpop.f32.mrf.mxu0
  %v2032 = vadd.f32 0.0, %v2031
  %v2033 = vpop.f32.mrf.mxu0
  %2034 = vmatprep.mubr.f32.mxu0 0.0
  %2035 = vmatmul.mubr.f32.gmra.mxu0 %v1732
  %v2036 = vpop.f32.mrf.mxu0
  %v2037 = vadd.f32 0.0, %v2036
  %v2038 = vpop.f32.mrf.mxu0
  %2039 = vmatprep.mubr.f32.mxu0 0.0
  %2040 = vmatmul.mubr.f32.gmra.mxu0 %v1735
  %v2041 = vpop.f32.mrf.mxu0
  %v2042 = vadd.f32 0.0, %v2041
  %v2043 = vpop.f32.mrf.mxu0
  %2044 = vmatprep.mubr.f32.mxu0 0.0
  %2045 = vmatmul.mubr.f32.gmra.mxu0 %v1738
  %v2046 = vpop.f32.mrf.mxu0
  %v2047 = vadd.f32 0.0, %v2046
  %v2048 = vpop.f32.mrf.mxu0
  %2049 = vdwg.mxu0
  %v2050 = vmax.f32 %v286, %v793
  %v2051 = vmax.f32 %v291, %v798
  %v2052 = vmax.f32 %v296, %v803
  %v2053 = vmax.f32 %v301, %v808
  %v2054 = vmax.f32 %v306, %v813
  %v2055 = vmax.f32 %v311, %v818
  %v2056 = vmax.f32 %v316, %v823
  %v2057 = vmax.f32 %v321, %v828
  %v2058 = vmax.f32 %v326, %v833
  %v2059 = vmax.f32 %v331, %v838
  %v2060 = vmax.f32 %v336, %v843
  %v2061 = vmax.f32 %v341, %v848
  %v2062 = vmax.f32 %v346, %v853
  %v2063 = vmax.f32 %v351, %v858
  %v2064 = vmax.f32 %v356, %v863
  %v2065 = vmax.f32 %v361, %v868
  %v2066 = vmax.f32 %v366, %v873
  %v2067 = vmax.f32 %v371, %v878
  %v2068 = vmax.f32 %v376, %v883
  %v2069 = vmax.f32 %v381, %v888
  %v2070 = vmax.f32 %v386, %v893
  %v2071 = vmax.f32 %v391, %v898
  %v2072 = vmax.f32 %v396, %v903
  %v2073 = vmax.f32 %v401, %v908
  %v2074 = vmax.f32 %v406, %v913
  %v2075 = vmax.f32 %v411, %v918
  %v2076 = vmax.f32 %v416, %v923
  %v2077 = vmax.f32 %v421, %v928
  %v2078 = vmax.f32 %v426, %v933
  %v2079 = vmax.f32 %v431, %v938
  %v2080 = vmax.f32 %v436, %v943
  %v2081 = vmax.f32 %v441, %v948
  %v2082 = vmax.f32 %v446, %v953
  %v2083 = vmax.f32 %v451, %v958
  %v2084 = vmax.f32 %v456, %v963
  %v2085 = vmax.f32 %v461, %v968
  %v2086 = vmax.f32 %v466, %v973
  %v2087 = vmax.f32 %v471, %v978
  %v2088 = vmax.f32 %v476, %v983
  %v2089 = vmax.f32 %v481, %v988
  %v2090 = vmax.f32 %v486, %v993
  %v2091 = vmax.f32 %v491, %v998
  %v2092 = vmax.f32 %v496, %v1003
  %v2093 = vmax.f32 %v501, %v1008
  %v2094 = vmax.f32 %v506, %v1013
  %v2095 = vmax.f32 %v511, %v1018
  %v2096 = vmax.f32 %v516, %v1023
  %v2097 = vmax.f32 %v521, %v1028
  %v2098 = vmax.f32 %v526, %v1033
  %v2099 = vmax.f32 %v1300, %v1807
  %v2100 = vmax.f32 %v1305, %v1812
  %v2101 = vmax.f32 %v1310, %v1817
  %v2102 = vmax.f32 %v1315, %v1822
  %v2103 = vmax.f32 %v1320, %v1827
  %v2104 = vmax.f32 %v1325, %v1832
  %v2105 = vmax.f32 %v1330, %v1837
  %v2106 = vmax.f32 %v1335, %v1842
  %v2107 = vmax.f32 %v1340, %v1847
  %v2108 = vmax.f32 %v1345, %v1852
  %v2109 = vmax.f32 %v1350, %v1857
  %v2110 = vmax.f32 %v1355, %v1862
  %v2111 = vmax.f32 %v1360, %v1867
  %v2112 = vmax.f32 %v1365, %v1872
  %v2113 = vmax.f32 %v1370, %v1877
  %v2114 = vmax.f32 %v1375, %v1882
  %v2115 = vmax.f32 %v1380, %v1887
  %v2116 = vmax.f32 %v1385, %v1892
  %v2117 = vmax.f32 %v1390, %v1897
  %v2118 = vmax.f32 %v1395, %v1902
  %v2119 = vmax.f32 %v1400, %v1907
  %v2120 = vmax.f32 %v1405, %v1912
  %v2121 = vmax.f32 %v1410, %v1917
  %v2122 = vmax.f32 %v1415, %v1922
  %v2123 = vmax.f32 %v1420, %v1927
  %v2124 = vmax.f32 %v1425, %v1932
  %v2125 = vmax.f32 %v1430, %v1937
  %v2126 = vmax.f32 %v1435, %v1942
  %v2127 = vmax.f32 %v1440, %v1947
  %v2128 = vmax.f32 %v1445, %v1952
  %v2129 = vmax.f32 %v1450, %v1957
  %v2130 = vmax.f32 %v1455, %v1962
  %v2131 = vmax.f32 %v1460, %v1967
  %v2132 = vmax.f32 %v1465, %v1972
  %v2133 = vmax.f32 %v1470, %v1977
  %v2134 = vmax.f32 %v1475, %v1982
  %v2135 = vmax.f32 %v1480, %v1987
  %v2136 = vmax.f32 %v1485, %v1992
  %v2137 = vmax.f32 %v1490, %v1997
  %v2138 = vmax.f32 %v1495, %v2002
  %v2139 = vmax.f32 %v1500, %v2007
  %v2140 = vmax.f32 %v1505, %v2012
  %v2141 = vmax.f32 %v1510, %v2017
  %v2142 = vmax.f32 %v1515, %v2022
  %v2143 = vmax.f32 %v1520, %v2027
  %v2144 = vmax.f32 %v1525, %v2032
  %v2145 = vmax.f32 %v1530, %v2037
  %v2146 = vmax.f32 %v1535, %v2042
  %v2147 = vmax.f32 %v1540, %v2047
  %v2148 = vmax.f32 %v2050, %v2099
  %v2149 = vmax.f32 %v2051, %v2100
  %v2150 = vmax.f32 %v2052, %v2101
  %v2151 = vmax.f32 %v2053, %v2102
  %v2152 = vmax.f32 %v2054, %v2103
  %v2153 = vmax.f32 %v2055, %v2104
  %v2154 = vmax.f32 %v2056, %v2105
  %v2155 = vmax.f32 %v2057, %v2106
  %v2156 = vmax.f32 %v2058, %v2107
  %v2157 = vmax.f32 %v2059, %v2108
  %v2158 = vmax.f32 %v2060, %v2109
  %v2159 = vmax.f32 %v2061, %v2110
  %v2160 = vmax.f32 %v2062, %v2111
  %v2161 = vmax.f32 %v2063, %v2112
  %v2162 = vmax.f32 %v2064, %v2113
  %v2163 = vmax.f32 %v2065, %v2114
  %v2164 = vmax.f32 %v2066, %v2115
  %v2165 = vmax.f32 %v2067, %v2116
  %v2166 = vmax.f32 %v2068, %v2117
  %v2167 = vmax.f32 %v2069, %v2118
  %v2168 = vmax.f32 %v2070, %v2119
  %v2169 = vmax.f32 %v2071, %v2120
  %v2170 = vmax.f32 %v2072, %v2121
  %v2171 = vmax.f32 %v2073, %v2122
  %v2172 = vmax.f32 %v2074, %v2123
  %v2173 = vmax.f32 %v2075, %v2124
  %v2174 = vmax.f32 %v2076, %v2125
  %v2175 = vmax.f32 %v2077, %v2126
  %v2176 = vmax.f32 %v2078, %v2127
  %v2177 = vmax.f32 %v2079, %v2128
  %v2178 = vmax.f32 %v2080, %v2129
  %v2179 = vmax.f32 %v2081, %v2130
  %v2180 = vmax.f32 %v2082, %v2131
  %v2181 = vmax.f32 %v2083, %v2132
  %v2182 = vmax.f32 %v2084, %v2133
  %v2183 = vmax.f32 %v2085, %v2134
  %v2184 = vmax.f32 %v2086, %v2135
  %v2185 = vmax.f32 %v2087, %v2136
  %v2186 = vmax.f32 %v2088, %v2137
  %v2187 = vmax.f32 %v2089, %v2138
  %v2188 = vmax.f32 %v2090, %v2139
  %v2189 = vmax.f32 %v2091, %v2140
  %v2190 = vmax.f32 %v2092, %v2141
  %v2191 = vmax.f32 %v2093, %v2142
  %v2192 = vmax.f32 %v2094, %v2143
  %v2193 = vmax.f32 %v2095, %v2144
  %v2194 = vmax.f32 %v2096, %v2145
  %v2195 = vmax.f32 %v2097, %v2146
  %v2196 = vmax.f32 %v2098, %v2147
  %v2197 = vld [vmem:[%s2] sm:$0x1]
  %v2199 = vlaneseq
  %v2200 = vshrl.u32 %v2199, 7
  %v2201 = vsub.s32 0, %v2200
  %v2202 = vrot.slane %v2197, %v2201
  %v2204 = vadd.f32 %v2148, %v2202
  %v2205 = vadd.f32 %v2149, %v2202
  %v2206 = vadd.f32 %v2150, %v2202
  %v2207 = vadd.f32 %v2151, %v2202
  %v2208 = vadd.f32 %v2152, %v2202
  %v2209 = vadd.f32 %v2153, %v2202
  %v2210 = vadd.f32 %v2154, %v2202
  %v2211 = vadd.f32 %v2155, %v2202
  %v2212 = vadd.f32 %v2156, %v2202
  %v2213 = vadd.f32 %v2157, %v2202
  %v2214 = vadd.f32 %v2158, %v2202
  %v2215 = vadd.f32 %v2159, %v2202
  %v2216 = vadd.f32 %v2160, %v2202
  %v2217 = vadd.f32 %v2161, %v2202
  %v2218 = vadd.f32 %v2162, %v2202
  %v2219 = vadd.f32 %v2163, %v2202
  %v2220 = vadd.f32 %v2164, %v2202
  %v2221 = vadd.f32 %v2165, %v2202
  %v2222 = vadd.f32 %v2166, %v2202
  %v2223 = vadd.f32 %v2167, %v2202
  %v2224 = vadd.f32 %v2168, %v2202
  %v2225 = vadd.f32 %v2169, %v2202
  %v2226 = vadd.f32 %v2170, %v2202
  %v2227 = vadd.f32 %v2171, %v2202
  %v2228 = vadd.f32 %v2172, %v2202
  %v2229 = vadd.f32 %v2173, %v2202
  %v2230 = vadd.f32 %v2174, %v2202
  %v2231 = vadd.f32 %v2175, %v2202
  %v2232 = vadd.f32 %v2176, %v2202
  %v2233 = vadd.f32 %v2177, %v2202
  %v2234 = vadd.f32 %v2178, %v2202
  %v2235 = vadd.f32 %v2179, %v2202
  %v2236 = vadd.f32 %v2180, %v2202
  %v2237 = vadd.f32 %v2181, %v2202
  %v2238 = vadd.f32 %v2182, %v2202
  %v2239 = vadd.f32 %v2183, %v2202
  %v2240 = vadd.f32 %v2184, %v2202
  %v2241 = vadd.f32 %v2185, %v2202
  %v2242 = vadd.f32 %v2186, %v2202
  %v2243 = vadd.f32 %v2187, %v2202
  %v2244 = vadd.f32 %v2188, %v2202
  %v2245 = vadd.f32 %v2189, %v2202
  %v2246 = vadd.f32 %v2190, %v2202
  %v2247 = vadd.f32 %v2191, %v2202
  %v2248 = vadd.f32 %v2192, %v2202
  %v2249 = vadd.f32 %v2193, %v2202
  %v2250 = vadd.f32 %v2194, %v2202
  %v2251 = vadd.f32 %v2195, %v2202
  %v2252 = vadd.f32 %v2196, %v2202
  %v2253 = vxor.u32 %v2204, 2147483648
  %v2254 = vxor.u32 %v2205, 2147483648
  %v2255 = vxor.u32 %v2206, 2147483648
  %v2256 = vxor.u32 %v2207, 2147483648
  %v2257 = vxor.u32 %v2208, 2147483648
  %v2258 = vxor.u32 %v2209, 2147483648
  %v2259 = vxor.u32 %v2210, 2147483648
  %v2260 = vxor.u32 %v2211, 2147483648
  %v2261 = vxor.u32 %v2212, 2147483648
  %v2262 = vxor.u32 %v2213, 2147483648
  %v2263 = vxor.u32 %v2214, 2147483648
  %v2264 = vxor.u32 %v2215, 2147483648
  %v2265 = vxor.u32 %v2216, 2147483648
  %v2266 = vxor.u32 %v2217, 2147483648
  %v2267 = vxor.u32 %v2218, 2147483648
  %v2268 = vxor.u32 %v2219, 2147483648
  %v2269 = vxor.u32 %v2220, 2147483648
  %v2270 = vxor.u32 %v2221, 2147483648
  %v2271 = vxor.u32 %v2222, 2147483648
  %v2272 = vxor.u32 %v2223, 2147483648
  %v2273 = vxor.u32 %v2224, 2147483648
  %v2274 = vxor.u32 %v2225, 2147483648
  %v2275 = vxor.u32 %v2226, 2147483648
  %v2276 = vxor.u32 %v2227, 2147483648
  %v2277 = vxor.u32 %v2228, 2147483648
  %v2278 = vxor.u32 %v2229, 2147483648
  %v2279 = vxor.u32 %v2230, 2147483648
  %v2280 = vxor.u32 %v2231, 2147483648
  %v2281 = vxor.u32 %v2232, 2147483648
  %v2282 = vxor.u32 %v2233, 2147483648
  %v2283 = vxor.u32 %v2234, 2147483648
  %v2284 = vxor.u32 %v2235, 2147483648
  %v2285 = vxor.u32 %v2236, 2147483648
  %v2286 = vxor.u32 %v2237, 2147483648
  %v2287 = vxor.u32 %v2238, 2147483648
  %v2288 = vxor.u32 %v2239, 2147483648
  %v2289 = vxor.u32 %v2240, 2147483648
  %v2290 = vxor.u32 %v2241, 2147483648
  %v2291 = vxor.u32 %v2242, 2147483648
  %v2292 = vxor.u32 %v2243, 2147483648
  %v2293 = vxor.u32 %v2244, 2147483648
  %v2294 = vxor.u32 %v2245, 2147483648
  %v2295 = vxor.u32 %v2246, 2147483648
  %v2296 = vxor.u32 %v2247, 2147483648
  %v2297 = vxor.u32 %v2248, 2147483648
  %v2298 = vxor.u32 %v2249, 2147483648
  %v2299 = vxor.u32 %v2250, 2147483648
  %v2300 = vxor.u32 %v2251, 2147483648
  %v2301 = vxor.u32 %v2252, 2147483648
  %v2302 = vmul.f32 %v2253, 1.442695
  %v2303 = vpow.pop %v2302
  %v2304 = vmul.f32 %v2254, 1.442695
  %v2305 = vpow.pop %v2304
  %v2306 = vmul.f32 %v2255, 1.442695
  %v2307 = vpow.pop %v2306
  %v2308 = vmul.f32 %v2256, 1.442695
  %v2309 = vpow.pop %v2308
  %v2310 = vmul.f32 %v2257, 1.442695
  %v2311 = vpow.pop %v2310
  %v2312 = vmul.f32 %v2258, 1.442695
  %v2313 = vpow.pop %v2312
  %v2314 = vmul.f32 %v2259, 1.442695
  %v2315 = vpow.pop %v2314
  %v2316 = vmul.f32 %v2260, 1.442695
  %v2317 = vpow.pop %v2316
  %v2318 = vmul.f32 %v2261, 1.442695
  %v2319 = vpow.pop %v2318
  %v2320 = vmul.f32 %v2262, 1.442695
  %v2321 = vpow.pop %v2320
  %v2322 = vmul.f32 %v2263, 1.442695
  %v2323 = vpow.pop %v2322
  %v2324 = vmul.f32 %v2264, 1.442695
  %v2325 = vpow.pop %v2324
  %v2326 = vmul.f32 %v2265, 1.442695
  %v2327 = vpow.pop %v2326
  %v2328 = vmul.f32 %v2266, 1.442695
  %v2329 = vpow.pop %v2328
  %v2330 = vmul.f32 %v2267, 1.442695
  %v2331 = vpow.pop %v2330
  %v2332 = vmul.f32 %v2268, 1.442695
  %v2333 = vpow.pop %v2332
  %v2334 = vmul.f32 %v2269, 1.442695
  %v2335 = vpow.pop %v2334
  %v2336 = vmul.f32 %v2270, 1.442695
  %v2337 = vpow.pop %v2336
  %v2338 = vmul.f32 %v2271, 1.442695
  %v2339 = vpow.pop %v2338
  %v2340 = vmul.f32 %v2272, 1.442695
  %v2341 = vpow.pop %v2340
  %v2342 = vmul.f32 %v2273, 1.442695
  %v2343 = vpow.pop %v2342
  %v2344 = vmul.f32 %v2274, 1.442695
  %v2345 = vpow.pop %v2344
  %v2346 = vmul.f32 %v2275, 1.442695
  %v2347 = vpow.pop %v2346
  %v2348 = vmul.f32 %v2276, 1.442695
  %v2349 = vpow.pop %v2348
  %v2350 = vmul.f32 %v2277, 1.442695
  %v2351 = vpow.pop %v2350
  %v2352 = vmul.f32 %v2278, 1.442695
  %v2353 = vpow.pop %v2352
  %v2354 = vmul.f32 %v2279, 1.442695
  %v2355 = vpow.pop %v2354
  %v2356 = vmul.f32 %v2280, 1.442695
  %v2357 = vpow.pop %v2356
  %v2358 = vmul.f32 %v2281, 1.442695
  %v2359 = vpow.pop %v2358
  %v2360 = vmul.f32 %v2282, 1.442695
  %v2361 = vpow.pop %v2360
  %v2362 = vmul.f32 %v2283, 1.442695
  %v2363 = vpow.pop %v2362
  %v2364 = vmul.f32 %v2284, 1.442695
  %v2365 = vpow.pop %v2364
  %v2366 = vmul.f32 %v2285, 1.442695
  %v2367 = vpow.pop %v2366
  %v2368 = vmul.f32 %v2286, 1.442695
  %v2369 = vpow.pop %v2368
  %v2370 = vmul.f32 %v2287, 1.442695
  %v2371 = vpow.pop %v2370
  %v2372 = vmul.f32 %v2288, 1.442695
  %v2373 = vpow.pop %v2372
  %v2374 = vmul.f32 %v2289, 1.442695
  %v2375 = vpow.pop %v2374
  %v2376 = vmul.f32 %v2290, 1.442695
  %v2377 = vpow.pop %v2376
  %v2378 = vmul.f32 %v2291, 1.442695
  %v2379 = vpow.pop %v2378
  %v2380 = vmul.f32 %v2292, 1.442695
  %v2381 = vpow.pop %v2380
  %v2382 = vmul.f32 %v2293, 1.442695
  %v2383 = vpow.pop %v2382
  %v2384 = vmul.f32 %v2294, 1.442695
  %v2385 = vpow.pop %v2384
  %v2386 = vmul.f32 %v2295, 1.442695
  %v2387 = vpow.pop %v2386
  %v2388 = vmul.f32 %v2296, 1.442695
  %v2389 = vpow.pop %v2388
  %v2390 = vmul.f32 %v2297, 1.442695
  %v2391 = vpow.pop %v2390
  %v2392 = vmul.f32 %v2298, 1.442695
  %v2393 = vpow.pop %v2392
  %v2394 = vmul.f32 %v2299, 1.442695
  %v2395 = vpow.pop %v2394
  %v2396 = vmul.f32 %v2300, 1.442695
  %v2397 = vpow.pop %v2396
  %v2398 = vmul.f32 %v2301, 1.442695
  %v2399 = vpow.pop %v2398
  %v2400 = vadd.f32 %v2303, 1.0
  %v2401 = vadd.f32 %v2305, 1.0
  %v2402 = vadd.f32 %v2307, 1.0
  %v2403 = vadd.f32 %v2309, 1.0
  %v2404 = vadd.f32 %v2311, 1.0
  %v2405 = vadd.f32 %v2313, 1.0
  %v2406 = vadd.f32 %v2315, 1.0
  %v2407 = vadd.f32 %v2317, 1.0
  %v2408 = vadd.f32 %v2319, 1.0
  %v2409 = vadd.f32 %v2321, 1.0
  %v2410 = vadd.f32 %v2323, 1.0
  %v2411 = vadd.f32 %v2325, 1.0
  %v2412 = vadd.f32 %v2327, 1.0
  %v2413 = vadd.f32 %v2329, 1.0
  %v2414 = vadd.f32 %v2331, 1.0
  %v2415 = vadd.f32 %v2333, 1.0
  %v2416 = vadd.f32 %v2335, 1.0
  %v2417 = vadd.f32 %v2337, 1.0
  %v2418 = vadd.f32 %v2339, 1.0
  %v2419 = vadd.f32 %v2341, 1.0
  %v2420 = vadd.f32 %v2343, 1.0
  %v2421 = vadd.f32 %v2345, 1.0
  %v2422 = vadd.f32 %v2347, 1.0
  %v2423 = vadd.f32 %v2349, 1.0
  %v2424 = vadd.f32 %v2351, 1.0
  %v2425 = vadd.f32 %v2353, 1.0
  %v2426 = vadd.f32 %v2355, 1.0
  %v2427 = vadd.f32 %v2357, 1.0
  %v2428 = vadd.f32 %v2359, 1.0
  %v2429 = vadd.f32 %v2361, 1.0
  %v2430 = vadd.f32 %v2363, 1.0
  %v2431 = vadd.f32 %v2365, 1.0
  %v2432 = vadd.f32 %v2367, 1.0
  %v2433 = vadd.f32 %v2369, 1.0
  %v2434 = vadd.f32 %v2371, 1.0
  %v2435 = vadd.f32 %v2373, 1.0
  %v2436 = vadd.f32 %v2375, 1.0
  %v2437 = vadd.f32 %v2377, 1.0
  %v2438 = vadd.f32 %v2379, 1.0
  %v2439 = vadd.f32 %v2381, 1.0
  %v2440 = vadd.f32 %v2383, 1.0
  %v2441 = vadd.f32 %v2385, 1.0
  %v2442 = vadd.f32 %v2387, 1.0
  %v2443 = vadd.f32 %v2389, 1.0
  %v2444 = vadd.f32 %v2391, 1.0
  %v2445 = vadd.f32 %v2393, 1.0
  %v2446 = vadd.f32 %v2395, 1.0
  %v2447 = vadd.f32 %v2397, 1.0
  %v2448 = vadd.f32 %v2399, 1.0
  %v2449 = vrcp.pop %v2400
  %v2450 = vmul.f32 1.0, %v2449
  %v2451 = vrcp.pop %v2401
  %v2452 = vmul.f32 1.0, %v2451
  %v2453 = vrcp.pop %v2402
  %v2454 = vmul.f32 1.0, %v2453
  %v2455 = vrcp.pop %v2403
  %v2456 = vmul.f32 1.0, %v2455
  %v2457 = vrcp.pop %v2404
  %v2458 = vmul.f32 1.0, %v2457
  %v2459 = vrcp.pop %v2405
  %v2460 = vmul.f32 1.0, %v2459
  %v2461 = vrcp.pop %v2406
  %v2462 = vmul.f32 1.0, %v2461
  %v2463 = vrcp.pop %v2407
  %v2464 = vmul.f32 1.0, %v2463
  %v2465 = vrcp.pop %v2408
  %v2466 = vmul.f32 1.0, %v2465
  %v2467 = vrcp.pop %v2409
  %v2468 = vmul.f32 1.0, %v2467
  %v2469 = vrcp.pop %v2410
  %v2470 = vmul.f32 1.0, %v2469
  %v2471 = vrcp.pop %v2411
  %v2472 = vmul.f32 1.0, %v2471
  %v2473 = vrcp.pop %v2412
  %v2474 = vmul.f32 1.0, %v2473
  %v2475 = vrcp.pop %v2413
  %v2476 = vmul.f32 1.0, %v2475
  %v2477 = vrcp.pop %v2414
  %v2478 = vmul.f32 1.0, %v2477
  %v2479 = vrcp.pop %v2415
  %v2480 = vmul.f32 1.0, %v2479
  %v2481 = vrcp.pop %v2416
  %v2482 = vmul.f32 1.0, %v2481
  %v2483 = vrcp.pop %v2417
  %v2484 = vmul.f32 1.0, %v2483
  %v2485 = vrcp.pop %v2418
  %v2486 = vmul.f32 1.0, %v2485
  %v2487 = vrcp.pop %v2419
  %v2488 = vmul.f32 1.0, %v2487
  %v2489 = vrcp.pop %v2420
  %v2490 = vmul.f32 1.0, %v2489
  %v2491 = vrcp.pop %v2421
  %v2492 = vmul.f32 1.0, %v2491
  %v2493 = vrcp.pop %v2422
  %v2494 = vmul.f32 1.0, %v2493
  %v2495 = vrcp.pop %v2423
  %v2496 = vmul.f32 1.0, %v2495
  %v2497 = vrcp.pop %v2424
  %v2498 = vmul.f32 1.0, %v2497
  %v2499 = vrcp.pop %v2425
  %v2500 = vmul.f32 1.0, %v2499
  %v2501 = vrcp.pop %v2426
  %v2502 = vmul.f32 1.0, %v2501
  %v2503 = vrcp.pop %v2427
  %v2504 = vmul.f32 1.0, %v2503
  %v2505 = vrcp.pop %v2428
  %v2506 = vmul.f32 1.0, %v2505
  %v2507 = vrcp.pop %v2429
  %v2508 = vmul.f32 1.0, %v2507
  %v2509 = vrcp.pop %v2430
  %v2510 = vmul.f32 1.0, %v2509
  %v2511 = vrcp.pop %v2431
  %v2512 = vmul.f32 1.0, %v2511
  %v2513 = vrcp.pop %v2432
  %v2514 = vmul.f32 1.0, %v2513
  %v2515 = vrcp.pop %v2433
  %v2516 = vmul.f32 1.0, %v2515
  %v2517 = vrcp.pop %v2434
  %v2518 = vmul.f32 1.0, %v2517
  %v2519 = vrcp.pop %v2435
  %v2520 = vmul.f32 1.0, %v2519
  %v2521 = vrcp.pop %v2436
  %v2522 = vmul.f32 1.0, %v2521
  %v2523 = vrcp.pop %v2437
  %v2524 = vmul.f32 1.0, %v2523
  %v2525 = vrcp.pop %v2438
  %v2526 = vmul.f32 1.0, %v2525
  %v2527 = vrcp.pop %v2439
  %v2528 = vmul.f32 1.0, %v2527
  %v2529 = vrcp.pop %v2440
  %v2530 = vmul.f32 1.0, %v2529
  %v2531 = vrcp.pop %v2441
  %v2532 = vmul.f32 1.0, %v2531
  %v2533 = vrcp.pop %v2442
  %v2534 = vmul.f32 1.0, %v2533
  %v2535 = vrcp.pop %v2443
  %v2536 = vmul.f32 1.0, %v2535
  %v2537 = vrcp.pop %v2444
  %v2538 = vmul.f32 1.0, %v2537
  %v2539 = vrcp.pop %v2445
  %v2540 = vmul.f32 1.0, %v2539
  %v2541 = vrcp.pop %v2446
  %v2542 = vmul.f32 1.0, %v2541
  %v2543 = vrcp.pop %v2447
  %v2544 = vmul.f32 1.0, %v2543
  %v2545 = vrcp.pop %v2448
  %v2546 = vmul.f32 1.0, %v2545
  %vm2547 = vcmask 130048
  %2548 = vst.msk [vmem:[%s3] sm:$0xff] %vm2547, %v2450
  %2549 = vst.msk [vmem:[%s3 + $0x8] sm:$0xff] %vm2547, %v2452
  %2550 = vst.msk [vmem:[%s3 + $0x10] sm:$0xff] %vm2547, %v2454
  %2551 = vst.msk [vmem:[%s3 + $0x18] sm:$0xff] %vm2547, %v2456
  %2552 = vst.msk [vmem:[%s3 + $0x20] sm:$0xff] %vm2547, %v2458
  %2553 = vst.msk [vmem:[%s3 + $0x28] sm:$0xff] %vm2547, %v2460
  %2554 = vst.msk [vmem:[%s3 + $0x30] sm:$0xff] %vm2547, %v2462
  %2555 = vst.msk [vmem:[%s3 + $0x38] sm:$0xff] %vm2547, %v2464
  %2556 = vst.msk [vmem:[%s3 + $0x40] sm:$0xff] %vm2547, %v2466
  %2557 = vst.msk [vmem:[%s3 + $0x48] sm:$0xff] %vm2547, %v2468
  %2558 = vst.msk [vmem:[%s3 + $0x50] sm:$0xff] %vm2547, %v2470
  %2559 = vst.msk [vmem:[%s3 + $0x58] sm:$0xff] %vm2547, %v2472
  %2560 = vst.msk [vmem:[%s3 + $0x60] sm:$0xff] %vm2547, %v2474
  %2561 = vst.msk [vmem:[%s3 + $0x68] sm:$0xff] %vm2547, %v2476
  %2562 = vst.msk [vmem:[%s3 + $0x70] sm:$0xff] %vm2547, %v2478
  %2563 = vst.msk [vmem:[%s3 + $0x78] sm:$0xff] %vm2547, %v2480
  %2564 = vst.msk [vmem:[%s3 + $0x80] sm:$0xff] %vm2547, %v2482
  %2565 = vst.msk [vmem:[%s3 + $0x88] sm:$0xff] %vm2547, %v2484
  %2566 = vst.msk [vmem:[%s3 + $0x90] sm:$0xff] %vm2547, %v2486
  %2567 = vst.msk [vmem:[%s3 + $0x98] sm:$0xff] %vm2547, %v2488
  %2568 = vst.msk [vmem:[%s3 + $0xa0] sm:$0xff] %vm2547, %v2490
  %2569 = vst.msk [vmem:[%s3 + $0xa8] sm:$0xff] %vm2547, %v2492
  %2570 = vst.msk [vmem:[%s3 + $0xb0] sm:$0xff] %vm2547, %v2494
  %2571 = vst.msk [vmem:[%s3 + $0xb8] sm:$0xff] %vm2547, %v2496
  %2572 = vst.msk [vmem:[%s3 + $0xc0] sm:$0xff] %vm2547, %v2498
  %2573 = vst.msk [vmem:[%s3 + $0xc8] sm:$0xff] %vm2547, %v2500
  %2574 = vst.msk [vmem:[%s3 + $0xd0] sm:$0xff] %vm2547, %v2502
  %2575 = vst.msk [vmem:[%s3 + $0xd8] sm:$0xff] %vm2547, %v2504
  %2576 = vst.msk [vmem:[%s3 + $0xe0] sm:$0xff] %vm2547, %v2506
  %2577 = vst.msk [vmem:[%s3 + $0xe8] sm:$0xff] %vm2547, %v2508
  %2578 = vst.msk [vmem:[%s3 + $0xf0] sm:$0xff] %vm2547, %v2510
  %2579 = vst.msk [vmem:[%s3 + $0xf8] sm:$0xff] %vm2547, %v2512
  %2580 = vst.msk [vmem:[%s3 + $0x100] sm:$0xff] %vm2547, %v2514
  %2581 = vst.msk [vmem:[%s3 + $0x108] sm:$0xff] %vm2547, %v2516
  %2582 = vst.msk [vmem:[%s3 + $0x110] sm:$0xff] %vm2547, %v2518
  %2583 = vst.msk [vmem:[%s3 + $0x118] sm:$0xff] %vm2547, %v2520
  %2584 = vst.msk [vmem:[%s3 + $0x120] sm:$0xff] %vm2547, %v2522
  %2585 = vst.msk [vmem:[%s3 + $0x128] sm:$0xff] %vm2547, %v2524
  %2586 = vst.msk [vmem:[%s3 + $0x130] sm:$0xff] %vm2547, %v2526
  %2587 = vst.msk [vmem:[%s3 + $0x138] sm:$0xff] %vm2547, %v2528
  %2588 = vst.msk [vmem:[%s3 + $0x140] sm:$0xff] %vm2547, %v2530
  %2589 = vst.msk [vmem:[%s3 + $0x148] sm:$0xff] %vm2547, %v2532
  %2590 = vst.msk [vmem:[%s3 + $0x150] sm:$0xff] %vm2547, %v2534
  %2591 = vst.msk [vmem:[%s3 + $0x158] sm:$0xff] %vm2547, %v2536
  %2592 = vst.msk [vmem:[%s3 + $0x160] sm:$0xff] %vm2547, %v2538
  %2593 = vst.msk [vmem:[%s3 + $0x168] sm:$0xff] %vm2547, %v2540
  %2594 = vst.msk [vmem:[%s3 + $0x170] sm:$0xff] %vm2547, %v2542
  %2595 = vst.msk [vmem:[%s3 + $0x178] sm:$0xff] %vm2547, %v2544
  %2596 = vst.msk [vmem:[%s3 + $0x180] sm:$0xff] %vm2547, %v2546
  // Predicated region
  $region14: #{cnn_forward.2} parent=0 // pred_check
    _
  $region15: #{cnn_forward.2} parent=0 // pred_check_branch
    %2598 = sbr.rel (0) target = $region17
  $region16: #{cnn_forward.2} parent=0 // pred_region
    _
  $region17: #{cnn_forward.2} parent=0 // pred_fallthru
    _
  // Predicated region
  $region18: #{cnn_forward.2} parent=0 // pred_check
    _
  $region19: #{cnn_forward.2} parent=0 // pred_check_branch
    %2600 = sbr.rel (0) target = $region21
  $region20: #{cnn_forward.2} parent=0 // pred_region
    _
  $region21: #{cnn_forward.2} parent=0 // pred_fallthru
    _

// kernel: cnn_forward.3
$region0: #{cnn_forward.3}
  #allocation0 [shape = 'u32[]', space=smem, size = 0x4, offset = 0x4, fixed_abs, tag = 'smem constant byte address 0x4 - core index']
  #allocation1 [shape = 'u32[144,128]{1,0:T(1,128)}', space=vmem, size = 0x12000, scoped, tag = 'internal scratch']
  %s0 = inlined_call_operand.vmem [shape: f32[2,3136], index: 0, kind: input, shape index: {}]
  %s1 = inlined_call_operand.vmem [shape: bf16[3136,512], index: 1, kind: input, shape index: {}]
  %s2 = inlined_call_operand.vmem [shape: f32[1,512], index: 2, kind: input, shape index: {}]
  %s3 = inlined_call_operand.vmem [shape: bf16[512,128], index: 3, kind: input, shape index: {}]
  %s4 = inlined_call_operand.vmem [shape: f32[1,128], index: 4, kind: input, shape index: {}]
  %s5 = inlined_call_operand.hbm [shape: f32[2,128], index: 5, kind: output, shape index: {}]
  %s6 = sld [smem:[#allocation0]]
  $region30: #{cnn_forward.3} parent=0
    _
  %s8 = ssub.s32 1, %s6
  %s9 = scalar_select 0, %s8, %s6
  $region1: #{cnn_forward.3} parent=0
    #allocation2 [shape = 'u8[1024]{0}', space=vmem, size = 0x400, scoped, tag = 'output window, operand 0, single buffered']
    #allocation3 [shape = 's32[1]{0}', space=sflag, size = 0x4, scoped, tag = 'scoped memory for cnn_forward.3']
    %10 = vsyncpa [#allocation3], 0
    // Predicated region
    $region2: #{cnn_forward.3} parent=1 // pred_check
      _
    $region3: #{cnn_forward.3} parent=1 // pred_check_branch
      %12 = sbr.rel (0) target = $region5
    $region4: #{cnn_forward.3} parent=1 // pred_region
      _
    $region5: #{cnn_forward.3} parent=1 // pred_fallthru
      _
    // Predicated region
    $region6: #{cnn_forward.3} parent=1 // pred_check
      _
    $region7: #{cnn_forward.3} parent=1 // pred_check_branch
      %14 = sbr.rel (0) target = $region9
    $region8: #{cnn_forward.3} parent=1 // pred_region
      _
    $region9: #{cnn_forward.3} parent=1 // pred_fallthru
      _
    // Predicated region
    $region10: #{cnn_forward.3} parent=1 // pred_check
      _
    $region11: #{cnn_forward.3} parent=1 // pred_check_branch
      %16 = sbr.rel (0) target = $region13
    $region12: #{cnn_forward.3} parent=1 // pred_region
      _
    $region13: #{cnn_forward.3} parent=1 // pred_fallthru
      _
    // Predicated region
    $region14: #{cnn_forward.3} parent=1 // pred_check
      _
    $region15: #{cnn_forward.3} parent=1 // pred_check_branch
      %18 = sbr.rel (0) target = $region17
    $region16: #{cnn_forward.3} parent=1 // pred_region
      _
    $region17: #{cnn_forward.3} parent=1 // pred_fallthru
      _
    // Predicated region
    $region18: #{cnn_forward.3} parent=1 // pred_check
      _
    $region19: #{cnn_forward.3} parent=1 // pred_check_branch
      %20 = sbr.rel (0) target = $region21
    $region20: #{cnn_forward.3} parent=1 // pred_region
      _
    $region21: #{cnn_forward.3} parent=1 // pred_fallthru
      _
    %v22 = vld [vmem:[%s0] sm:$0xff]
    %v23 = vld [vmem:[%s0 + $0x8] sm:$0xff]
    %v24 = vld [vmem:[%s0 + $0x10] sm:$0xff]
    %v25 = vld [vmem:[%s0 + $0x18] sm:$0xff]
    %v26 = vld [vmem:[%s0 + $0x20] sm:$0xff]
    %v27 = vld [vmem:[%s0 + $0x28] sm:$0xff]
    %v28 = vld [vmem:[%s0 + $0x30] sm:$0x3]
    %v36 = vcombine.high %v22, %v22
    %v38 = vunpack.c.l.s4 1983009808
    %v39 = vunpack.c.0.s8 %v38
    %v40 = vlaneseq
    %v41 = vshrl.u32 %v40, 7
    %v42 = vsub.s32 %v39, %v41
    %v43 = vrot.slane %v22, %v42
    %v45 = vunpack.c.l.s4 1983009808
    %v46 = vunpack.c.0.s8 %v45
    %v47 = vlaneseq
    %v48 = vshrl.u32 %v47, 7
    %v49 = vsub.s32 %v46, %v48
    %v50 = vrot.slane %v36, %v49
    %v51 = vcombine.high %v43, %v43
    %v52 = vcombine.high %v50, %v50
    %v53 = vcombine.high %v23, %v23
    %v55 = vunpack.c.l.s4 1983009808
    %v56 = vunpack.c.0.s8 %v55
    %v57 = vlaneseq
    %v58 = vshrl.u32 %v57, 7
    %v59 = vsub.s32 %v56, %v58
    %v60 = vrot.slane %v23, %v59
    %v62 = vunpack.c.l.s4 1983009808
    %v63 = vunpack.c.0.s8 %v62
    %v64 = vlaneseq
    %v65 = vshrl.u32 %v64, 7
    %v66 = vsub.s32 %v63, %v65
    %v67 = vrot.slane %v53, %v66
    %v68 = vcombine.high %v60, %v60
    %v69 = vcombine.high %v67, %v67
    %v70 = vcombine.high %v24, %v24
    %v72 = vunpack.c.l.s4 1983009808
    %v73 = vunpack.c.0.s8 %v72
    %v74 = vlaneseq
    %v75 = vshrl.u32 %v74, 7
    %v76 = vsub.s32 %v73, %v75
    %v77 = vrot.slane %v24, %v76
    %v79 = vunpack.c.l.s4 1983009808
    %v80 = vunpack.c.0.s8 %v79
    %v81 = vlaneseq
    %v82 = vshrl.u32 %v81, 7
    %v83 = vsub.s32 %v80, %v82
    %v84 = vrot.slane %v70, %v83
    %v85 = vcombine.high %v77, %v77
    %v86 = vcombine.high %v84, %v84
    %v87 = vcombine.high %v25, %v25
    %v89 = vunpack.c.l.s4 1983009808
    %v90 = vunpack.c.0.s8 %v89
    %v91 = vlaneseq
    %v92 = vshrl.u32 %v91, 7
    %v93 = vsub.s32 %v90, %v92
    %v94 = vrot.slane %v25, %v93
    %v96 = vunpack.c.l.s4 1983009808
    %v97 = vunpack.c.0.s8 %v96
    %v98 = vlaneseq
    %v99 = vshrl.u32 %v98, 7
    %v100 = vsub.s32 %v97, %v99
    %v101 = vrot.slane %v87, %v100
    %v102 = vcombine.high %v94, %v94
    %v103 = vcombine.high %v101, %v101
    %v104 = vcombine.high %v26, %v26
    %v106 = vunpack.c.l.s4 1983009808
    %v107 = vunpack.c.0.s8 %v106
    %v108 = vlaneseq
    %v109 = vshrl.u32 %v108, 7
    %v110 = vsub.s32 %v107, %v109
    %v111 = vrot.slane %v26, %v110
    %v113 = vunpack.c.l.s4 1983009808
    %v114 = vunpack.c.0.s8 %v113
    %v115 = vlaneseq
    %v116 = vshrl.u32 %v115, 7
    %v117 = vsub.s32 %v114, %v116
    %v118 = vrot.slane %v104, %v117
    %v119 = vcombine.high %v111, %v111
    %v120 = vcombine.high %v118, %v118
    %v121 = vcombine.high %v27, %v27
    %v123 = vunpack.c.l.s4 1983009808
    %v124 = vunpack.c.0.s8 %v123
    %v125 = vlaneseq
    %v126 = vshrl.u32 %v125, 7
    %v127 = vsub.s32 %v124, %v126
    %v128 = vrot.slane %v27, %v127
    %v130 = vunpack.c.l.s4 1983009808
    %v131 = vunpack.c.0.s8 %v130
    %v132 = vlaneseq
    %v133 = vshrl.u32 %v132, 7
    %v134 = vsub.s32 %v131, %v133
    %v135 = vrot.slane %v121, %v134
    %v136 = vcombine.high %v128, %v128
    %v137 = vcombine.high %v135, %v135
    %v139 = vunpack.c.l.s4 1983009808
    %v140 = vunpack.c.0.s8 %v139
    %v141 = vlaneseq
    %v142 = vshrl.u32 %v141, 7
    %v143 = vsub.s32 %v140, %v142
    %v144 = vrot.slane %v28, %v143
    %v170 = vpack.c.bf16 %v43, %v43
    %v171 = vpack.c.bf16 %v51, %v51
    %v172 = vpack.c.bf16 %v50, %v50
    %v173 = vpack.c.bf16 %v52, %v52
    %v174 = vpack.c.bf16 %v60, %v60
    %v175 = vpack.c.bf16 %v68, %v68
    %v176 = vpack.c.bf16 %v67, %v67
    %v177 = vpack.c.bf16 %v69, %v69
    %v178 = vpack.c.bf16 %v77, %v77
    %v179 = vpack.c.bf16 %v85, %v85
    %v180 = vpack.c.bf16 %v84, %v84
    %v181 = vpack.c.bf16 %v86, %v86
    %v182 = vpack.c.bf16 %v94, %v94
    %v183 = vpack.c.bf16 %v102, %v102
    %v184 = vpack.c.bf16 %v101, %v101
    %v185 = vpack.c.bf16 %v103, %v103
    %v186 = vpack.c.bf16 %v111, %v111
    %v187 = vpack.c.bf16 %v119, %v119
    %v188 = vpack.c.bf16 %v118, %v118
    %v189 = vpack.c.bf16 %v120, %v120
    %v190 = vpack.c.bf16 %v128, %v128
    %v191 = vpack.c.bf16 %v136, %v136
    %v192 = vpack.c.bf16 %v135, %v135
    %v193 = vpack.c.bf16 %v137, %v137
    %v194 = vpack.c.bf16 %v144, %v144
    %v195 = vld [vmem:[%s1] sm:$0xff]
    %v196 = vld [vmem:[%s1 + $0x8] sm:$0xff]
    %v197 = vld [vmem:[%s1 + $0x10] sm:$0xff]
    %v198 = vld [vmem:[%s1 + $0x18] sm:$0xff]
    %v199 = vld [vmem:[%s1 + $0x20] sm:$0xff]
    %v200 = vld [vmem:[%s1 + $0x28] sm:$0xff]
    %v201 = vld [vmem:[%s1 + $0x30] sm:$0xff]
    %v202 = vld [vmem:[%s1 + $0x38] sm:$0xff]
    %v203 = vld [vmem:[%s1 + $0x40] sm:$0xff]
    %v204 = vld [vmem:[%s1 + $0x48] sm:$0xff]
    %v205 = vld [vmem:[%s1 + $0x50] sm:$0xff]
    %v206 = vld [vmem:[%s1 + $0x58] sm:$0xff]
    %v207 = vld [vmem:[%s1 + $0x60] sm:$0xff]
    %v208 = vld [vmem:[%s1 + $0x68] sm:$0xff]
    %v209 = vld [vmem:[%s1 + $0x70] sm:$0xff]
    %v210 = vld [vmem:[%s1 + $0x78] sm:$0xff]
    %v211 = vld [vmem:[%s1 + $0x80] sm:$0xff]
    %v212 = vld [vmem:[%s1 + $0x88] sm:$0xff]
    %v213 = vld [vmem:[%s1 + $0x90] sm:$0xff]
    %v214 = vld [vmem:[%s1 + $0x98] sm:$0xff]
    %v215 = vld [vmem:[%s1 + $0xa0] sm:$0xff]
    %v216 = vld [vmem:[%s1 + $0xa8] sm:$0xff]
    %v217 = vld [vmem:[%s1 + $0xb0] sm:$0xff]
    %v218 = vld [vmem:[%s1 + $0xb8] sm:$0xff]
    %v219 = vld [vmem:[%s1 + $0xc0] sm:$0xff]
    %v220 = vld [vmem:[%s1 + $0xc8] sm:$0xff]
    %v221 = vld [vmem:[%s1 + $0xd0] sm:$0xff]
    %v222 = vld [vmem:[%s1 + $0xd8] sm:$0xff]
    %v223 = vld [vmem:[%s1 + $0xe0] sm:$0xff]
    %v224 = vld [vmem:[%s1 + $0xe8] sm:$0xff]
    %v225 = vld [vmem:[%s1 + $0xf0] sm:$0xff]
    %v226 = vld [vmem:[%s1 + $0xf8] sm:$0xff]
    %v227 = vld [vmem:[%s1 + $0x100] sm:$0xff]
    %v228 = vld [vmem:[%s1 + $0x108] sm:$0xff]
    %v229 = vld [vmem:[%s1 + $0x110] sm:$0xff]
    %v230 = vld [vmem:[%s1 + $0x118] sm:$0xff]
    %v231 = vld [vmem:[%s1 + $0x120] sm:$0xff]
    %v232 = vld [vmem:[%s1 + $0x128] sm:$0xff]
    %v233 = vld [vmem:[%s1 + $0x130] sm:$0xff]
    %v234 = vld [vmem:[%s1 + $0x138] sm:$0xff]
    %v235 = vld [vmem:[%s1 + $0x140] sm:$0xff]
    %v236 = vld [vmem:[%s1 + $0x148] sm:$0xff]
    %v237 = vld [vmem:[%s1 + $0x150] sm:$0xff]
    %v238 = vld [vmem:[%s1 + $0x158] sm:$0xff]
    %v239 = vld [vmem:[%s1 + $0x160] sm:$0xff]
    %v240 = vld [vmem:[%s1 + $0x168] sm:$0xff]
    %v241 = vld [vmem:[%s1 + $0x170] sm:$0xff]
    %v242 = vld [vmem:[%s1 + $0x178] sm:$0xff]
    %v243 = vld [vmem:[%s1 + $0x180] sm:$0xff]
    %v244 = vld [vmem:[%s1 + $0x188] sm:$0xff]
    %v245 = vld [vmem:[%s1 + $0x190] sm:$0xff]
    %v246 = vld [vmem:[%s1 + $0x198] sm:$0xff]
    %v247 = vld [vmem:[%s1 + $0x1a0] sm:$0xff]
    %v248 = vld [vmem:[%s1 + $0x1a8] sm:$0xff]
    %v249 = vld [vmem:[%s1 + $0x1b0] sm:$0xff]
    %v250 = vld [vmem:[%s1 + $0x1b8] sm:$0xff]
    %v251 = vld [vmem:[%s1 + $0x1c0] sm:$0xff]
    %v252 = vld [vmem:[%s1 + $0x1c8] sm:$0xff]
    %v253 = vld [vmem:[%s1 + $0x1d0] sm:$0xff]
    %v254 = vld [vmem:[%s1 + $0x1d8] sm:$0xff]
    %v255 = vld [vmem:[%s1 + $0x1e0] sm:$0xff]
    %v256 = vld [vmem:[%s1 + $0x1e8] sm:$0xff]
    %v257 = vld [vmem:[%s1 + $0x1f0] sm:$0xff]
    %v258 = vld [vmem:[%s1 + $0x1f8] sm:$0xff]
    %v259 = vld [vmem:[%s1 + $0x200] sm:$0xff]
    %v260 = vld [vmem:[%s1 + $0x208] sm:$0xff]
    %v261 = vld [vmem:[%s1 + $0x210] sm:$0xff]
    %v262 = vld [vmem:[%s1 + $0x218] sm:$0xff]
    %v263 = vld [vmem:[%s1 + $0x220] sm:$0xff]
    %v264 = vld [vmem:[%s1 + $0x228] sm:$0xff]
    %v265 = vld [vmem:[%s1 + $0x230] sm:$0xff]
    %v266 = vld [vmem:[%s1 + $0x238] sm:$0xff]
    %v267 = vld [vmem:[%s1 + $0x240] sm:$0xff]
    %v268 = vld [vmem:[%s1 + $0x248] sm:$0xff]
    %v269 = vld [vmem:[%s1 + $0x250] sm:$0xff]
    %v270 = vld [vmem:[%s1 + $0x258] sm:$0xff]
    %v271 = vld [vmem:[%s1 + $0x260] sm:$0xff]
    %v272 = vld [vmem:[%s1 + $0x268] sm:$0xff]
    %v273 = vld [vmem:[%s1 + $0x270] sm:$0xff]
    %v274 = vld [vmem:[%s1 + $0x278] sm:$0xff]
    %v275 = vld [vmem:[%s1 + $0x280] sm:$0xff]
    %v276 = vld [vmem:[%s1 + $0x288] sm:$0xff]
    %v277 = vld [vmem:[%s1 + $0x290] sm:$0xff]
    %v278 = vld [vmem:[%s1 + $0x298] sm:$0xff]
    %v279 = vld [vmem:[%s1 + $0x2a0] sm:$0xff]
    %v280 = vld [vmem:[%s1 + $0x2a8] sm:$0xff]
    %v281 = vld [vmem:[%s1 + $0x2b0] sm:$0xff]
    %v282 = vld [vmem:[%s1 + $0x2b8] sm:$0xff]
    %v283 = vld [vmem:[%s1 + $0x2c0] sm:$0xff]
    %v284 = vld [vmem:[%s1 + $0x2c8] sm:$0xff]
    %v285 = vld [vmem:[%s1 + $0x2d0] sm:$0xff]
    %v286 = vld [vmem:[%s1 + $0x2d8] sm:$0xff]
    %v287 = vld [vmem:[%s1 + $0x2e0] sm:$0xff]
    %v288 = vld [vmem:[%s1 + $0x2e8] sm:$0xff]
    %v289 = vld [vmem:[%s1 + $0x2f0] sm:$0xff]
    %v290 = vld [vmem:[%s1 + $0x2f8] sm:$0xff]
    %v291 = vld [vmem:[%s1 + $0x300] sm:$0xff]
    %v292 = vld [vmem:[%s1 + $0x308] sm:$0xff]
    %v293 = vld [vmem:[%s1 + $0x310] sm:$0xff]
    %v294 = vld [vmem:[%s1 + $0x318] sm:$0xff]
    %v295 = vld [vmem:[%s1 + $0x320] sm:$0xff]
    %v296 = vld [vmem:[%s1 + $0x328] sm:$0xff]
    %v297 = vld [vmem:[%s1 + $0x330] sm:$0xff]
    %v298 = vld [vmem:[%s1 + $0x338] sm:$0xff]
    %v299 = vld [vmem:[%s1 + $0x340] sm:$0xff]
    %v300 = vld [vmem:[%s1 + $0x348] sm:$0xff]
    %v301 = vld [vmem:[%s1 + $0x350] sm:$0xff]
    %v302 = vld [vmem:[%s1 + $0x358] sm:$0xff]
    %v303 = vld [vmem:[%s1 + $0x360] sm:$0xff]
    %v304 = vld [vmem:[%s1 + $0x368] sm:$0xff]
    %v305 = vld [vmem:[%s1 + $0x370] sm:$0xff]
    %v306 = vld [vmem:[%s1 + $0x378] sm:$0xff]
    %v307 = vld [vmem:[%s1 + $0x380] sm:$0xff]
    %v308 = vld [vmem:[%s1 + $0x388] sm:$0xff]
    %v309 = vld [vmem:[%s1 + $0x390] sm:$0xff]
    %v310 = vld [vmem:[%s1 + $0x398] sm:$0xff]
    %v311 = vld [vmem:[%s1 + $0x3a0] sm:$0xff]
    %v312 = vld [vmem:[%s1 + $0x3a8] sm:$0xff]
    %v313 = vld [vmem:[%s1 + $0x3b0] sm:$0xff]
    %v314 = vld [vmem:[%s1 + $0x3b8] sm:$0xff]
    %v315 = vld [vmem:[%s1 + $0x3c0] sm:$0xff]
    %v316 = vld [vmem:[%s1 + $0x3c8] sm:$0xff]
    %v317 = vld [vmem:[%s1 + $0x3d0] sm:$0xff]
    %v318 = vld [vmem:[%s1 + $0x3d8] sm:$0xff]
    %v319 = vld [vmem:[%s1 + $0x3e0] sm:$0xff]
    %v320 = vld [vmem:[%s1 + $0x3e8] sm:$0xff]
    %v321 = vld [vmem:[%s1 + $0x3f0] sm:$0xff]
    %v322 = vld [vmem:[%s1 + $0x3f8] sm:$0xff]
    %v323 = vld [vmem:[%s1 + $0x400] sm:$0xff]
    %v324 = vld [vmem:[%s1 + $0x408] sm:$0xff]
    %v325 = vld [vmem:[%s1 + $0x410] sm:$0xff]
    %v326 = vld [vmem:[%s1 + $0x418] sm:$0xff]
    %v327 = vld [vmem:[%s1 + $0x420] sm:$0xff]
    %v328 = vld [vmem:[%s1 + $0x428] sm:$0xff]
    %v329 = vld [vmem:[%s1 + $0x430] sm:$0xff]
    %v330 = vld [vmem:[%s1 + $0x438] sm:$0xff]
    %v331 = vld [vmem:[%s1 + $0x440] sm:$0xff]
    %v332 = vld [vmem:[%s1 + $0x448] sm:$0xff]
    %v333 = vld [vmem:[%s1 + $0x450] sm:$0xff]
    %v334 = vld [vmem:[%s1 + $0x458] sm:$0xff]
    %v335 = vld [vmem:[%s1 + $0x460] sm:$0xff]
    %v336 = vld [vmem:[%s1 + $0x468] sm:$0xff]
    %v337 = vld [vmem:[%s1 + $0x470] sm:$0xff]
    %v338 = vld [vmem:[%s1 + $0x478] sm:$0xff]
    %v339 = vld [vmem:[%s1 + $0x480] sm:$0xff]
    %v340 = vld [vmem:[%s1 + $0x488] sm:$0xff]
    %v341 = vld [vmem:[%s1 + $0x490] sm:$0xff]
    %v342 = vld [vmem:[%s1 + $0x498] sm:$0xff]
    %v343 = vld [vmem:[%s1 + $0x4a0] sm:$0xff]
    %v344 = vld [vmem:[%s1 + $0x4a8] sm:$0xff]
    %v345 = vld [vmem:[%s1 + $0x4b0] sm:$0xff]
    %v346 = vld [vmem:[%s1 + $0x4b8] sm:$0xff]
    %v347 = vld [vmem:[%s1 + $0x4c0] sm:$0xff]
    %v348 = vld [vmem:[%s1 + $0x4c8] sm:$0xff]
    %v349 = vld [vmem:[%s1 + $0x4d0] sm:$0xff]
    %v350 = vld [vmem:[%s1 + $0x4d8] sm:$0xff]
    %v351 = vld [vmem:[%s1 + $0x4e0] sm:$0xff]
    %v352 = vld [vmem:[%s1 + $0x4e8] sm:$0xff]
    %v353 = vld [vmem:[%s1 + $0x4f0] sm:$0xff]
    %v354 = vld [vmem:[%s1 + $0x4f8] sm:$0xff]
    %v355 = vld [vmem:[%s1 + $0x500] sm:$0xff]
    %v356 = vld [vmem:[%s1 + $0x508] sm:$0xff]
    %v357 = vld [vmem:[%s1 + $0x510] sm:$0xff]
    %v358 = vld [vmem:[%s1 + $0x518] sm:$0xff]
    %v359 = vld [vmem:[%s1 + $0x520] sm:$0xff]
    %v360 = vld [vmem:[%s1 + $0x528] sm:$0xff]
    %v361 = vld [vmem:[%s1 + $0x530] sm:$0xff]
    %v362 = vld [vmem:[%s1 + $0x538] sm:$0xff]
    %v363 = vld [vmem:[%s1 + $0x540] sm:$0xff]
    %v364 = vld [vmem:[%s1 + $0x548] sm:$0xff]
    %v365 = vld [vmem:[%s1 + $0x550] sm:$0xff]
    %v366 = vld [vmem:[%s1 + $0x558] sm:$0xff]
    %v367 = vld [vmem:[%s1 + $0x560] sm:$0xff]
    %v368 = vld [vmem:[%s1 + $0x568] sm:$0xff]
    %v369 = vld [vmem:[%s1 + $0x570] sm:$0xff]
    %v370 = vld [vmem:[%s1 + $0x578] sm:$0xff]
    %v371 = vld [vmem:[%s1 + $0x580] sm:$0xff]
    %v372 = vld [vmem:[%s1 + $0x588] sm:$0xff]
    %v373 = vld [vmem:[%s1 + $0x590] sm:$0xff]
    %v374 = vld [vmem:[%s1 + $0x598] sm:$0xff]
    %v375 = vld [vmem:[%s1 + $0x5a0] sm:$0xff]
    %v376 = vld [vmem:[%s1 + $0x5a8] sm:$0xff]
    %v377 = vld [vmem:[%s1 + $0x5b0] sm:$0xff]
    %v378 = vld [vmem:[%s1 + $0x5b8] sm:$0xff]
    %v379 = vld [vmem:[%s1 + $0x5c0] sm:$0xff]
    %v380 = vld [vmem:[%s1 + $0x5c8] sm:$0xff]
    %v381 = vld [vmem:[%s1 + $0x5d0] sm:$0xff]
    %v382 = vld [vmem:[%s1 + $0x5d8] sm:$0xff]
    %v383 = vld [vmem:[%s1 + $0x5e0] sm:$0xff]
    %v384 = vld [vmem:[%s1 + $0x5e8] sm:$0xff]
    %v385 = vld [vmem:[%s1 + $0x5f0] sm:$0xff]
    %v386 = vld [vmem:[%s1 + $0x5f8] sm:$0xff]
    %v387 = vld [vmem:[%s1 + $0x600] sm:$0xff]
    %v388 = vld [vmem:[%s1 + $0x608] sm:$0xff]
    %v389 = vld [vmem:[%s1 + $0x610] sm:$0xff]
    %v390 = vld [vmem:[%s1 + $0x618] sm:$0xff]
    %v391 = vld [vmem:[%s1 + $0x620] sm:$0xff]
    %v392 = vld [vmem:[%s1 + $0x628] sm:$0xff]
    %v393 = vld [vmem:[%s1 + $0x630] sm:$0xff]
    %v394 = vld [vmem:[%s1 + $0x638] sm:$0xff]
    %v395 = vld [vmem:[%s1 + $0x640] sm:$0xff]
    %v396 = vld [vmem:[%s1 + $0x648] sm:$0xff]
    %v397 = vld [vmem:[%s1 + $0x650] sm:$0xff]
    %v398 = vld [vmem:[%s1 + $0x658] sm:$0xff]
    %v399 = vld [vmem:[%s1 + $0x660] sm:$0xff]
    %v400 = vld [vmem:[%s1 + $0x668] sm:$0xff]
    %v401 = vld [vmem:[%s1 + $0x670] sm:$0xff]
    %v402 = vld [vmem:[%s1 + $0x678] sm:$0xff]
    %v403 = vld [vmem:[%s1 + $0x680] sm:$0xff]
    %v404 = vld [vmem:[%s1 + $0x688] sm:$0xff]
    %v405 = vld [vmem:[%s1 + $0x690] sm:$0xff]
    %v406 = vld [vmem:[%s1 + $0x698] sm:$0xff]
    %v407 = vld [vmem:[%s1 + $0x6a0] sm:$0xff]
    %v408 = vld [vmem:[%s1 + $0x6a8] sm:$0xff]
    %v409 = vld [vmem:[%s1 + $0x6b0] sm:$0xff]
    %v410 = vld [vmem:[%s1 + $0x6b8] sm:$0xff]
    %v411 = vld [vmem:[%s1 + $0x6c0] sm:$0xff]
    %v412 = vld [vmem:[%s1 + $0x6c8] sm:$0xff]
    %v413 = vld [vmem:[%s1 + $0x6d0] sm:$0xff]
    %v414 = vld [vmem:[%s1 + $0x6d8] sm:$0xff]
    %v415 = vld [vmem:[%s1 + $0x6e0] sm:$0xff]
    %v416 = vld [vmem:[%s1 + $0x6e8] sm:$0xff]
    %v417 = vld [vmem:[%s1 + $0x6f0] sm:$0xff]
    %v418 = vld [vmem:[%s1 + $0x6f8] sm:$0xff]
    %v419 = vld [vmem:[%s1 + $0x700] sm:$0xff]
    %v420 = vld [vmem:[%s1 + $0x708] sm:$0xff]
    %v421 = vld [vmem:[%s1 + $0x710] sm:$0xff]
    %v422 = vld [vmem:[%s1 + $0x718] sm:$0xff]
    %v423 = vld [vmem:[%s1 + $0x720] sm:$0xff]
    %v424 = vld [vmem:[%s1 + $0x728] sm:$0xff]
    %v425 = vld [vmem:[%s1 + $0x730] sm:$0xff]
    %v426 = vld [vmem:[%s1 + $0x738] sm:$0xff]
    %v427 = vld [vmem:[%s1 + $0x740] sm:$0xff]
    %v428 = vld [vmem:[%s1 + $0x748] sm:$0xff]
    %v429 = vld [vmem:[%s1 + $0x750] sm:$0xff]
    %v430 = vld [vmem:[%s1 + $0x758] sm:$0xff]
    %v431 = vld [vmem:[%s1 + $0x760] sm:$0xff]
    %v432 = vld [vmem:[%s1 + $0x768] sm:$0xff]
    %v433 = vld [vmem:[%s1 + $0x770] sm:$0xff]
    %v434 = vld [vmem:[%s1 + $0x778] sm:$0xff]
    %v435 = vld [vmem:[%s1 + $0x780] sm:$0xff]
    %v436 = vld [vmem:[%s1 + $0x788] sm:$0xff]
    %v437 = vld [vmem:[%s1 + $0x790] sm:$0xff]
    %v438 = vld [vmem:[%s1 + $0x798] sm:$0xff]
    %v439 = vld [vmem:[%s1 + $0x7a0] sm:$0xff]
    %v440 = vld [vmem:[%s1 + $0x7a8] sm:$0xff]
    %v441 = vld [vmem:[%s1 + $0x7b0] sm:$0xff]
    %v442 = vld [vmem:[%s1 + $0x7b8] sm:$0xff]
    %v443 = vld [vmem:[%s1 + $0x7c0] sm:$0xff]
    %v444 = vld [vmem:[%s1 + $0x7c8] sm:$0xff]
    %v445 = vld [vmem:[%s1 + $0x7d0] sm:$0xff]
    %v446 = vld [vmem:[%s1 + $0x7d8] sm:$0xff]
    %v447 = vld [vmem:[%s1 + $0x7e0] sm:$0xff]
    %v448 = vld [vmem:[%s1 + $0x7e8] sm:$0xff]
    %v449 = vld [vmem:[%s1 + $0x7f0] sm:$0xff]
    %v450 = vld [vmem:[%s1 + $0x7f8] sm:$0xff]
    %v451 = vld [vmem:[%s1 + $0x800] sm:$0xff]
    %v452 = vld [vmem:[%s1 + $0x808] sm:$0xff]
    %v453 = vld [vmem:[%s1 + $0x810] sm:$0xff]
    %v454 = vld [vmem:[%s1 + $0x818] sm:$0xff]
    %v455 = vld [vmem:[%s1 + $0x820] sm:$0xff]
    %v456 = vld [vmem:[%s1 + $0x828] sm:$0xff]
    %v457 = vld [vmem:[%s1 + $0x830] sm:$0xff]
    %v458 = vld [vmem:[%s1 + $0x838] sm:$0xff]
    %v459 = vld [vmem:[%s1 + $0x840] sm:$0xff]
    %v460 = vld [vmem:[%s1 + $0x848] sm:$0xff]
    %v461 = vld [vmem:[%s1 + $0x850] sm:$0xff]
    %v462 = vld [vmem:[%s1 + $0x858] sm:$0xff]
    %v463 = vld [vmem:[%s1 + $0x860] sm:$0xff]
    %v464 = vld [vmem:[%s1 + $0x868] sm:$0xff]
    %v465 = vld [vmem:[%s1 + $0x870] sm:$0xff]
    %v466 = vld [vmem:[%s1 + $0x878] sm:$0xff]
    %v467 = vld [vmem:[%s1 + $0x880] sm:$0xff]
    %v468 = vld [vmem:[%s1 + $0x888] sm:$0xff]
    %v469 = vld [vmem:[%s1 + $0x890] sm:$0xff]
    %v470 = vld [vmem:[%s1 + $0x898] sm:$0xff]
    %v471 = vld [vmem:[%s1 + $0x8a0] sm:$0xff]
    %v472 = vld [vmem:[%s1 + $0x8a8] sm:$0xff]
    %v473 = vld [vmem:[%s1 + $0x8b0] sm:$0xff]
    %v474 = vld [vmem:[%s1 + $0x8b8] sm:$0xff]
    %v475 = vld [vmem:[%s1 + $0x8c0] sm:$0xff]
    %v476 = vld [vmem:[%s1 + $0x8c8] sm:$0xff]
    %v477 = vld [vmem:[%s1 + $0x8d0] sm:$0xff]
    %v478 = vld [vmem:[%s1 + $0x8d8] sm:$0xff]
    %v479 = vld [vmem:[%s1 + $0x8e0] sm:$0xff]
    %v480 = vld [vmem:[%s1 + $0x8e8] sm:$0xff]
    %v481 = vld [vmem:[%s1 + $0x8f0] sm:$0xff]
    %v482 = vld [vmem:[%s1 + $0x8f8] sm:$0xff]
    %v483 = vld [vmem:[%s1 + $0x900] sm:$0xff]
    %v484 = vld [vmem:[%s1 + $0x908] sm:$0xff]
    %v485 = vld [vmem:[%s1 + $0x910] sm:$0xff]
    %v486 = vld [vmem:[%s1 + $0x918] sm:$0xff]
    %v487 = vld [vmem:[%s1 + $0x920] sm:$0xff]
    %v488 = vld [vmem:[%s1 + $0x928] sm:$0xff]
    %v489 = vld [vmem:[%s1 + $0x930] sm:$0xff]
    %v490 = vld [vmem:[%s1 + $0x938] sm:$0xff]
    %v491 = vld [vmem:[%s1 + $0x940] sm:$0xff]
    %v492 = vld [vmem:[%s1 + $0x948] sm:$0xff]
    %v493 = vld [vmem:[%s1 + $0x950] sm:$0xff]
    %v494 = vld [vmem:[%s1 + $0x958] sm:$0xff]
    %v495 = vld [vmem:[%s1 + $0x960] sm:$0xff]
    %v496 = vld [vmem:[%s1 + $0x968] sm:$0xff]
    %v497 = vld [vmem:[%s1 + $0x970] sm:$0xff]
    %v498 = vld [vmem:[%s1 + $0x978] sm:$0xff]
    %v499 = vld [vmem:[%s1 + $0x980] sm:$0xff]
    %v500 = vld [vmem:[%s1 + $0x988] sm:$0xff]
    %v501 = vld [vmem:[%s1 + $0x990] sm:$0xff]
    %v502 = vld [vmem:[%s1 + $0x998] sm:$0xff]
    %v503 = vld [vmem:[%s1 + $0x9a0] sm:$0xff]
    %v504 = vld [vmem:[%s1 + $0x9a8] sm:$0xff]
    %v505 = vld [vmem:[%s1 + $0x9b0] sm:$0xff]
    %v506 = vld [vmem:[%s1 + $0x9b8] sm:$0xff]
    %v507 = vld [vmem:[%s1 + $0x9c0] sm:$0xff]
    %v508 = vld [vmem:[%s1 + $0x9c8] sm:$0xff]
    %v509 = vld [vmem:[%s1 + $0x9d0] sm:$0xff]
    %v510 = vld [vmem:[%s1 + $0x9d8] sm:$0xff]
    %v511 = vld [vmem:[%s1 + $0x9e0] sm:$0xff]
    %v512 = vld [vmem:[%s1 + $0x9e8] sm:$0xff]
    %v513 = vld [vmem:[%s1 + $0x9f0] sm:$0xff]
    %v514 = vld [vmem:[%s1 + $0x9f8] sm:$0xff]
    %v515 = vld [vmem:[%s1 + $0xa00] sm:$0xff]
    %v516 = vld [vmem:[%s1 + $0xa08] sm:$0xff]
    %v517 = vld [vmem:[%s1 + $0xa10] sm:$0xff]
    %v518 = vld [vmem:[%s1 + $0xa18] sm:$0xff]
    %v519 = vld [vmem:[%s1 + $0xa20] sm:$0xff]
    %v520 = vld [vmem:[%s1 + $0xa28] sm:$0xff]
    %v521 = vld [vmem:[%s1 + $0xa30] sm:$0xff]
    %v522 = vld [vmem:[%s1 + $0xa38] sm:$0xff]
    %v523 = vld [vmem:[%s1 + $0xa40] sm:$0xff]
    %v524 = vld [vmem:[%s1 + $0xa48] sm:$0xff]
    %v525 = vld [vmem:[%s1 + $0xa50] sm:$0xff]
    %v526 = vld [vmem:[%s1 + $0xa58] sm:$0xff]
    %v527 = vld [vmem:[%s1 + $0xa60] sm:$0xff]
    %v528 = vld [vmem:[%s1 + $0xa68] sm:$0xff]
    %v529 = vld [vmem:[%s1 + $0xa70] sm:$0xff]
    %v530 = vld [vmem:[%s1 + $0xa78] sm:$0xff]
    %v531 = vld [vmem:[%s1 + $0xa80] sm:$0xff]
    %v532 = vld [vmem:[%s1 + $0xa88] sm:$0xff]
    %v533 = vld [vmem:[%s1 + $0xa90] sm:$0xff]
    %v534 = vld [vmem:[%s1 + $0xa98] sm:$0xff]
    %v535 = vld [vmem:[%s1 + $0xaa0] sm:$0xff]
    %v536 = vld [vmem:[%s1 + $0xaa8] sm:$0xff]
    %v537 = vld [vmem:[%s1 + $0xab0] sm:$0xff]
    %v538 = vld [vmem:[%s1 + $0xab8] sm:$0xff]
    %v539 = vld [vmem:[%s1 + $0xac0] sm:$0xff]
    %v540 = vld [vmem:[%s1 + $0xac8] sm:$0xff]
    %v541 = vld [vmem:[%s1 + $0xad0] sm:$0xff]
    %v542 = vld [vmem:[%s1 + $0xad8] sm:$0xff]
    %v543 = vld [vmem:[%s1 + $0xae0] sm:$0xff]
    %v544 = vld [vmem:[%s1 + $0xae8] sm:$0xff]
    %v545 = vld [vmem:[%s1 + $0xaf0] sm:$0xff]
    %v546 = vld [vmem:[%s1 + $0xaf8] sm:$0xff]
    %v547 = vld [vmem:[%s1 + $0xb00] sm:$0xff]
    %v548 = vld [vmem:[%s1 + $0xb08] sm:$0xff]
    %v549 = vld [vmem:[%s1 + $0xb10] sm:$0xff]
    %v550 = vld [vmem:[%s1 + $0xb18] sm:$0xff]
    %v551 = vld [vmem:[%s1 + $0xb20] sm:$0xff]
    %v552 = vld [vmem:[%s1 + $0xb28] sm:$0xff]
    %v553 = vld [vmem:[%s1 + $0xb30] sm:$0xff]
    %v554 = vld [vmem:[%s1 + $0xb38] sm:$0xff]
    %v555 = vld [vmem:[%s1 + $0xb40] sm:$0xff]
    %v556 = vld [vmem:[%s1 + $0xb48] sm:$0xff]
    %v557 = vld [vmem:[%s1 + $0xb50] sm:$0xff]
    %v558 = vld [vmem:[%s1 + $0xb58] sm:$0xff]
    %v559 = vld [vmem:[%s1 + $0xb60] sm:$0xff]
    %v560 = vld [vmem:[%s1 + $0xb68] sm:$0xff]
    %v561 = vld [vmem:[%s1 + $0xb70] sm:$0xff]
    %v562 = vld [vmem:[%s1 + $0xb78] sm:$0xff]
    %v563 = vld [vmem:[%s1 + $0xb80] sm:$0xff]
    %v564 = vld [vmem:[%s1 + $0xb88] sm:$0xff]
    %v565 = vld [vmem:[%s1 + $0xb90] sm:$0xff]
    %v566 = vld [vmem:[%s1 + $0xb98] sm:$0xff]
    %v567 = vld [vmem:[%s1 + $0xba0] sm:$0xff]
    %v568 = vld [vmem:[%s1 + $0xba8] sm:$0xff]
    %v569 = vld [vmem:[%s1 + $0xbb0] sm:$0xff]
    %v570 = vld [vmem:[%s1 + $0xbb8] sm:$0xff]
    %v571 = vld [vmem:[%s1 + $0xbc0] sm:$0xff]
    %v572 = vld [vmem:[%s1 + $0xbc8] sm:$0xff]
    %v573 = vld [vmem:[%s1 + $0xbd0] sm:$0xff]
    %v574 = vld [vmem:[%s1 + $0xbd8] sm:$0xff]
    %v575 = vld [vmem:[%s1 + $0xbe0] sm:$0xff]
    %v576 = vld [vmem:[%s1 + $0xbe8] sm:$0xff]
    %v577 = vld [vmem:[%s1 + $0xbf0] sm:$0xff]
    %v578 = vld [vmem:[%s1 + $0xbf8] sm:$0xff]
    %v579 = vld [vmem:[%s1 + $0xc00] sm:$0xff]
    %v580 = vld [vmem:[%s1 + $0xc08] sm:$0xff]
    %v581 = vld [vmem:[%s1 + $0xc10] sm:$0xff]
    %v582 = vld [vmem:[%s1 + $0xc18] sm:$0xff]
    %v583 = vld [vmem:[%s1 + $0xc20] sm:$0xff]
    %v584 = vld [vmem:[%s1 + $0xc28] sm:$0xff]
    %v585 = vld [vmem:[%s1 + $0xc30] sm:$0xff]
    %v586 = vld [vmem:[%s1 + $0xc38] sm:$0xff]
    %v587 = vld [vmem:[%s1 + $0xc40] sm:$0xff]
    %v588 = vld [vmem:[%s1 + $0xc48] sm:$0xff]
    %v589 = vld [vmem:[%s1 + $0xc50] sm:$0xff]
    %v590 = vld [vmem:[%s1 + $0xc58] sm:$0xff]
    %v591 = vld [vmem:[%s1 + $0xc60] sm:$0xff]
    %v592 = vld [vmem:[%s1 + $0xc68] sm:$0xff]
    %v593 = vld [vmem:[%s1 + $0xc70] sm:$0xff]
    %v594 = vld [vmem:[%s1 + $0xc78] sm:$0xff]
    %v595 = vld [vmem:[%s1 + $0xc80] sm:$0xff]
    %v596 = vld [vmem:[%s1 + $0xc88] sm:$0xff]
    %v597 = vld [vmem:[%s1 + $0xc90] sm:$0xff]
    %v598 = vld [vmem:[%s1 + $0xc98] sm:$0xff]
    %v599 = vld [vmem:[%s1 + $0xca0] sm:$0xff]
    %v600 = vld [vmem:[%s1 + $0xca8] sm:$0xff]
    %v601 = vld [vmem:[%s1 + $0xcb0] sm:$0xff]
    %v602 = vld [vmem:[%s1 + $0xcb8] sm:$0xff]
    %v603 = vld [vmem:[%s1 + $0xcc0] sm:$0xff]
    %v604 = vld [vmem:[%s1 + $0xcc8] sm:$0xff]
    %v605 = vld [vmem:[%s1 + $0xcd0] sm:$0xff]
    %v606 = vld [vmem:[%s1 + $0xcd8] sm:$0xff]
    %v607 = vld [vmem:[%s1 + $0xce0] sm:$0xff]
    %v608 = vld [vmem:[%s1 + $0xce8] sm:$0xff]
    %v609 = vld [vmem:[%s1 + $0xcf0] sm:$0xff]
    %v610 = vld [vmem:[%s1 + $0xcf8] sm:$0xff]
    %v611 = vld [vmem:[%s1 + $0xd00] sm:$0xff]
    %v612 = vld [vmem:[%s1 + $0xd08] sm:$0xff]
    %v613 = vld [vmem:[%s1 + $0xd10] sm:$0xff]
    %v614 = vld [vmem:[%s1 + $0xd18] sm:$0xff]
    %v615 = vld [vmem:[%s1 + $0xd20] sm:$0xff]
    %v616 = vld [vmem:[%s1 + $0xd28] sm:$0xff]
    %v617 = vld [vmem:[%s1 + $0xd30] sm:$0xff]
    %v618 = vld [vmem:[%s1 + $0xd38] sm:$0xff]
    %v619 = vld [vmem:[%s1 + $0xd40] sm:$0xff]
    %v620 = vld [vmem:[%s1 + $0xd48] sm:$0xff]
    %v621 = vld [vmem:[%s1 + $0xd50] sm:$0xff]
    %v622 = vld [vmem:[%s1 + $0xd58] sm:$0xff]
    %v623 = vld [vmem:[%s1 + $0xd60] sm:$0xff]
    %v624 = vld [vmem:[%s1 + $0xd68] sm:$0xff]
    %v625 = vld [vmem:[%s1 + $0xd70] sm:$0xff]
    %v626 = vld [vmem:[%s1 + $0xd78] sm:$0xff]
    %v627 = vld [vmem:[%s1 + $0xd80] sm:$0xff]
    %v628 = vld [vmem:[%s1 + $0xd88] sm:$0xff]
    %v629 = vld [vmem:[%s1 + $0xd90] sm:$0xff]
    %v630 = vld [vmem:[%s1 + $0xd98] sm:$0xff]
    %v631 = vld [vmem:[%s1 + $0xda0] sm:$0xff]
    %v632 = vld [vmem:[%s1 + $0xda8] sm:$0xff]
    %v633 = vld [vmem:[%s1 + $0xdb0] sm:$0xff]
    %v634 = vld [vmem:[%s1 + $0xdb8] sm:$0xff]
    %v635 = vld [vmem:[%s1 + $0xdc0] sm:$0xff]
    %v636 = vld [vmem:[%s1 + $0xdc8] sm:$0xff]
    %v637 = vld [vmem:[%s1 + $0xdd0] sm:$0xff]
    %v638 = vld [vmem:[%s1 + $0xdd8] sm:$0xff]
    %v639 = vld [vmem:[%s1 + $0xde0] sm:$0xff]
    %v640 = vld [vmem:[%s1 + $0xde8] sm:$0xff]
    %v641 = vld [vmem:[%s1 + $0xdf0] sm:$0xff]
    %v642 = vld [vmem:[%s1 + $0xdf8] sm:$0xff]
    %v643 = vld [vmem:[%s1 + $0xe00] sm:$0xff]
    %v644 = vld [vmem:[%s1 + $0xe08] sm:$0xff]
    %v645 = vld [vmem:[%s1 + $0xe10] sm:$0xff]
    %v646 = vld [vmem:[%s1 + $0xe18] sm:$0xff]
    %v647 = vld [vmem:[%s1 + $0xe20] sm:$0xff]
    %v648 = vld [vmem:[%s1 + $0xe28] sm:$0xff]
    %v649 = vld [vmem:[%s1 + $0xe30] sm:$0xff]
    %v650 = vld [vmem:[%s1 + $0xe38] sm:$0xff]
    %v651 = vld [vmem:[%s1 + $0xe40] sm:$0xff]
    %v652 = vld [vmem:[%s1 + $0xe48] sm:$0xff]
    %v653 = vld [vmem:[%s1 + $0xe50] sm:$0xff]
    %v654 = vld [vmem:[%s1 + $0xe58] sm:$0xff]
    %v655 = vld [vmem:[%s1 + $0xe60] sm:$0xff]
    %v656 = vld [vmem:[%s1 + $0xe68] sm:$0xff]
    %v657 = vld [vmem:[%s1 + $0xe70] sm:$0xff]
    %v658 = vld [vmem:[%s1 + $0xe78] sm:$0xff]
    %v659 = vld [vmem:[%s1 + $0xe80] sm:$0xff]
    %v660 = vld [vmem:[%s1 + $0xe88] sm:$0xff]
    %v661 = vld [vmem:[%s1 + $0xe90] sm:$0xff]
    %v662 = vld [vmem:[%s1 + $0xe98] sm:$0xff]
    %v663 = vld [vmem:[%s1 + $0xea0] sm:$0xff]
    %v664 = vld [vmem:[%s1 + $0xea8] sm:$0xff]
    %v665 = vld [vmem:[%s1 + $0xeb0] sm:$0xff]
    %v666 = vld [vmem:[%s1 + $0xeb8] sm:$0xff]
    %v667 = vld [vmem:[%s1 + $0xec0] sm:$0xff]
    %v668 = vld [vmem:[%s1 + $0xec8] sm:$0xff]
    %v669 = vld [vmem:[%s1 + $0xed0] sm:$0xff]
    %v670 = vld [vmem:[%s1 + $0xed8] sm:$0xff]
    %v671 = vld [vmem:[%s1 + $0xee0] sm:$0xff]
    %v672 = vld [vmem:[%s1 + $0xee8] sm:$0xff]
    %v673 = vld [vmem:[%s1 + $0xef0] sm:$0xff]
    %v674 = vld [vmem:[%s1 + $0xef8] sm:$0xff]
    %v675 = vld [vmem:[%s1 + $0xf00] sm:$0xff]
    %v676 = vld [vmem:[%s1 + $0xf08] sm:$0xff]
    %v677 = vld [vmem:[%s1 + $0xf10] sm:$0xff]
    %v678 = vld [vmem:[%s1 + $0xf18] sm:$0xff]
    %v679 = vld [vmem:[%s1 + $0xf20] sm:$0xff]
    %v680 = vld [vmem:[%s1 + $0xf28] sm:$0xff]
    %v681 = vld [vmem:[%s1 + $0xf30] sm:$0xff]
    %v682 = vld [vmem:[%s1 + $0xf38] sm:$0xff]
    %v683 = vld [vmem:[%s1 + $0xf40] sm:$0xff]
    %v684 = vld [vmem:[%s1 + $0xf48] sm:$0xff]
    %v685 = vld [vmem:[%s1 + $0xf50] sm:$0xff]
    %v686 = vld [vmem:[%s1 + $0xf58] sm:$0xff]
    %v687 = vld [vmem:[%s1 + $0xf60] sm:$0xff]
    %v688 = vld [vmem:[%s1 + $0xf68] sm:$0xff]
    %v689 = vld [vmem:[%s1 + $0xf70] sm:$0xff]
    %v690 = vld [vmem:[%s1 + $0xf78] sm:$0xff]
    %v691 = vld [vmem:[%s1 + $0xf80] sm:$0xff]
    %v692 = vld [vmem:[%s1 + $0xf88] sm:$0xff]
    %v693 = vld [vmem:[%s1 + $0xf90] sm:$0xff]
    %v694 = vld [vmem:[%s1 + $0xf98] sm:$0xff]
    %v695 = vld [vmem:[%s1 + $0xfa0] sm:$0xff]
    %v696 = vld [vmem:[%s1 + $0xfa8] sm:$0xff]
    %v697 = vld [vmem:[%s1 + $0xfb0] sm:$0xff]
    %v698 = vld [vmem:[%s1 + $0xfb8] sm:$0xff]
    %v699 = vld [vmem:[%s1 + $0xfc0] sm:$0xff]
    %v700 = vld [vmem:[%s1 + $0xfc8] sm:$0xff]
    %v701 = vld [vmem:[%s1 + $0xfd0] sm:$0xff]
    %v702 = vld [vmem:[%s1 + $0xfd8] sm:$0xff]
    %v703 = vld [vmem:[%s1 + $0xfe0] sm:$0xff]
    %v704 = vld [vmem:[%s1 + $0xfe8] sm:$0xff]
    %v705 = vld [vmem:[%s1 + $0xff0] sm:$0xff]
    %v706 = vld [vmem:[%s1 + $0xff8] sm:$0xff]
    %v707 = vld [vmem:[%s1 + $0x1000] sm:$0xff]
    %v708 = vld [vmem:[%s1 + $0x1008] sm:$0xff]
    %v709 = vld [vmem:[%s1 + $0x1010] sm:$0xff]
    %v710 = vld [vmem:[%s1 + $0x1018] sm:$0xff]
    %v711 = vld [vmem:[%s1 + $0x1020] sm:$0xff]
    %v712 = vld [vmem:[%s1 + $0x1028] sm:$0xff]
    %v713 = vld [vmem:[%s1 + $0x1030] sm:$0xff]
    %v714 = vld [vmem:[%s1 + $0x1038] sm:$0xff]
    %v715 = vld [vmem:[%s1 + $0x1040] sm:$0xff]
    %v716 = vld [vmem:[%s1 + $0x1048] sm:$0xff]
    %v717 = vld [vmem:[%s1 + $0x1050] sm:$0xff]
    %v718 = vld [vmem:[%s1 + $0x1058] sm:$0xff]
    %v719 = vld [vmem:[%s1 + $0x1060] sm:$0xff]
    %v720 = vld [vmem:[%s1 + $0x1068] sm:$0xff]
    %v721 = vld [vmem:[%s1 + $0x1070] sm:$0xff]
    %v722 = vld [vmem:[%s1 + $0x1078] sm:$0xff]
    %v723 = vld [vmem:[%s1 + $0x1080] sm:$0xff]
    %v724 = vld [vmem:[%s1 + $0x1088] sm:$0xff]
    %v725 = vld [vmem:[%s1 + $0x1090] sm:$0xff]
    %v726 = vld [vmem:[%s1 + $0x1098] sm:$0xff]
    %v727 = vld [vmem:[%s1 + $0x10a0] sm:$0xff]
    %v728 = vld [vmem:[%s1 + $0x10a8] sm:$0xff]
    %v729 = vld [vmem:[%s1 + $0x10b0] sm:$0xff]
    %v730 = vld [vmem:[%s1 + $0x10b8] sm:$0xff]
    %v731 = vld [vmem:[%s1 + $0x10c0] sm:$0xff]
    %v732 = vld [vmem:[%s1 + $0x10c8] sm:$0xff]
    %v733 = vld [vmem:[%s1 + $0x10d0] sm:$0xff]
    %v734 = vld [vmem:[%s1 + $0x10d8] sm:$0xff]
    %v735 = vld [vmem:[%s1 + $0x10e0] sm:$0xff]
    %v736 = vld [vmem:[%s1 + $0x10e8] sm:$0xff]
    %v737 = vld [vmem:[%s1 + $0x10f0] sm:$0xff]
    %v738 = vld [vmem:[%s1 + $0x10f8] sm:$0xff]
    %v739 = vld [vmem:[%s1 + $0x1100] sm:$0xff]
    %v740 = vld [vmem:[%s1 + $0x1108] sm:$0xff]
    %v741 = vld [vmem:[%s1 + $0x1110] sm:$0xff]
    %v742 = vld [vmem:[%s1 + $0x1118] sm:$0xff]
    %v743 = vld [vmem:[%s1 + $0x1120] sm:$0xff]
    %v744 = vld [vmem:[%s1 + $0x1128] sm:$0xff]
    %v745 = vld [vmem:[%s1 + $0x1130] sm:$0xff]
    %v746 = vld [vmem:[%s1 + $0x1138] sm:$0xff]
    %v747 = vld [vmem:[%s1 + $0x1140] sm:$0xff]
    %v748 = vld [vmem:[%s1 + $0x1148] sm:$0xff]
    %v749 = vld [vmem:[%s1 + $0x1150] sm:$0xff]
    %v750 = vld [vmem:[%s1 + $0x1158] sm:$0xff]
    %v751 = vld [vmem:[%s1 + $0x1160] sm:$0xff]
    %v752 = vld [vmem:[%s1 + $0x1168] sm:$0xff]
    %v753 = vld [vmem:[%s1 + $0x1170] sm:$0xff]
    %v754 = vld [vmem:[%s1 + $0x1178] sm:$0xff]
    %v755 = vld [vmem:[%s1 + $0x1180] sm:$0xff]
    %v756 = vld [vmem:[%s1 + $0x1188] sm:$0xff]
    %v757 = vld [vmem:[%s1 + $0x1190] sm:$0xff]
    %v758 = vld [vmem:[%s1 + $0x1198] sm:$0xff]
    %v759 = vld [vmem:[%s1 + $0x11a0] sm:$0xff]
    %v760 = vld [vmem:[%s1 + $0x11a8] sm:$0xff]
    %v761 = vld [vmem:[%s1 + $0x11b0] sm:$0xff]
    %v762 = vld [vmem:[%s1 + $0x11b8] sm:$0xff]
    %v763 = vld [vmem:[%s1 + $0x11c0] sm:$0xff]
    %v764 = vld [vmem:[%s1 + $0x11c8] sm:$0xff]
    %v765 = vld [vmem:[%s1 + $0x11d0] sm:$0xff]
    %v766 = vld [vmem:[%s1 + $0x11d8] sm:$0xff]
    %v767 = vld [vmem:[%s1 + $0x11e0] sm:$0xff]
    %v768 = vld [vmem:[%s1 + $0x11e8] sm:$0xff]
    %v769 = vld [vmem:[%s1 + $0x11f0] sm:$0xff]
    %v770 = vld [vmem:[%s1 + $0x11f8] sm:$0xff]
    %v771 = vld [vmem:[%s1 + $0x1200] sm:$0xff]
    %v772 = vld [vmem:[%s1 + $0x1208] sm:$0xff]
    %v773 = vld [vmem:[%s1 + $0x1210] sm:$0xff]
    %v774 = vld [vmem:[%s1 + $0x1218] sm:$0xff]
    %v775 = vld [vmem:[%s1 + $0x1220] sm:$0xff]
    %v776 = vld [vmem:[%s1 + $0x1228] sm:$0xff]
    %v777 = vld [vmem:[%s1 + $0x1230] sm:$0xff]
    %v778 = vld [vmem:[%s1 + $0x1238] sm:$0xff]
    %v779 = vld [vmem:[%s1 + $0x1240] sm:$0xff]
    %v780 = vld [vmem:[%s1 + $0x1248] sm:$0xff]
    %v781 = vld [vmem:[%s1 + $0x1250] sm:$0xff]
    %v782 = vld [vmem:[%s1 + $0x1258] sm:$0xff]
    %v783 = vld [vmem:[%s1 + $0x1260] sm:$0xff]
    %v784 = vld [vmem:[%s1 + $0x1268] sm:$0xff]
    %v785 = vld [vmem:[%s1 + $0x1270] sm:$0xff]
    %v786 = vld [vmem:[%s1 + $0x1278] sm:$0xff]
    %v787 = vld [vmem:[%s1 + $0x1280] sm:$0xff]
    %v788 = vld [vmem:[%s1 + $0x1288] sm:$0xff]
    %v789 = vld [vmem:[%s1 + $0x1290] sm:$0xff]
    %v790 = vld [vmem:[%s1 + $0x1298] sm:$0xff]
    %v791 = vld [vmem:[%s1 + $0x12a0] sm:$0xff]
    %v792 = vld [vmem:[%s1 + $0x12a8] sm:$0xff]
    %v793 = vld [vmem:[%s1 + $0x12b0] sm:$0xff]
    %v794 = vld [vmem:[%s1 + $0x12b8] sm:$0xff]
    %v795 = vld [vmem:[%s1 + $0x12c0] sm:$0xff]
    %v796 = vld [vmem:[%s1 + $0x12c8] sm:$0xff]
    %v797 = vld [vmem:[%s1 + $0x12d0] sm:$0xff]
    %v798 = vld [vmem:[%s1 + $0x12d8] sm:$0xff]
    %v799 = vld [vmem:[%s1 + $0x12e0] sm:$0xff]
    %v800 = vld [vmem:[%s1 + $0x12e8] sm:$0xff]
    %v801 = vld [vmem:[%s1 + $0x12f0] sm:$0xff]
    %v802 = vld [vmem:[%s1 + $0x12f8] sm:$0xff]
    %v803 = vld [vmem:[%s1 + $0x1300] sm:$0xff]
    %v804 = vld [vmem:[%s1 + $0x1308] sm:$0xff]
    %v805 = vld [vmem:[%s1 + $0x1310] sm:$0xff]
    %v806 = vld [vmem:[%s1 + $0x1318] sm:$0xff]
    %v807 = vld [vmem:[%s1 + $0x1320] sm:$0xff]
    %v808 = vld [vmem:[%s1 + $0x1328] sm:$0xff]
    %v809 = vld [vmem:[%s1 + $0x1330] sm:$0xff]
    %v810 = vld [vmem:[%s1 + $0x1338] sm:$0xff]
    %v811 = vld [vmem:[%s1 + $0x1340] sm:$0xff]
    %v812 = vld [vmem:[%s1 + $0x1348] sm:$0xff]
    %v813 = vld [vmem:[%s1 + $0x1350] sm:$0xff]
    %v814 = vld [vmem:[%s1 + $0x1358] sm:$0xff]
    %v815 = vld [vmem:[%s1 + $0x1360] sm:$0xff]
    %v816 = vld [vmem:[%s1 + $0x1368] sm:$0xff]
    %v817 = vld [vmem:[%s1 + $0x1370] sm:$0xff]
    %v818 = vld [vmem:[%s1 + $0x1378] sm:$0xff]
    %v819 = vld [vmem:[%s1 + $0x1380] sm:$0xff]
    %v820 = vld [vmem:[%s1 + $0x1388] sm:$0xff]
    %v821 = vld [vmem:[%s1 + $0x1390] sm:$0xff]
    %v822 = vld [vmem:[%s1 + $0x1398] sm:$0xff]
    %v823 = vld [vmem:[%s1 + $0x13a0] sm:$0xff]
    %v824 = vld [vmem:[%s1 + $0x13a8] sm:$0xff]
    %v825 = vld [vmem:[%s1 + $0x13b0] sm:$0xff]
    %v826 = vld [vmem:[%s1 + $0x13b8] sm:$0xff]
    %v827 = vld [vmem:[%s1 + $0x13c0] sm:$0xff]
    %v828 = vld [vmem:[%s1 + $0x13c8] sm:$0xff]
    %v829 = vld [vmem:[%s1 + $0x13d0] sm:$0xff]
    %v830 = vld [vmem:[%s1 + $0x13d8] sm:$0xff]
    %v831 = vld [vmem:[%s1 + $0x13e0] sm:$0xff]
    %v832 = vld [vmem:[%s1 + $0x13e8] sm:$0xff]
    %v833 = vld [vmem:[%s1 + $0x13f0] sm:$0xff]
    %v834 = vld [vmem:[%s1 + $0x13f8] sm:$0xff]
    %v835 = vld [vmem:[%s1 + $0x1400] sm:$0xff]
    %v836 = vld [vmem:[%s1 + $0x1408] sm:$0xff]
    %v837 = vld [vmem:[%s1 + $0x1410] sm:$0xff]
    %v838 = vld [vmem:[%s1 + $0x1418] sm:$0xff]
    %v839 = vld [vmem:[%s1 + $0x1420] sm:$0xff]
    %v840 = vld [vmem:[%s1 + $0x1428] sm:$0xff]
    %v841 = vld [vmem:[%s1 + $0x1430] sm:$0xff]
    %v842 = vld [vmem:[%s1 + $0x1438] sm:$0xff]
    %v843 = vld [vmem:[%s1 + $0x1440] sm:$0xff]
    %v844 = vld [vmem:[%s1 + $0x1448] sm:$0xff]
    %v845 = vld [vmem:[%s1 + $0x1450] sm:$0xff]
    %v846 = vld [vmem:[%s1 + $0x1458] sm:$0xff]
    %v847 = vld [vmem:[%s1 + $0x1460] sm:$0xff]
    %v848 = vld [vmem:[%s1 + $0x1468] sm:$0xff]
    %v849 = vld [vmem:[%s1 + $0x1470] sm:$0xff]
    %v850 = vld [vmem:[%s1 + $0x1478] sm:$0xff]
    %v851 = vld [vmem:[%s1 + $0x1480] sm:$0xff]
    %v852 = vld [vmem:[%s1 + $0x1488] sm:$0xff]
    %v853 = vld [vmem:[%s1 + $0x1490] sm:$0xff]
    %v854 = vld [vmem:[%s1 + $0x1498] sm:$0xff]
    %v855 = vld [vmem:[%s1 + $0x14a0] sm:$0xff]
    %v856 = vld [vmem:[%s1 + $0x14a8] sm:$0xff]
    %v857 = vld [vmem:[%s1 + $0x14b0] sm:$0xff]
    %v858 = vld [vmem:[%s1 + $0x14b8] sm:$0xff]
    %v859 = vld [vmem:[%s1 + $0x14c0] sm:$0xff]
    %v860 = vld [vmem:[%s1 + $0x14c8] sm:$0xff]
    %v861 = vld [vmem:[%s1 + $0x14d0] sm:$0xff]
    %v862 = vld [vmem:[%s1 + $0x14d8] sm:$0xff]
    %v863 = vld [vmem:[%s1 + $0x14e0] sm:$0xff]
    %v864 = vld [vmem:[%s1 + $0x14e8] sm:$0xff]
    %v865 = vld [vmem:[%s1 + $0x14f0] sm:$0xff]
    %v866 = vld [vmem:[%s1 + $0x14f8] sm:$0xff]
    %v867 = vld [vmem:[%s1 + $0x1500] sm:$0xff]
    %v868 = vld [vmem:[%s1 + $0x1508] sm:$0xff]
    %v869 = vld [vmem:[%s1 + $0x1510] sm:$0xff]
    %v870 = vld [vmem:[%s1 + $0x1518] sm:$0xff]
    %v871 = vld [vmem:[%s1 + $0x1520] sm:$0xff]
    %v872 = vld [vmem:[%s1 + $0x1528] sm:$0xff]
    %v873 = vld [vmem:[%s1 + $0x1530] sm:$0xff]
    %v874 = vld [vmem:[%s1 + $0x1538] sm:$0xff]
    %v875 = vld [vmem:[%s1 + $0x1540] sm:$0xff]
    %v876 = vld [vmem:[%s1 + $0x1548] sm:$0xff]
    %v877 = vld [vmem:[%s1 + $0x1550] sm:$0xff]
    %v878 = vld [vmem:[%s1 + $0x1558] sm:$0xff]
    %v879 = vld [vmem:[%s1 + $0x1560] sm:$0xff]
    %v880 = vld [vmem:[%s1 + $0x1568] sm:$0xff]
    %v881 = vld [vmem:[%s1 + $0x1570] sm:$0xff]
    %v882 = vld [vmem:[%s1 + $0x1578] sm:$0xff]
    %v883 = vld [vmem:[%s1 + $0x1580] sm:$0xff]
    %v884 = vld [vmem:[%s1 + $0x1588] sm:$0xff]
    %v885 = vld [vmem:[%s1 + $0x1590] sm:$0xff]
    %v886 = vld [vmem:[%s1 + $0x1598] sm:$0xff]
    %v887 = vld [vmem:[%s1 + $0x15a0] sm:$0xff]
    %v888 = vld [vmem:[%s1 + $0x15a8] sm:$0xff]
    %v889 = vld [vmem:[%s1 + $0x15b0] sm:$0xff]
    %v890 = vld [vmem:[%s1 + $0x15b8] sm:$0xff]
    %v891 = vld [vmem:[%s1 + $0x15c0] sm:$0xff]
    %v892 = vld [vmem:[%s1 + $0x15c8] sm:$0xff]
    %v893 = vld [vmem:[%s1 + $0x15d0] sm:$0xff]
    %v894 = vld [vmem:[%s1 + $0x15d8] sm:$0xff]
    %v895 = vld [vmem:[%s1 + $0x15e0] sm:$0xff]
    %v896 = vld [vmem:[%s1 + $0x15e8] sm:$0xff]
    %v897 = vld [vmem:[%s1 + $0x15f0] sm:$0xff]
    %v898 = vld [vmem:[%s1 + $0x15f8] sm:$0xff]
    %v899 = vld [vmem:[%s1 + $0x1600] sm:$0xff]
    %v900 = vld [vmem:[%s1 + $0x1608] sm:$0xff]
    %v901 = vld [vmem:[%s1 + $0x1610] sm:$0xff]
    %v902 = vld [vmem:[%s1 + $0x1618] sm:$0xff]
    %v903 = vld [vmem:[%s1 + $0x1620] sm:$0xff]
    %v904 = vld [vmem:[%s1 + $0x1628] sm:$0xff]
    %v905 = vld [vmem:[%s1 + $0x1630] sm:$0xff]
    %v906 = vld [vmem:[%s1 + $0x1638] sm:$0xff]
    %v907 = vld [vmem:[%s1 + $0x1640] sm:$0xff]
    %v908 = vld [vmem:[%s1 + $0x1648] sm:$0xff]
    %v909 = vld [vmem:[%s1 + $0x1650] sm:$0xff]
    %v910 = vld [vmem:[%s1 + $0x1658] sm:$0xff]
    %v911 = vld [vmem:[%s1 + $0x1660] sm:$0xff]
    %v912 = vld [vmem:[%s1 + $0x1668] sm:$0xff]
    %v913 = vld [vmem:[%s1 + $0x1670] sm:$0xff]
    %v914 = vld [vmem:[%s1 + $0x1678] sm:$0xff]
    %v915 = vld [vmem:[%s1 + $0x1680] sm:$0xff]
    %v916 = vld [vmem:[%s1 + $0x1688] sm:$0xff]
    %v917 = vld [vmem:[%s1 + $0x1690] sm:$0xff]
    %v918 = vld [vmem:[%s1 + $0x1698] sm:$0xff]
    %v919 = vld [vmem:[%s1 + $0x16a0] sm:$0xff]
    %v920 = vld [vmem:[%s1 + $0x16a8] sm:$0xff]
    %v921 = vld [vmem:[%s1 + $0x16b0] sm:$0xff]
    %v922 = vld [vmem:[%s1 + $0x16b8] sm:$0xff]
    %v923 = vld [vmem:[%s1 + $0x16c0] sm:$0xff]
    %v924 = vld [vmem:[%s1 + $0x16c8] sm:$0xff]
    %v925 = vld [vmem:[%s1 + $0x16d0] sm:$0xff]
    %v926 = vld [vmem:[%s1 + $0x16d8] sm:$0xff]
    %v927 = vld [vmem:[%s1 + $0x16e0] sm:$0xff]
    %v928 = vld [vmem:[%s1 + $0x16e8] sm:$0xff]
    %v929 = vld [vmem:[%s1 + $0x16f0] sm:$0xff]
    %v930 = vld [vmem:[%s1 + $0x16f8] sm:$0xff]
    %v931 = vld [vmem:[%s1 + $0x1700] sm:$0xff]
    %v932 = vld [vmem:[%s1 + $0x1708] sm:$0xff]
    %v933 = vld [vmem:[%s1 + $0x1710] sm:$0xff]
    %v934 = vld [vmem:[%s1 + $0x1718] sm:$0xff]
    %v935 = vld [vmem:[%s1 + $0x1720] sm:$0xff]
    %v936 = vld [vmem:[%s1 + $0x1728] sm:$0xff]
    %v937 = vld [vmem:[%s1 + $0x1730] sm:$0xff]
    %v938 = vld [vmem:[%s1 + $0x1738] sm:$0xff]
    %v939 = vld [vmem:[%s1 + $0x1740] sm:$0xff]
    %v940 = vld [vmem:[%s1 + $0x1748] sm:$0xff]
    %v941 = vld [vmem:[%s1 + $0x1750] sm:$0xff]
    %v942 = vld [vmem:[%s1 + $0x1758] sm:$0xff]
    %v943 = vld [vmem:[%s1 + $0x1760] sm:$0xff]
    %v944 = vld [vmem:[%s1 + $0x1768] sm:$0xff]
    %v945 = vld [vmem:[%s1 + $0x1770] sm:$0xff]
    %v946 = vld [vmem:[%s1 + $0x1778] sm:$0xff]
    %v947 = vld [vmem:[%s1 + $0x1780] sm:$0xff]
    %v948 = vld [vmem:[%s1 + $0x1788] sm:$0xff]
    %v949 = vld [vmem:[%s1 + $0x1790] sm:$0xff]
    %v950 = vld [vmem:[%s1 + $0x1798] sm:$0xff]
    %v951 = vld [vmem:[%s1 + $0x17a0] sm:$0xff]
    %v952 = vld [vmem:[%s1 + $0x17a8] sm:$0xff]
    %v953 = vld [vmem:[%s1 + $0x17b0] sm:$0xff]
    %v954 = vld [vmem:[%s1 + $0x17b8] sm:$0xff]
    %v955 = vld [vmem:[%s1 + $0x17c0] sm:$0xff]
    %v956 = vld [vmem:[%s1 + $0x17c8] sm:$0xff]
    %v957 = vld [vmem:[%s1 + $0x17d0] sm:$0xff]
    %v958 = vld [vmem:[%s1 + $0x17d8] sm:$0xff]
    %v959 = vld [vmem:[%s1 + $0x17e0] sm:$0xff]
    %v960 = vld [vmem:[%s1 + $0x17e8] sm:$0xff]
    %v961 = vld [vmem:[%s1 + $0x17f0] sm:$0xff]
    %v962 = vld [vmem:[%s1 + $0x17f8] sm:$0xff]
    %v963 = vld [vmem:[%s1 + $0x1800] sm:$0xff]
    %v964 = vld [vmem:[%s1 + $0x1808] sm:$0xff]
    %v965 = vld [vmem:[%s1 + $0x1810] sm:$0xff]
    %v966 = vld [vmem:[%s1 + $0x1818] sm:$0xff]
    %v967 = vld [vmem:[%s1 + $0x1820] sm:$0xff]
    %v968 = vld [vmem:[%s1 + $0x1828] sm:$0xff]
    %v969 = vld [vmem:[%s1 + $0x1830] sm:$0xff]
    %v970 = vld [vmem:[%s1 + $0x1838] sm:$0xff]
    %v971 = vld [vmem:[%s1 + $0x1840] sm:$0xff]
    %v972 = vld [vmem:[%s1 + $0x1848] sm:$0xff]
    %v973 = vld [vmem:[%s1 + $0x1850] sm:$0xff]
    %v974 = vld [vmem:[%s1 + $0x1858] sm:$0xff]
    %v975 = vld [vmem:[%s1 + $0x1860] sm:$0xff]
    %v976 = vld [vmem:[%s1 + $0x1868] sm:$0xff]
    %v977 = vld [vmem:[%s1 + $0x1870] sm:$0xff]
    %v978 = vld [vmem:[%s1 + $0x1878] sm:$0xff]
    %v979 = vld [vmem:[%s2] sm:$0xf]
    %v981 = vlaneseq
    %v982 = vshrl.u32 %v981, 7
    %v983 = vsub.s32 0, %v982
    %v984 = vrot.slane %v979, %v983
    %v985 = vlaneseq
    %v986 = vshrl.u32 %v985, 7
    %v987 = vsub.s32 1, %v986
    %v988 = vrot.slane %v979, %v987
    %v989 = vlaneseq
    %v990 = vshrl.u32 %v989, 7
    %v991 = vsub.s32 2, %v990
    %v992 = vrot.slane %v979, %v991
    %v993 = vlaneseq
    %v994 = vshrl.u32 %v993, 7
    %v995 = vsub.s32 3, %v994
    %v996 = vrot.slane %v979, %v995
    %v1785 = vunpack.c.l.b16 %v195
    %v1786 = vunpack.c.h.b16 %v195
    %v1787 = vunpack.c.l.b16 %v196
    %v1788 = vunpack.c.h.b16 %v196
    %v1789 = vunpack.c.l.b16 %v197
    %v1790 = vunpack.c.h.b16 %v197
    %v1791 = vunpack.c.l.b16 %v198
    %v1792 = vunpack.c.h.b16 %v198
    %v1793 = vunpack.c.l.b16 %v199
    %v1794 = vunpack.c.h.b16 %v199
    %v1795 = vunpack.c.l.b16 %v200
    %v1796 = vunpack.c.h.b16 %v200
    %v1797 = vunpack.c.l.b16 %v201
    %v1798 = vunpack.c.h.b16 %v201
    %v1799 = vunpack.c.l.b16 %v202
    %v1800 = vunpack.c.h.b16 %v202
    %v1801 = vunpack.c.l.b16 %v203
    %v1802 = vunpack.c.h.b16 %v203
    %v1803 = vunpack.c.l.b16 %v204
    %v1804 = vunpack.c.h.b16 %v204
    %v1805 = vunpack.c.l.b16 %v205
    %v1806 = vunpack.c.h.b16 %v205
    %v1807 = vunpack.c.l.b16 %v206
    %v1808 = vunpack.c.h.b16 %v206
    %v1809 = vunpack.c.l.b16 %v207
    %v1810 = vunpack.c.h.b16 %v207
    %v1811 = vunpack.c.l.b16 %v208
    %v1812 = vunpack.c.h.b16 %v208
    %v1813 = vunpack.c.l.b16 %v209
    %v1814 = vunpack.c.h.b16 %v209
    %v1815 = vunpack.c.l.b16 %v210
    %v1816 = vunpack.c.h.b16 %v210
    %v1817 = vunpack.c.l.b16 %v211
    %v1818 = vunpack.c.h.b16 %v211
    %v1819 = vunpack.c.l.b16 %v212
    %v1820 = vunpack.c.h.b16 %v212
    %v1821 = vunpack.c.l.b16 %v213
    %v1822 = vunpack.c.h.b16 %v213
    %v1823 = vunpack.c.l.b16 %v214
    %v1824 = vunpack.c.h.b16 %v214
    %v1825 = vunpack.c.l.b16 %v215
    %v1826 = vunpack.c.h.b16 %v215
    %v1827 = vunpack.c.l.b16 %v216
    %v1828 = vunpack.c.h.b16 %v216
    %v1829 = vunpack.c.l.b16 %v217
    %v1830 = vunpack.c.h.b16 %v217
    %v1831 = vunpack.c.l.b16 %v218
    %v1832 = vunpack.c.h.b16 %v218
    %v1833 = vunpack.c.l.b16 %v219
    %v1834 = vunpack.c.h.b16 %v219
    %v1835 = vunpack.c.l.b16 %v220
    %v1836 = vunpack.c.h.b16 %v220
    %v1837 = vunpack.c.l.b16 %v221
    %v1838 = vunpack.c.h.b16 %v221
    %v1839 = vunpack.c.l.b16 %v222
    %v1840 = vunpack.c.h.b16 %v222
    %v1841 = vunpack.c.l.b16 %v223
    %v1842 = vunpack.c.h.b16 %v223
    %v1843 = vunpack.c.l.b16 %v224
    %v1844 = vunpack.c.h.b16 %v224
    %v1845 = vunpack.c.l.b16 %v225
    %v1846 = vunpack.c.h.b16 %v225
    %v1847 = vunpack.c.l.b16 %v226
    %v1848 = vunpack.c.h.b16 %v226
    %v1849 = vunpack.c.l.b16 %v227
    %v1850 = vunpack.c.h.b16 %v227
    %v1851 = vunpack.c.l.b16 %v228
    %v1852 = vunpack.c.h.b16 %v228
    %v1853 = vunpack.c.l.b16 %v229
    %v1854 = vunpack.c.h.b16 %v229
    %v1855 = vunpack.c.l.b16 %v230
    %v1856 = vunpack.c.h.b16 %v230
    %v1857 = vunpack.c.l.b16 %v231
    %v1858 = vunpack.c.h.b16 %v231
    %v1859 = vunpack.c.l.b16 %v232
    %v1860 = vunpack.c.h.b16 %v232
    %v1861 = vunpack.c.l.b16 %v233
    %v1862 = vunpack.c.h.b16 %v233
    %v1863 = vunpack.c.l.b16 %v234
    %v1864 = vunpack.c.h.b16 %v234
    %v1865 = vunpack.c.l.b16 %v235
    %v1866 = vunpack.c.h.b16 %v235
    %v1867 = vunpack.c.l.b16 %v236
    %v1868 = vunpack.c.h.b16 %v236
    %v1869 = vunpack.c.l.b16 %v237
    %v1870 = vunpack.c.h.b16 %v237
    %v1871 = vunpack.c.l.b16 %v238
    %v1872 = vunpack.c.h.b16 %v238
    %v1873 = vunpack.c.l.b16 %v239
    %v1874 = vunpack.c.h.b16 %v239
    %v1875 = vunpack.c.l.b16 %v240
    %v1876 = vunpack.c.h.b16 %v240
    %v1877 = vunpack.c.l.b16 %v241
    %v1878 = vunpack.c.h.b16 %v241
    %v1879 = vunpack.c.l.b16 %v242
    %v1880 = vunpack.c.h.b16 %v242
    %v1881 = vunpack.c.l.b16 %v243
    %v1882 = vunpack.c.h.b16 %v243
    %v1883 = vunpack.c.l.b16 %v244
    %v1884 = vunpack.c.h.b16 %v244
    %v1885 = vunpack.c.l.b16 %v245
    %v1886 = vunpack.c.h.b16 %v245
    %v1887 = vunpack.c.l.b16 %v246
    %v1888 = vunpack.c.h.b16 %v246
    %v1889 = vunpack.c.l.b16 %v247
    %v1890 = vunpack.c.h.b16 %v247
    %v1891 = vunpack.c.l.b16 %v248
    %v1892 = vunpack.c.h.b16 %v248
    %v1893 = vunpack.c.l.b16 %v249
    %v1894 = vunpack.c.h.b16 %v249
    %v1895 = vunpack.c.l.b16 %v250
    %v1896 = vunpack.c.h.b16 %v250
    %v1897 = vunpack.c.l.b16 %v251
    %v1898 = vunpack.c.h.b16 %v251
    %v1899 = vunpack.c.l.b16 %v252
    %v1900 = vunpack.c.h.b16 %v252
    %v1901 = vunpack.c.l.b16 %v253
    %v1902 = vunpack.c.h.b16 %v253
    %v1903 = vunpack.c.l.b16 %v254
    %v1904 = vunpack.c.h.b16 %v254
    %v1905 = vunpack.c.l.b16 %v255
    %v1906 = vunpack.c.h.b16 %v255
    %v1907 = vunpack.c.l.b16 %v256
    %v1908 = vunpack.c.h.b16 %v256
    %v1909 = vunpack.c.l.b16 %v257
    %v1910 = vunpack.c.h.b16 %v257
    %v1911 = vunpack.c.l.b16 %v258
    %v1912 = vunpack.c.h.b16 %v258
    %v1913 = vunpack.c.l.b16 %v259
    %v1914 = vunpack.c.h.b16 %v259
    %v1915 = vunpack.c.l.b16 %v260
    %v1916 = vunpack.c.h.b16 %v260
    %v1917 = vunpack.c.l.b16 %v261
    %v1918 = vunpack.c.h.b16 %v261
    %v1919 = vunpack.c.l.b16 %v262
    %v1920 = vunpack.c.h.b16 %v262
    %v1921 = vunpack.c.l.b16 %v263
    %v1922 = vunpack.c.h.b16 %v263
    %v1923 = vunpack.c.l.b16 %v264
    %v1924 = vunpack.c.h.b16 %v264
    %v1925 = vunpack.c.l.b16 %v265
    %v1926 = vunpack.c.h.b16 %v265
    %v1927 = vunpack.c.l.b16 %v266
    %v1928 = vunpack.c.h.b16 %v266
    %v1929 = vunpack.c.l.b16 %v267
    %v1930 = vunpack.c.h.b16 %v267
    %v1931 = vunpack.c.l.b16 %v268
    %v1932 = vunpack.c.h.b16 %v268
    %v1933 = vunpack.c.l.b16 %v269
    %v1934 = vunpack.c.h.b16 %v269
    %v1935 = vunpack.c.l.b16 %v270
    %v1936 = vunpack.c.h.b16 %v270
    %v1937 = vunpack.c.l.b16 %v271
    %v1938 = vunpack.c.h.b16 %v271
    %v1939 = vunpack.c.l.b16 %v272
    %v1940 = vunpack.c.h.b16 %v272
    %v1941 = vunpack.c.l.b16 %v273
    %v1942 = vunpack.c.h.b16 %v273
    %v1943 = vunpack.c.l.b16 %v274
    %v1944 = vunpack.c.h.b16 %v274
    %v1945 = vunpack.c.l.b16 %v275
    %v1946 = vunpack.c.h.b16 %v275
    %v1947 = vunpack.c.l.b16 %v276
    %v1948 = vunpack.c.h.b16 %v276
    %v1949 = vunpack.c.l.b16 %v277
    %v1950 = vunpack.c.h.b16 %v277
    %v1951 = vunpack.c.l.b16 %v278
    %v1952 = vunpack.c.h.b16 %v278
    %v1953 = vunpack.c.l.b16 %v279
    %v1954 = vunpack.c.h.b16 %v279
    %v1955 = vunpack.c.l.b16 %v280
    %v1956 = vunpack.c.h.b16 %v280
    %v1957 = vunpack.c.l.b16 %v281
    %v1958 = vunpack.c.h.b16 %v281
    %v1959 = vunpack.c.l.b16 %v282
    %v1960 = vunpack.c.h.b16 %v282
    %v1961 = vunpack.c.l.b16 %v283
    %v1962 = vunpack.c.h.b16 %v283
    %v1963 = vunpack.c.l.b16 %v284
    %v1964 = vunpack.c.h.b16 %v284
    %v1965 = vunpack.c.l.b16 %v285
    %v1966 = vunpack.c.h.b16 %v285
    %v1967 = vunpack.c.l.b16 %v286
    %v1968 = vunpack.c.h.b16 %v286
    %v1969 = vunpack.c.l.b16 %v287
    %v1970 = vunpack.c.h.b16 %v287
    %v1971 = vunpack.c.l.b16 %v288
    %v1972 = vunpack.c.h.b16 %v288
    %v1973 = vunpack.c.l.b16 %v289
    %v1974 = vunpack.c.h.b16 %v289
    %v1975 = vunpack.c.l.b16 %v290
    %v1976 = vunpack.c.h.b16 %v290
    %v1977 = vunpack.c.l.b16 %v291
    %v1978 = vunpack.c.h.b16 %v291
    %v1979 = vunpack.c.l.b16 %v292
    %v1980 = vunpack.c.h.b16 %v292
    %v1981 = vunpack.c.l.b16 %v293
    %v1982 = vunpack.c.h.b16 %v293
    %v1983 = vunpack.c.l.b16 %v294
    %v1984 = vunpack.c.h.b16 %v294
    %v1985 = vunpack.c.l.b16 %v295
    %v1986 = vunpack.c.h.b16 %v295
    %v1987 = vunpack.c.l.b16 %v296
    %v1988 = vunpack.c.h.b16 %v296
    %v1989 = vunpack.c.l.b16 %v297
    %v1990 = vunpack.c.h.b16 %v297
    %v1991 = vunpack.c.l.b16 %v298
    %v1992 = vunpack.c.h.b16 %v298
    %v1993 = vunpack.c.l.b16 %v299
    %v1994 = vunpack.c.h.b16 %v299
    %v1995 = vunpack.c.l.b16 %v300
    %v1996 = vunpack.c.h.b16 %v300
    %v1997 = vunpack.c.l.b16 %v301
    %v1998 = vunpack.c.h.b16 %v301
    %v1999 = vunpack.c.l.b16 %v302
    %v2000 = vunpack.c.h.b16 %v302
    %v2001 = vunpack.c.l.b16 %v303
    %v2002 = vunpack.c.h.b16 %v303
    %v2003 = vunpack.c.l.b16 %v304
    %v2004 = vunpack.c.h.b16 %v304
    %v2005 = vunpack.c.l.b16 %v305
    %v2006 = vunpack.c.h.b16 %v305
    %v2007 = vunpack.c.l.b16 %v306
    %v2008 = vunpack.c.h.b16 %v306
    %v2009 = vunpack.c.l.b16 %v307
    %v2010 = vunpack.c.h.b16 %v307
    %v2011 = vunpack.c.l.b16 %v308
    %v2012 = vunpack.c.h.b16 %v308
    %v2013 = vunpack.c.l.b16 %v309
    %v2014 = vunpack.c.h.b16 %v309
    %v2015 = vunpack.c.l.b16 %v310
    %v2016 = vunpack.c.h.b16 %v310
    %v2017 = vunpack.c.l.b16 %v311
    %v2018 = vunpack.c.h.b16 %v311
    %v2019 = vunpack.c.l.b16 %v312
    %v2020 = vunpack.c.h.b16 %v312
    %v2021 = vunpack.c.l.b16 %v313
    %v2022 = vunpack.c.h.b16 %v313
    %v2023 = vunpack.c.l.b16 %v314
    %v2024 = vunpack.c.h.b16 %v314
    %v2025 = vunpack.c.l.b16 %v315
    %v2026 = vunpack.c.h.b16 %v315
    %v2027 = vunpack.c.l.b16 %v316
    %v2028 = vunpack.c.h.b16 %v316
    %v2029 = vunpack.c.l.b16 %v317
    %v2030 = vunpack.c.h.b16 %v317
    %v2031 = vunpack.c.l.b16 %v318
    %v2032 = vunpack.c.h.b16 %v318
    %v2033 = vunpack.c.l.b16 %v319
    %v2034 = vunpack.c.h.b16 %v319
    %v2035 = vunpack.c.l.b16 %v320
    %v2036 = vunpack.c.h.b16 %v320
    %v2037 = vunpack.c.l.b16 %v321
    %v2038 = vunpack.c.h.b16 %v321
    %v2039 = vunpack.c.l.b16 %v322
    %v2040 = vunpack.c.h.b16 %v322
    %v2041 = vunpack.c.l.b16 %v323
    %v2042 = vunpack.c.h.b16 %v323
    %v2043 = vunpack.c.l.b16 %v324
    %v2044 = vunpack.c.h.b16 %v324
    %v2045 = vunpack.c.l.b16 %v325
    %v2046 = vunpack.c.h.b16 %v325
    %v2047 = vunpack.c.l.b16 %v326
    %v2048 = vunpack.c.h.b16 %v326
    %v2049 = vunpack.c.l.b16 %v327
    %v2050 = vunpack.c.h.b16 %v327
    %v2051 = vunpack.c.l.b16 %v328
    %v2052 = vunpack.c.h.b16 %v328
    %v2053 = vunpack.c.l.b16 %v329
    %v2054 = vunpack.c.h.b16 %v329
    %v2055 = vunpack.c.l.b16 %v330
    %v2056 = vunpack.c.h.b16 %v330
    %v2057 = vunpack.c.l.b16 %v331
    %v2058 = vunpack.c.h.b16 %v331
    %v2059 = vunpack.c.l.b16 %v332
    %v2060 = vunpack.c.h.b16 %v332
    %v2061 = vunpack.c.l.b16 %v333
    %v2062 = vunpack.c.h.b16 %v333
    %v2063 = vunpack.c.l.b16 %v334
    %v2064 = vunpack.c.h.b16 %v334
    %v2065 = vunpack.c.l.b16 %v335
    %v2066 = vunpack.c.h.b16 %v335
    %v2067 = vunpack.c.l.b16 %v336
    %v2068 = vunpack.c.h.b16 %v336
    %v2069 = vunpack.c.l.b16 %v337
    %v2070 = vunpack.c.h.b16 %v337
    %v2071 = vunpack.c.l.b16 %v338
    %v2072 = vunpack.c.h.b16 %v338
    %v2073 = vunpack.c.l.b16 %v339
    %v2074 = vunpack.c.h.b16 %v339
    %v2075 = vunpack.c.l.b16 %v340
    %v2076 = vunpack.c.h.b16 %v340
    %v2077 = vunpack.c.l.b16 %v341
    %v2078 = vunpack.c.h.b16 %v341
    %v2079 = vunpack.c.l.b16 %v342
    %v2080 = vunpack.c.h.b16 %v342
    %v2081 = vunpack.c.l.b16 %v343
    %v2082 = vunpack.c.h.b16 %v343
    %v2083 = vunpack.c.l.b16 %v344
    %v2084 = vunpack.c.h.b16 %v344
    %v2085 = vunpack.c.l.b16 %v345
    %v2086 = vunpack.c.h.b16 %v345
    %v2087 = vunpack.c.l.b16 %v346
    %v2088 = vunpack.c.h.b16 %v346
    %v2089 = vunpack.c.l.b16 %v347
    %v2090 = vunpack.c.h.b16 %v347
    %v2091 = vunpack.c.l.b16 %v348
    %v2092 = vunpack.c.h.b16 %v348
    %v2093 = vunpack.c.l.b16 %v349
    %v2094 = vunpack.c.h.b16 %v349
    %v2095 = vunpack.c.l.b16 %v350
    %v2096 = vunpack.c.h.b16 %v350
    %v2097 = vunpack.c.l.b16 %v351
    %v2098 = vunpack.c.h.b16 %v351
    %v2099 = vunpack.c.l.b16 %v352
    %v2100 = vunpack.c.h.b16 %v352
    %v2101 = vunpack.c.l.b16 %v353
    %v2102 = vunpack.c.h.b16 %v353
    %v2103 = vunpack.c.l.b16 %v354
    %v2104 = vunpack.c.h.b16 %v354
    %v2105 = vunpack.c.l.b16 %v355
    %v2106 = vunpack.c.h.b16 %v355
    %v2107 = vunpack.c.l.b16 %v356
    %v2108 = vunpack.c.h.b16 %v356
    %v2109 = vunpack.c.l.b16 %v357
    %v2110 = vunpack.c.h.b16 %v357
    %v2111 = vunpack.c.l.b16 %v358
    %v2112 = vunpack.c.h.b16 %v358
    %v2113 = vunpack.c.l.b16 %v359
    %v2114 = vunpack.c.h.b16 %v359
    %v2115 = vunpack.c.l.b16 %v360
    %v2116 = vunpack.c.h.b16 %v360
    %v2117 = vunpack.c.l.b16 %v361
    %v2118 = vunpack.c.h.b16 %v361
    %v2119 = vunpack.c.l.b16 %v362
    %v2120 = vunpack.c.h.b16 %v362
    %v2121 = vunpack.c.l.b16 %v363
    %v2122 = vunpack.c.h.b16 %v363
    %v2123 = vunpack.c.l.b16 %v364
    %v2124 = vunpack.c.h.b16 %v364
    %v2125 = vunpack.c.l.b16 %v365
    %v2126 = vunpack.c.h.b16 %v365
    %v2127 = vunpack.c.l.b16 %v366
    %v2128 = vunpack.c.h.b16 %v366
    %v2129 = vunpack.c.l.b16 %v367
    %v2130 = vunpack.c.h.b16 %v367
    %v2131 = vunpack.c.l.b16 %v368
    %v2132 = vunpack.c.h.b16 %v368
    %v2133 = vunpack.c.l.b16 %v369
    %v2134 = vunpack.c.h.b16 %v369
    %v2135 = vunpack.c.l.b16 %v370
    %v2136 = vunpack.c.h.b16 %v370
    %v2137 = vunpack.c.l.b16 %v371
    %v2138 = vunpack.c.h.b16 %v371
    %v2139 = vunpack.c.l.b16 %v372
    %v2140 = vunpack.c.h.b16 %v372
    %v2141 = vunpack.c.l.b16 %v373
    %v2142 = vunpack.c.h.b16 %v373
    %v2143 = vunpack.c.l.b16 %v374
    %v2144 = vunpack.c.h.b16 %v374
    %v2145 = vunpack.c.l.b16 %v375
    %v2146 = vunpack.c.h.b16 %v375
    %v2147 = vunpack.c.l.b16 %v376
    %v2148 = vunpack.c.h.b16 %v376
    %v2149 = vunpack.c.l.b16 %v377
    %v2150 = vunpack.c.h.b16 %v377
    %v2151 = vunpack.c.l.b16 %v378
    %v2152 = vunpack.c.h.b16 %v378
    %v2153 = vunpack.c.l.b16 %v379
    %v2154 = vunpack.c.h.b16 %v379
    %v2155 = vunpack.c.l.b16 %v380
    %v2156 = vunpack.c.h.b16 %v380
    %v2157 = vunpack.c.l.b16 %v381
    %v2158 = vunpack.c.h.b16 %v381
    %v2159 = vunpack.c.l.b16 %v382
    %v2160 = vunpack.c.h.b16 %v382
    %v2161 = vunpack.c.l.b16 %v383
    %v2162 = vunpack.c.h.b16 %v383
    %v2163 = vunpack.c.l.b16 %v384
    %v2164 = vunpack.c.h.b16 %v384
    %v2165 = vunpack.c.l.b16 %v385
    %v2166 = vunpack.c.h.b16 %v385
    %v2167 = vunpack.c.l.b16 %v386
    %v2168 = vunpack.c.h.b16 %v386
    %v2169 = vunpack.c.l.b16 %v387
    %v2170 = vunpack.c.h.b16 %v387
    %v2171 = vunpack.c.l.b16 %v388
    %v2172 = vunpack.c.h.b16 %v388
    %v2173 = vunpack.c.l.b16 %v389
    %v2174 = vunpack.c.h.b16 %v389
    %v2175 = vunpack.c.l.b16 %v390
    %v2176 = vunpack.c.h.b16 %v390
    %v2177 = vunpack.c.l.b16 %v391
    %v2178 = vunpack.c.h.b16 %v391
    %v2179 = vunpack.c.l.b16 %v392
    %v2180 = vunpack.c.h.b16 %v392
    %v2181 = vunpack.c.l.b16 %v393
    %v2182 = vunpack.c.h.b16 %v393
    %v2183 = vunpack.c.l.b16 %v394
    %v2184 = vunpack.c.h.b16 %v394
    %v2185 = vunpack.c.l.b16 %v395
    %v2186 = vunpack.c.h.b16 %v395
    %v2187 = vunpack.c.l.b16 %v396
    %v2188 = vunpack.c.h.b16 %v396
    %v2189 = vunpack.c.l.b16 %v397
    %v2190 = vunpack.c.h.b16 %v397
    %v2191 = vunpack.c.l.b16 %v398
    %v2192 = vunpack.c.h.b16 %v398
    %v2193 = vunpack.c.l.b16 %v399
    %v2194 = vunpack.c.h.b16 %v399
    %v2195 = vunpack.c.l.b16 %v400
    %v2196 = vunpack.c.h.b16 %v400
    %v2197 = vunpack.c.l.b16 %v401
    %v2198 = vunpack.c.h.b16 %v401
    %v2199 = vunpack.c.l.b16 %v402
    %v2200 = vunpack.c.h.b16 %v402
    %v2201 = vunpack.c.l.b16 %v403
    %v2202 = vunpack.c.h.b16 %v403
    %v2203 = vunpack.c.l.b16 %v404
    %v2204 = vunpack.c.h.b16 %v404
    %v2205 = vunpack.c.l.b16 %v405
    %v2206 = vunpack.c.h.b16 %v405
    %v2207 = vunpack.c.l.b16 %v406
    %v2208 = vunpack.c.h.b16 %v406
    %v2209 = vunpack.c.l.b16 %v407
    %v2210 = vunpack.c.h.b16 %v407
    %v2211 = vunpack.c.l.b16 %v408
    %v2212 = vunpack.c.h.b16 %v408
    %v2213 = vunpack.c.l.b16 %v409
    %v2214 = vunpack.c.h.b16 %v409
    %v2215 = vunpack.c.l.b16 %v410
    %v2216 = vunpack.c.h.b16 %v410
    %v2217 = vunpack.c.l.b16 %v411
    %v2218 = vunpack.c.h.b16 %v411
    %v2219 = vunpack.c.l.b16 %v412
    %v2220 = vunpack.c.h.b16 %v412
    %v2221 = vunpack.c.l.b16 %v413
    %v2222 = vunpack.c.h.b16 %v413
    %v2223 = vunpack.c.l.b16 %v414
    %v2224 = vunpack.c.h.b16 %v414
    %v2225 = vunpack.c.l.b16 %v415
    %v2226 = vunpack.c.h.b16 %v415
    %v2227 = vunpack.c.l.b16 %v416
    %v2228 = vunpack.c.h.b16 %v416
    %v2229 = vunpack.c.l.b16 %v417
    %v2230 = vunpack.c.h.b16 %v417
    %v2231 = vunpack.c.l.b16 %v418
    %v2232 = vunpack.c.h.b16 %v418
    %v2233 = vunpack.c.l.b16 %v419
    %v2234 = vunpack.c.h.b16 %v419
    %v2235 = vunpack.c.l.b16 %v420
    %v2236 = vunpack.c.h.b16 %v420
    %v2237 = vunpack.c.l.b16 %v421
    %v2238 = vunpack.c.h.b16 %v421
    %v2239 = vunpack.c.l.b16 %v422
    %v2240 = vunpack.c.h.b16 %v422
    %v2241 = vunpack.c.l.b16 %v423
    %v2242 = vunpack.c.h.b16 %v423
    %v2243 = vunpack.c.l.b16 %v424
    %v2244 = vunpack.c.h.b16 %v424
    %v2245 = vunpack.c.l.b16 %v425
    %v2246 = vunpack.c.h.b16 %v425
    %v2247 = vunpack.c.l.b16 %v426
    %v2248 = vunpack.c.h.b16 %v426
    %v2249 = vunpack.c.l.b16 %v427
    %v2250 = vunpack.c.h.b16 %v427
    %v2251 = vunpack.c.l.b16 %v428
    %v2252 = vunpack.c.h.b16 %v428
    %v2253 = vunpack.c.l.b16 %v429
    %v2254 = vunpack.c.h.b16 %v429
    %v2255 = vunpack.c.l.b16 %v430
    %v2256 = vunpack.c.h.b16 %v430
    %v2257 = vunpack.c.l.b16 %v431
    %v2258 = vunpack.c.h.b16 %v431
    %v2259 = vunpack.c.l.b16 %v432
    %v2260 = vunpack.c.h.b16 %v432
    %v2261 = vunpack.c.l.b16 %v433
    %v2262 = vunpack.c.h.b16 %v433
    %v2263 = vunpack.c.l.b16 %v434
    %v2264 = vunpack.c.h.b16 %v434
    %v2265 = vunpack.c.l.b16 %v435
    %v2266 = vunpack.c.h.b16 %v435
    %v2267 = vunpack.c.l.b16 %v436
    %v2268 = vunpack.c.h.b16 %v436
    %v2269 = vunpack.c.l.b16 %v437
    %v2270 = vunpack.c.h.b16 %v437
    %v2271 = vunpack.c.l.b16 %v438
    %v2272 = vunpack.c.h.b16 %v438
    %v2273 = vunpack.c.l.b16 %v439
    %v2274 = vunpack.c.h.b16 %v439
    %v2275 = vunpack.c.l.b16 %v440
    %v2276 = vunpack.c.h.b16 %v440
    %v2277 = vunpack.c.l.b16 %v441
    %v2278 = vunpack.c.h.b16 %v441
    %v2279 = vunpack.c.l.b16 %v442
    %v2280 = vunpack.c.h.b16 %v442
    %v2281 = vunpack.c.l.b16 %v443
    %v2282 = vunpack.c.h.b16 %v443
    %v2283 = vunpack.c.l.b16 %v444
    %v2284 = vunpack.c.h.b16 %v444
    %v2285 = vunpack.c.l.b16 %v445
    %v2286 = vunpack.c.h.b16 %v445
    %v2287 = vunpack.c.l.b16 %v446
    %v2288 = vunpack.c.h.b16 %v446
    %v2289 = vunpack.c.l.b16 %v447
    %v2290 = vunpack.c.h.b16 %v447
    %v2291 = vunpack.c.l.b16 %v448
    %v2292 = vunpack.c.h.b16 %v448
    %v2293 = vunpack.c.l.b16 %v449
    %v2294 = vunpack.c.h.b16 %v449
    %v2295 = vunpack.c.l.b16 %v450
    %v2296 = vunpack.c.h.b16 %v450
    %v2297 = vunpack.c.l.b16 %v451
    %v2298 = vunpack.c.h.b16 %v451
    %v2299 = vunpack.c.l.b16 %v452
    %v2300 = vunpack.c.h.b16 %v452
    %v2301 = vunpack.c.l.b16 %v453
    %v2302 = vunpack.c.h.b16 %v453
    %v2303 = vunpack.c.l.b16 %v454
    %v2304 = vunpack.c.h.b16 %v454
    %v2305 = vunpack.c.l.b16 %v455
    %v2306 = vunpack.c.h.b16 %v455
    %v2307 = vunpack.c.l.b16 %v456
    %v2308 = vunpack.c.h.b16 %v456
    %v2309 = vunpack.c.l.b16 %v457
    %v2310 = vunpack.c.h.b16 %v457
    %v2311 = vunpack.c.l.b16 %v458
    %v2312 = vunpack.c.h.b16 %v458
    %v2313 = vunpack.c.l.b16 %v459
    %v2314 = vunpack.c.h.b16 %v459
    %v2315 = vunpack.c.l.b16 %v460
    %v2316 = vunpack.c.h.b16 %v460
    %v2317 = vunpack.c.l.b16 %v461
    %v2318 = vunpack.c.h.b16 %v461
    %v2319 = vunpack.c.l.b16 %v462
    %v2320 = vunpack.c.h.b16 %v462
    %v2321 = vunpack.c.l.b16 %v463
    %v2322 = vunpack.c.h.b16 %v463
    %v2323 = vunpack.c.l.b16 %v464
    %v2324 = vunpack.c.h.b16 %v464
    %v2325 = vunpack.c.l.b16 %v465
    %v2326 = vunpack.c.h.b16 %v465
    %v2327 = vunpack.c.l.b16 %v466
    %v2328 = vunpack.c.h.b16 %v466
    %v2329 = vunpack.c.l.b16 %v467
    %v2330 = vunpack.c.h.b16 %v467
    %v2331 = vunpack.c.l.b16 %v468
    %v2332 = vunpack.c.h.b16 %v468
    %v2333 = vunpack.c.l.b16 %v469
    %v2334 = vunpack.c.h.b16 %v469
    %v2335 = vunpack.c.l.b16 %v470
    %v2336 = vunpack.c.h.b16 %v470
    %v2337 = vunpack.c.l.b16 %v471
    %v2338 = vunpack.c.h.b16 %v471
    %v2339 = vunpack.c.l.b16 %v472
    %v2340 = vunpack.c.h.b16 %v472
    %v2341 = vunpack.c.l.b16 %v473
    %v2342 = vunpack.c.h.b16 %v473
    %v2343 = vunpack.c.l.b16 %v474
    %v2344 = vunpack.c.h.b16 %v474
    %v2345 = vunpack.c.l.b16 %v475
    %v2346 = vunpack.c.h.b16 %v475
    %v2347 = vunpack.c.l.b16 %v476
    %v2348 = vunpack.c.h.b16 %v476
    %v2349 = vunpack.c.l.b16 %v477
    %v2350 = vunpack.c.h.b16 %v477
    %v2351 = vunpack.c.l.b16 %v478
    %v2352 = vunpack.c.h.b16 %v478
    %v2353 = vunpack.c.l.b16 %v479
    %v2354 = vunpack.c.h.b16 %v479
    %v2355 = vunpack.c.l.b16 %v480
    %v2356 = vunpack.c.h.b16 %v480
    %v2357 = vunpack.c.l.b16 %v481
    %v2358 = vunpack.c.h.b16 %v481
    %v2359 = vunpack.c.l.b16 %v482
    %v2360 = vunpack.c.h.b16 %v482
    %v2361 = vunpack.c.l.b16 %v483
    %v2362 = vunpack.c.h.b16 %v483
    %v2363 = vunpack.c.l.b16 %v484
    %v2364 = vunpack.c.h.b16 %v484
    %v2365 = vunpack.c.l.b16 %v485
    %v2366 = vunpack.c.h.b16 %v485
    %v2367 = vunpack.c.l.b16 %v486
    %v2368 = vunpack.c.h.b16 %v486
    %v2369 = vunpack.c.l.b16 %v487
    %v2370 = vunpack.c.h.b16 %v487
    %v2371 = vunpack.c.l.b16 %v488
    %v2372 = vunpack.c.h.b16 %v488
    %v2373 = vunpack.c.l.b16 %v489
    %v2374 = vunpack.c.h.b16 %v489
    %v2375 = vunpack.c.l.b16 %v490
    %v2376 = vunpack.c.h.b16 %v490
    %v2377 = vunpack.c.l.b16 %v491
    %v2378 = vunpack.c.h.b16 %v491
    %v2379 = vunpack.c.l.b16 %v492
    %v2380 = vunpack.c.h.b16 %v492
    %v2381 = vunpack.c.l.b16 %v493
    %v2382 = vunpack.c.h.b16 %v493
    %v2383 = vunpack.c.l.b16 %v494
    %v2384 = vunpack.c.h.b16 %v494
    %v2385 = vunpack.c.l.b16 %v495
    %v2386 = vunpack.c.h.b16 %v495
    %v2387 = vunpack.c.l.b16 %v496
    %v2388 = vunpack.c.h.b16 %v496
    %v2389 = vunpack.c.l.b16 %v497
    %v2390 = vunpack.c.h.b16 %v497
    %v2391 = vunpack.c.l.b16 %v498
    %v2392 = vunpack.c.h.b16 %v498
    %v2393 = vunpack.c.l.b16 %v499
    %v2394 = vunpack.c.h.b16 %v499
    %v2395 = vunpack.c.l.b16 %v500
    %v2396 = vunpack.c.h.b16 %v500
    %v2397 = vunpack.c.l.b16 %v501
    %v2398 = vunpack.c.h.b16 %v501
    %v2399 = vunpack.c.l.b16 %v502
    %v2400 = vunpack.c.h.b16 %v502
    %v2401 = vunpack.c.l.b16 %v503
    %v2402 = vunpack.c.h.b16 %v503
    %v2403 = vunpack.c.l.b16 %v504
    %v2404 = vunpack.c.h.b16 %v504
    %v2405 = vunpack.c.l.b16 %v505
    %v2406 = vunpack.c.h.b16 %v505
    %v2407 = vunpack.c.l.b16 %v506
    %v2408 = vunpack.c.h.b16 %v506
    %v2409 = vunpack.c.l.b16 %v507
    %v2410 = vunpack.c.h.b16 %v507
    %v2411 = vunpack.c.l.b16 %v508
    %v2412 = vunpack.c.h.b16 %v508
    %v2413 = vunpack.c.l.b16 %v509
    %v2414 = vunpack.c.h.b16 %v509
    %v2415 = vunpack.c.l.b16 %v510
    %v2416 = vunpack.c.h.b16 %v510
    %v2417 = vunpack.c.l.b16 %v511
    %v2418 = vunpack.c.h.b16 %v511
    %v2419 = vunpack.c.l.b16 %v512
    %v2420 = vunpack.c.h.b16 %v512
    %v2421 = vunpack.c.l.b16 %v513
    %v2422 = vunpack.c.h.b16 %v513
    %v2423 = vunpack.c.l.b16 %v514
    %v2424 = vunpack.c.h.b16 %v514
    %v2425 = vunpack.c.l.b16 %v515
    %v2426 = vunpack.c.h.b16 %v515
    %v2427 = vunpack.c.l.b16 %v516
    %v2428 = vunpack.c.h.b16 %v516
    %v2429 = vunpack.c.l.b16 %v517
    %v2430 = vunpack.c.h.b16 %v517
    %v2431 = vunpack.c.l.b16 %v518
    %v2432 = vunpack.c.h.b16 %v518
    %v2433 = vunpack.c.l.b16 %v519
    %v2434 = vunpack.c.h.b16 %v519
    %v2435 = vunpack.c.l.b16 %v520
    %v2436 = vunpack.c.h.b16 %v520
    %v2437 = vunpack.c.l.b16 %v521
    %v2438 = vunpack.c.h.b16 %v521
    %v2439 = vunpack.c.l.b16 %v522
    %v2440 = vunpack.c.h.b16 %v522
    %v2441 = vunpack.c.l.b16 %v523
    %v2442 = vunpack.c.h.b16 %v523
    %v2443 = vunpack.c.l.b16 %v524
    %v2444 = vunpack.c.h.b16 %v524
    %v2445 = vunpack.c.l.b16 %v525
    %v2446 = vunpack.c.h.b16 %v525
    %v2447 = vunpack.c.l.b16 %v526
    %v2448 = vunpack.c.h.b16 %v526
    %v2449 = vunpack.c.l.b16 %v527
    %v2450 = vunpack.c.h.b16 %v527
    %v2451 = vunpack.c.l.b16 %v528
    %v2452 = vunpack.c.h.b16 %v528
    %v2453 = vunpack.c.l.b16 %v529
    %v2454 = vunpack.c.h.b16 %v529
    %v2455 = vunpack.c.l.b16 %v530
    %v2456 = vunpack.c.h.b16 %v530
    %v2457 = vunpack.c.l.b16 %v531
    %v2458 = vunpack.c.h.b16 %v531
    %v2459 = vunpack.c.l.b16 %v532
    %v2460 = vunpack.c.h.b16 %v532
    %v2461 = vunpack.c.l.b16 %v533
    %v2462 = vunpack.c.h.b16 %v533
    %v2463 = vunpack.c.l.b16 %v534
    %v2464 = vunpack.c.h.b16 %v534
    %v2465 = vunpack.c.l.b16 %v535
    %v2466 = vunpack.c.h.b16 %v535
    %v2467 = vunpack.c.l.b16 %v536
    %v2468 = vunpack.c.h.b16 %v536
    %v2469 = vunpack.c.l.b16 %v537
    %v2470 = vunpack.c.h.b16 %v537
    %v2471 = vunpack.c.l.b16 %v538
    %v2472 = vunpack.c.h.b16 %v538
    %v2473 = vunpack.c.l.b16 %v539
    %v2474 = vunpack.c.h.b16 %v539
    %v2475 = vunpack.c.l.b16 %v540
    %v2476 = vunpack.c.h.b16 %v540
    %v2477 = vunpack.c.l.b16 %v541
    %v2478 = vunpack.c.h.b16 %v541
    %v2479 = vunpack.c.l.b16 %v542
    %v2480 = vunpack.c.h.b16 %v542
    %v2481 = vunpack.c.l.b16 %v543
    %v2482 = vunpack.c.h.b16 %v543
    %v2483 = vunpack.c.l.b16 %v544
    %v2484 = vunpack.c.h.b16 %v544
    %v2485 = vunpack.c.l.b16 %v545
    %v2486 = vunpack.c.h.b16 %v545
    %v2487 = vunpack.c.l.b16 %v546
    %v2488 = vunpack.c.h.b16 %v546
    %v2489 = vunpack.c.l.b16 %v547
    %v2490 = vunpack.c.h.b16 %v547
    %v2491 = vunpack.c.l.b16 %v548
    %v2492 = vunpack.c.h.b16 %v548
    %v2493 = vunpack.c.l.b16 %v549
    %v2494 = vunpack.c.h.b16 %v549
    %v2495 = vunpack.c.l.b16 %v550
    %v2496 = vunpack.c.h.b16 %v550
    %v2497 = vunpack.c.l.b16 %v551
    %v2498 = vunpack.c.h.b16 %v551
    %v2499 = vunpack.c.l.b16 %v552
    %v2500 = vunpack.c.h.b16 %v552
    %v2501 = vunpack.c.l.b16 %v553
    %v2502 = vunpack.c.h.b16 %v553
    %v2503 = vunpack.c.l.b16 %v554
    %v2504 = vunpack.c.h.b16 %v554
    %v2505 = vunpack.c.l.b16 %v555
    %v2506 = vunpack.c.h.b16 %v555
    %v2507 = vunpack.c.l.b16 %v556
    %v2508 = vunpack.c.h.b16 %v556
    %v2509 = vunpack.c.l.b16 %v557
    %v2510 = vunpack.c.h.b16 %v557
    %v2511 = vunpack.c.l.b16 %v558
    %v2512 = vunpack.c.h.b16 %v558
    %v2513 = vunpack.c.l.b16 %v559
    %v2514 = vunpack.c.h.b16 %v559
    %v2515 = vunpack.c.l.b16 %v560
    %v2516 = vunpack.c.h.b16 %v560
    %v2517 = vunpack.c.l.b16 %v561
    %v2518 = vunpack.c.h.b16 %v561
    %v2519 = vunpack.c.l.b16 %v562
    %v2520 = vunpack.c.h.b16 %v562
    %v2521 = vunpack.c.l.b16 %v563
    %v2522 = vunpack.c.h.b16 %v563
    %v2523 = vunpack.c.l.b16 %v564
    %v2524 = vunpack.c.h.b16 %v564
    %v2525 = vunpack.c.l.b16 %v565
    %v2526 = vunpack.c.h.b16 %v565
    %v2527 = vunpack.c.l.b16 %v566
    %v2528 = vunpack.c.h.b16 %v566
    %v2529 = vunpack.c.l.b16 %v567
    %v2530 = vunpack.c.h.b16 %v567
    %v2531 = vunpack.c.l.b16 %v568
    %v2532 = vunpack.c.h.b16 %v568
    %v2533 = vunpack.c.l.b16 %v569
    %v2534 = vunpack.c.h.b16 %v569
    %v2535 = vunpack.c.l.b16 %v570
    %v2536 = vunpack.c.h.b16 %v570
    %v2537 = vunpack.c.l.b16 %v571
    %v2538 = vunpack.c.h.b16 %v571
    %v2539 = vunpack.c.l.b16 %v572
    %v2540 = vunpack.c.h.b16 %v572
    %v2541 = vunpack.c.l.b16 %v573
    %v2542 = vunpack.c.h.b16 %v573
    %v2543 = vunpack.c.l.b16 %v574
    %v2544 = vunpack.c.h.b16 %v574
    %v2545 = vunpack.c.l.b16 %v575
    %v2546 = vunpack.c.h.b16 %v575
    %v2547 = vunpack.c.l.b16 %v576
    %v2548 = vunpack.c.h.b16 %v576
    %v2549 = vunpack.c.l.b16 %v577
    %v2550 = vunpack.c.h.b16 %v577
    %v2551 = vunpack.c.l.b16 %v578
    %v2552 = vunpack.c.h.b16 %v578
    %v2553 = vunpack.c.l.b16 %v579
    %v2554 = vunpack.c.h.b16 %v579
    %v2555 = vunpack.c.l.b16 %v580
    %v2556 = vunpack.c.h.b16 %v580
    %v2557 = vunpack.c.l.b16 %v581
    %v2558 = vunpack.c.h.b16 %v581
    %v2559 = vunpack.c.l.b16 %v582
    %v2560 = vunpack.c.h.b16 %v582
    %v2561 = vunpack.c.l.b16 %v583
    %v2562 = vunpack.c.h.b16 %v583
    %v2563 = vunpack.c.l.b16 %v584
    %v2564 = vunpack.c.h.b16 %v584
    %v2565 = vunpack.c.l.b16 %v585
    %v2566 = vunpack.c.h.b16 %v585
    %v2567 = vunpack.c.l.b16 %v586
    %v2568 = vunpack.c.h.b16 %v586
    %v2569 = vunpack.c.l.b16 %v587
    %v2570 = vunpack.c.h.b16 %v587
    %v2571 = vunpack.c.l.b16 %v588
    %v2572 = vunpack.c.h.b16 %v588
    %v2573 = vunpack.c.l.b16 %v589
    %v2574 = vunpack.c.h.b16 %v589
    %v2575 = vunpack.c.l.b16 %v590
    %v2576 = vunpack.c.h.b16 %v590
    %v2577 = vunpack.c.l.b16 %v591
    %v2578 = vunpack.c.h.b16 %v591
    %v2579 = vunpack.c.l.b16 %v592
    %v2580 = vunpack.c.h.b16 %v592
    %v2581 = vunpack.c.l.b16 %v593
    %v2582 = vunpack.c.h.b16 %v593
    %v2583 = vunpack.c.l.b16 %v594
    %v2584 = vunpack.c.h.b16 %v594
    %v2585 = vunpack.c.l.b16 %v595
    %v2586 = vunpack.c.h.b16 %v595
    %v2587 = vunpack.c.l.b16 %v596
    %v2588 = vunpack.c.h.b16 %v596
    %v2589 = vunpack.c.l.b16 %v597
    %v2590 = vunpack.c.h.b16 %v597
    %v2591 = vunpack.c.l.b16 %v598
    %v2592 = vunpack.c.h.b16 %v598
    %v2593 = vunpack.c.l.b16 %v599
    %v2594 = vunpack.c.h.b16 %v599
    %v2595 = vunpack.c.l.b16 %v600
    %v2596 = vunpack.c.h.b16 %v600
    %v2597 = vunpack.c.l.b16 %v601
    %v2598 = vunpack.c.h.b16 %v601
    %v2599 = vunpack.c.l.b16 %v602
    %v2600 = vunpack.c.h.b16 %v602
    %v2601 = vunpack.c.l.b16 %v603
    %v2602 = vunpack.c.h.b16 %v603
    %v2603 = vunpack.c.l.b16 %v604
    %v2604 = vunpack.c.h.b16 %v604
    %v2605 = vunpack.c.l.b16 %v605
    %v2606 = vunpack.c.h.b16 %v605
    %v2607 = vunpack.c.l.b16 %v606
    %v2608 = vunpack.c.h.b16 %v606
    %v2609 = vunpack.c.l.b16 %v607
    %v2610 = vunpack.c.h.b16 %v607
    %v2611 = vunpack.c.l.b16 %v608
    %v2612 = vunpack.c.h.b16 %v608
    %v2613 = vunpack.c.l.b16 %v609
    %v2614 = vunpack.c.h.b16 %v609
    %v2615 = vunpack.c.l.b16 %v610
    %v2616 = vunpack.c.h.b16 %v610
    %v2617 = vunpack.c.l.b16 %v611
    %v2618 = vunpack.c.h.b16 %v611
    %v2619 = vunpack.c.l.b16 %v612
    %v2620 = vunpack.c.h.b16 %v612
    %v2621 = vunpack.c.l.b16 %v613
    %v2622 = vunpack.c.h.b16 %v613
    %v2623 = vunpack.c.l.b16 %v614
    %v2624 = vunpack.c.h.b16 %v614
    %v2625 = vunpack.c.l.b16 %v615
    %v2626 = vunpack.c.h.b16 %v615
    %v2627 = vunpack.c.l.b16 %v616
    %v2628 = vunpack.c.h.b16 %v616
    %v2629 = vunpack.c.l.b16 %v617
    %v2630 = vunpack.c.h.b16 %v617
    %v2631 = vunpack.c.l.b16 %v618
    %v2632 = vunpack.c.h.b16 %v618
    %v2633 = vunpack.c.l.b16 %v619
    %v2634 = vunpack.c.h.b16 %v619
    %v2635 = vunpack.c.l.b16 %v620
    %v2636 = vunpack.c.h.b16 %v620
    %v2637 = vunpack.c.l.b16 %v621
    %v2638 = vunpack.c.h.b16 %v621
    %v2639 = vunpack.c.l.b16 %v622
    %v2640 = vunpack.c.h.b16 %v622
    %v2641 = vunpack.c.l.b16 %v623
    %v2642 = vunpack.c.h.b16 %v623
    %v2643 = vunpack.c.l.b16 %v624
    %v2644 = vunpack.c.h.b16 %v624
    %v2645 = vunpack.c.l.b16 %v625
    %v2646 = vunpack.c.h.b16 %v625
    %v2647 = vunpack.c.l.b16 %v626
    %v2648 = vunpack.c.h.b16 %v626
    %v2649 = vunpack.c.l.b16 %v627
    %v2650 = vunpack.c.h.b16 %v627
    %v2651 = vunpack.c.l.b16 %v628
    %v2652 = vunpack.c.h.b16 %v628
    %v2653 = vunpack.c.l.b16 %v629
    %v2654 = vunpack.c.h.b16 %v629
    %v2655 = vunpack.c.l.b16 %v630
    %v2656 = vunpack.c.h.b16 %v630
    %v2657 = vunpack.c.l.b16 %v631
    %v2658 = vunpack.c.h.b16 %v631
    %v2659 = vunpack.c.l.b16 %v632
    %v2660 = vunpack.c.h.b16 %v632
    %v2661 = vunpack.c.l.b16 %v633
    %v2662 = vunpack.c.h.b16 %v633
    %v2663 = vunpack.c.l.b16 %v634
    %v2664 = vunpack.c.h.b16 %v634
    %v2665 = vunpack.c.l.b16 %v635
    %v2666 = vunpack.c.h.b16 %v635
    %v2667 = vunpack.c.l.b16 %v636
    %v2668 = vunpack.c.h.b16 %v636
    %v2669 = vunpack.c.l.b16 %v637
    %v2670 = vunpack.c.h.b16 %v637
    %v2671 = vunpack.c.l.b16 %v638
    %v2672 = vunpack.c.h.b16 %v638
    %v2673 = vunpack.c.l.b16 %v639
    %v2674 = vunpack.c.h.b16 %v639
    %v2675 = vunpack.c.l.b16 %v640
    %v2676 = vunpack.c.h.b16 %v640
    %v2677 = vunpack.c.l.b16 %v641
    %v2678 = vunpack.c.h.b16 %v641
    %v2679 = vunpack.c.l.b16 %v642
    %v2680 = vunpack.c.h.b16 %v642
    %v2681 = vunpack.c.l.b16 %v643
    %v2682 = vunpack.c.h.b16 %v643
    %v2683 = vunpack.c.l.b16 %v644
    %v2684 = vunpack.c.h.b16 %v644
    %v2685 = vunpack.c.l.b16 %v645
    %v2686 = vunpack.c.h.b16 %v645
    %v2687 = vunpack.c.l.b16 %v646
    %v2688 = vunpack.c.h.b16 %v646
    %v2689 = vunpack.c.l.b16 %v647
    %v2690 = vunpack.c.h.b16 %v647
    %v2691 = vunpack.c.l.b16 %v648
    %v2692 = vunpack.c.h.b16 %v648
    %v2693 = vunpack.c.l.b16 %v649
    %v2694 = vunpack.c.h.b16 %v649
    %v2695 = vunpack.c.l.b16 %v650
    %v2696 = vunpack.c.h.b16 %v650
    %v2697 = vunpack.c.l.b16 %v651
    %v2698 = vunpack.c.h.b16 %v651
    %v2699 = vunpack.c.l.b16 %v652
    %v2700 = vunpack.c.h.b16 %v652
    %v2701 = vunpack.c.l.b16 %v653
    %v2702 = vunpack.c.h.b16 %v653
    %v2703 = vunpack.c.l.b16 %v654
    %v2704 = vunpack.c.h.b16 %v654
    %v2705 = vunpack.c.l.b16 %v655
    %v2706 = vunpack.c.h.b16 %v655
    %v2707 = vunpack.c.l.b16 %v656
    %v2708 = vunpack.c.h.b16 %v656
    %v2709 = vunpack.c.l.b16 %v657
    %v2710 = vunpack.c.h.b16 %v657
    %v2711 = vunpack.c.l.b16 %v658
    %v2712 = vunpack.c.h.b16 %v658
    %v2713 = vunpack.c.l.b16 %v659
    %v2714 = vunpack.c.h.b16 %v659
    %v2715 = vunpack.c.l.b16 %v660
    %v2716 = vunpack.c.h.b16 %v660
    %v2717 = vunpack.c.l.b16 %v661
    %v2718 = vunpack.c.h.b16 %v661
    %v2719 = vunpack.c.l.b16 %v662
    %v2720 = vunpack.c.h.b16 %v662
    %v2721 = vunpack.c.l.b16 %v663
    %v2722 = vunpack.c.h.b16 %v663
    %v2723 = vunpack.c.l.b16 %v664
    %v2724 = vunpack.c.h.b16 %v664
    %v2725 = vunpack.c.l.b16 %v665
    %v2726 = vunpack.c.h.b16 %v665
    %v2727 = vunpack.c.l.b16 %v666
    %v2728 = vunpack.c.h.b16 %v666
    %v2729 = vunpack.c.l.b16 %v667
    %v2730 = vunpack.c.h.b16 %v667
    %v2731 = vunpack.c.l.b16 %v668
    %v2732 = vunpack.c.h.b16 %v668
    %v2733 = vunpack.c.l.b16 %v669
    %v2734 = vunpack.c.h.b16 %v669
    %v2735 = vunpack.c.l.b16 %v670
    %v2736 = vunpack.c.h.b16 %v670
    %v2737 = vunpack.c.l.b16 %v671
    %v2738 = vunpack.c.h.b16 %v671
    %v2739 = vunpack.c.l.b16 %v672
    %v2740 = vunpack.c.h.b16 %v672
    %v2741 = vunpack.c.l.b16 %v673
    %v2742 = vunpack.c.h.b16 %v673
    %v2743 = vunpack.c.l.b16 %v674
    %v2744 = vunpack.c.h.b16 %v674
    %v2745 = vunpack.c.l.b16 %v675
    %v2746 = vunpack.c.h.b16 %v675
    %v2747 = vunpack.c.l.b16 %v676
    %v2748 = vunpack.c.h.b16 %v676
    %v2749 = vunpack.c.l.b16 %v677
    %v2750 = vunpack.c.h.b16 %v677
    %v2751 = vunpack.c.l.b16 %v678
    %v2752 = vunpack.c.h.b16 %v678
    %v2753 = vunpack.c.l.b16 %v679
    %v2754 = vunpack.c.h.b16 %v679
    %v2755 = vunpack.c.l.b16 %v680
    %v2756 = vunpack.c.h.b16 %v680
    %v2757 = vunpack.c.l.b16 %v681
    %v2758 = vunpack.c.h.b16 %v681
    %v2759 = vunpack.c.l.b16 %v682
    %v2760 = vunpack.c.h.b16 %v682
    %v2761 = vunpack.c.l.b16 %v683
    %v2762 = vunpack.c.h.b16 %v683
    %v2763 = vunpack.c.l.b16 %v684
    %v2764 = vunpack.c.h.b16 %v684
    %v2765 = vunpack.c.l.b16 %v685
    %v2766 = vunpack.c.h.b16 %v685
    %v2767 = vunpack.c.l.b16 %v686
    %v2768 = vunpack.c.h.b16 %v686
    %v2769 = vunpack.c.l.b16 %v687
    %v2770 = vunpack.c.h.b16 %v687
    %v2771 = vunpack.c.l.b16 %v688
    %v2772 = vunpack.c.h.b16 %v688
    %v2773 = vunpack.c.l.b16 %v689
    %v2774 = vunpack.c.h.b16 %v689
    %v2775 = vunpack.c.l.b16 %v690
    %v2776 = vunpack.c.h.b16 %v690
    %v2777 = vunpack.c.l.b16 %v691
    %v2778 = vunpack.c.h.b16 %v691
    %v2779 = vunpack.c.l.b16 %v692
    %v2780 = vunpack.c.h.b16 %v692
    %v2781 = vunpack.c.l.b16 %v693
    %v2782 = vunpack.c.h.b16 %v693
    %v2783 = vunpack.c.l.b16 %v694
    %v2784 = vunpack.c.h.b16 %v694
    %v2785 = vunpack.c.l.b16 %v695
    %v2786 = vunpack.c.h.b16 %v695
    %v2787 = vunpack.c.l.b16 %v696
    %v2788 = vunpack.c.h.b16 %v696
    %v2789 = vunpack.c.l.b16 %v697
    %v2790 = vunpack.c.h.b16 %v697
    %v2791 = vunpack.c.l.b16 %v698
    %v2792 = vunpack.c.h.b16 %v698
    %v2793 = vunpack.c.l.b16 %v699
    %v2794 = vunpack.c.h.b16 %v699
    %v2795 = vunpack.c.l.b16 %v700
    %v2796 = vunpack.c.h.b16 %v700
    %v2797 = vunpack.c.l.b16 %v701
    %v2798 = vunpack.c.h.b16 %v701
    %v2799 = vunpack.c.l.b16 %v702
    %v2800 = vunpack.c.h.b16 %v702
    %v2801 = vunpack.c.l.b16 %v703
    %v2802 = vunpack.c.h.b16 %v703
    %v2803 = vunpack.c.l.b16 %v704
    %v2804 = vunpack.c.h.b16 %v704
    %v2805 = vunpack.c.l.b16 %v705
    %v2806 = vunpack.c.h.b16 %v705
    %v2807 = vunpack.c.l.b16 %v706
    %v2808 = vunpack.c.h.b16 %v706
    %v2809 = vunpack.c.l.b16 %v707
    %v2810 = vunpack.c.h.b16 %v707
    %v2811 = vunpack.c.l.b16 %v708
    %v2812 = vunpack.c.h.b16 %v708
    %v2813 = vunpack.c.l.b16 %v709
    %v2814 = vunpack.c.h.b16 %v709
    %v2815 = vunpack.c.l.b16 %v710
    %v2816 = vunpack.c.h.b16 %v710
    %v2817 = vunpack.c.l.b16 %v711
    %v2818 = vunpack.c.h.b16 %v711
    %v2819 = vunpack.c.l.b16 %v712
    %v2820 = vunpack.c.h.b16 %v712
    %v2821 = vunpack.c.l.b16 %v713
    %v2822 = vunpack.c.h.b16 %v713
    %v2823 = vunpack.c.l.b16 %v714
    %v2824 = vunpack.c.h.b16 %v714
    %v2825 = vunpack.c.l.b16 %v715
    %v2826 = vunpack.c.h.b16 %v715
    %v2827 = vunpack.c.l.b16 %v716
    %v2828 = vunpack.c.h.b16 %v716
    %v2829 = vunpack.c.l.b16 %v717
    %v2830 = vunpack.c.h.b16 %v717
    %v2831 = vunpack.c.l.b16 %v718
    %v2832 = vunpack.c.h.b16 %v718
    %v2833 = vunpack.c.l.b16 %v719
    %v2834 = vunpack.c.h.b16 %v719
    %v2835 = vunpack.c.l.b16 %v720
    %v2836 = vunpack.c.h.b16 %v720
    %v2837 = vunpack.c.l.b16 %v721
    %v2838 = vunpack.c.h.b16 %v721
    %v2839 = vunpack.c.l.b16 %v722
    %v2840 = vunpack.c.h.b16 %v722
    %v2841 = vunpack.c.l.b16 %v723
    %v2842 = vunpack.c.h.b16 %v723
    %v2843 = vunpack.c.l.b16 %v724
    %v2844 = vunpack.c.h.b16 %v724
    %v2845 = vunpack.c.l.b16 %v725
    %v2846 = vunpack.c.h.b16 %v725
    %v2847 = vunpack.c.l.b16 %v726
    %v2848 = vunpack.c.h.b16 %v726
    %v2849 = vunpack.c.l.b16 %v727
    %v2850 = vunpack.c.h.b16 %v727
    %v2851 = vunpack.c.l.b16 %v728
    %v2852 = vunpack.c.h.b16 %v728
    %v2853 = vunpack.c.l.b16 %v729
    %v2854 = vunpack.c.h.b16 %v729
    %v2855 = vunpack.c.l.b16 %v730
    %v2856 = vunpack.c.h.b16 %v730
    %v2857 = vunpack.c.l.b16 %v731
    %v2858 = vunpack.c.h.b16 %v731
    %v2859 = vunpack.c.l.b16 %v732
    %v2860 = vunpack.c.h.b16 %v732
    %v2861 = vunpack.c.l.b16 %v733
    %v2862 = vunpack.c.h.b16 %v733
    %v2863 = vunpack.c.l.b16 %v734
    %v2864 = vunpack.c.h.b16 %v734
    %v2865 = vunpack.c.l.b16 %v735
    %v2866 = vunpack.c.h.b16 %v735
    %v2867 = vunpack.c.l.b16 %v736
    %v2868 = vunpack.c.h.b16 %v736
    %v2869 = vunpack.c.l.b16 %v737
    %v2870 = vunpack.c.h.b16 %v737
    %v2871 = vunpack.c.l.b16 %v738
    %v2872 = vunpack.c.h.b16 %v738
    %v2873 = vunpack.c.l.b16 %v739
    %v2874 = vunpack.c.h.b16 %v739
    %v2875 = vunpack.c.l.b16 %v740
    %v2876 = vunpack.c.h.b16 %v740
    %v2877 = vunpack.c.l.b16 %v741
    %v2878 = vunpack.c.h.b16 %v741
    %v2879 = vunpack.c.l.b16 %v742
    %v2880 = vunpack.c.h.b16 %v742
    %v2881 = vunpack.c.l.b16 %v743
    %v2882 = vunpack.c.h.b16 %v743
    %v2883 = vunpack.c.l.b16 %v744
    %v2884 = vunpack.c.h.b16 %v744
    %v2885 = vunpack.c.l.b16 %v745
    %v2886 = vunpack.c.h.b16 %v745
    %v2887 = vunpack.c.l.b16 %v746
    %v2888 = vunpack.c.h.b16 %v746
    %v2889 = vunpack.c.l.b16 %v747
    %v2890 = vunpack.c.h.b16 %v747
    %v2891 = vunpack.c.l.b16 %v748
    %v2892 = vunpack.c.h.b16 %v748
    %v2893 = vunpack.c.l.b16 %v749
    %v2894 = vunpack.c.h.b16 %v749
    %v2895 = vunpack.c.l.b16 %v750
    %v2896 = vunpack.c.h.b16 %v750
    %v2897 = vunpack.c.l.b16 %v751
    %v2898 = vunpack.c.h.b16 %v751
    %v2899 = vunpack.c.l.b16 %v752
    %v2900 = vunpack.c.h.b16 %v752
    %v2901 = vunpack.c.l.b16 %v753
    %v2902 = vunpack.c.h.b16 %v753
    %v2903 = vunpack.c.l.b16 %v754
    %v2904 = vunpack.c.h.b16 %v754
    %v2905 = vunpack.c.l.b16 %v755
    %v2906 = vunpack.c.h.b16 %v755
    %v2907 = vunpack.c.l.b16 %v756
    %v2908 = vunpack.c.h.b16 %v756
    %v2909 = vunpack.c.l.b16 %v757
    %v2910 = vunpack.c.h.b16 %v757
    %v2911 = vunpack.c.l.b16 %v758
    %v2912 = vunpack.c.h.b16 %v758
    %v2913 = vunpack.c.l.b16 %v759
    %v2914 = vunpack.c.h.b16 %v759
    %v2915 = vunpack.c.l.b16 %v760
    %v2916 = vunpack.c.h.b16 %v760
    %v2917 = vunpack.c.l.b16 %v761
    %v2918 = vunpack.c.h.b16 %v761
    %v2919 = vunpack.c.l.b16 %v762
    %v2920 = vunpack.c.h.b16 %v762
    %v2921 = vunpack.c.l.b16 %v763
    %v2922 = vunpack.c.h.b16 %v763
    %v2923 = vunpack.c.l.b16 %v764
    %v2924 = vunpack.c.h.b16 %v764
    %v2925 = vunpack.c.l.b16 %v765
    %v2926 = vunpack.c.h.b16 %v765
    %v2927 = vunpack.c.l.b16 %v766
    %v2928 = vunpack.c.h.b16 %v766
    %v2929 = vunpack.c.l.b16 %v767
    %v2930 = vunpack.c.h.b16 %v767
    %v2931 = vunpack.c.l.b16 %v768
    %v2932 = vunpack.c.h.b16 %v768
    %v2933 = vunpack.c.l.b16 %v769
    %v2934 = vunpack.c.h.b16 %v769
    %v2935 = vunpack.c.l.b16 %v770
    %v2936 = vunpack.c.h.b16 %v770
    %v2937 = vunpack.c.l.b16 %v771
    %v2938 = vunpack.c.h.b16 %v771
    %v2939 = vunpack.c.l.b16 %v772
    %v2940 = vunpack.c.h.b16 %v772
    %v2941 = vunpack.c.l.b16 %v773
    %v2942 = vunpack.c.h.b16 %v773
    %v2943 = vunpack.c.l.b16 %v774
    %v2944 = vunpack.c.h.b16 %v774
    %v2945 = vunpack.c.l.b16 %v775
    %v2946 = vunpack.c.h.b16 %v775
    %v2947 = vunpack.c.l.b16 %v776
    %v2948 = vunpack.c.h.b16 %v776
    %v2949 = vunpack.c.l.b16 %v777
    %v2950 = vunpack.c.h.b16 %v777
    %v2951 = vunpack.c.l.b16 %v778
    %v2952 = vunpack.c.h.b16 %v778
    %v2953 = vunpack.c.l.b16 %v779
    %v2954 = vunpack.c.h.b16 %v779
    %v2955 = vunpack.c.l.b16 %v780
    %v2956 = vunpack.c.h.b16 %v780
    %v2957 = vunpack.c.l.b16 %v781
    %v2958 = vunpack.c.h.b16 %v781
    %v2959 = vunpack.c.l.b16 %v782
    %v2960 = vunpack.c.h.b16 %v782
    %v2961 = vunpack.c.l.b16 %v783
    %v2962 = vunpack.c.h.b16 %v783
    %v2963 = vunpack.c.l.b16 %v784
    %v2964 = vunpack.c.h.b16 %v784
    %v2965 = vunpack.c.l.b16 %v785
    %v2966 = vunpack.c.h.b16 %v785
    %v2967 = vunpack.c.l.b16 %v786
    %v2968 = vunpack.c.h.b16 %v786
    %v2969 = vunpack.c.l.b16 %v787
    %v2970 = vunpack.c.h.b16 %v787
    %v2971 = vunpack.c.l.b16 %v788
    %v2972 = vunpack.c.h.b16 %v788
    %v2973 = vunpack.c.l.b16 %v789
    %v2974 = vunpack.c.h.b16 %v789
    %v2975 = vunpack.c.l.b16 %v790
    %v2976 = vunpack.c.h.b16 %v790
    %v2977 = vunpack.c.l.b16 %v791
    %v2978 = vunpack.c.h.b16 %v791
    %v2979 = vunpack.c.l.b16 %v792
    %v2980 = vunpack.c.h.b16 %v792
    %v2981 = vunpack.c.l.b16 %v793
    %v2982 = vunpack.c.h.b16 %v793
    %v2983 = vunpack.c.l.b16 %v794
    %v2984 = vunpack.c.h.b16 %v794
    %v2985 = vunpack.c.l.b16 %v795
    %v2986 = vunpack.c.h.b16 %v795
    %v2987 = vunpack.c.l.b16 %v796
    %v2988 = vunpack.c.h.b16 %v796
    %v2989 = vunpack.c.l.b16 %v797
    %v2990 = vunpack.c.h.b16 %v797
    %v2991 = vunpack.c.l.b16 %v798
    %v2992 = vunpack.c.h.b16 %v798
    %v2993 = vunpack.c.l.b16 %v799
    %v2994 = vunpack.c.h.b16 %v799
    %v2995 = vunpack.c.l.b16 %v800
    %v2996 = vunpack.c.h.b16 %v800
    %v2997 = vunpack.c.l.b16 %v801
    %v2998 = vunpack.c.h.b16 %v801
    %v2999 = vunpack.c.l.b16 %v802
    %v3000 = vunpack.c.h.b16 %v802
    %v3001 = vunpack.c.l.b16 %v803
    %v3002 = vunpack.c.h.b16 %v803
    %v3003 = vunpack.c.l.b16 %v804
    %v3004 = vunpack.c.h.b16 %v804
    %v3005 = vunpack.c.l.b16 %v805
    %v3006 = vunpack.c.h.b16 %v805
    %v3007 = vunpack.c.l.b16 %v806
    %v3008 = vunpack.c.h.b16 %v806
    %v3009 = vunpack.c.l.b16 %v807
    %v3010 = vunpack.c.h.b16 %v807
    %v3011 = vunpack.c.l.b16 %v808
    %v3012 = vunpack.c.h.b16 %v808
    %v3013 = vunpack.c.l.b16 %v809
    %v3014 = vunpack.c.h.b16 %v809
    %v3015 = vunpack.c.l.b16 %v810
    %v3016 = vunpack.c.h.b16 %v810
    %v3017 = vunpack.c.l.b16 %v811
    %v3018 = vunpack.c.h.b16 %v811
    %v3019 = vunpack.c.l.b16 %v812
    %v3020 = vunpack.c.h.b16 %v812
    %v3021 = vunpack.c.l.b16 %v813
    %v3022 = vunpack.c.h.b16 %v813
    %v3023 = vunpack.c.l.b16 %v814
    %v3024 = vunpack.c.h.b16 %v814
    %v3025 = vunpack.c.l.b16 %v815
    %v3026 = vunpack.c.h.b16 %v815
    %v3027 = vunpack.c.l.b16 %v816
    %v3028 = vunpack.c.h.b16 %v816
    %v3029 = vunpack.c.l.b16 %v817
    %v3030 = vunpack.c.h.b16 %v817
    %v3031 = vunpack.c.l.b16 %v818
    %v3032 = vunpack.c.h.b16 %v818
    %v3033 = vunpack.c.l.b16 %v819
    %v3034 = vunpack.c.h.b16 %v819
    %v3035 = vunpack.c.l.b16 %v820
    %v3036 = vunpack.c.h.b16 %v820
    %v3037 = vunpack.c.l.b16 %v821
    %v3038 = vunpack.c.h.b16 %v821
    %v3039 = vunpack.c.l.b16 %v822
    %v3040 = vunpack.c.h.b16 %v822
    %v3041 = vunpack.c.l.b16 %v823
    %v3042 = vunpack.c.h.b16 %v823
    %v3043 = vunpack.c.l.b16 %v824
    %v3044 = vunpack.c.h.b16 %v824
    %v3045 = vunpack.c.l.b16 %v825
    %v3046 = vunpack.c.h.b16 %v825
    %v3047 = vunpack.c.l.b16 %v826
    %v3048 = vunpack.c.h.b16 %v826
    %v3049 = vunpack.c.l.b16 %v827
    %v3050 = vunpack.c.h.b16 %v827
    %v3051 = vunpack.c.l.b16 %v828
    %v3052 = vunpack.c.h.b16 %v828
    %v3053 = vunpack.c.l.b16 %v829
    %v3054 = vunpack.c.h.b16 %v829
    %v3055 = vunpack.c.l.b16 %v830
    %v3056 = vunpack.c.h.b16 %v830
    %v3057 = vunpack.c.l.b16 %v831
    %v3058 = vunpack.c.h.b16 %v831
    %v3059 = vunpack.c.l.b16 %v832
    %v3060 = vunpack.c.h.b16 %v832
    %v3061 = vunpack.c.l.b16 %v833
    %v3062 = vunpack.c.h.b16 %v833
    %v3063 = vunpack.c.l.b16 %v834
    %v3064 = vunpack.c.h.b16 %v834
    %v3065 = vunpack.c.l.b16 %v835
    %v3066 = vunpack.c.h.b16 %v835
    %v3067 = vunpack.c.l.b16 %v836
    %v3068 = vunpack.c.h.b16 %v836
    %v3069 = vunpack.c.l.b16 %v837
    %v3070 = vunpack.c.h.b16 %v837
    %v3071 = vunpack.c.l.b16 %v838
    %v3072 = vunpack.c.h.b16 %v838
    %v3073 = vunpack.c.l.b16 %v839
    %v3074 = vunpack.c.h.b16 %v839
    %v3075 = vunpack.c.l.b16 %v840
    %v3076 = vunpack.c.h.b16 %v840
    %v3077 = vunpack.c.l.b16 %v841
    %v3078 = vunpack.c.h.b16 %v841
    %v3079 = vunpack.c.l.b16 %v842
    %v3080 = vunpack.c.h.b16 %v842
    %v3081 = vunpack.c.l.b16 %v843
    %v3082 = vunpack.c.h.b16 %v843
    %v3083 = vunpack.c.l.b16 %v844
    %v3084 = vunpack.c.h.b16 %v844
    %v3085 = vunpack.c.l.b16 %v845
    %v3086 = vunpack.c.h.b16 %v845
    %v3087 = vunpack.c.l.b16 %v846
    %v3088 = vunpack.c.h.b16 %v846
    %v3089 = vunpack.c.l.b16 %v847
    %v3090 = vunpack.c.h.b16 %v847
    %v3091 = vunpack.c.l.b16 %v848
    %v3092 = vunpack.c.h.b16 %v848
    %v3093 = vunpack.c.l.b16 %v849
    %v3094 = vunpack.c.h.b16 %v849
    %v3095 = vunpack.c.l.b16 %v850
    %v3096 = vunpack.c.h.b16 %v850
    %v3097 = vunpack.c.l.b16 %v851
    %v3098 = vunpack.c.h.b16 %v851
    %v3099 = vunpack.c.l.b16 %v852
    %v3100 = vunpack.c.h.b16 %v852
    %v3101 = vunpack.c.l.b16 %v853
    %v3102 = vunpack.c.h.b16 %v853
    %v3103 = vunpack.c.l.b16 %v854
    %v3104 = vunpack.c.h.b16 %v854
    %v3105 = vunpack.c.l.b16 %v855
    %v3106 = vunpack.c.h.b16 %v855
    %v3107 = vunpack.c.l.b16 %v856
    %v3108 = vunpack.c.h.b16 %v856
    %v3109 = vunpack.c.l.b16 %v857
    %v3110 = vunpack.c.h.b16 %v857
    %v3111 = vunpack.c.l.b16 %v858
    %v3112 = vunpack.c.h.b16 %v858
    %v3113 = vunpack.c.l.b16 %v859
    %v3114 = vunpack.c.h.b16 %v859
    %v3115 = vunpack.c.l.b16 %v860
    %v3116 = vunpack.c.h.b16 %v860
    %v3117 = vunpack.c.l.b16 %v861
    %v3118 = vunpack.c.h.b16 %v861
    %v3119 = vunpack.c.l.b16 %v862
    %v3120 = vunpack.c.h.b16 %v862
    %v3121 = vunpack.c.l.b16 %v863
    %v3122 = vunpack.c.h.b16 %v863
    %v3123 = vunpack.c.l.b16 %v864
    %v3124 = vunpack.c.h.b16 %v864
    %v3125 = vunpack.c.l.b16 %v865
    %v3126 = vunpack.c.h.b16 %v865
    %v3127 = vunpack.c.l.b16 %v866
    %v3128 = vunpack.c.h.b16 %v866
    %v3129 = vunpack.c.l.b16 %v867
    %v3130 = vunpack.c.h.b16 %v867
    %v3131 = vunpack.c.l.b16 %v868
    %v3132 = vunpack.c.h.b16 %v868
    %v3133 = vunpack.c.l.b16 %v869
    %v3134 = vunpack.c.h.b16 %v869
    %v3135 = vunpack.c.l.b16 %v870
    %v3136 = vunpack.c.h.b16 %v870
    %v3137 = vunpack.c.l.b16 %v871
    %v3138 = vunpack.c.h.b16 %v871
    %v3139 = vunpack.c.l.b16 %v872
    %v3140 = vunpack.c.h.b16 %v872
    %v3141 = vunpack.c.l.b16 %v873
    %v3142 = vunpack.c.h.b16 %v873
    %v3143 = vunpack.c.l.b16 %v874
    %v3144 = vunpack.c.h.b16 %v874
    %v3145 = vunpack.c.l.b16 %v875
    %v3146 = vunpack.c.h.b16 %v875
    %v3147 = vunpack.c.l.b16 %v876
    %v3148 = vunpack.c.h.b16 %v876
    %v3149 = vunpack.c.l.b16 %v877
    %v3150 = vunpack.c.h.b16 %v877
    %v3151 = vunpack.c.l.b16 %v878
    %v3152 = vunpack.c.h.b16 %v878
    %v3153 = vunpack.c.l.b16 %v879
    %v3154 = vunpack.c.h.b16 %v879
    %v3155 = vunpack.c.l.b16 %v880
    %v3156 = vunpack.c.h.b16 %v880
    %v3157 = vunpack.c.l.b16 %v881
    %v3158 = vunpack.c.h.b16 %v881
    %v3159 = vunpack.c.l.b16 %v882
    %v3160 = vunpack.c.h.b16 %v882
    %v3161 = vunpack.c.l.b16 %v883
    %v3162 = vunpack.c.h.b16 %v883
    %v3163 = vunpack.c.l.b16 %v884
    %v3164 = vunpack.c.h.b16 %v884
    %v3165 = vunpack.c.l.b16 %v885
    %v3166 = vunpack.c.h.b16 %v885
    %v3167 = vunpack.c.l.b16 %v886
    %v3168 = vunpack.c.h.b16 %v886
    %v3169 = vunpack.c.l.b16 %v887
    %v3170 = vunpack.c.h.b16 %v887
    %v3171 = vunpack.c.l.b16 %v888
    %v3172 = vunpack.c.h.b16 %v888
    %v3173 = vunpack.c.l.b16 %v889
    %v3174 = vunpack.c.h.b16 %v889
    %v3175 = vunpack.c.l.b16 %v890
    %v3176 = vunpack.c.h.b16 %v890
    %v3177 = vunpack.c.l.b16 %v891
    %v3178 = vunpack.c.h.b16 %v891
    %v3179 = vunpack.c.l.b16 %v892
    %v3180 = vunpack.c.h.b16 %v892
    %v3181 = vunpack.c.l.b16 %v893
    %v3182 = vunpack.c.h.b16 %v893
    %v3183 = vunpack.c.l.b16 %v894
    %v3184 = vunpack.c.h.b16 %v894
    %v3185 = vunpack.c.l.b16 %v895
    %v3186 = vunpack.c.h.b16 %v895
    %v3187 = vunpack.c.l.b16 %v896
    %v3188 = vunpack.c.h.b16 %v896
    %v3189 = vunpack.c.l.b16 %v897
    %v3190 = vunpack.c.h.b16 %v897
    %v3191 = vunpack.c.l.b16 %v898
    %v3192 = vunpack.c.h.b16 %v898
    %v3193 = vunpack.c.l.b16 %v899
    %v3194 = vunpack.c.h.b16 %v899
    %v3195 = vunpack.c.l.b16 %v900
    %v3196 = vunpack.c.h.b16 %v900
    %v3197 = vunpack.c.l.b16 %v901
    %v3198 = vunpack.c.h.b16 %v901
    %v3199 = vunpack.c.l.b16 %v902
    %v3200 = vunpack.c.h.b16 %v902
    %v3201 = vunpack.c.l.b16 %v903
    %v3202 = vunpack.c.h.b16 %v903
    %v3203 = vunpack.c.l.b16 %v904
    %v3204 = vunpack.c.h.b16 %v904
    %v3205 = vunpack.c.l.b16 %v905
    %v3206 = vunpack.c.h.b16 %v905
    %v3207 = vunpack.c.l.b16 %v906
    %v3208 = vunpack.c.h.b16 %v906
    %v3209 = vunpack.c.l.b16 %v907
    %v3210 = vunpack.c.h.b16 %v907
    %v3211 = vunpack.c.l.b16 %v908
    %v3212 = vunpack.c.h.b16 %v908
    %v3213 = vunpack.c.l.b16 %v909
    %v3214 = vunpack.c.h.b16 %v909
    %v3215 = vunpack.c.l.b16 %v910
    %v3216 = vunpack.c.h.b16 %v910
    %v3217 = vunpack.c.l.b16 %v911
    %v3218 = vunpack.c.h.b16 %v911
    %v3219 = vunpack.c.l.b16 %v912
    %v3220 = vunpack.c.h.b16 %v912
    %v3221 = vunpack.c.l.b16 %v913
    %v3222 = vunpack.c.h.b16 %v913
    %v3223 = vunpack.c.l.b16 %v914
    %v3224 = vunpack.c.h.b16 %v914
    %v3225 = vunpack.c.l.b16 %v915
    %v3226 = vunpack.c.h.b16 %v915
    %v3227 = vunpack.c.l.b16 %v916
    %v3228 = vunpack.c.h.b16 %v916
    %v3229 = vunpack.c.l.b16 %v917
    %v3230 = vunpack.c.h.b16 %v917
    %v3231 = vunpack.c.l.b16 %v918
    %v3232 = vunpack.c.h.b16 %v918
    %v3233 = vunpack.c.l.b16 %v919
    %v3234 = vunpack.c.h.b16 %v919
    %v3235 = vunpack.c.l.b16 %v920
    %v3236 = vunpack.c.h.b16 %v920
    %v3237 = vunpack.c.l.b16 %v921
    %v3238 = vunpack.c.h.b16 %v921
    %v3239 = vunpack.c.l.b16 %v922
    %v3240 = vunpack.c.h.b16 %v922
    %v3241 = vunpack.c.l.b16 %v923
    %v3242 = vunpack.c.h.b16 %v923
    %v3243 = vunpack.c.l.b16 %v924
    %v3244 = vunpack.c.h.b16 %v924
    %v3245 = vunpack.c.l.b16 %v925
    %v3246 = vunpack.c.h.b16 %v925
    %v3247 = vunpack.c.l.b16 %v926
    %v3248 = vunpack.c.h.b16 %v926
    %v3249 = vunpack.c.l.b16 %v927
    %v3250 = vunpack.c.h.b16 %v927
    %v3251 = vunpack.c.l.b16 %v928
    %v3252 = vunpack.c.h.b16 %v928
    %v3253 = vunpack.c.l.b16 %v929
    %v3254 = vunpack.c.h.b16 %v929
    %v3255 = vunpack.c.l.b16 %v930
    %v3256 = vunpack.c.h.b16 %v930
    %v3257 = vunpack.c.l.b16 %v931
    %v3258 = vunpack.c.h.b16 %v931
    %v3259 = vunpack.c.l.b16 %v932
    %v3260 = vunpack.c.h.b16 %v932
    %v3261 = vunpack.c.l.b16 %v933
    %v3262 = vunpack.c.h.b16 %v933
    %v3263 = vunpack.c.l.b16 %v934
    %v3264 = vunpack.c.h.b16 %v934
    %v3265 = vunpack.c.l.b16 %v935
    %v3266 = vunpack.c.h.b16 %v935
    %v3267 = vunpack.c.l.b16 %v936
    %v3268 = vunpack.c.h.b16 %v936
    %v3269 = vunpack.c.l.b16 %v937
    %v3270 = vunpack.c.h.b16 %v937
    %v3271 = vunpack.c.l.b16 %v938
    %v3272 = vunpack.c.h.b16 %v938
    %v3273 = vunpack.c.l.b16 %v939
    %v3274 = vunpack.c.h.b16 %v939
    %v3275 = vunpack.c.l.b16 %v940
    %v3276 = vunpack.c.h.b16 %v940
    %v3277 = vunpack.c.l.b16 %v941
    %v3278 = vunpack.c.h.b16 %v941
    %v3279 = vunpack.c.l.b16 %v942
    %v3280 = vunpack.c.h.b16 %v942
    %v3281 = vunpack.c.l.b16 %v943
    %v3282 = vunpack.c.h.b16 %v943
    %v3283 = vunpack.c.l.b16 %v944
    %v3284 = vunpack.c.h.b16 %v944
    %v3285 = vunpack.c.l.b16 %v945
    %v3286 = vunpack.c.h.b16 %v945
    %v3287 = vunpack.c.l.b16 %v946
    %v3288 = vunpack.c.h.b16 %v946
    %v3289 = vunpack.c.l.b16 %v947
    %v3290 = vunpack.c.h.b16 %v947
    %v3291 = vunpack.c.l.b16 %v948
    %v3292 = vunpack.c.h.b16 %v948
    %v3293 = vunpack.c.l.b16 %v949
    %v3294 = vunpack.c.h.b16 %v949
    %v3295 = vunpack.c.l.b16 %v950
    %v3296 = vunpack.c.h.b16 %v950
    %v3297 = vunpack.c.l.b16 %v951
    %v3298 = vunpack.c.h.b16 %v951
    %v3299 = vunpack.c.l.b16 %v952
    %v3300 = vunpack.c.h.b16 %v952
    %v3301 = vunpack.c.l.b16 %v953
    %v3302 = vunpack.c.h.b16 %v953
    %v3303 = vunpack.c.l.b16 %v954
    %v3304 = vunpack.c.h.b16 %v954
    %v3305 = vunpack.c.l.b16 %v955
    %v3306 = vunpack.c.h.b16 %v955
    %v3307 = vunpack.c.l.b16 %v956
    %v3308 = vunpack.c.h.b16 %v956
    %v3309 = vunpack.c.l.b16 %v957
    %v3310 = vunpack.c.h.b16 %v957
    %v3311 = vunpack.c.l.b16 %v958
    %v3312 = vunpack.c.h.b16 %v958
    %v3313 = vunpack.c.l.b16 %v959
    %v3314 = vunpack.c.h.b16 %v959
    %v3315 = vunpack.c.l.b16 %v960
    %v3316 = vunpack.c.h.b16 %v960
    %v3317 = vunpack.c.l.b16 %v961
    %v3318 = vunpack.c.h.b16 %v961
    %v3319 = vunpack.c.l.b16 %v962
    %v3320 = vunpack.c.h.b16 %v962
    %v3321 = vunpack.c.l.b16 %v963
    %v3322 = vunpack.c.h.b16 %v963
    %v3323 = vunpack.c.l.b16 %v964
    %v3324 = vunpack.c.h.b16 %v964
    %v3325 = vunpack.c.l.b16 %v965
    %v3326 = vunpack.c.h.b16 %v965
    %v3327 = vunpack.c.l.b16 %v966
    %v3328 = vunpack.c.h.b16 %v966
    %v3329 = vunpack.c.l.b16 %v967
    %v3330 = vunpack.c.h.b16 %v967
    %v3331 = vunpack.c.l.b16 %v968
    %v3332 = vunpack.c.h.b16 %v968
    %v3333 = vunpack.c.l.b16 %v969
    %v3334 = vunpack.c.h.b16 %v969
    %v3335 = vunpack.c.l.b16 %v970
    %v3336 = vunpack.c.h.b16 %v970
    %v3337 = vunpack.c.l.b16 %v971
    %v3338 = vunpack.c.h.b16 %v971
    %v3339 = vunpack.c.l.b16 %v972
    %v3340 = vunpack.c.h.b16 %v972
    %v3341 = vunpack.c.l.b16 %v973
    %v3342 = vunpack.c.h.b16 %v973
    %v3343 = vunpack.c.l.b16 %v974
    %v3344 = vunpack.c.h.b16 %v974
    %v3345 = vunpack.c.l.b16 %v975
    %v3346 = vunpack.c.h.b16 %v975
    %v3347 = vunpack.c.l.b16 %v976
    %v3348 = vunpack.c.h.b16 %v976
    %v3349 = vunpack.c.l.b16 %v977
    %v3350 = vunpack.c.h.b16 %v977
    %v3351 = vunpack.c.l.b16 %v978
    %v3352 = vunpack.c.h.b16 %v978
    %v3353 = vpack.c.b16 %v1789, %v1785
    %v3354 = vpack.c.b16 %v1790, %v1786
    %v3355 = vpack.c.b16 %v1791, %v1787
    %v3356 = vpack.c.b16 %v1792, %v1788
    %v3357 = vpack.c.b16 %v1797, %v1793
    %v3358 = vpack.c.b16 %v1798, %v1794
    %v3359 = vpack.c.b16 %v1799, %v1795
    %v3360 = vpack.c.b16 %v1800, %v1796
    %v3361 = vpack.c.b16 %v1805, %v1801
    %v3362 = vpack.c.b16 %v1806, %v1802
    %v3363 = vpack.c.b16 %v1807, %v1803
    %v3364 = vpack.c.b16 %v1808, %v1804
    %v3365 = vpack.c.b16 %v1813, %v1809
    %v3366 = vpack.c.b16 %v1814, %v1810
    %v3367 = vpack.c.b16 %v1815, %v1811
    %v3368 = vpack.c.b16 %v1816, %v1812
    %v3369 = vpack.c.b16 %v1821, %v1817
    %v3370 = vpack.c.b16 %v1822, %v1818
    %v3371 = vpack.c.b16 %v1823, %v1819
    %v3372 = vpack.c.b16 %v1824, %v1820
    %v3373 = vpack.c.b16 %v1829, %v1825
    %v3374 = vpack.c.b16 %v1830, %v1826
    %v3375 = vpack.c.b16 %v1831, %v1827
    %v3376 = vpack.c.b16 %v1832, %v1828
    %v3377 = vpack.c.b16 %v1837, %v1833
    %v3378 = vpack.c.b16 %v1838, %v1834
    %v3379 = vpack.c.b16 %v1839, %v1835
    %v3380 = vpack.c.b16 %v1840, %v1836
    %v3381 = vpack.c.b16 %v1845, %v1841
    %v3382 = vpack.c.b16 %v1846, %v1842
    %v3383 = vpack.c.b16 %v1847, %v1843
    %v3384 = vpack.c.b16 %v1848, %v1844
    %v3385 = vpack.c.b16 %v1853, %v1849
    %v3386 = vpack.c.b16 %v1854, %v1850
    %v3387 = vpack.c.b16 %v1855, %v1851
    %v3388 = vpack.c.b16 %v1856, %v1852
    %v3389 = vpack.c.b16 %v1861, %v1857
    %v3390 = vpack.c.b16 %v1862, %v1858
    %v3391 = vpack.c.b16 %v1863, %v1859
    %v3392 = vpack.c.b16 %v1864, %v1860
    %v3393 = vpack.c.b16 %v1869, %v1865
    %v3394 = vpack.c.b16 %v1870, %v1866
    %v3395 = vpack.c.b16 %v1871, %v1867
    %v3396 = vpack.c.b16 %v1872, %v1868
    %v3397 = vpack.c.b16 %v1877, %v1873
    %v3398 = vpack.c.b16 %v1878, %v1874
    %v3399 = vpack.c.b16 %v1879, %v1875
    %v3400 = vpack.c.b16 %v1880, %v1876
    %v3401 = vpack.c.b16 %v1885, %v1881
    %v3402 = vpack.c.b16 %v1886, %v1882
    %v3403 = vpack.c.b16 %v1887, %v1883
    %v3404 = vpack.c.b16 %v1888, %v1884
    %v3405 = vpack.c.b16 %v1893, %v1889
    %v3406 = vpack.c.b16 %v1894, %v1890
    %v3407 = vpack.c.b16 %v1895, %v1891
    %v3408 = vpack.c.b16 %v1896, %v1892
    %v3409 = vpack.c.b16 %v1901, %v1897
    %v3410 = vpack.c.b16 %v1902, %v1898
    %v3411 = vpack.c.b16 %v1903, %v1899
    %v3412 = vpack.c.b16 %v1904, %v1900
    %v3413 = vpack.c.b16 %v1909, %v1905
    %v3414 = vpack.c.b16 %v1910, %v1906
    %v3415 = vpack.c.b16 %v1911, %v1907
    %v3416 = vpack.c.b16 %v1912, %v1908
    %v3417 = vpack.c.b16 %v1917, %v1913
    %v3418 = vpack.c.b16 %v1918, %v1914
    %v3419 = vpack.c.b16 %v1919, %v1915
    %v3420 = vpack.c.b16 %v1920, %v1916
    %v3421 = vpack.c.b16 %v1925, %v1921
    %v3422 = vpack.c.b16 %v1926, %v1922
    %v3423 = vpack.c.b16 %v1927, %v1923
    %v3424 = vpack.c.b16 %v1928, %v1924
    %v3425 = vpack.c.b16 %v1933, %v1929
    %v3426 = vpack.c.b16 %v1934, %v1930
    %v3427 = vpack.c.b16 %v1935, %v1931
    %v3428 = vpack.c.b16 %v1936, %v1932
    %v3429 = vpack.c.b16 %v1941, %v1937
    %v3430 = vpack.c.b16 %v1942, %v1938
    %v3431 = vpack.c.b16 %v1943, %v1939
    %v3432 = vpack.c.b16 %v1944, %v1940
    %v3433 = vpack.c.b16 %v1949, %v1945
    %v3434 = vpack.c.b16 %v1950, %v1946
    %v3435 = vpack.c.b16 %v1951, %v1947
    %v3436 = vpack.c.b16 %v1952, %v1948
    %v3437 = vpack.c.b16 %v1957, %v1953
    %v3438 = vpack.c.b16 %v1958, %v1954
    %v3439 = vpack.c.b16 %v1959, %v1955
    %v3440 = vpack.c.b16 %v1960, %v1956
    %v3441 = vpack.c.b16 %v1965, %v1961
    %v3442 = vpack.c.b16 %v1966, %v1962
    %v3443 = vpack.c.b16 %v1967, %v1963
    %v3444 = vpack.c.b16 %v1968, %v1964
    %v3445 = vpack.c.b16 %v1973, %v1969
    %v3446 = vpack.c.b16 %v1974, %v1970
    %v3447 = vpack.c.b16 %v1975, %v1971
    %v3448 = vpack.c.b16 %v1976, %v1972
    %v3449 = vpack.c.b16 %v1981, %v1977
    %v3450 = vpack.c.b16 %v1982, %v1978
    %v3451 = vpack.c.b16 %v1983, %v1979
    %v3452 = vpack.c.b16 %v1984, %v1980
    %v3453 = vpack.c.b16 %v1989, %v1985
    %v3454 = vpack.c.b16 %v1990, %v1986
    %v3455 = vpack.c.b16 %v1991, %v1987
    %v3456 = vpack.c.b16 %v1992, %v1988
    %v3457 = vpack.c.b16 %v1997, %v1993
    %v3458 = vpack.c.b16 %v1998, %v1994
    %v3459 = vpack.c.b16 %v1999, %v1995
    %v3460 = vpack.c.b16 %v2000, %v1996
    %v3461 = vpack.c.b16 %v2005, %v2001
    %v3462 = vpack.c.b16 %v2006, %v2002
    %v3463 = vpack.c.b16 %v2007, %v2003
    %v3464 = vpack.c.b16 %v2008, %v2004
    %v3465 = vpack.c.b16 %v2013, %v2009
    %v3466 = vpack.c.b16 %v2014, %v2010
    %v3467 = vpack.c.b16 %v2015, %v2011
    %v3468 = vpack.c.b16 %v2016, %v2012
    %v3469 = vpack.c.b16 %v2021, %v2017
    %v3470 = vpack.c.b16 %v2022, %v2018
    %v3471 = vpack.c.b16 %v2023, %v2019
    %v3472 = vpack.c.b16 %v2024, %v2020
    %v3473 = vpack.c.b16 %v2029, %v2025
    %v3474 = vpack.c.b16 %v2030, %v2026
    %v3475 = vpack.c.b16 %v2031, %v2027
    %v3476 = vpack.c.b16 %v2032, %v2028
    %v3477 = vpack.c.b16 %v2037, %v2033
    %v3478 = vpack.c.b16 %v2038, %v2034
    %v3479 = vpack.c.b16 %v2039, %v2035
    %v3480 = vpack.c.b16 %v2040, %v2036
    %v3481 = vpack.c.b16 %v2045, %v2041
    %v3482 = vpack.c.b16 %v2046, %v2042
    %v3483 = vpack.c.b16 %v2047, %v2043
    %v3484 = vpack.c.b16 %v2048, %v2044
    %v3485 = vpack.c.b16 %v2053, %v2049
    %v3486 = vpack.c.b16 %v2054, %v2050
    %v3487 = vpack.c.b16 %v2055, %v2051
    %v3488 = vpack.c.b16 %v2056, %v2052
    %v3489 = vpack.c.b16 %v2061, %v2057
    %v3490 = vpack.c.b16 %v2062, %v2058
    %v3491 = vpack.c.b16 %v2063, %v2059
    %v3492 = vpack.c.b16 %v2064, %v2060
    %v3493 = vpack.c.b16 %v2069, %v2065
    %v3494 = vpack.c.b16 %v2070, %v2066
    %v3495 = vpack.c.b16 %v2071, %v2067
    %v3496 = vpack.c.b16 %v2072, %v2068
    %v3497 = vpack.c.b16 %v2077, %v2073
    %v3498 = vpack.c.b16 %v2078, %v2074
    %v3499 = vpack.c.b16 %v2079, %v2075
    %v3500 = vpack.c.b16 %v2080, %v2076
    %v3501 = vpack.c.b16 %v2085, %v2081
    %v3502 = vpack.c.b16 %v2086, %v2082
    %v3503 = vpack.c.b16 %v2087, %v2083
    %v3504 = vpack.c.b16 %v2088, %v2084
    %v3505 = vpack.c.b16 %v2093, %v2089
    %v3506 = vpack.c.b16 %v2094, %v2090
    %v3507 = vpack.c.b16 %v2095, %v2091
    %v3508 = vpack.c.b16 %v2096, %v2092
    %v3509 = vpack.c.b16 %v2101, %v2097
    %v3510 = vpack.c.b16 %v2102, %v2098
    %v3511 = vpack.c.b16 %v2103, %v2099
    %v3512 = vpack.c.b16 %v2104, %v2100
    %v3513 = vpack.c.b16 %v2109, %v2105
    %v3514 = vpack.c.b16 %v2110, %v2106
    %v3515 = vpack.c.b16 %v2111, %v2107
    %v3516 = vpack.c.b16 %v2112, %v2108
    %v3517 = vpack.c.b16 %v2117, %v2113
    %v3518 = vpack.c.b16 %v2118, %v2114
    %v3519 = vpack.c.b16 %v2119, %v2115
    %v3520 = vpack.c.b16 %v2120, %v2116
    %v3521 = vpack.c.b16 %v2125, %v2121
    %v3522 = vpack.c.b16 %v2126, %v2122
    %v3523 = vpack.c.b16 %v2127, %v2123
    %v3524 = vpack.c.b16 %v2128, %v2124
    %v3525 = vpack.c.b16 %v2133, %v2129
    %v3526 = vpack.c.b16 %v2134, %v2130
    %v3527 = vpack.c.b16 %v2135, %v2131
    %v3528 = vpack.c.b16 %v2136, %v2132
    %v3529 = vpack.c.b16 %v2141, %v2137
    %v3530 = vpack.c.b16 %v2142, %v2138
    %v3531 = vpack.c.b16 %v2143, %v2139
    %v3532 = vpack.c.b16 %v2144, %v2140
    %v3533 = vpack.c.b16 %v2149, %v2145
    %v3534 = vpack.c.b16 %v2150, %v2146
    %v3535 = vpack.c.b16 %v2151, %v2147
    %v3536 = vpack.c.b16 %v2152, %v2148
    %v3537 = vpack.c.b16 %v2157, %v2153
    %v3538 = vpack.c.b16 %v2158, %v2154
    %v3539 = vpack.c.b16 %v2159, %v2155
    %v3540 = vpack.c.b16 %v2160, %v2156
    %v3541 = vpack.c.b16 %v2165, %v2161
    %v3542 = vpack.c.b16 %v2166, %v2162
    %v3543 = vpack.c.b16 %v2167, %v2163
    %v3544 = vpack.c.b16 %v2168, %v2164
    %v3545 = vpack.c.b16 %v2173, %v2169
    %v3546 = vpack.c.b16 %v2174, %v2170
    %v3547 = vpack.c.b16 %v2175, %v2171
    %v3548 = vpack.c.b16 %v2176, %v2172
    %v3549 = vpack.c.b16 %v2181, %v2177
    %v3550 = vpack.c.b16 %v2182, %v2178
    %v3551 = vpack.c.b16 %v2183, %v2179
    %v3552 = vpack.c.b16 %v2184, %v2180
    %v3553 = vpack.c.b16 %v2189, %v2185
    %v3554 = vpack.c.b16 %v2190, %v2186
    %v3555 = vpack.c.b16 %v2191, %v2187
    %v3556 = vpack.c.b16 %v2192, %v2188
    %v3557 = vpack.c.b16 %v2197, %v2193
    %v3558 = vpack.c.b16 %v2198, %v2194
    %v3559 = vpack.c.b16 %v2199, %v2195
    %v3560 = vpack.c.b16 %v2200, %v2196
    %v3561 = vpack.c.b16 %v2205, %v2201
    %v3562 = vpack.c.b16 %v2206, %v2202
    %v3563 = vpack.c.b16 %v2207, %v2203
    %v3564 = vpack.c.b16 %v2208, %v2204
    %v3565 = vpack.c.b16 %v2213, %v2209
    %v3566 = vpack.c.b16 %v2214, %v2210
    %v3567 = vpack.c.b16 %v2215, %v2211
    %v3568 = vpack.c.b16 %v2216, %v2212
    %v3569 = vpack.c.b16 %v2221, %v2217
    %v3570 = vpack.c.b16 %v2222, %v2218
    %v3571 = vpack.c.b16 %v2223, %v2219
    %v3572 = vpack.c.b16 %v2224, %v2220
    %v3573 = vpack.c.b16 %v2229, %v2225
    %v3574 = vpack.c.b16 %v2230, %v2226
    %v3575 = vpack.c.b16 %v2231, %v2227
    %v3576 = vpack.c.b16 %v2232, %v2228
    %v3577 = vpack.c.b16 %v2237, %v2233
    %v3578 = vpack.c.b16 %v2238, %v2234
    %v3579 = vpack.c.b16 %v2239, %v2235
    %v3580 = vpack.c.b16 %v2240, %v2236
    %v3581 = vpack.c.b16 %v2245, %v2241
    %v3582 = vpack.c.b16 %v2246, %v2242
    %v3583 = vpack.c.b16 %v2247, %v2243
    %v3584 = vpack.c.b16 %v2248, %v2244
    %v3585 = vpack.c.b16 %v2253, %v2249
    %v3586 = vpack.c.b16 %v2254, %v2250
    %v3587 = vpack.c.b16 %v2255, %v2251
    %v3588 = vpack.c.b16 %v2256, %v2252
    %v3589 = vpack.c.b16 %v2261, %v2257
    %v3590 = vpack.c.b16 %v2262, %v2258
    %v3591 = vpack.c.b16 %v2263, %v2259
    %v3592 = vpack.c.b16 %v2264, %v2260
    %v3593 = vpack.c.b16 %v2269, %v2265
    %v3594 = vpack.c.b16 %v2270, %v2266
    %v3595 = vpack.c.b16 %v2271, %v2267
    %v3596 = vpack.c.b16 %v2272, %v2268
    %v3597 = vpack.c.b16 %v2277, %v2273
    %v3598 = vpack.c.b16 %v2278, %v2274
    %v3599 = vpack.c.b16 %v2279, %v2275
    %v3600 = vpack.c.b16 %v2280, %v2276
    %v3601 = vpack.c.b16 %v2285, %v2281
    %v3602 = vpack.c.b16 %v2286, %v2282
    %v3603 = vpack.c.b16 %v2287, %v2283
    %v3604 = vpack.c.b16 %v2288, %v2284
    %v3605 = vpack.c.b16 %v2293, %v2289
    %v3606 = vpack.c.b16 %v2294, %v2290
    %v3607 = vpack.c.b16 %v2295, %v2291
    %v3608 = vpack.c.b16 %v2296, %v2292
    %v3609 = vpack.c.b16 %v2301, %v2297
    %v3610 = vpack.c.b16 %v2302, %v2298
    %v3611 = vpack.c.b16 %v2303, %v2299
    %v3612 = vpack.c.b16 %v2304, %v2300
    %v3613 = vpack.c.b16 %v2309, %v2305
    %v3614 = vpack.c.b16 %v2310, %v2306
    %v3615 = vpack.c.b16 %v2311, %v2307
    %v3616 = vpack.c.b16 %v2312, %v2308
    %v3617 = vpack.c.b16 %v2317, %v2313
    %v3618 = vpack.c.b16 %v2318, %v2314
    %v3619 = vpack.c.b16 %v2319, %v2315
    %v3620 = vpack.c.b16 %v2320, %v2316
    %v3621 = vpack.c.b16 %v2325, %v2321
    %v3622 = vpack.c.b16 %v2326, %v2322
    %v3623 = vpack.c.b16 %v2327, %v2323
    %v3624 = vpack.c.b16 %v2328, %v2324
    %v3625 = vpack.c.b16 %v2333, %v2329
    %v3626 = vpack.c.b16 %v2334, %v2330
    %v3627 = vpack.c.b16 %v2335, %v2331
    %v3628 = vpack.c.b16 %v2336, %v2332
    %v3629 = vpack.c.b16 %v2341, %v2337
    %v3630 = vpack.c.b16 %v2342, %v2338
    %v3631 = vpack.c.b16 %v2343, %v2339
    %v3632 = vpack.c.b16 %v2344, %v2340
    %v3633 = vpack.c.b16 %v2349, %v2345
    %v3634 = vpack.c.b16 %v2350, %v2346
    %v3635 = vpack.c.b16 %v2351, %v2347
    %v3636 = vpack.c.b16 %v2352, %v2348
    %v3637 = vpack.c.b16 %v2357, %v2353
    %v3638 = vpack.c.b16 %v2358, %v2354
    %v3639 = vpack.c.b16 %v2359, %v2355
    %v3640 = vpack.c.b16 %v2360, %v2356
    %v3641 = vpack.c.b16 %v2365, %v2361
    %v3642 = vpack.c.b16 %v2366, %v2362
    %v3643 = vpack.c.b16 %v2367, %v2363
    %v3644 = vpack.c.b16 %v2368, %v2364
    %v3645 = vpack.c.b16 %v2373, %v2369
    %v3646 = vpack.c.b16 %v2374, %v2370
    %v3647 = vpack.c.b16 %v2375, %v2371
    %v3648 = vpack.c.b16 %v2376, %v2372
    %v3649 = vpack.c.b16 %v2381, %v2377
    %v3650 = vpack.c.b16 %v2382, %v2378
    %v3651 = vpack.c.b16 %v2383, %v2379
    %v3652 = vpack.c.b16 %v2384, %v2380
    %v3653 = vpack.c.b16 %v2389, %v2385
    %v3654 = vpack.c.b16 %v2390, %v2386
    %v3655 = vpack.c.b16 %v2391, %v2387
    %v3656 = vpack.c.b16 %v2392, %v2388
    %v3657 = vpack.c.b16 %v2397, %v2393
    %v3658 = vpack.c.b16 %v2398, %v2394
    %v3659 = vpack.c.b16 %v2399, %v2395
    %v3660 = vpack.c.b16 %v2400, %v2396
    %v3661 = vpack.c.b16 %v2405, %v2401
    %v3662 = vpack.c.b16 %v2406, %v2402
    %v3663 = vpack.c.b16 %v2407, %v2403
    %v3664 = vpack.c.b16 %v2408, %v2404
    %v3665 = vpack.c.b16 %v2413, %v2409
    %v3666 = vpack.c.b16 %v2414, %v2410
    %v3667 = vpack.c.b16 %v2415, %v2411
    %v3668 = vpack.c.b16 %v2416, %v2412
    %v3669 = vpack.c.b16 %v2421, %v2417
    %v3670 = vpack.c.b16 %v2422, %v2418
    %v3671 = vpack.c.b16 %v2423, %v2419
    %v3672 = vpack.c.b16 %v2424, %v2420
    %v3673 = vpack.c.b16 %v2429, %v2425
    %v3674 = vpack.c.b16 %v2430, %v2426
    %v3675 = vpack.c.b16 %v2431, %v2427
    %v3676 = vpack.c.b16 %v2432, %v2428
    %v3677 = vpack.c.b16 %v2437, %v2433
    %v3678 = vpack.c.b16 %v2438, %v2434
    %v3679 = vpack.c.b16 %v2439, %v2435
    %v3680 = vpack.c.b16 %v2440, %v2436
    %v3681 = vpack.c.b16 %v2445, %v2441
    %v3682 = vpack.c.b16 %v2446, %v2442
    %v3683 = vpack.c.b16 %v2447, %v2443
    %v3684 = vpack.c.b16 %v2448, %v2444
    %v3685 = vpack.c.b16 %v2453, %v2449
    %v3686 = vpack.c.b16 %v2454, %v2450
    %v3687 = vpack.c.b16 %v2455, %v2451
    %v3688 = vpack.c.b16 %v2456, %v2452
    %v3689 = vpack.c.b16 %v2461, %v2457
    %v3690 = vpack.c.b16 %v2462, %v2458
    %v3691 = vpack.c.b16 %v2463, %v2459
    %v3692 = vpack.c.b16 %v2464, %v2460
    %v3693 = vpack.c.b16 %v2469, %v2465
    %v3694 = vpack.c.b16 %v2470, %v2466
    %v3695 = vpack.c.b16 %v2471, %v2467
    %v3696 = vpack.c.b16 %v2472, %v2468
    %v3697 = vpack.c.b16 %v2477, %v2473
    %v3698 = vpack.c.b16 %v2478, %v2474
    %v3699 = vpack.c.b16 %v2479, %v2475
    %v3700 = vpack.c.b16 %v2480, %v2476
    %v3701 = vpack.c.b16 %v2485, %v2481
    %v3702 = vpack.c.b16 %v2486, %v2482
    %v3703 = vpack.c.b16 %v2487, %v2483
    %v3704 = vpack.c.b16 %v2488, %v2484
    %v3705 = vpack.c.b16 %v2493, %v2489
    %v3706 = vpack.c.b16 %v2494, %v2490
    %v3707 = vpack.c.b16 %v2495, %v2491
    %v3708 = vpack.c.b16 %v2496, %v2492
    %v3709 = vpack.c.b16 %v2501, %v2497
    %v3710 = vpack.c.b16 %v2502, %v2498
    %v3711 = vpack.c.b16 %v2503, %v2499
    %v3712 = vpack.c.b16 %v2504, %v2500
    %v3713 = vpack.c.b16 %v2509, %v2505
    %v3714 = vpack.c.b16 %v2510, %v2506
    %v3715 = vpack.c.b16 %v2511, %v2507
    %v3716 = vpack.c.b16 %v2512, %v2508
    %v3717 = vpack.c.b16 %v2517, %v2513
    %v3718 = vpack.c.b16 %v2518, %v2514
    %v3719 = vpack.c.b16 %v2519, %v2515
    %v3720 = vpack.c.b16 %v2520, %v2516
    %v3721 = vpack.c.b16 %v2525, %v2521
    %v3722 = vpack.c.b16 %v2526, %v2522
    %v3723 = vpack.c.b16 %v2527, %v2523
    %v3724 = vpack.c.b16 %v2528, %v2524
    %v3725 = vpack.c.b16 %v2533, %v2529
    %v3726 = vpack.c.b16 %v2534, %v2530
    %v3727 = vpack.c.b16 %v2535, %v2531
    %v3728 = vpack.c.b16 %v2536, %v2532
    %v3729 = vpack.c.b16 %v2541, %v2537
    %v3730 = vpack.c.b16 %v2542, %v2538
    %v3731 = vpack.c.b16 %v2543, %v2539
    %v3732 = vpack.c.b16 %v2544, %v2540
    %v3733 = vpack.c.b16 %v2549, %v2545
    %v3734 = vpack.c.b16 %v2550, %v2546
    %v3735 = vpack.c.b16 %v2551, %v2547
    %v3736 = vpack.c.b16 %v2552, %v2548
    %v3737 = vpack.c.b16 %v2557, %v2553
    %v3738 = vpack.c.b16 %v2558, %v2554
    %v3739 = vpack.c.b16 %v2559, %v2555
    %v3740 = vpack.c.b16 %v2560, %v2556
    %v3741 = vpack.c.b16 %v2565, %v2561
    %v3742 = vpack.c.b16 %v2566, %v2562
    %v3743 = vpack.c.b16 %v2567, %v2563
    %v3744 = vpack.c.b16 %v2568, %v2564
    %v3745 = vpack.c.b16 %v2573, %v2569
    %v3746 = vpack.c.b16 %v2574, %v2570
    %v3747 = vpack.c.b16 %v2575, %v2571
    %v3748 = vpack.c.b16 %v2576, %v2572
    %v3749 = vpack.c.b16 %v2581, %v2577
    %v3750 = vpack.c.b16 %v2582, %v2578
    %v3751 = vpack.c.b16 %v2583, %v2579
    %v3752 = vpack.c.b16 %v2584, %v2580
    %v3753 = vpack.c.b16 %v2589, %v2585
    %v3754 = vpack.c.b16 %v2590, %v2586
    %v3755 = vpack.c.b16 %v2591, %v2587
    %v3756 = vpack.c.b16 %v2592, %v2588
    %v3757 = vpack.c.b16 %v2597, %v2593
    %v3758 = vpack.c.b16 %v2598, %v2594
    %v3759 = vpack.c.b16 %v2599, %v2595
    %v3760 = vpack.c.b16 %v2600, %v2596
    %v3761 = vpack.c.b16 %v2605, %v2601
    %v3762 = vpack.c.b16 %v2606, %v2602
    %v3763 = vpack.c.b16 %v2607, %v2603
    %v3764 = vpack.c.b16 %v2608, %v2604
    %v3765 = vpack.c.b16 %v2613, %v2609
    %v3766 = vpack.c.b16 %v2614, %v2610
    %v3767 = vpack.c.b16 %v2615, %v2611
    %v3768 = vpack.c.b16 %v2616, %v2612
    %v3769 = vpack.c.b16 %v2621, %v2617
    %v3770 = vpack.c.b16 %v2622, %v2618
    %v3771 = vpack.c.b16 %v2623, %v2619
    %v3772 = vpack.c.b16 %v2624, %v2620
    %v3773 = vpack.c.b16 %v2629, %v2625
    %v3774 = vpack.c.b16 %v2630, %v2626
    %v3775 = vpack.c.b16 %v2631, %v2627
    %v3776 = vpack.c.b16 %v2632, %v2628
    %v3777 = vpack.c.b16 %v2637, %v2633
    %v3778 = vpack.c.b16 %v2638, %v2634
    %v3779 = vpack.c.b16 %v2639, %v2635
    %v3780 = vpack.c.b16 %v2640, %v2636
    %v3781 = vpack.c.b16 %v2645, %v2641
    %v3782 = vpack.c.b16 %v2646, %v2642
    %v3783 = vpack.c.b16 %v2647, %v2643
    %v3784 = vpack.c.b16 %v2648, %v2644
    %v3785 = vpack.c.b16 %v2653, %v2649
    %v3786 = vpack.c.b16 %v2654, %v2650
    %v3787 = vpack.c.b16 %v2655, %v2651
    %v3788 = vpack.c.b16 %v2656, %v2652
    %v3789 = vpack.c.b16 %v2661, %v2657
    %v3790 = vpack.c.b16 %v2662, %v2658
    %v3791 = vpack.c.b16 %v2663, %v2659
    %v3792 = vpack.c.b16 %v2664, %v2660
    %v3793 = vpack.c.b16 %v2669, %v2665
    %v3794 = vpack.c.b16 %v2670, %v2666
    %v3795 = vpack.c.b16 %v2671, %v2667
    %v3796 = vpack.c.b16 %v2672, %v2668
    %v3797 = vpack.c.b16 %v2677, %v2673
    %v3798 = vpack.c.b16 %v2678, %v2674
    %v3799 = vpack.c.b16 %v2679, %v2675
    %v3800 = vpack.c.b16 %v2680, %v2676
    %v3801 = vpack.c.b16 %v2685, %v2681
    %v3802 = vpack.c.b16 %v2686, %v2682
    %v3803 = vpack.c.b16 %v2687, %v2683
    %v3804 = vpack.c.b16 %v2688, %v2684
    %v3805 = vpack.c.b16 %v2693, %v2689
    %v3806 = vpack.c.b16 %v2694, %v2690
    %v3807 = vpack.c.b16 %v2695, %v2691
    %v3808 = vpack.c.b16 %v2696, %v2692
    %v3809 = vpack.c.b16 %v2701, %v2697
    %v3810 = vpack.c.b16 %v2702, %v2698
    %v3811 = vpack.c.b16 %v2703, %v2699
    %v3812 = vpack.c.b16 %v2704, %v2700
    %v3813 = vpack.c.b16 %v2709, %v2705
    %v3814 = vpack.c.b16 %v2710, %v2706
    %v3815 = vpack.c.b16 %v2711, %v2707
    %v3816 = vpack.c.b16 %v2712, %v2708
    %v3817 = vpack.c.b16 %v2717, %v2713
    %v3818 = vpack.c.b16 %v2718, %v2714
    %v3819 = vpack.c.b16 %v2719, %v2715
    %v3820 = vpack.c.b16 %v2720, %v2716
    %v3821 = vpack.c.b16 %v2725, %v2721
    %v3822 = vpack.c.b16 %v2726, %v2722
    %v3823 = vpack.c.b16 %v2727, %v2723
    %v3824 = vpack.c.b16 %v2728, %v2724
    %v3825 = vpack.c.b16 %v2733, %v2729
    %v3826 = vpack.c.b16 %v2734, %v2730
    %v3827 = vpack.c.b16 %v2735, %v2731
    %v3828 = vpack.c.b16 %v2736, %v2732
    %v3829 = vpack.c.b16 %v2741, %v2737
    %v3830 = vpack.c.b16 %v2742, %v2738
    %v3831 = vpack.c.b16 %v2743, %v2739
    %v3832 = vpack.c.b16 %v2744, %v2740
    %v3833 = vpack.c.b16 %v2749, %v2745
    %v3834 = vpack.c.b16 %v2750, %v2746
    %v3835 = vpack.c.b16 %v2751, %v2747
    %v3836 = vpack.c.b16 %v2752, %v2748
    %v3837 = vpack.c.b16 %v2757, %v2753
    %v3838 = vpack.c.b16 %v2758, %v2754
    %v3839 = vpack.c.b16 %v2759, %v2755
    %v3840 = vpack.c.b16 %v2760, %v2756
    %v3841 = vpack.c.b16 %v2765, %v2761
    %v3842 = vpack.c.b16 %v2766, %v2762
    %v3843 = vpack.c.b16 %v2767, %v2763
    %v3844 = vpack.c.b16 %v2768, %v2764
    %v3845 = vpack.c.b16 %v2773, %v2769
    %v3846 = vpack.c.b16 %v2774, %v2770
    %v3847 = vpack.c.b16 %v2775, %v2771
    %v3848 = vpack.c.b16 %v2776, %v2772
    %v3849 = vpack.c.b16 %v2781, %v2777
    %v3850 = vpack.c.b16 %v2782, %v2778
    %v3851 = vpack.c.b16 %v2783, %v2779
    %v3852 = vpack.c.b16 %v2784, %v2780
    %v3853 = vpack.c.b16 %v2789, %v2785
    %v3854 = vpack.c.b16 %v2790, %v2786
    %v3855 = vpack.c.b16 %v2791, %v2787
    %v3856 = vpack.c.b16 %v2792, %v2788
    %v3857 = vpack.c.b16 %v2797, %v2793
    %v3858 = vpack.c.b16 %v2798, %v2794
    %v3859 = vpack.c.b16 %v2799, %v2795
    %v3860 = vpack.c.b16 %v2800, %v2796
    %v3861 = vpack.c.b16 %v2805, %v2801
    %v3862 = vpack.c.b16 %v2806, %v2802
    %v3863 = vpack.c.b16 %v2807, %v2803
    %v3864 = vpack.c.b16 %v2808, %v2804
    %v3865 = vpack.c.b16 %v2813, %v2809
    %v3866 = vpack.c.b16 %v2814, %v2810
    %v3867 = vpack.c.b16 %v2815, %v2811
    %v3868 = vpack.c.b16 %v2816, %v2812
    %v3869 = vpack.c.b16 %v2821, %v2817
    %v3870 = vpack.c.b16 %v2822, %v2818
    %v3871 = vpack.c.b16 %v2823, %v2819
    %v3872 = vpack.c.b16 %v2824, %v2820
    %v3873 = vpack.c.b16 %v2829, %v2825
    %v3874 = vpack.c.b16 %v2830, %v2826
    %v3875 = vpack.c.b16 %v2831, %v2827
    %v3876 = vpack.c.b16 %v2832, %v2828
    %v3877 = vpack.c.b16 %v2837, %v2833
    %v3878 = vpack.c.b16 %v2838, %v2834
    %v3879 = vpack.c.b16 %v2839, %v2835
    %v3880 = vpack.c.b16 %v2840, %v2836
    %v3881 = vpack.c.b16 %v2845, %v2841
    %v3882 = vpack.c.b16 %v2846, %v2842
    %v3883 = vpack.c.b16 %v2847, %v2843
    %v3884 = vpack.c.b16 %v2848, %v2844
    %v3885 = vpack.c.b16 %v2853, %v2849
    %v3886 = vpack.c.b16 %v2854, %v2850
    %v3887 = vpack.c.b16 %v2855, %v2851
    %v3888 = vpack.c.b16 %v2856, %v2852
    %v3889 = vpack.c.b16 %v2861, %v2857
    %v3890 = vpack.c.b16 %v2862, %v2858
    %v3891 = vpack.c.b16 %v2863, %v2859
    %v3892 = vpack.c.b16 %v2864, %v2860
    %v3893 = vpack.c.b16 %v2869, %v2865
    %v3894 = vpack.c.b16 %v2870, %v2866
    %v3895 = vpack.c.b16 %v2871, %v2867
    %v3896 = vpack.c.b16 %v2872, %v2868
    %v3897 = vpack.c.b16 %v2877, %v2873
    %v3898 = vpack.c.b16 %v2878, %v2874
    %v3899 = vpack.c.b16 %v2879, %v2875
    %v3900 = vpack.c.b16 %v2880, %v2876
    %v3901 = vpack.c.b16 %v2885, %v2881
    %v3902 = vpack.c.b16 %v2886, %v2882
    %v3903 = vpack.c.b16 %v2887, %v2883
    %v3904 = vpack.c.b16 %v2888, %v2884
    %v3905 = vpack.c.b16 %v2893, %v2889
    %v3906 = vpack.c.b16 %v2894, %v2890
    %v3907 = vpack.c.b16 %v2895, %v2891
    %v3908 = vpack.c.b16 %v2896, %v2892
    %v3909 = vpack.c.b16 %v2901, %v2897
    %v3910 = vpack.c.b16 %v2902, %v2898
    %v3911 = vpack.c.b16 %v2903, %v2899
    %v3912 = vpack.c.b16 %v2904, %v2900
    %v3913 = vpack.c.b16 %v2909, %v2905
    %v3914 = vpack.c.b16 %v2910, %v2906
    %v3915 = vpack.c.b16 %v2911, %v2907
    %v3916 = vpack.c.b16 %v2912, %v2908
    %v3917 = vpack.c.b16 %v2917, %v2913
    %v3918 = vpack.c.b16 %v2918, %v2914
    %v3919 = vpack.c.b16 %v2919, %v2915
    %v3920 = vpack.c.b16 %v2920, %v2916
    %v3921 = vpack.c.b16 %v2925, %v2921
    %v3922 = vpack.c.b16 %v2926, %v2922
    %v3923 = vpack.c.b16 %v2927, %v2923
    %v3924 = vpack.c.b16 %v2928, %v2924
    %v3925 = vpack.c.b16 %v2933, %v2929
    %v3926 = vpack.c.b16 %v2934, %v2930
    %v3927 = vpack.c.b16 %v2935, %v2931
    %v3928 = vpack.c.b16 %v2936, %v2932
    %v3929 = vpack.c.b16 %v2941, %v2937
    %v3930 = vpack.c.b16 %v2942, %v2938
    %v3931 = vpack.c.b16 %v2943, %v2939
    %v3932 = vpack.c.b16 %v2944, %v2940
    %v3933 = vpack.c.b16 %v2949, %v2945
    %v3934 = vpack.c.b16 %v2950, %v2946
    %v3935 = vpack.c.b16 %v2951, %v2947
    %v3936 = vpack.c.b16 %v2952, %v2948
    %v3937 = vpack.c.b16 %v2957, %v2953
    %v3938 = vpack.c.b16 %v2958, %v2954
    %v3939 = vpack.c.b16 %v2959, %v2955
    %v3940 = vpack.c.b16 %v2960, %v2956
    %v3941 = vpack.c.b16 %v2965, %v2961
    %v3942 = vpack.c.b16 %v2966, %v2962
    %v3943 = vpack.c.b16 %v2967, %v2963
    %v3944 = vpack.c.b16 %v2968, %v2964
    %v3945 = vpack.c.b16 %v2973, %v2969
    %v3946 = vpack.c.b16 %v2974, %v2970
    %v3947 = vpack.c.b16 %v2975, %v2971
    %v3948 = vpack.c.b16 %v2976, %v2972
    %v3949 = vpack.c.b16 %v2981, %v2977
    %v3950 = vpack.c.b16 %v2982, %v2978
    %v3951 = vpack.c.b16 %v2983, %v2979
    %v3952 = vpack.c.b16 %v2984, %v2980
    %v3953 = vpack.c.b16 %v2989, %v2985
    %v3954 = vpack.c.b16 %v2990, %v2986
    %v3955 = vpack.c.b16 %v2991, %v2987
    %v3956 = vpack.c.b16 %v2992, %v2988
    %v3957 = vpack.c.b16 %v2997, %v2993
    %v3958 = vpack.c.b16 %v2998, %v2994
    %v3959 = vpack.c.b16 %v2999, %v2995
    %v3960 = vpack.c.b16 %v3000, %v2996
    %v3961 = vpack.c.b16 %v3005, %v3001
    %v3962 = vpack.c.b16 %v3006, %v3002
    %v3963 = vpack.c.b16 %v3007, %v3003
    %v3964 = vpack.c.b16 %v3008, %v3004
    %v3965 = vpack.c.b16 %v3013, %v3009
    %v3966 = vpack.c.b16 %v3014, %v3010
    %v3967 = vpack.c.b16 %v3015, %v3011
    %v3968 = vpack.c.b16 %v3016, %v3012
    %v3969 = vpack.c.b16 %v3021, %v3017
    %v3970 = vpack.c.b16 %v3022, %v3018
    %v3971 = vpack.c.b16 %v3023, %v3019
    %v3972 = vpack.c.b16 %v3024, %v3020
    %v3973 = vpack.c.b16 %v3029, %v3025
    %v3974 = vpack.c.b16 %v3030, %v3026
    %v3975 = vpack.c.b16 %v3031, %v3027
    %v3976 = vpack.c.b16 %v3032, %v3028
    %v3977 = vpack.c.b16 %v3037, %v3033
    %v3978 = vpack.c.b16 %v3038, %v3034
    %v3979 = vpack.c.b16 %v3039, %v3035
    %v3980 = vpack.c.b16 %v3040, %v3036
    %v3981 = vpack.c.b16 %v3045, %v3041
    %v3982 = vpack.c.b16 %v3046, %v3042
    %v3983 = vpack.c.b16 %v3047, %v3043
    %v3984 = vpack.c.b16 %v3048, %v3044
    %v3985 = vpack.c.b16 %v3053, %v3049
    %v3986 = vpack.c.b16 %v3054, %v3050
    %v3987 = vpack.c.b16 %v3055, %v3051
    %v3988 = vpack.c.b16 %v3056, %v3052
    %v3989 = vpack.c.b16 %v3061, %v3057
    %v3990 = vpack.c.b16 %v3062, %v3058
    %v3991 = vpack.c.b16 %v3063, %v3059
    %v3992 = vpack.c.b16 %v3064, %v3060
    %v3993 = vpack.c.b16 %v3069, %v3065
    %v3994 = vpack.c.b16 %v3070, %v3066
    %v3995 = vpack.c.b16 %v3071, %v3067
    %v3996 = vpack.c.b16 %v3072, %v3068
    %v3997 = vpack.c.b16 %v3077, %v3073
    %v3998 = vpack.c.b16 %v3078, %v3074
    %v3999 = vpack.c.b16 %v3079, %v3075
    %v4000 = vpack.c.b16 %v3080, %v3076
    %v4001 = vpack.c.b16 %v3085, %v3081
    %v4002 = vpack.c.b16 %v3086, %v3082
    %v4003 = vpack.c.b16 %v3087, %v3083
    %v4004 = vpack.c.b16 %v3088, %v3084
    %v4005 = vpack.c.b16 %v3093, %v3089
    %v4006 = vpack.c.b16 %v3094, %v3090
    %v4007 = vpack.c.b16 %v3095, %v3091
    %v4008 = vpack.c.b16 %v3096, %v3092
    %v4009 = vpack.c.b16 %v3101, %v3097
    %v4010 = vpack.c.b16 %v3102, %v3098
    %v4011 = vpack.c.b16 %v3103, %v3099
    %v4012 = vpack.c.b16 %v3104, %v3100
    %v4013 = vpack.c.b16 %v3109, %v3105
    %v4014 = vpack.c.b16 %v3110, %v3106
    %v4015 = vpack.c.b16 %v3111, %v3107
    %v4016 = vpack.c.b16 %v3112, %v3108
    %v4017 = vpack.c.b16 %v3117, %v3113
    %v4018 = vpack.c.b16 %v3118, %v3114
    %v4019 = vpack.c.b16 %v3119, %v3115
    %v4020 = vpack.c.b16 %v3120, %v3116
    %v4021 = vpack.c.b16 %v3125, %v3121
    %v4022 = vpack.c.b16 %v3126, %v3122
    %v4023 = vpack.c.b16 %v3127, %v3123
    %v4024 = vpack.c.b16 %v3128, %v3124
    %v4025 = vpack.c.b16 %v3133, %v3129
    %v4026 = vpack.c.b16 %v3134, %v3130
    %v4027 = vpack.c.b16 %v3135, %v3131
    %v4028 = vpack.c.b16 %v3136, %v3132
    %v4029 = vpack.c.b16 %v3141, %v3137
    %v4030 = vpack.c.b16 %v3142, %v3138
    %v4031 = vpack.c.b16 %v3143, %v3139
    %v4032 = vpack.c.b16 %v3144, %v3140
    %v4033 = vpack.c.b16 %v3149, %v3145
    %v4034 = vpack.c.b16 %v3150, %v3146
    %v4035 = vpack.c.b16 %v3151, %v3147
    %v4036 = vpack.c.b16 %v3152, %v3148
    %v4037 = vpack.c.b16 %v3157, %v3153
    %v4038 = vpack.c.b16 %v3158, %v3154
    %v4039 = vpack.c.b16 %v3159, %v3155
    %v4040 = vpack.c.b16 %v3160, %v3156
    %v4041 = vpack.c.b16 %v3165, %v3161
    %v4042 = vpack.c.b16 %v3166, %v3162
    %v4043 = vpack.c.b16 %v3167, %v3163
    %v4044 = vpack.c.b16 %v3168, %v3164
    %v4045 = vpack.c.b16 %v3173, %v3169
    %v4046 = vpack.c.b16 %v3174, %v3170
    %v4047 = vpack.c.b16 %v3175, %v3171
    %v4048 = vpack.c.b16 %v3176, %v3172
    %v4049 = vpack.c.b16 %v3181, %v3177
    %v4050 = vpack.c.b16 %v3182, %v3178
    %v4051 = vpack.c.b16 %v3183, %v3179
    %v4052 = vpack.c.b16 %v3184, %v3180
    %v4053 = vpack.c.b16 %v3189, %v3185
    %v4054 = vpack.c.b16 %v3190, %v3186
    %v4055 = vpack.c.b16 %v3191, %v3187
    %v4056 = vpack.c.b16 %v3192, %v3188
    %v4057 = vpack.c.b16 %v3197, %v3193
    %v4058 = vpack.c.b16 %v3198, %v3194
    %v4059 = vpack.c.b16 %v3199, %v3195
    %v4060 = vpack.c.b16 %v3200, %v3196
    %v4061 = vpack.c.b16 %v3205, %v3201
    %v4062 = vpack.c.b16 %v3206, %v3202
    %v4063 = vpack.c.b16 %v3207, %v3203
    %v4064 = vpack.c.b16 %v3208, %v3204
    %v4065 = vpack.c.b16 %v3213, %v3209
    %v4066 = vpack.c.b16 %v3214, %v3210
    %v4067 = vpack.c.b16 %v3215, %v3211
    %v4068 = vpack.c.b16 %v3216, %v3212
    %v4069 = vpack.c.b16 %v3221, %v3217
    %v4070 = vpack.c.b16 %v3222, %v3218
    %v4071 = vpack.c.b16 %v3223, %v3219
    %v4072 = vpack.c.b16 %v3224, %v3220
    %v4073 = vpack.c.b16 %v3229, %v3225
    %v4074 = vpack.c.b16 %v3230, %v3226
    %v4075 = vpack.c.b16 %v3231, %v3227
    %v4076 = vpack.c.b16 %v3232, %v3228
    %v4077 = vpack.c.b16 %v3237, %v3233
    %v4078 = vpack.c.b16 %v3238, %v3234
    %v4079 = vpack.c.b16 %v3239, %v3235
    %v4080 = vpack.c.b16 %v3240, %v3236
    %v4081 = vpack.c.b16 %v3245, %v3241
    %v4082 = vpack.c.b16 %v3246, %v3242
    %v4083 = vpack.c.b16 %v3247, %v3243
    %v4084 = vpack.c.b16 %v3248, %v3244
    %v4085 = vpack.c.b16 %v3253, %v3249
    %v4086 = vpack.c.b16 %v3254, %v3250
    %v4087 = vpack.c.b16 %v3255, %v3251
    %v4088 = vpack.c.b16 %v3256, %v3252
    %v4089 = vpack.c.b16 %v3261, %v3257
    %v4090 = vpack.c.b16 %v3262, %v3258
    %v4091 = vpack.c.b16 %v3263, %v3259
    %v4092 = vpack.c.b16 %v3264, %v3260
    %v4093 = vpack.c.b16 %v3269, %v3265
    %v4094 = vpack.c.b16 %v3270, %v3266
    %v4095 = vpack.c.b16 %v3271, %v3267
    %v4096 = vpack.c.b16 %v3272, %v3268
    %v4097 = vpack.c.b16 %v3277, %v3273
    %v4098 = vpack.c.b16 %v3278, %v3274
    %v4099 = vpack.c.b16 %v3279, %v3275
    %v4100 = vpack.c.b16 %v3280, %v3276
    %v4101 = vpack.c.b16 %v3285, %v3281
    %v4102 = vpack.c.b16 %v3286, %v3282
    %v4103 = vpack.c.b16 %v3287, %v3283
    %v4104 = vpack.c.b16 %v3288, %v3284
    %v4105 = vpack.c.b16 %v3293, %v3289
    %v4106 = vpack.c.b16 %v3294, %v3290
    %v4107 = vpack.c.b16 %v3295, %v3291
    %v4108 = vpack.c.b16 %v3296, %v3292
    %v4109 = vpack.c.b16 %v3301, %v3297
    %v4110 = vpack.c.b16 %v3302, %v3298
    %v4111 = vpack.c.b16 %v3303, %v3299
    %v4112 = vpack.c.b16 %v3304, %v3300
    %v4113 = vpack.c.b16 %v3309, %v3305
    %v4114 = vpack.c.b16 %v3310, %v3306
    %v4115 = vpack.c.b16 %v3311, %v3307
    %v4116 = vpack.c.b16 %v3312, %v3308
    %v4117 = vpack.c.b16 %v3317, %v3313
    %v4118 = vpack.c.b16 %v3318, %v3314
    %v4119 = vpack.c.b16 %v3319, %v3315
    %v4120 = vpack.c.b16 %v3320, %v3316
    %v4121 = vpack.c.b16 %v3325, %v3321
    %v4122 = vpack.c.b16 %v3326, %v3322
    %v4123 = vpack.c.b16 %v3327, %v3323
    %v4124 = vpack.c.b16 %v3328, %v3324
    %v4125 = vpack.c.b16 %v3333, %v3329
    %v4126 = vpack.c.b16 %v3334, %v3330
    %v4127 = vpack.c.b16 %v3335, %v3331
    %v4128 = vpack.c.b16 %v3336, %v3332
    %v4129 = vpack.c.b16 %v3341, %v3337
    %v4130 = vpack.c.b16 %v3342, %v3338
    %v4131 = vpack.c.b16 %v3343, %v3339
    %v4132 = vpack.c.b16 %v3344, %v3340
    %v4133 = vpack.c.b16 %v3349, %v3345
    %v4134 = vpack.c.b16 %v3350, %v3346
    %v4135 = vpack.c.b16 %v3351, %v3347
    %v4136 = vpack.c.b16 %v3352, %v3348
    %vm4921 = vcmask 523264
    %v4923 = vsel %vm4921, %v194, 0
    %4925 = vmatprep.subr.bf16.mxu0 %v3382
    %4926 = vmatpush1.bf16.msra.mxu0 %v3381
    %4927 = vmatprep.subr.bf16.mxu0 %v3378
    %4928 = vmatpush1.bf16.msra.mxu0 %v3377
    %4929 = vmatprep.subr.bf16.mxu0 %v3374
    %4930 = vmatpush1.bf16.msra.mxu0 %v3373
    %4931 = vmatprep.subr.bf16.mxu0 %v3370
    %4932 = vmatpush1.bf16.msra.mxu0 %v3369
    %4933 = vmatprep.subr.bf16.mxu0 %v3366
    %4934 = vmatpush1.bf16.msra.mxu0 %v3365
    %4935 = vmatprep.subr.bf16.mxu0 %v3362
    %4936 = vmatpush1.bf16.msra.mxu0 %v3361
    %4937 = vmatprep.subr.bf16.mxu0 %v3358
    %4938 = vmatpush1.bf16.msra.mxu0 %v3357
    %4939 = vmatprep.subr.bf16.mxu0 %v3354
    %4940 = vmatpush1.bf16.msra.mxu0 %v3353
    %4941 = vmatprep.subr.bf16.mxu0 %v3414
    %4942 = vmatpush2.bf16.msra.mxu0 %v3413
    %4943 = vmatprep.subr.bf16.mxu0 %v3410
    %4944 = vmatpush2.bf16.msra.mxu0 %v3409
    %4945 = vmatprep.subr.bf16.mxu0 %v3406
    %4946 = vmatpush2.bf16.msra.mxu0 %v3405
    %4947 = vmatprep.subr.bf16.mxu0 %v3402
    %4948 = vmatpush2.bf16.msra.mxu0 %v3401
    %4949 = vmatprep.subr.bf16.mxu0 %v3398
    %4950 = vmatpush2.bf16.msra.mxu0 %v3397
    %4951 = vmatprep.subr.bf16.mxu0 %v3394
    %4952 = vmatpush2.bf16.msra.mxu0 %v3393
    %4953 = vmatprep.subr.bf16.mxu0 %v3390
    %4954 = vmatpush2.bf16.msra.mxu0 %v3389
    %4955 = vmatprep.subr.bf16.mxu0 %v3386
    %4956 = vmatpush2.bf16.msra.mxu0 %v3385
    %4957 = vmatprep.mubr.bf16.mxu0 %v171
    %4958 = vmatmul.mubr.bf16.gmra.mxu0 %v170
    %v4959 = vpop.f32.mrf.mxu0
    %v4960 = vadd.f32 %v984, %v4959
    %v4961 = vpop.f32.mrf.mxu0
    %v4962 = vadd.f32 %v988, %v4961
    %v4963 = vpop.f32.mrf.mxu0
    %v4964 = vpop.f32.mrf.mxu0
    %4965 = vdwg.mxu0
    %4966 = vmatprep.subr.bf16.mxu0 %v3446
    %4967 = vmatpush1.bf16.msra.mxu0 %v3445
    %4968 = vmatprep.subr.bf16.mxu0 %v3442
    %4969 = vmatpush1.bf16.msra.mxu0 %v3441
    %4970 = vmatprep.subr.bf16.mxu0 %v3438
    %4971 = vmatpush1.bf16.msra.mxu0 %v3437
    %4972 = vmatprep.subr.bf16.mxu0 %v3434
    %4973 = vmatpush1.bf16.msra.mxu0 %v3433
    %4974 = vmatprep.subr.bf16.mxu0 %v3430
    %4975 = vmatpush1.bf16.msra.mxu0 %v3429
    %4976 = vmatprep.subr.bf16.mxu0 %v3426
    %4977 = vmatpush1.bf16.msra.mxu0 %v3425
    %4978 = vmatprep.subr.bf16.mxu0 %v3422
    %4979 = vmatpush1.bf16.msra.mxu0 %v3421
    %4980 = vmatprep.subr.bf16.mxu0 %v3418
    %4981 = vmatpush1.bf16.msra.mxu0 %v3417
    %4982 = vmatprep.subr.bf16.mxu0 %v3478
    %4983 = vmatpush2.bf16.msra.mxu0 %v3477
    %4984 = vmatprep.subr.bf16.mxu0 %v3474
    %4985 = vmatpush2.bf16.msra.mxu0 %v3473
    %4986 = vmatprep.subr.bf16.mxu0 %v3470
    %4987 = vmatpush2.bf16.msra.mxu0 %v3469
    %4988 = vmatprep.subr.bf16.mxu0 %v3466
    %4989 = vmatpush2.bf16.msra.mxu0 %v3465
    %4990 = vmatprep.subr.bf16.mxu0 %v3462
    %4991 = vmatpush2.bf16.msra.mxu0 %v3461
    %4992 = vmatprep.subr.bf16.mxu0 %v3458
    %4993 = vmatpush2.bf16.msra.mxu0 %v3457
    %4994 = vmatprep.subr.bf16.mxu0 %v3454
    %4995 = vmatpush2.bf16.msra.mxu0 %v3453
    %4996 = vmatprep.subr.bf16.mxu0 %v3450
    %4997 = vmatpush2.bf16.msra.mxu0 %v3449
    %4998 = vmatprep.mubr.bf16.mxu0 %v173
    %4999 = vmatmul.mubr.bf16.gmra.mxu0 %v172
    %v5000 = vpop.f32.mrf.mxu0
    %v5001 = vadd.f32 %v4960, %v5000
    %v5002 = vpop.f32.mrf.mxu0
    %v5003 = vadd.f32 %v4962, %v5002
    %v5004 = vpop.f32.mrf.mxu0
    %v5005 = vpop.f32.mrf.mxu0
    %5006 = vdwg.mxu0
    %5007 = vmatprep.subr.bf16.mxu0 %v3510
    %5008 = vmatpush1.bf16.msra.mxu0 %v3509
    %5009 = vmatprep.subr.bf16.mxu0 %v3506
    %5010 = vmatpush1.bf16.msra.mxu0 %v3505
    %5011 = vmatprep.subr.bf16.mxu0 %v3502
    %5012 = vmatpush1.bf16.msra.mxu0 %v3501
    %5013 = vmatprep.subr.bf16.mxu0 %v3498
    %5014 = vmatpush1.bf16.msra.mxu0 %v3497
    %5015 = vmatprep.subr.bf16.mxu0 %v3494
    %5016 = vmatpush1.bf16.msra.mxu0 %v3493
    %5017 = vmatprep.subr.bf16.mxu0 %v3490
    %5018 = vmatpush1.bf16.msra.mxu0 %v3489
    %5019 = vmatprep.subr.bf16.mxu0 %v3486
    %5020 = vmatpush1.bf16.msra.mxu0 %v3485
    %5021 = vmatprep.subr.bf16.mxu0 %v3482
    %5022 = vmatpush1.bf16.msra.mxu0 %v3481
    %5023 = vmatprep.subr.bf16.mxu0 %v3542
    %5024 = vmatpush2.bf16.msra.mxu0 %v3541
    %5025 = vmatprep.subr.bf16.mxu0 %v3538
    %5026 = vmatpush2.bf16.msra.mxu0 %v3537
    %5027 = vmatprep.subr.bf16.mxu0 %v3534
    %5028 = vmatpush2.bf16.msra.mxu0 %v3533
    %5029 = vmatprep.subr.bf16.mxu0 %v3530
    %5030 = vmatpush2.bf16.msra.mxu0 %v3529
    %5031 = vmatprep.subr.bf16.mxu0 %v3526
    %5032 = vmatpush2.bf16.msra.mxu0 %v3525
    %5033 = vmatprep.subr.bf16.mxu0 %v3522
    %5034 = vmatpush2.bf16.msra.mxu0 %v3521
    %5035 = vmatprep.subr.bf16.mxu0 %v3518
    %5036 = vmatpush2.bf16.msra.mxu0 %v3517
    %5037 = vmatprep.subr.bf16.mxu0 %v3514
    %5038 = vmatpush2.bf16.msra.mxu0 %v3513
    %5039 = vmatprep.mubr.bf16.mxu0 %v175
    %5040 = vmatmul.mubr.bf16.gmra.mxu0 %v174
    %v5041 = vpop.f32.mrf.mxu0
    %v5042 = vadd.f32 %v5001, %v5041
    %v5043 = vpop.f32.mrf.mxu0
    %v5044 = vadd.f32 %v5003, %v5043
    %v5045 = vpop.f32.mrf.mxu0
    %v5046 = vpop.f32.mrf.mxu0
    %5047 = vdwg.mxu0
    %5048 = vmatprep.subr.bf16.mxu0 %v3574
    %5049 = vmatpush1.bf16.msra.mxu0 %v3573
    %5050 = vmatprep.subr.bf16.mxu0 %v3570
    %5051 = vmatpush1.bf16.msra.mxu0 %v3569
    %5052 = vmatprep.subr.bf16.mxu0 %v3566
    %5053 = vmatpush1.bf16.msra.mxu0 %v3565
    %5054 = vmatprep.subr.bf16.mxu0 %v3562
    %5055 = vmatpush1.bf16.msra.mxu0 %v3561
    %5056 = vmatprep.subr.bf16.mxu0 %v3558
    %5057 = vmatpush1.bf16.msra.mxu0 %v3557
    %5058 = vmatprep.subr.bf16.mxu0 %v3554
    %5059 = vmatpush1.bf16.msra.mxu0 %v3553
    %5060 = vmatprep.subr.bf16.mxu0 %v3550
    %5061 = vmatpush1.bf16.msra.mxu0 %v3549
    %5062 = vmatprep.subr.bf16.mxu0 %v3546
    %5063 = vmatpush1.bf16.msra.mxu0 %v3545
    %5064 = vmatprep.subr.bf16.mxu0 %v3606
    %5065 = vmatpush2.bf16.msra.mxu0 %v3605
    %5066 = vmatprep.subr.bf16.mxu0 %v3602
    %5067 = vmatpush2.bf16.msra.mxu0 %v3601
    %5068 = vmatprep.subr.bf16.mxu0 %v3598
    %5069 = vmatpush2.bf16.msra.mxu0 %v3597
    %5070 = vmatprep.subr.bf16.mxu0 %v3594
    %5071 = vmatpush2.bf16.msra.mxu0 %v3593
    %5072 = vmatprep.subr.bf16.mxu0 %v3590
    %5073 = vmatpush2.bf16.msra.mxu0 %v3589
    %5074 = vmatprep.subr.bf16.mxu0 %v3586
    %5075 = vmatpush2.bf16.msra.mxu0 %v3585
    %5076 = vmatprep.subr.bf16.mxu0 %v3582
    %5077 = vmatpush2.bf16.msra.mxu0 %v3581
    %5078 = vmatprep.subr.bf16.mxu0 %v3578
    %5079 = vmatpush2.bf16.msra.mxu0 %v3577
    %5080 = vmatprep.mubr.bf16.mxu0 %v177
    %5081 = vmatmul.mubr.bf16.gmra.mxu0 %v176
    %v5082 = vpop.f32.mrf.mxu0
    %v5083 = vadd.f32 %v5042, %v5082
    %v5084 = vpop.f32.mrf.mxu0
    %v5085 = vadd.f32 %v5044, %v5084
    %v5086 = vpop.f32.mrf.mxu0
    %v5087 = vpop.f32.mrf.mxu0
    %5088 = vdwg.mxu0
    %5089 = vmatprep.subr.bf16.mxu0 %v3638
    %5090 = vmatpush1.bf16.msra.mxu0 %v3637
    %5091 = vmatprep.subr.bf16.mxu0 %v3634
    %5092 = vmatpush1.bf16.msra.mxu0 %v3633
    %5093 = vmatprep.subr.bf16.mxu0 %v3630
    %5094 = vmatpush1.bf16.msra.mxu0 %v3629
    %5095 = vmatprep.subr.bf16.mxu0 %v3626
    %5096 = vmatpush1.bf16.msra.mxu0 %v3625
    %5097 = vmatprep.subr.bf16.mxu0 %v3622
    %5098 = vmatpush1.bf16.msra.mxu0 %v3621
    %5099 = vmatprep.subr.bf16.mxu0 %v3618
    %5100 = vmatpush1.bf16.msra.mxu0 %v3617
    %5101 = vmatprep.subr.bf16.mxu0 %v3614
    %5102 = vmatpush1.bf16.msra.mxu0 %v3613
    %5103 = vmatprep.subr.bf16.mxu0 %v3610
    %5104 = vmatpush1.bf16.msra.mxu0 %v3609
    %5105 = vmatprep.subr.bf16.mxu0 %v3670
    %5106 = vmatpush2.bf16.msra.mxu0 %v3669
    %5107 = vmatprep.subr.bf16.mxu0 %v3666
    %5108 = vmatpush2.bf16.msra.mxu0 %v3665
    %5109 = vmatprep.subr.bf16.mxu0 %v3662
    %5110 = vmatpush2.bf16.msra.mxu0 %v3661
    %5111 = vmatprep.subr.bf16.mxu0 %v3658
    %5112 = vmatpush2.bf16.msra.mxu0 %v3657
    %5113 = vmatprep.subr.bf16.mxu0 %v3654
    %5114 = vmatpush2.bf16.msra.mxu0 %v3653
    %5115 = vmatprep.subr.bf16.mxu0 %v3650
    %5116 = vmatpush2.bf16.msra.mxu0 %v3649
    %5117 = vmatprep.subr.bf16.mxu0 %v3646
    %5118 = vmatpush2.bf16.msra.mxu0 %v3645
    %5119 = vmatprep.subr.bf16.mxu0 %v3642
    %5120 = vmatpush2.bf16.msra.mxu0 %v3641
    %5121 = vmatprep.mubr.bf16.mxu0 %v179
    %5122 = vmatmul.mubr.bf16.gmra.mxu0 %v178
    %v5123 = vpop.f32.mrf.mxu0
    %v5124 = vadd.f32 %v5083, %v5123
    %v5125 = vpop.f32.mrf.mxu0
    %v5126 = vadd.f32 %v5085, %v5125
    %v5127 = vpop.f32.mrf.mxu0
    %v5128 = vpop.f32.mrf.mxu0
    %5129 = vdwg.mxu0
    %5130 = vmatprep.subr.bf16.mxu0 %v3702
    %5131 = vmatpush1.bf16.msra.mxu0 %v3701
    %5132 = vmatprep.subr.bf16.mxu0 %v3698
    %5133 = vmatpush1.bf16.msra.mxu0 %v3697
    %5134 = vmatprep.subr.bf16.mxu0 %v3694
    %5135 = vmatpush1.bf16.msra.mxu0 %v3693
    %5136 = vmatprep.subr.bf16.mxu0 %v3690
    %5137 = vmatpush1.bf16.msra.mxu0 %v3689
    %5138 = vmatprep.subr.bf16.mxu0 %v3686
    %5139 = vmatpush1.bf16.msra.mxu0 %v3685
    %5140 = vmatprep.subr.bf16.mxu0 %v3682
    %5141 = vmatpush1.bf16.msra.mxu0 %v3681
    %5142 = vmatprep.subr.bf16.mxu0 %v3678
    %5143 = vmatpush1.bf16.msra.mxu0 %v3677
    %5144 = vmatprep.subr.bf16.mxu0 %v3674
    %5145 = vmatpush1.bf16.msra.mxu0 %v3673
    %5146 = vmatprep.subr.bf16.mxu0 %v3734
    %5147 = vmatpush2.bf16.msra.mxu0 %v3733
    %5148 = vmatprep.subr.bf16.mxu0 %v3730
    %5149 = vmatpush2.bf16.msra.mxu0 %v3729
    %5150 = vmatprep.subr.bf16.mxu0 %v3726
    %5151 = vmatpush2.bf16.msra.mxu0 %v3725
    %5152 = vmatprep.subr.bf16.mxu0 %v3722
    %5153 = vmatpush2.bf16.msra.mxu0 %v3721
    %5154 = vmatprep.subr.bf16.mxu0 %v3718
    %5155 = vmatpush2.bf16.msra.mxu0 %v3717
    %5156 = vmatprep.subr.bf16.mxu0 %v3714
    %5157 = vmatpush2.bf16.msra.mxu0 %v3713
    %5158 = vmatprep.subr.bf16.mxu0 %v3710
    %5159 = vmatpush2.bf16.msra.mxu0 %v3709
    %5160 = vmatprep.subr.bf16.mxu0 %v3706
    %5161 = vmatpush2.bf16.msra.mxu0 %v3705
    %5162 = vmatprep.mubr.bf16.mxu0 %v181
    %5163 = vmatmul.mubr.bf16.gmra.mxu0 %v180
    %v5164 = vpop.f32.mrf.mxu0
    %v5165 = vadd.f32 %v5124, %v5164
    %v5166 = vpop.f32.mrf.mxu0
    %v5167 = vadd.f32 %v5126, %v5166
    %v5168 = vpop.f32.mrf.mxu0
    %v5169 = vpop.f32.mrf.mxu0
    %5170 = vdwg.mxu0
    %5171 = vmatprep.subr.bf16.mxu0 %v3766
    %5172 = vmatpush1.bf16.msra.mxu0 %v3765
    %5173 = vmatprep.subr.bf16.mxu0 %v3762
    %5174 = vmatpush1.bf16.msra.mxu0 %v3761
    %5175 = vmatprep.subr.bf16.mxu0 %v3758
    %5176 = vmatpush1.bf16.msra.mxu0 %v3757
    %5177 = vmatprep.subr.bf16.mxu0 %v3754
    %5178 = vmatpush1.bf16.msra.mxu0 %v3753
    %5179 = vmatprep.subr.bf16.mxu0 %v3750
    %5180 = vmatpush1.bf16.msra.mxu0 %v3749
    %5181 = vmatprep.subr.bf16.mxu0 %v3746
    %5182 = vmatpush1.bf16.msra.mxu0 %v3745
    %5183 = vmatprep.subr.bf16.mxu0 %v3742
    %5184 = vmatpush1.bf16.msra.mxu0 %v3741
    %5185 = vmatprep.subr.bf16.mxu0 %v3738
    %5186 = vmatpush1.bf16.msra.mxu0 %v3737
    %5187 = vmatprep.subr.bf16.mxu0 %v3798
    %5188 = vmatpush2.bf16.msra.mxu0 %v3797
    %5189 = vmatprep.subr.bf16.mxu0 %v3794
    %5190 = vmatpush2.bf16.msra.mxu0 %v3793
    %5191 = vmatprep.subr.bf16.mxu0 %v3790
    %5192 = vmatpush2.bf16.msra.mxu0 %v3789
    %5193 = vmatprep.subr.bf16.mxu0 %v3786
    %5194 = vmatpush2.bf16.msra.mxu0 %v3785
    %5195 = vmatprep.subr.bf16.mxu0 %v3782
    %5196 = vmatpush2.bf16.msra.mxu0 %v3781
    %5197 = vmatprep.subr.bf16.mxu0 %v3778
    %5198 = vmatpush2.bf16.msra.mxu0 %v3777
    %5199 = vmatprep.subr.bf16.mxu0 %v3774
    %5200 = vmatpush2.bf16.msra.mxu0 %v3773
    %5201 = vmatprep.subr.bf16.mxu0 %v3770
    %5202 = vmatpush2.bf16.msra.mxu0 %v3769
    %5203 = vmatprep.mubr.bf16.mxu0 %v183
    %5204 = vmatmul.mubr.bf16.gmra.mxu0 %v182
    %v5205 = vpop.f32.mrf.mxu0
    %v5206 = vadd.f32 %v5165, %v5205
    %v5207 = vpop.f32.mrf.mxu0
    %v5208 = vadd.f32 %v5167, %v5207
    %v5209 = vpop.f32.mrf.mxu0
    %v5210 = vpop.f32.mrf.mxu0
    %5211 = vdwg.mxu0
    %5212 = vmatprep.subr.bf16.mxu0 %v3830
    %5213 = vmatpush1.bf16.msra.mxu0 %v3829
    %5214 = vmatprep.subr.bf16.mxu0 %v3826
    %5215 = vmatpush1.bf16.msra.mxu0 %v3825
    %5216 = vmatprep.subr.bf16.mxu0 %v3822
    %5217 = vmatpush1.bf16.msra.mxu0 %v3821
    %5218 = vmatprep.subr.bf16.mxu0 %v3818
    %5219 = vmatpush1.bf16.msra.mxu0 %v3817
    %5220 = vmatprep.subr.bf16.mxu0 %v3814
    %5221 = vmatpush1.bf16.msra.mxu0 %v3813
    %5222 = vmatprep.subr.bf16.mxu0 %v3810
    %5223 = vmatpush1.bf16.msra.mxu0 %v3809
    %5224 = vmatprep.subr.bf16.mxu0 %v3806
    %5225 = vmatpush1.bf16.msra.mxu0 %v3805
    %5226 = vmatprep.subr.bf16.mxu0 %v3802
    %5227 = vmatpush1.bf16.msra.mxu0 %v3801
    %5228 = vmatprep.subr.bf16.mxu0 %v3862
    %5229 = vmatpush2.bf16.msra.mxu0 %v3861
    %5230 = vmatprep.subr.bf16.mxu0 %v3858
    %5231 = vmatpush2.bf16.msra.mxu0 %v3857
    %5232 = vmatprep.subr.bf16.mxu0 %v3854
    %5233 = vmatpush2.bf16.msra.mxu0 %v3853
    %5234 = vmatprep.subr.bf16.mxu0 %v3850
    %5235 = vmatpush2.bf16.msra.mxu0 %v3849
    %5236 = vmatprep.subr.bf16.mxu0 %v3846
    %5237 = vmatpush2.bf16.msra.mxu0 %v3845
    %5238 = vmatprep.subr.bf16.mxu0 %v3842
    %5239 = vmatpush2.bf16.msra.mxu0 %v3841
    %5240 = vmatprep.subr.bf16.mxu0 %v3838
    %5241 = vmatpush2.bf16.msra.mxu0 %v3837
    %5242 = vmatprep.subr.bf16.mxu0 %v3834
    %5243 = vmatpush2.bf16.msra.mxu0 %v3833
    %5244 = vmatprep.mubr.bf16.mxu0 %v185
    %5245 = vmatmul.mubr.bf16.gmra.mxu0 %v184
    %v5246 = vpop.f32.mrf.mxu0
    %v5247 = vadd.f32 %v5206, %v5246
    %v5248 = vpop.f32.mrf.mxu0
    %v5249 = vadd.f32 %v5208, %v5248
    %v5250 = vpop.f32.mrf.mxu0
    %v5251 = vpop.f32.mrf.mxu0
    %5252 = vdwg.mxu0
    %5253 = vmatprep.subr.bf16.mxu0 %v3894
    %5254 = vmatpush1.bf16.msra.mxu0 %v3893
    %5255 = vmatprep.subr.bf16.mxu0 %v3890
    %5256 = vmatpush1.bf16.msra.mxu0 %v3889
    %5257 = vmatprep.subr.bf16.mxu0 %v3886
    %5258 = vmatpush1.bf16.msra.mxu0 %v3885
    %5259 = vmatprep.subr.bf16.mxu0 %v3882
    %5260 = vmatpush1.bf16.msra.mxu0 %v3881
    %5261 = vmatprep.subr.bf16.mxu0 %v3878
    %5262 = vmatpush1.bf16.msra.mxu0 %v3877
    %5263 = vmatprep.subr.bf16.mxu0 %v3874
    %5264 = vmatpush1.bf16.msra.mxu0 %v3873
    %5265 = vmatprep.subr.bf16.mxu0 %v3870
    %5266 = vmatpush1.bf16.msra.mxu0 %v3869
    %5267 = vmatprep.subr.bf16.mxu0 %v3866
    %5268 = vmatpush1.bf16.msra.mxu0 %v3865
    %5269 = vmatprep.subr.bf16.mxu0 %v3926
    %5270 = vmatpush2.bf16.msra.mxu0 %v3925
    %5271 = vmatprep.subr.bf16.mxu0 %v3922
    %5272 = vmatpush2.bf16.msra.mxu0 %v3921
    %5273 = vmatprep.subr.bf16.mxu0 %v3918
    %5274 = vmatpush2.bf16.msra.mxu0 %v3917
    %5275 = vmatprep.subr.bf16.mxu0 %v3914
    %5276 = vmatpush2.bf16.msra.mxu0 %v3913
    %5277 = vmatprep.subr.bf16.mxu0 %v3910
    %5278 = vmatpush2.bf16.msra.mxu0 %v3909
    %5279 = vmatprep.subr.bf16.mxu0 %v3906
    %5280 = vmatpush2.bf16.msra.mxu0 %v3905
    %5281 = vmatprep.subr.bf16.mxu0 %v3902
    %5282 = vmatpush2.bf16.msra.mxu0 %v3901
    %5283 = vmatprep.subr.bf16.mxu0 %v3898
    %5284 = vmatpush2.bf16.msra.mxu0 %v3897
    %5285 = vmatprep.mubr.bf16.mxu0 %v187
    %5286 = vmatmul.mubr.bf16.gmra.mxu0 %v186
    %v5287 = vpop.f32.mrf.mxu0
    %v5288 = vadd.f32 %v5247, %v5287
    %v5289 = vpop.f32.mrf.mxu0
    %v5290 = vadd.f32 %v5249, %v5289
    %v5291 = vpop.f32.mrf.mxu0
    %v5292 = vpop.f32.mrf.mxu0
    %5293 = vdwg.mxu0
    %5294 = vmatprep.subr.bf16.mxu0 %v3958
    %5295 = vmatpush1.bf16.msra.mxu0 %v3957
    %5296 = vmatprep.subr.bf16.mxu0 %v3954
    %5297 = vmatpush1.bf16.msra.mxu0 %v3953
    %5298 = vmatprep.subr.bf16.mxu0 %v3950
    %5299 = vmatpush1.bf16.msra.mxu0 %v3949
    %5300 = vmatprep.subr.bf16.mxu0 %v3946
    %5301 = vmatpush1.bf16.msra.mxu0 %v3945
    %5302 = vmatprep.subr.bf16.mxu0 %v3942
    %5303 = vmatpush1.bf16.msra.mxu0 %v3941
    %5304 = vmatprep.subr.bf16.mxu0 %v3938
    %5305 = vmatpush1.bf16.msra.mxu0 %v3937
    %5306 = vmatprep.subr.bf16.mxu0 %v3934
    %5307 = vmatpush1.bf16.msra.mxu0 %v3933
    %5308 = vmatprep.subr.bf16.mxu0 %v3930
    %5309 = vmatpush1.bf16.msra.mxu0 %v3929
    %5310 = vmatprep.subr.bf16.mxu0 %v3990
    %5311 = vmatpush2.bf16.msra.mxu0 %v3989
    %5312 = vmatprep.subr.bf16.mxu0 %v3986
    %5313 = vmatpush2.bf16.msra.mxu0 %v3985
    %5314 = vmatprep.subr.bf16.mxu0 %v3982
    %5315 = vmatpush2.bf16.msra.mxu0 %v3981
    %5316 = vmatprep.subr.bf16.mxu0 %v3978
    %5317 = vmatpush2.bf16.msra.mxu0 %v3977
    %5318 = vmatprep.subr.bf16.mxu0 %v3974
    %5319 = vmatpush2.bf16.msra.mxu0 %v3973
    %5320 = vmatprep.subr.bf16.mxu0 %v3970
    %5321 = vmatpush2.bf16.msra.mxu0 %v3969
    %5322 = vmatprep.subr.bf16.mxu0 %v3966
    %5323 = vmatpush2.bf16.msra.mxu0 %v3965
    %5324 = vmatprep.subr.bf16.mxu0 %v3962
    %5325 = vmatpush2.bf16.msra.mxu0 %v3961
    %5326 = vmatprep.mubr.bf16.mxu0 %v189
    %5327 = vmatmul.mubr.bf16.gmra.mxu0 %v188
    %v5328 = vpop.f32.mrf.mxu0
    %v5329 = vadd.f32 %v5288, %v5328
    %v5330 = vpop.f32.mrf.mxu0
    %v5331 = vadd.f32 %v5290, %v5330
    %v5332 = vpop.f32.mrf.mxu0
    %v5333 = vpop.f32.mrf.mxu0
    %5334 = vdwg.mxu0
    %5335 = vmatprep.subr.bf16.mxu0 %v4022
    %5336 = vmatpush1.bf16.msra.mxu0 %v4021
    %5337 = vmatprep.subr.bf16.mxu0 %v4018
    %5338 = vmatpush1.bf16.msra.mxu0 %v4017
    %5339 = vmatprep.subr.bf16.mxu0 %v4014
    %5340 = vmatpush1.bf16.msra.mxu0 %v4013
    %5341 = vmatprep.subr.bf16.mxu0 %v4010
    %5342 = vmatpush1.bf16.msra.mxu0 %v4009
    %5343 = vmatprep.subr.bf16.mxu0 %v4006
    %5344 = vmatpush1.bf16.msra.mxu0 %v4005
    %5345 = vmatprep.subr.bf16.mxu0 %v4002
    %5346 = vmatpush1.bf16.msra.mxu0 %v4001
    %5347 = vmatprep.subr.bf16.mxu0 %v3998
    %5348 = vmatpush1.bf16.msra.mxu0 %v3997
    %5349 = vmatprep.subr.bf16.mxu0 %v3994
    %5350 = vmatpush1.bf16.msra.mxu0 %v3993
    %5351 = vmatprep.subr.bf16.mxu0 %v4054
    %5352 = vmatpush2.bf16.msra.mxu0 %v4053
    %5353 = vmatprep.subr.bf16.mxu0 %v4050
    %5354 = vmatpush2.bf16.msra.mxu0 %v4049
    %5355 = vmatprep.subr.bf16.mxu0 %v4046
    %5356 = vmatpush2.bf16.msra.mxu0 %v4045
    %5357 = vmatprep.subr.bf16.mxu0 %v4042
    %5358 = vmatpush2.bf16.msra.mxu0 %v4041
    %5359 = vmatprep.subr.bf16.mxu0 %v4038
    %5360 = vmatpush2.bf16.msra.mxu0 %v4037
    %5361 = vmatprep.subr.bf16.mxu0 %v4034
    %5362 = vmatpush2.bf16.msra.mxu0 %v4033
    %5363 = vmatprep.subr.bf16.mxu0 %v4030
    %5364 = vmatpush2.bf16.msra.mxu0 %v4029
    %5365 = vmatprep.subr.bf16.mxu0 %v4026
    %5366 = vmatpush2.bf16.msra.mxu0 %v4025
    %5367 = vmatprep.mubr.bf16.mxu0 %v191
    %5368 = vmatmul.mubr.bf16.gmra.mxu0 %v190
    %v5369 = vpop.f32.mrf.mxu0
    %v5370 = vadd.f32 %v5329, %v5369
    %v5371 = vpop.f32.mrf.mxu0
    %v5372 = vadd.f32 %v5331, %v5371
    %v5373 = vpop.f32.mrf.mxu0
    %v5374 = vpop.f32.mrf.mxu0
    %5375 = vdwg.mxu0
    %5376 = vmatprep.subr.bf16.mxu0 %v4086
    %5377 = vmatpush1.bf16.msra.mxu0 %v4085
    %5378 = vmatprep.subr.bf16.mxu0 %v4082
    %5379 = vmatpush1.bf16.msra.mxu0 %v4081
    %5380 = vmatprep.subr.bf16.mxu0 %v4078
    %5381 = vmatpush1.bf16.msra.mxu0 %v4077
    %5382 = vmatprep.subr.bf16.mxu0 %v4074
    %5383 = vmatpush1.bf16.msra.mxu0 %v4073
    %5384 = vmatprep.subr.bf16.mxu0 %v4070
    %5385 = vmatpush1.bf16.msra.mxu0 %v4069
    %5386 = vmatprep.subr.bf16.mxu0 %v4066
    %5387 = vmatpush1.bf16.msra.mxu0 %v4065
    %5388 = vmatprep.subr.bf16.mxu0 %v4062
    %5389 = vmatpush1.bf16.msra.mxu0 %v4061
    %5390 = vmatprep.subr.bf16.mxu0 %v4058
    %5391 = vmatpush1.bf16.msra.mxu0 %v4057
    %5392 = vmatprep.subr.bf16.mxu0 %v4118
    %5393 = vmatpush2.bf16.msra.mxu0 %v4117
    %5394 = vmatprep.subr.bf16.mxu0 %v4114
    %5395 = vmatpush2.bf16.msra.mxu0 %v4113
    %5396 = vmatprep.subr.bf16.mxu0 %v4110
    %5397 = vmatpush2.bf16.msra.mxu0 %v4109
    %5398 = vmatprep.subr.bf16.mxu0 %v4106
    %5399 = vmatpush2.bf16.msra.mxu0 %v4105
    %5400 = vmatprep.subr.bf16.mxu0 %v4102
    %5401 = vmatpush2.bf16.msra.mxu0 %v4101
    %5402 = vmatprep.subr.bf16.mxu0 %v4098
    %5403 = vmatpush2.bf16.msra.mxu0 %v4097
    %5404 = vmatprep.subr.bf16.mxu0 %v4094
    %5405 = vmatpush2.bf16.msra.mxu0 %v4093
    %5406 = vmatprep.subr.bf16.mxu0 %v4090
    %5407 = vmatpush2.bf16.msra.mxu0 %v4089
    %5408 = vmatprep.mubr.bf16.mxu0 %v193
    %5409 = vmatmul.mubr.bf16.gmra.mxu0 %v192
    %v5410 = vpop.f32.mrf.mxu0
    %v5411 = vadd.f32 %v5370, %v5410
    %v5412 = vpop.f32.mrf.mxu0
    %v5413 = vadd.f32 %v5372, %v5412
    %v5414 = vpop.f32.mrf.mxu0
    %v5415 = vpop.f32.mrf.mxu0
    %5416 = vdwg.mxu0
    %5417 = vmatprep.subr.bf16.mxu0 0
    %5418 = vmatpush1.bf16.msra.mxu0 0
    %5419 = vmatprep.subr.bf16.mxu0 0
    %5420 = vmatpush1.bf16.msra.mxu0 0
    %5421 = vmatprep.subr.bf16.mxu0 0
    %5422 = vmatpush1.bf16.msra.mxu0 0
    %5423 = vmatprep.subr.bf16.mxu0 0
    %5424 = vmatpush1.bf16.msra.mxu0 0
    %5425 = vmatprep.subr.bf16.mxu0 %v4134
    %5426 = vmatpush1.bf16.msra.mxu0 %v4133
    %5427 = vmatprep.subr.bf16.mxu0 %v4130
    %5428 = vmatpush1.bf16.msra.mxu0 %v4129
    %5429 = vmatprep.subr.bf16.mxu0 %v4126
    %5430 = vmatpush1.bf16.msra.mxu0 %v4125
    %5431 = vmatprep.subr.bf16.mxu0 %v4122
    %5432 = vmatpush1.bf16.msra.mxu0 %v4121
    %5433 = vmatprep.subr.bf16.mxu0 0
    %5434 = vmatpush2.bf16.msra.mxu0 0
    %5435 = vmatprep.subr.bf16.mxu0 0
    %5436 = vmatpush2.bf16.msra.mxu0 0
    %5437 = vmatprep.subr.bf16.mxu0 0
    %5438 = vmatpush2.bf16.msra.mxu0 0
    %5439 = vmatprep.subr.bf16.mxu0 0
    %5440 = vmatpush2.bf16.msra.mxu0 0
    %5441 = vmatprep.subr.bf16.mxu0 0
    %5442 = vmatpush2.bf16.msra.mxu0 0
    %5443 = vmatprep.subr.bf16.mxu0 0
    %5444 = vmatpush2.bf16.msra.mxu0 0
    %5445 = vmatprep.subr.bf16.mxu0 0
    %5446 = vmatpush2.bf16.msra.mxu0 0
    %5447 = vmatprep.subr.bf16.mxu0 0
    %5448 = vmatpush2.bf16.msra.mxu0 0
    %5449 = vmatprep.mubr.bf16.mxu0 0
    %5450 = vmatmul.mubr.bf16.gmra.mxu0 %v4923
    %v5451 = vpop.f32.mrf.mxu0
    %v5452 = vadd.f32 %v5411, %v5451
    %v5453 = vpop.f32.mrf.mxu0
    %v5454 = vadd.f32 %v5413, %v5453
    %v5455 = vpop.f32.mrf.mxu0
    %v5456 = vpop.f32.mrf.mxu0
    %5457 = vdwg.mxu0
    %5458 = vmatprep.subr.bf16.mxu0 %v3384
    %5459 = vmatpush1.bf16.msra.mxu0 %v3383
    %5460 = vmatprep.subr.bf16.mxu0 %v3380
    %5461 = vmatpush1.bf16.msra.mxu0 %v3379
    %5462 = vmatprep.subr.bf16.mxu0 %v3376
    %5463 = vmatpush1.bf16.msra.mxu0 %v3375
    %5464 = vmatprep.subr.bf16.mxu0 %v3372
    %5465 = vmatpush1.bf16.msra.mxu0 %v3371
    %5466 = vmatprep.subr.bf16.mxu0 %v3368
    %5467 = vmatpush1.bf16.msra.mxu0 %v3367
    %5468 = vmatprep.subr.bf16.mxu0 %v3364
    %5469 = vmatpush1.bf16.msra.mxu0 %v3363
    %5470 = vmatprep.subr.bf16.mxu0 %v3360
    %5471 = vmatpush1.bf16.msra.mxu0 %v3359
    %5472 = vmatprep.subr.bf16.mxu0 %v3356
    %5473 = vmatpush1.bf16.msra.mxu0 %v3355
    %5474 = vmatprep.subr.bf16.mxu0 %v3416
    %5475 = vmatpush2.bf16.msra.mxu0 %v3415
    %5476 = vmatprep.subr.bf16.mxu0 %v3412
    %5477 = vmatpush2.bf16.msra.mxu0 %v3411
    %5478 = vmatprep.subr.bf16.mxu0 %v3408
    %5479 = vmatpush2.bf16.msra.mxu0 %v3407
    %5480 = vmatprep.subr.bf16.mxu0 %v3404
    %5481 = vmatpush2.bf16.msra.mxu0 %v3403
    %5482 = vmatprep.subr.bf16.mxu0 %v3400
    %5483 = vmatpush2.bf16.msra.mxu0 %v3399
    %5484 = vmatprep.subr.bf16.mxu0 %v3396
    %5485 = vmatpush2.bf16.msra.mxu0 %v3395
    %5486 = vmatprep.subr.bf16.mxu0 %v3392
    %5487 = vmatpush2.bf16.msra.mxu0 %v3391
    %5488 = vmatprep.subr.bf16.mxu0 %v3388
    %5489 = vmatpush2.bf16.msra.mxu0 %v3387
    %5490 = vmatprep.mubr.bf16.mxu0 %v171
    %5491 = vmatmul.mubr.bf16.gmra.mxu0 %v170
    %v5492 = vpop.f32.mrf.mxu0
    %v5493 = vadd.f32 %v992, %v5492
    %v5494 = vpop.f32.mrf.mxu0
    %v5495 = vadd.f32 %v996, %v5494
    %v5496 = vpop.f32.mrf.mxu0
    %v5497 = vpop.f32.mrf.mxu0
    %5498 = vdwg.mxu0
    %5499 = vmatprep.subr.bf16.mxu0 %v3448
    %5500 = vmatpush1.bf16.msra.mxu0 %v3447
    %5501 = vmatprep.subr.bf16.mxu0 %v3444
    %5502 = vmatpush1.bf16.msra.mxu0 %v3443
    %5503 = vmatprep.subr.bf16.mxu0 %v3440
    %5504 = vmatpush1.bf16.msra.mxu0 %v3439
    %5505 = vmatprep.subr.bf16.mxu0 %v3436
    %5506 = vmatpush1.bf16.msra.mxu0 %v3435
    %5507 = vmatprep.subr.bf16.mxu0 %v3432
    %5508 = vmatpush1.bf16.msra.mxu0 %v3431
    %5509 = vmatprep.subr.bf16.mxu0 %v3428
    %5510 = vmatpush1.bf16.msra.mxu0 %v3427
    %5511 = vmatprep.subr.bf16.mxu0 %v3424
    %5512 = vmatpush1.bf16.msra.mxu0 %v3423
    %5513 = vmatprep.subr.bf16.mxu0 %v3420
    %5514 = vmatpush1.bf16.msra.mxu0 %v3419
    %5515 = vmatprep.subr.bf16.mxu0 %v3480
    %5516 = vmatpush2.bf16.msra.mxu0 %v3479
    %5517 = vmatprep.subr.bf16.mxu0 %v3476
    %5518 = vmatpush2.bf16.msra.mxu0 %v3475
    %5519 = vmatprep.subr.bf16.mxu0 %v3472
    %5520 = vmatpush2.bf16.msra.mxu0 %v3471
    %5521 = vmatprep.subr.bf16.mxu0 %v3468
    %5522 = vmatpush2.bf16.msra.mxu0 %v3467
    %5523 = vmatprep.subr.bf16.mxu0 %v3464
    %5524 = vmatpush2.bf16.msra.mxu0 %v3463
    %5525 = vmatprep.subr.bf16.mxu0 %v3460
    %5526 = vmatpush2.bf16.msra.mxu0 %v3459
    %5527 = vmatprep.subr.bf16.mxu0 %v3456
    %5528 = vmatpush2.bf16.msra.mxu0 %v3455
    %5529 = vmatprep.subr.bf16.mxu0 %v3452
    %5530 = vmatpush2.bf16.msra.mxu0 %v3451
    %5531 = vmatprep.mubr.bf16.mxu0 %v173
    %5532 = vmatmul.mubr.bf16.gmra.mxu0 %v172
    %v5533 = vpop.f32.mrf.mxu0
    %v5534 = vadd.f32 %v5493, %v5533
    %v5535 = vpop.f32.mrf.mxu0
    %v5536 = vadd.f32 %v5495, %v5535
    %v5537 = vpop.f32.mrf.mxu0
    %v5538 = vpop.f32.mrf.mxu0
    %5539 = vdwg.mxu0
    %5540 = vmatprep.subr.bf16.mxu0 %v3512
    %5541 = vmatpush1.bf16.msra.mxu0 %v3511
    %5542 = vmatprep.subr.bf16.mxu0 %v3508
    %5543 = vmatpush1.bf16.msra.mxu0 %v3507
    %5544 = vmatprep.subr.bf16.mxu0 %v3504
    %5545 = vmatpush1.bf16.msra.mxu0 %v3503
    %5546 = vmatprep.subr.bf16.mxu0 %v3500
    %5547 = vmatpush1.bf16.msra.mxu0 %v3499
    %5548 = vmatprep.subr.bf16.mxu0 %v3496
    %5549 = vmatpush1.bf16.msra.mxu0 %v3495
    %5550 = vmatprep.subr.bf16.mxu0 %v3492
    %5551 = vmatpush1.bf16.msra.mxu0 %v3491
    %5552 = vmatprep.subr.bf16.mxu0 %v3488
    %5553 = vmatpush1.bf16.msra.mxu0 %v3487
    %5554 = vmatprep.subr.bf16.mxu0 %v3484
    %5555 = vmatpush1.bf16.msra.mxu0 %v3483
    %5556 = vmatprep.subr.bf16.mxu0 %v3544
    %5557 = vmatpush2.bf16.msra.mxu0 %v3543
    %5558 = vmatprep.subr.bf16.mxu0 %v3540
    %5559 = vmatpush2.bf16.msra.mxu0 %v3539
    %5560 = vmatprep.subr.bf16.mxu0 %v3536
    %5561 = vmatpush2.bf16.msra.mxu0 %v3535
    %5562 = vmatprep.subr.bf16.mxu0 %v3532
    %5563 = vmatpush2.bf16.msra.mxu0 %v3531
    %5564 = vmatprep.subr.bf16.mxu0 %v3528
    %5565 = vmatpush2.bf16.msra.mxu0 %v3527
    %5566 = vmatprep.subr.bf16.mxu0 %v3524
    %5567 = vmatpush2.bf16.msra.mxu0 %v3523
    %5568 = vmatprep.subr.bf16.mxu0 %v3520
    %5569 = vmatpush2.bf16.msra.mxu0 %v3519
    %5570 = vmatprep.subr.bf16.mxu0 %v3516
    %5571 = vmatpush2.bf16.msra.mxu0 %v3515
    %5572 = vmatprep.mubr.bf16.mxu0 %v175
    %5573 = vmatmul.mubr.bf16.gmra.mxu0 %v174
    %v5574 = vpop.f32.mrf.mxu0
    %v5575 = vadd.f32 %v5534, %v5574
    %v5576 = vpop.f32.mrf.mxu0
    %v5577 = vadd.f32 %v5536, %v5576
    %v5578 = vpop.f32.mrf.mxu0
    %v5579 = vpop.f32.mrf.mxu0
    %5580 = vdwg.mxu0
    %5581 = vmatprep.subr.bf16.mxu0 %v3576
    %5582 = vmatpush1.bf16.msra.mxu0 %v3575
    %5583 = vmatprep.subr.bf16.mxu0 %v3572
    %5584 = vmatpush1.bf16.msra.mxu0 %v3571
    %5585 = vmatprep.subr.bf16.mxu0 %v3568
    %5586 = vmatpush1.bf16.msra.mxu0 %v3567
    %5587 = vmatprep.subr.bf16.mxu0 %v3564
    %5588 = vmatpush1.bf16.msra.mxu0 %v3563
    %5589 = vmatprep.subr.bf16.mxu0 %v3560
    %5590 = vmatpush1.bf16.msra.mxu0 %v3559
    %5591 = vmatprep.subr.bf16.mxu0 %v3556
    %5592 = vmatpush1.bf16.msra.mxu0 %v3555
    %5593 = vmatprep.subr.bf16.mxu0 %v3552
    %5594 = vmatpush1.bf16.msra.mxu0 %v3551
    %5595 = vmatprep.subr.bf16.mxu0 %v3548
    %5596 = vmatpush1.bf16.msra.mxu0 %v3547
    %5597 = vmatprep.subr.bf16.mxu0 %v3608
    %5598 = vmatpush2.bf16.msra.mxu0 %v3607
    %5599 = vmatprep.subr.bf16.mxu0 %v3604
    %5600 = vmatpush2.bf16.msra.mxu0 %v3603
    %5601 = vmatprep.subr.bf16.mxu0 %v3600
    %5602 = vmatpush2.bf16.msra.mxu0 %v3599
    %5603 = vmatprep.subr.bf16.mxu0 %v3596
    %5604 = vmatpush2.bf16.msra.mxu0 %v3595
    %5605 = vmatprep.subr.bf16.mxu0 %v3592
    %5606 = vmatpush2.bf16.msra.mxu0 %v3591
    %5607 = vmatprep.subr.bf16.mxu0 %v3588
    %5608 = vmatpush2.bf16.msra.mxu0 %v3587
    %5609 = vmatprep.subr.bf16.mxu0 %v3584
    %5610 = vmatpush2.bf16.msra.mxu0 %v3583
    %5611 = vmatprep.subr.bf16.mxu0 %v3580
    %5612 = vmatpush2.bf16.msra.mxu0 %v3579
    %5613 = vmatprep.mubr.bf16.mxu0 %v177
    %5614 = vmatmul.mubr.bf16.gmra.mxu0 %v176
    %v5615 = vpop.f32.mrf.mxu0
    %v5616 = vadd.f32 %v5575, %v5615
    %v5617 = vpop.f32.mrf.mxu0
    %v5618 = vadd.f32 %v5577, %v5617
    %v5619 = vpop.f32.mrf.mxu0
    %v5620 = vpop.f32.mrf.mxu0
    %5621 = vdwg.mxu0
    %5622 = vmatprep.subr.bf16.mxu0 %v3640
    %5623 = vmatpush1.bf16.msra.mxu0 %v3639
    %5624 = vmatprep.subr.bf16.mxu0 %v3636
    %5625 = vmatpush1.bf16.msra.mxu0 %v3635
    %5626 = vmatprep.subr.bf16.mxu0 %v3632
    %5627 = vmatpush1.bf16.msra.mxu0 %v3631
    %5628 = vmatprep.subr.bf16.mxu0 %v3628
    %5629 = vmatpush1.bf16.msra.mxu0 %v3627
    %5630 = vmatprep.subr.bf16.mxu0 %v3624
    %5631 = vmatpush1.bf16.msra.mxu0 %v3623
    %5632 = vmatprep.subr.bf16.mxu0 %v3620
    %5633 = vmatpush1.bf16.msra.mxu0 %v3619
    %5634 = vmatprep.subr.bf16.mxu0 %v3616
    %5635 = vmatpush1.bf16.msra.mxu0 %v3615
    %5636 = vmatprep.subr.bf16.mxu0 %v3612
    %5637 = vmatpush1.bf16.msra.mxu0 %v3611
    %5638 = vmatprep.subr.bf16.mxu0 %v3672
    %5639 = vmatpush2.bf16.msra.mxu0 %v3671
    %5640 = vmatprep.subr.bf16.mxu0 %v3668
    %5641 = vmatpush2.bf16.msra.mxu0 %v3667
    %5642 = vmatprep.subr.bf16.mxu0 %v3664
    %5643 = vmatpush2.bf16.msra.mxu0 %v3663
    %5644 = vmatprep.subr.bf16.mxu0 %v3660
    %5645 = vmatpush2.bf16.msra.mxu0 %v3659
    %5646 = vmatprep.subr.bf16.mxu0 %v3656
    %5647 = vmatpush2.bf16.msra.mxu0 %v3655
    %5648 = vmatprep.subr.bf16.mxu0 %v3652
    %5649 = vmatpush2.bf16.msra.mxu0 %v3651
    %5650 = vmatprep.subr.bf16.mxu0 %v3648
    %5651 = vmatpush2.bf16.msra.mxu0 %v3647
    %5652 = vmatprep.subr.bf16.mxu0 %v3644
    %5653 = vmatpush2.bf16.msra.mxu0 %v3643
    %5654 = vmatprep.mubr.bf16.mxu0 %v179
    %5655 = vmatmul.mubr.bf16.gmra.mxu0 %v178
    %v5656 = vpop.f32.mrf.mxu0
    %v5657 = vadd.f32 %v5616, %v5656
    %v5658 = vpop.f32.mrf.mxu0
    %v5659 = vadd.f32 %v5618, %v5658
    %v5660 = vpop.f32.mrf.mxu0
    %v5661 = vpop.f32.mrf.mxu0
    %5662 = vdwg.mxu0
    %5663 = vmatprep.subr.bf16.mxu0 %v3704
    %5664 = vmatpush1.bf16.msra.mxu0 %v3703
    %5665 = vmatprep.subr.bf16.mxu0 %v3700
    %5666 = vmatpush1.bf16.msra.mxu0 %v3699
    %5667 = vmatprep.subr.bf16.mxu0 %v3696
    %5668 = vmatpush1.bf16.msra.mxu0 %v3695
    %5669 = vmatprep.subr.bf16.mxu0 %v3692
    %5670 = vmatpush1.bf16.msra.mxu0 %v3691
    %5671 = vmatprep.subr.bf16.mxu0 %v3688
    %5672 = vmatpush1.bf16.msra.mxu0 %v3687
    %5673 = vmatprep.subr.bf16.mxu0 %v3684
    %5674 = vmatpush1.bf16.msra.mxu0 %v3683
    %5675 = vmatprep.subr.bf16.mxu0 %v3680
    %5676 = vmatpush1.bf16.msra.mxu0 %v3679
    %5677 = vmatprep.subr.bf16.mxu0 %v3676
    %5678 = vmatpush1.bf16.msra.mxu0 %v3675
    %5679 = vmatprep.subr.bf16.mxu0 %v3736
    %5680 = vmatpush2.bf16.msra.mxu0 %v3735
    %5681 = vmatprep.subr.bf16.mxu0 %v3732
    %5682 = vmatpush2.bf16.msra.mxu0 %v3731
    %5683 = vmatprep.subr.bf16.mxu0 %v3728
    %5684 = vmatpush2.bf16.msra.mxu0 %v3727
    %5685 = vmatprep.subr.bf16.mxu0 %v3724
    %5686 = vmatpush2.bf16.msra.mxu0 %v3723
    %5687 = vmatprep.subr.bf16.mxu0 %v3720
    %5688 = vmatpush2.bf16.msra.mxu0 %v3719
    %5689 = vmatprep.subr.bf16.mxu0 %v3716
    %5690 = vmatpush2.bf16.msra.mxu0 %v3715
    %5691 = vmatprep.subr.bf16.mxu0 %v3712
    %5692 = vmatpush2.bf16.msra.mxu0 %v3711
    %5693 = vmatprep.subr.bf16.mxu0 %v3708
    %5694 = vmatpush2.bf16.msra.mxu0 %v3707
    %5695 = vmatprep.mubr.bf16.mxu0 %v181
    %5696 = vmatmul.mubr.bf16.gmra.mxu0 %v180
    %v5697 = vpop.f32.mrf.mxu0
    %v5698 = vadd.f32 %v5657, %v5697
    %v5699 = vpop.f32.mrf.mxu0
    %v5700 = vadd.f32 %v5659, %v5699
    %v5701 = vpop.f32.mrf.mxu0
    %v5702 = vpop.f32.mrf.mxu0
    %5703 = vdwg.mxu0
    %5704 = vmatprep.subr.bf16.mxu0 %v3768
    %5705 = vmatpush1.bf16.msra.mxu0 %v3767
    %5706 = vmatprep.subr.bf16.mxu0 %v3764
    %5707 = vmatpush1.bf16.msra.mxu0 %v3763
    %5708 = vmatprep.subr.bf16.mxu0 %v3760
    %5709 = vmatpush1.bf16.msra.mxu0 %v3759
    %5710 = vmatprep.subr.bf16.mxu0 %v3756
    %5711 = vmatpush1.bf16.msra.mxu0 %v3755
    %5712 = vmatprep.subr.bf16.mxu0 %v3752
    %5713 = vmatpush1.bf16.msra.mxu0 %v3751
    %5714 = vmatprep.subr.bf16.mxu0 %v3748
    %5715 = vmatpush1.bf16.msra.mxu0 %v3747
    %5716 = vmatprep.subr.bf16.mxu0 %v3744
    %5717 = vmatpush1.bf16.msra.mxu0 %v3743
    %5718 = vmatprep.subr.bf16.mxu0 %v3740
    %5719 = vmatpush1.bf16.msra.mxu0 %v3739
    %5720 = vmatprep.subr.bf16.mxu0 %v3800
    %5721 = vmatpush2.bf16.msra.mxu0 %v3799
    %5722 = vmatprep.subr.bf16.mxu0 %v3796
    %5723 = vmatpush2.bf16.msra.mxu0 %v3795
    %5724 = vmatprep.subr.bf16.mxu0 %v3792
    %5725 = vmatpush2.bf16.msra.mxu0 %v3791
    %5726 = vmatprep.subr.bf16.mxu0 %v3788
    %5727 = vmatpush2.bf16.msra.mxu0 %v3787
    %5728 = vmatprep.subr.bf16.mxu0 %v3784
    %5729 = vmatpush2.bf16.msra.mxu0 %v3783
    %5730 = vmatprep.subr.bf16.mxu0 %v3780
    %5731 = vmatpush2.bf16.msra.mxu0 %v3779
    %5732 = vmatprep.subr.bf16.mxu0 %v3776
    %5733 = vmatpush2.bf16.msra.mxu0 %v3775
    %5734 = vmatprep.subr.bf16.mxu0 %v3772
    %5735 = vmatpush2.bf16.msra.mxu0 %v3771
    %5736 = vmatprep.mubr.bf16.mxu0 %v183
    %5737 = vmatmul.mubr.bf16.gmra.mxu0 %v182
    %v5738 = vpop.f32.mrf.mxu0
    %v5739 = vadd.f32 %v5698, %v5738
    %v5740 = vpop.f32.mrf.mxu0
    %v5741 = vadd.f32 %v5700, %v5740
    %v5742 = vpop.f32.mrf.mxu0
    %v5743 = vpop.f32.mrf.mxu0
    %5744 = vdwg.mxu0
    %5745 = vmatprep.subr.bf16.mxu0 %v3832
    %5746 = vmatpush1.bf16.msra.mxu0 %v3831
    %5747 = vmatprep.subr.bf16.mxu0 %v3828
    %5748 = vmatpush1.bf16.msra.mxu0 %v3827
    %5749 = vmatprep.subr.bf16.mxu0 %v3824
    %5750 = vmatpush1.bf16.msra.mxu0 %v3823
    %5751 = vmatprep.subr.bf16.mxu0 %v3820
    %5752 = vmatpush1.bf16.msra.mxu0 %v3819
    %5753 = vmatprep.subr.bf16.mxu0 %v3816
    %5754 = vmatpush1.bf16.msra.mxu0 %v3815
    %5755 = vmatprep.subr.bf16.mxu0 %v3812
    %5756 = vmatpush1.bf16.msra.mxu0 %v3811
    %5757 = vmatprep.subr.bf16.mxu0 %v3808
    %5758 = vmatpush1.bf16.msra.mxu0 %v3807
    %5759 = vmatprep.subr.bf16.mxu0 %v3804
    %5760 = vmatpush1.bf16.msra.mxu0 %v3803
    %5761 = vmatprep.subr.bf16.mxu0 %v3864
    %5762 = vmatpush2.bf16.msra.mxu0 %v3863
    %5763 = vmatprep.subr.bf16.mxu0 %v3860
    %5764 = vmatpush2.bf16.msra.mxu0 %v3859
    %5765 = vmatprep.subr.bf16.mxu0 %v3856
    %5766 = vmatpush2.bf16.msra.mxu0 %v3855
    %5767 = vmatprep.subr.bf16.mxu0 %v3852
    %5768 = vmatpush2.bf16.msra.mxu0 %v3851
    %5769 = vmatprep.subr.bf16.mxu0 %v3848
    %5770 = vmatpush2.bf16.msra.mxu0 %v3847
    %5771 = vmatprep.subr.bf16.mxu0 %v3844
    %5772 = vmatpush2.bf16.msra.mxu0 %v3843
    %5773 = vmatprep.subr.bf16.mxu0 %v3840
    %5774 = vmatpush2.bf16.msra.mxu0 %v3839
    %5775 = vmatprep.subr.bf16.mxu0 %v3836
    %5776 = vmatpush2.bf16.msra.mxu0 %v3835
    %5777 = vmatprep.mubr.bf16.mxu0 %v185
    %5778 = vmatmul.mubr.bf16.gmra.mxu0 %v184
    %v5779 = vpop.f32.mrf.mxu0
    %v5780 = vadd.f32 %v5739, %v5779
    %v5781 = vpop.f32.mrf.mxu0
    %v5782 = vadd.f32 %v5741, %v5781
    %v5783 = vpop.f32.mrf.mxu0
    %v5784 = vpop.f32.mrf.mxu0
    %5785 = vdwg.mxu0
    %5786 = vmatprep.subr.bf16.mxu0 %v3896
    %5787 = vmatpush1.bf16.msra.mxu0 %v3895
    %5788 = vmatprep.subr.bf16.mxu0 %v3892
    %5789 = vmatpush1.bf16.msra.mxu0 %v3891
    %5790 = vmatprep.subr.bf16.mxu0 %v3888
    %5791 = vmatpush1.bf16.msra.mxu0 %v3887
    %5792 = vmatprep.subr.bf16.mxu0 %v3884
    %5793 = vmatpush1.bf16.msra.mxu0 %v3883
    %5794 = vmatprep.subr.bf16.mxu0 %v3880
    %5795 = vmatpush1.bf16.msra.mxu0 %v3879
    %5796 = vmatprep.subr.bf16.mxu0 %v3876
    %5797 = vmatpush1.bf16.msra.mxu0 %v3875
    %5798 = vmatprep.subr.bf16.mxu0 %v3872
    %5799 = vmatpush1.bf16.msra.mxu0 %v3871
    %5800 = vmatprep.subr.bf16.mxu0 %v3868
    %5801 = vmatpush1.bf16.msra.mxu0 %v3867
    %5802 = vmatprep.subr.bf16.mxu0 %v3928
    %5803 = vmatpush2.bf16.msra.mxu0 %v3927
    %5804 = vmatprep.subr.bf16.mxu0 %v3924
    %5805 = vmatpush2.bf16.msra.mxu0 %v3923
    %5806 = vmatprep.subr.bf16.mxu0 %v3920
    %5807 = vmatpush2.bf16.msra.mxu0 %v3919
    %5808 = vmatprep.subr.bf16.mxu0 %v3916
    %5809 = vmatpush2.bf16.msra.mxu0 %v3915
    %5810 = vmatprep.subr.bf16.mxu0 %v3912
    %5811 = vmatpush2.bf16.msra.mxu0 %v3911
    %5812 = vmatprep.subr.bf16.mxu0 %v3908
    %5813 = vmatpush2.bf16.msra.mxu0 %v3907
    %5814 = vmatprep.subr.bf16.mxu0 %v3904
    %5815 = vmatpush2.bf16.msra.mxu0 %v3903
    %5816 = vmatprep.subr.bf16.mxu0 %v3900
    %5817 = vmatpush2.bf16.msra.mxu0 %v3899
    %5818 = vmatprep.mubr.bf16.mxu0 %v187
    %5819 = vmatmul.mubr.bf16.gmra.mxu0 %v186
    %v5820 = vpop.f32.mrf.mxu0
    %v5821 = vadd.f32 %v5780, %v5820
    %v5822 = vpop.f32.mrf.mxu0
    %v5823 = vadd.f32 %v5782, %v5822
    %v5824 = vpop.f32.mrf.mxu0
    %v5825 = vpop.f32.mrf.mxu0
    %5826 = vdwg.mxu0
    %5827 = vmatprep.subr.bf16.mxu0 %v3960
    %5828 = vmatpush1.bf16.msra.mxu0 %v3959
    %5829 = vmatprep.subr.bf16.mxu0 %v3956
    %5830 = vmatpush1.bf16.msra.mxu0 %v3955
    %5831 = vmatprep.subr.bf16.mxu0 %v3952
    %5832 = vmatpush1.bf16.msra.mxu0 %v3951
    %5833 = vmatprep.subr.bf16.mxu0 %v3948
    %5834 = vmatpush1.bf16.msra.mxu0 %v3947
    %5835 = vmatprep.subr.bf16.mxu0 %v3944
    %5836 = vmatpush1.bf16.msra.mxu0 %v3943
    %5837 = vmatprep.subr.bf16.mxu0 %v3940
    %5838 = vmatpush1.bf16.msra.mxu0 %v3939
    %5839 = vmatprep.subr.bf16.mxu0 %v3936
    %5840 = vmatpush1.bf16.msra.mxu0 %v3935
    %5841 = vmatprep.subr.bf16.mxu0 %v3932
    %5842 = vmatpush1.bf16.msra.mxu0 %v3931
    %5843 = vmatprep.subr.bf16.mxu0 %v3992
    %5844 = vmatpush2.bf16.msra.mxu0 %v3991
    %5845 = vmatprep.subr.bf16.mxu0 %v3988
    %5846 = vmatpush2.bf16.msra.mxu0 %v3987
    %5847 = vmatprep.subr.bf16.mxu0 %v3984
    %5848 = vmatpush2.bf16.msra.mxu0 %v3983
    %5849 = vmatprep.subr.bf16.mxu0 %v3980
    %5850 = vmatpush2.bf16.msra.mxu0 %v3979
    %5851 = vmatprep.subr.bf16.mxu0 %v3976
    %5852 = vmatpush2.bf16.msra.mxu0 %v3975
    %5853 = vmatprep.subr.bf16.mxu0 %v3972
    %5854 = vmatpush2.bf16.msra.mxu0 %v3971
    %5855 = vmatprep.subr.bf16.mxu0 %v3968
    %5856 = vmatpush2.bf16.msra.mxu0 %v3967
    %5857 = vmatprep.subr.bf16.mxu0 %v3964
    %5858 = vmatpush2.bf16.msra.mxu0 %v3963
    %5859 = vmatprep.mubr.bf16.mxu0 %v189
    %5860 = vmatmul.mubr.bf16.gmra.mxu0 %v188
    %v5861 = vpop.f32.mrf.mxu0
    %v5862 = vadd.f32 %v5821, %v5861
    %v5863 = vpop.f32.mrf.mxu0
    %v5864 = vadd.f32 %v5823, %v5863
    %v5865 = vpop.f32.mrf.mxu0
    %v5866 = vpop.f32.mrf.mxu0
    %5867 = vdwg.mxu0
    %5868 = vmatprep.subr.bf16.mxu0 %v4024
    %5869 = vmatpush1.bf16.msra.mxu0 %v4023
    %5870 = vmatprep.subr.bf16.mxu0 %v4020
    %5871 = vmatpush1.bf16.msra.mxu0 %v4019
    %5872 = vmatprep.subr.bf16.mxu0 %v4016
    %5873 = vmatpush1.bf16.msra.mxu0 %v4015
    %5874 = vmatprep.subr.bf16.mxu0 %v4012
    %5875 = vmatpush1.bf16.msra.mxu0 %v4011
    %5876 = vmatprep.subr.bf16.mxu0 %v4008
    %5877 = vmatpush1.bf16.msra.mxu0 %v4007
    %5878 = vmatprep.subr.bf16.mxu0 %v4004
    %5879 = vmatpush1.bf16.msra.mxu0 %v4003
    %5880 = vmatprep.subr.bf16.mxu0 %v4000
    %5881 = vmatpush1.bf16.msra.mxu0 %v3999
    %5882 = vmatprep.subr.bf16.mxu0 %v3996
    %5883 = vmatpush1.bf16.msra.mxu0 %v3995
    %5884 = vmatprep.subr.bf16.mxu0 %v4056
    %5885 = vmatpush2.bf16.msra.mxu0 %v4055
    %5886 = vmatprep.subr.bf16.mxu0 %v4052
    %5887 = vmatpush2.bf16.msra.mxu0 %v4051
    %5888 = vmatprep.subr.bf16.mxu0 %v4048
    %5889 = vmatpush2.bf16.msra.mxu0 %v4047
    %5890 = vmatprep.subr.bf16.mxu0 %v4044
    %5891 = vmatpush2.bf16.msra.mxu0 %v4043
    %5892 = vmatprep.subr.bf16.mxu0 %v4040
    %5893 = vmatpush2.bf16.msra.mxu0 %v4039
    %5894 = vmatprep.subr.bf16.mxu0 %v4036
    %5895 = vmatpush2.bf16.msra.mxu0 %v4035
    %5896 = vmatprep.subr.bf16.mxu0 %v4032
    %5897 = vmatpush2.bf16.msra.mxu0 %v4031
    %5898 = vmatprep.subr.bf16.mxu0 %v4028
    %5899 = vmatpush2.bf16.msra.mxu0 %v4027
    %5900 = vmatprep.mubr.bf16.mxu0 %v191
    %5901 = vmatmul.mubr.bf16.gmra.mxu0 %v190
    %v5902 = vpop.f32.mrf.mxu0
    %v5903 = vadd.f32 %v5862, %v5902
    %v5904 = vpop.f32.mrf.mxu0
    %v5905 = vadd.f32 %v5864, %v5904
    %v5906 = vpop.f32.mrf.mxu0
    %v5907 = vpop.f32.mrf.mxu0
    %5908 = vdwg.mxu0
    %5909 = vmatprep.subr.bf16.mxu0 %v4088
    %5910 = vmatpush1.bf16.msra.mxu0 %v4087
    %5911 = vmatprep.subr.bf16.mxu0 %v4084
    %5912 = vmatpush1.bf16.msra.mxu0 %v4083
    %5913 = vmatprep.subr.bf16.mxu0 %v4080
    %5914 = vmatpush1.bf16.msra.mxu0 %v4079
    %5915 = vmatprep.subr.bf16.mxu0 %v4076
    %5916 = vmatpush1.bf16.msra.mxu0 %v4075
    %5917 = vmatprep.subr.bf16.mxu0 %v4072
    %5918 = vmatpush1.bf16.msra.mxu0 %v4071
    %5919 = vmatprep.subr.bf16.mxu0 %v4068
    %5920 = vmatpush1.bf16.msra.mxu0 %v4067
    %5921 = vmatprep.subr.bf16.mxu0 %v4064
    %5922 = vmatpush1.bf16.msra.mxu0 %v4063
    %5923 = vmatprep.subr.bf16.mxu0 %v4060
    %5924 = vmatpush1.bf16.msra.mxu0 %v4059
    %5925 = vmatprep.subr.bf16.mxu0 %v4120
    %5926 = vmatpush2.bf16.msra.mxu0 %v4119
    %5927 = vmatprep.subr.bf16.mxu0 %v4116
    %5928 = vmatpush2.bf16.msra.mxu0 %v4115
    %5929 = vmatprep.subr.bf16.mxu0 %v4112
    %5930 = vmatpush2.bf16.msra.mxu0 %v4111
    %5931 = vmatprep.subr.bf16.mxu0 %v4108
    %5932 = vmatpush2.bf16.msra.mxu0 %v4107
    %5933 = vmatprep.subr.bf16.mxu0 %v4104
    %5934 = vmatpush2.bf16.msra.mxu0 %v4103
    %5935 = vmatprep.subr.bf16.mxu0 %v4100
    %5936 = vmatpush2.bf16.msra.mxu0 %v4099
    %5937 = vmatprep.subr.bf16.mxu0 %v4096
    %5938 = vmatpush2.bf16.msra.mxu0 %v4095
    %5939 = vmatprep.subr.bf16.mxu0 %v4092
    %5940 = vmatpush2.bf16.msra.mxu0 %v4091
    %5941 = vmatprep.mubr.bf16.mxu0 %v193
    %5942 = vmatmul.mubr.bf16.gmra.mxu0 %v192
    %v5943 = vpop.f32.mrf.mxu0
    %v5944 = vadd.f32 %v5903, %v5943
    %v5945 = vpop.f32.mrf.mxu0
    %v5946 = vadd.f32 %v5905, %v5945
    %v5947 = vpop.f32.mrf.mxu0
    %v5948 = vpop.f32.mrf.mxu0
    %5949 = vdwg.mxu0
    %5950 = vmatprep.subr.bf16.mxu0 0
    %5951 = vmatpush1.bf16.msra.mxu0 0
    %5952 = vmatprep.subr.bf16.mxu0 0
    %5953 = vmatpush1.bf16.msra.mxu0 0
    %5954 = vmatprep.subr.bf16.mxu0 0
    %5955 = vmatpush1.bf16.msra.mxu0 0
    %5956 = vmatprep.subr.bf16.mxu0 0
    %5957 = vmatpush1.bf16.msra.mxu0 0
    %5958 = vmatprep.subr.bf16.mxu0 %v4136
    %5959 = vmatpush1.bf16.msra.mxu0 %v4135
    %5960 = vmatprep.subr.bf16.mxu0 %v4132
    %5961 = vmatpush1.bf16.msra.mxu0 %v4131
    %5962 = vmatprep.subr.bf16.mxu0 %v4128
    %5963 = vmatpush1.bf16.msra.mxu0 %v4127
    %5964 = vmatprep.subr.bf16.mxu0 %v4124
    %5965 = vmatpush1.bf16.msra.mxu0 %v4123
    %5966 = vmatprep.subr.bf16.mxu0 0
    %5967 = vmatpush2.bf16.msra.mxu0 0
    %5968 = vmatprep.subr.bf16.mxu0 0
    %5969 = vmatpush2.bf16.msra.mxu0 0
    %5970 = vmatprep.subr.bf16.mxu0 0
    %5971 = vmatpush2.bf16.msra.mxu0 0
    %5972 = vmatprep.subr.bf16.mxu0 0
    %5973 = vmatpush2.bf16.msra.mxu0 0
    %5974 = vmatprep.subr.bf16.mxu0 0
    %5975 = vmatpush2.bf16.msra.mxu0 0
    %5976 = vmatprep.subr.bf16.mxu0 0
    %5977 = vmatpush2.bf16.msra.mxu0 0
    %5978 = vmatprep.subr.bf16.mxu0 0
    %5979 = vmatpush2.bf16.msra.mxu0 0
    %5980 = vmatprep.subr.bf16.mxu0 0
    %5981 = vmatpush2.bf16.msra.mxu0 0
    %5982 = vmatprep.mubr.bf16.mxu0 0
    %5983 = vmatmul.mubr.bf16.gmra.mxu0 %v4923
    %v5984 = vpop.f32.mrf.mxu0
    %v5985 = vadd.f32 %v5944, %v5984
    %v5986 = vpop.f32.mrf.mxu0
    %v5987 = vadd.f32 %v5946, %v5986
    %v5988 = vpop.f32.mrf.mxu0
    %v5989 = vpop.f32.mrf.mxu0
    %5990 = vdwg.mxu0
    %v5991 = vxor.u32 %v5452, 2147483648
    %v5992 = vxor.u32 %v5454, 2147483648
    %v5993 = vxor.u32 %v5985, 2147483648
    %v5994 = vxor.u32 %v5987, 2147483648
    %v5995 = vmul.f32 %v5991, 1.442695
    %v5996 = vpow.pop %v5995
    %v5997 = vmul.f32 %v5992, 1.442695
    %v5998 = vpow.pop %v5997
    %v5999 = vmul.f32 %v5993, 1.442695
    %v6000 = vpow.pop %v5999
    %v6001 = vmul.f32 %v5994, 1.442695
    %v6002 = vpow.pop %v6001
    %v6003 = vadd.f32 %v5996, 1.0
    %v6004 = vadd.f32 %v5998, 1.0
    %v6005 = vadd.f32 %v6000, 1.0
    %v6006 = vadd.f32 %v6002, 1.0
    %v6007 = vrcp.pop %v6003
    %v6008 = vmul.f32 1.0, %v6007
    %v6009 = vrcp.pop %v6004
    %v6010 = vmul.f32 1.0, %v6009
    %v6011 = vrcp.pop %v6005
    %v6012 = vmul.f32 1.0, %v6011
    %v6013 = vrcp.pop %v6006
    %v6014 = vmul.f32 1.0, %v6013
    %v6015 = vpack.c.bf16 %v6008, %v6008
    %v6016 = vpack.c.bf16 %v6010, %v6010
    %v6017 = vpack.c.bf16 %v6012, %v6012
    %v6018 = vpack.c.bf16 %v6014, %v6014
    %v6019 = vld [vmem:[%s3] sm:$0xf]
    %v6020 = vld [vmem:[%s3 + $0x4] sm:$0xf]
    %v6021 = vld [vmem:[%s3 + $0x8] sm:$0xf]
    %v6022 = vld [vmem:[%s3 + $0xc] sm:$0xf]
    %v6023 = vld [vmem:[%s3 + $0x10] sm:$0xf]
    %v6024 = vld [vmem:[%s3 + $0x14] sm:$0xf]
    %v6025 = vld [vmem:[%s3 + $0x18] sm:$0xf]
    %v6026 = vld [vmem:[%s3 + $0x1c] sm:$0xf]
    %v6027 = vld [vmem:[%s3 + $0x20] sm:$0xf]
    %v6028 = vld [vmem:[%s3 + $0x24] sm:$0xf]
    %v6029 = vld [vmem:[%s3 + $0x28] sm:$0xf]
    %v6030 = vld [vmem:[%s3 + $0x2c] sm:$0xf]
    %v6031 = vld [vmem:[%s3 + $0x30] sm:$0xf]
    %v6032 = vld [vmem:[%s3 + $0x34] sm:$0xf]
    %v6033 = vld [vmem:[%s3 + $0x38] sm:$0xf]
    %v6034 = vld [vmem:[%s3 + $0x3c] sm:$0xf]
    %v6035 = vld [vmem:[%s3 + $0x40] sm:$0xf]
    %v6036 = vld [vmem:[%s3 + $0x44] sm:$0xf]
    %v6037 = vld [vmem:[%s3 + $0x48] sm:$0xf]
    %v6038 = vld [vmem:[%s3 + $0x4c] sm:$0xf]
    %v6039 = vld [vmem:[%s3 + $0x50] sm:$0xf]
    %v6040 = vld [vmem:[%s3 + $0x54] sm:$0xf]
    %v6041 = vld [vmem:[%s3 + $0x58] sm:$0xf]
    %v6042 = vld [vmem:[%s3 + $0x5c] sm:$0xf]
    %v6043 = vld [vmem:[%s3 + $0x60] sm:$0xf]
    %v6044 = vld [vmem:[%s3 + $0x64] sm:$0xf]
    %v6045 = vld [vmem:[%s3 + $0x68] sm:$0xf]
    %v6046 = vld [vmem:[%s3 + $0x6c] sm:$0xf]
    %v6047 = vld [vmem:[%s3 + $0x70] sm:$0xf]
    %v6048 = vld [vmem:[%s3 + $0x74] sm:$0xf]
    %v6049 = vld [vmem:[%s3 + $0x78] sm:$0xf]
    %v6050 = vld [vmem:[%s3 + $0x7c] sm:$0xf]
    %v6051 = vld [vmem:[%s3 + $0x80] sm:$0xf]
    %v6052 = vld [vmem:[%s3 + $0x84] sm:$0xf]
    %v6053 = vld [vmem:[%s3 + $0x88] sm:$0xf]
    %v6054 = vld [vmem:[%s3 + $0x8c] sm:$0xf]
    %v6055 = vld [vmem:[%s3 + $0x90] sm:$0xf]
    %v6056 = vld [vmem:[%s3 + $0x94] sm:$0xf]
    %v6057 = vld [vmem:[%s3 + $0x98] sm:$0xf]
    %v6058 = vld [vmem:[%s3 + $0x9c] sm:$0xf]
    %v6059 = vld [vmem:[%s3 + $0xa0] sm:$0xf]
    %v6060 = vld [vmem:[%s3 + $0xa4] sm:$0xf]
    %v6061 = vld [vmem:[%s3 + $0xa8] sm:$0xf]
    %v6062 = vld [vmem:[%s3 + $0xac] sm:$0xf]
    %v6063 = vld [vmem:[%s3 + $0xb0] sm:$0xf]
    %v6064 = vld [vmem:[%s3 + $0xb4] sm:$0xf]
    %v6065 = vld [vmem:[%s3 + $0xb8] sm:$0xf]
    %v6066 = vld [vmem:[%s3 + $0xbc] sm:$0xf]
    %v6067 = vld [vmem:[%s3 + $0xc0] sm:$0xf]
    %v6068 = vld [vmem:[%s3 + $0xc4] sm:$0xf]
    %v6069 = vld [vmem:[%s3 + $0xc8] sm:$0xf]
    %v6070 = vld [vmem:[%s3 + $0xcc] sm:$0xf]
    %v6071 = vld [vmem:[%s3 + $0xd0] sm:$0xf]
    %v6072 = vld [vmem:[%s3 + $0xd4] sm:$0xf]
    %v6073 = vld [vmem:[%s3 + $0xd8] sm:$0xf]
    %v6074 = vld [vmem:[%s3 + $0xdc] sm:$0xf]
    %v6075 = vld [vmem:[%s3 + $0xe0] sm:$0xf]
    %v6076 = vld [vmem:[%s3 + $0xe4] sm:$0xf]
    %v6077 = vld [vmem:[%s3 + $0xe8] sm:$0xf]
    %v6078 = vld [vmem:[%s3 + $0xec] sm:$0xf]
    %v6079 = vld [vmem:[%s3 + $0xf0] sm:$0xf]
    %v6080 = vld [vmem:[%s3 + $0xf4] sm:$0xf]
    %v6081 = vld [vmem:[%s3 + $0xf8] sm:$0xf]
    %v6082 = vld [vmem:[%s3 + $0xfc] sm:$0xf]
    %v6083 = vld [vmem:[%s4] sm:$0x1]
    %v6085 = vlaneseq
    %v6086 = vshrl.u32 %v6085, 7
    %v6087 = vsub.s32 0, %v6086
    %v6088 = vrot.slane %v6083, %v6087
    %v6154 = vunpack.c.l.b16 %v6019
    %v6155 = vunpack.c.l.b16 %v6020
    %v6156 = vunpack.c.l.b16 %v6021
    %v6157 = vunpack.c.l.b16 %v6022
    %v6158 = vunpack.c.l.b16 %v6023
    %v6159 = vunpack.c.l.b16 %v6024
    %v6160 = vunpack.c.l.b16 %v6025
    %v6161 = vunpack.c.l.b16 %v6026
    %v6162 = vunpack.c.l.b16 %v6027
    %v6163 = vunpack.c.l.b16 %v6028
    %v6164 = vunpack.c.l.b16 %v6029
    %v6165 = vunpack.c.l.b16 %v6030
    %v6166 = vunpack.c.l.b16 %v6031
    %v6167 = vunpack.c.l.b16 %v6032
    %v6168 = vunpack.c.l.b16 %v6033
    %v6169 = vunpack.c.l.b16 %v6034
    %v6170 = vunpack.c.l.b16 %v6035
    %v6171 = vunpack.c.l.b16 %v6036
    %v6172 = vunpack.c.l.b16 %v6037
    %v6173 = vunpack.c.l.b16 %v6038
    %v6174 = vunpack.c.l.b16 %v6039
    %v6175 = vunpack.c.l.b16 %v6040
    %v6176 = vunpack.c.l.b16 %v6041
    %v6177 = vunpack.c.l.b16 %v6042
    %v6178 = vunpack.c.l.b16 %v6043
    %v6179 = vunpack.c.l.b16 %v6044
    %v6180 = vunpack.c.l.b16 %v6045
    %v6181 = vunpack.c.l.b16 %v6046
    %v6182 = vunpack.c.l.b16 %v6047
    %v6183 = vunpack.c.l.b16 %v6048
    %v6184 = vunpack.c.l.b16 %v6049
    %v6185 = vunpack.c.l.b16 %v6050
    %v6186 = vunpack.c.l.b16 %v6051
    %v6187 = vunpack.c.l.b16 %v6052
    %v6188 = vunpack.c.l.b16 %v6053
    %v6189 = vunpack.c.l.b16 %v6054
    %v6190 = vunpack.c.l.b16 %v6055
    %v6191 = vunpack.c.l.b16 %v6056
    %v6192 = vunpack.c.l.b16 %v6057
    %v6193 = vunpack.c.l.b16 %v6058
    %v6194 = vunpack.c.l.b16 %v6059
    %v6195 = vunpack.c.l.b16 %v6060
    %v6196 = vunpack.c.l.b16 %v6061
    %v6197 = vunpack.c.l.b16 %v6062
    %v6198 = vunpack.c.l.b16 %v6063
    %v6199 = vunpack.c.l.b16 %v6064
    %v6200 = vunpack.c.l.b16 %v6065
    %v6201 = vunpack.c.l.b16 %v6066
    %v6202 = vunpack.c.l.b16 %v6067
    %v6203 = vunpack.c.l.b16 %v6068
    %v6204 = vunpack.c.l.b16 %v6069
    %v6205 = vunpack.c.l.b16 %v6070
    %v6206 = vunpack.c.l.b16 %v6071
    %v6207 = vunpack.c.l.b16 %v6072
    %v6208 = vunpack.c.l.b16 %v6073
    %v6209 = vunpack.c.l.b16 %v6074
    %v6210 = vunpack.c.l.b16 %v6075
    %v6211 = vunpack.c.l.b16 %v6076
    %v6212 = vunpack.c.l.b16 %v6077
    %v6213 = vunpack.c.l.b16 %v6078
    %v6214 = vunpack.c.l.b16 %v6079
    %v6215 = vunpack.c.l.b16 %v6080
    %v6216 = vunpack.c.l.b16 %v6081
    %v6217 = vunpack.c.l.b16 %v6082
    %v6218 = vpack.c.b16 %v6155, %v6154
    %v6219 = vpack.c.b16 %v6157, %v6156
    %v6220 = vpack.c.b16 %v6159, %v6158
    %v6221 = vpack.c.b16 %v6161, %v6160
    %v6222 = vpack.c.b16 %v6163, %v6162
    %v6223 = vpack.c.b16 %v6165, %v6164
    %v6224 = vpack.c.b16 %v6167, %v6166
    %v6225 = vpack.c.b16 %v6169, %v6168
    %v6226 = vpack.c.b16 %v6171, %v6170
    %v6227 = vpack.c.b16 %v6173, %v6172
    %v6228 = vpack.c.b16 %v6175, %v6174
    %v6229 = vpack.c.b16 %v6177, %v6176
    %v6230 = vpack.c.b16 %v6179, %v6178
    %v6231 = vpack.c.b16 %v6181, %v6180
    %v6232 = vpack.c.b16 %v6183, %v6182
    %v6233 = vpack.c.b16 %v6185, %v6184
    %v6234 = vpack.c.b16 %v6187, %v6186
    %v6235 = vpack.c.b16 %v6189, %v6188
    %v6236 = vpack.c.b16 %v6191, %v6190
    %v6237 = vpack.c.b16 %v6193, %v6192
    %v6238 = vpack.c.b16 %v6195, %v6194
    %v6239 = vpack.c.b16 %v6197, %v6196
    %v6240 = vpack.c.b16 %v6199, %v6198
    %v6241 = vpack.c.b16 %v6201, %v6200
    %v6242 = vpack.c.b16 %v6203, %v6202
    %v6243 = vpack.c.b16 %v6205, %v6204
    %v6244 = vpack.c.b16 %v6207, %v6206
    %v6245 = vpack.c.b16 %v6209, %v6208
    %v6246 = vpack.c.b16 %v6211, %v6210
    %v6247 = vpack.c.b16 %v6213, %v6212
    %v6248 = vpack.c.b16 %v6215, %v6214
    %v6249 = vpack.c.b16 %v6217, %v6216
    %6282 = vmatprep.subr.bf16.mxu0 0
    %6283 = vmatpush1.bf16.msra.mxu0 %v6225
    %6284 = vmatprep.subr.bf16.mxu0 0
    %6285 = vmatpush1.bf16.msra.mxu0 %v6224
    %6286 = vmatprep.subr.bf16.mxu0 0
    %6287 = vmatpush1.bf16.msra.mxu0 %v6223
    %6288 = vmatprep.subr.bf16.mxu0 0
    %6289 = vmatpush1.bf16.msra.mxu0 %v6222
    %6290 = vmatprep.subr.bf16.mxu0 0
    %6291 = vmatpush1.bf16.msra.mxu0 %v6221
    %6292 = vmatprep.subr.bf16.mxu0 0
    %6293 = vmatpush1.bf16.msra.mxu0 %v6220
    %6294 = vmatprep.subr.bf16.mxu0 0
    %6295 = vmatpush1.bf16.msra.mxu0 %v6219
    %6296 = vmatprep.subr.bf16.mxu0 0
    %6297 = vmatpush1.bf16.msra.mxu0 %v6218
    %6298 = vmatprep.subr.bf16.mxu0 0
    %6299 = vmatpush2.bf16.msra.mxu0 %v6233
    %6300 = vmatprep.subr.bf16.mxu0 0
    %6301 = vmatpush2.bf16.msra.mxu0 %v6232
    %6302 = vmatprep.subr.bf16.mxu0 0
    %6303 = vmatpush2.bf16.msra.mxu0 %v6231
    %6304 = vmatprep.subr.bf16.mxu0 0
    %6305 = vmatpush2.bf16.msra.mxu0 %v6230
    %6306 = vmatprep.subr.bf16.mxu0 0
    %6307 = vmatpush2.bf16.msra.mxu0 %v6229
    %6308 = vmatprep.subr.bf16.mxu0 0
    %6309 = vmatpush2.bf16.msra.mxu0 %v6228
    %6310 = vmatprep.subr.bf16.mxu0 0
    %6311 = vmatpush2.bf16.msra.mxu0 %v6227
    %6312 = vmatprep.subr.bf16.mxu0 0
    %6313 = vmatpush2.bf16.msra.mxu0 %v6226
    %6314 = vmatprep.mubr.bf16.mxu0 %v6016
    %6315 = vmatmul.mubr.bf16.gmra.mxu0 %v6015
    %v6316 = vpop.f32.mrf.mxu0
    %v6317 = vadd.f32 %v6088, %v6316
    %v6318 = vpop.f32.mrf.mxu0
    %v6319 = vpop.f32.mrf.mxu0
    %v6320 = vpop.f32.mrf.mxu0
    %6321 = vdwg.mxu0
    %6322 = vmatprep.subr.bf16.mxu0 0
    %6323 = vmatpush1.bf16.msra.mxu0 %v6241
    %6324 = vmatprep.subr.bf16.mxu0 0
    %6325 = vmatpush1.bf16.msra.mxu0 %v6240
    %6326 = vmatprep.subr.bf16.mxu0 0
    %6327 = vmatpush1.bf16.msra.mxu0 %v6239
    %6328 = vmatprep.subr.bf16.mxu0 0
    %6329 = vmatpush1.bf16.msra.mxu0 %v6238
    %6330 = vmatprep.subr.bf16.mxu0 0
    %6331 = vmatpush1.bf16.msra.mxu0 %v6237
    %6332 = vmatprep.subr.bf16.mxu0 0
    %6333 = vmatpush1.bf16.msra.mxu0 %v6236
    %6334 = vmatprep.subr.bf16.mxu0 0
    %6335 = vmatpush1.bf16.msra.mxu0 %v6235
    %6336 = vmatprep.subr.bf16.mxu0 0
    %6337 = vmatpush1.bf16.msra.mxu0 %v6234
    %6338 = vmatprep.subr.bf16.mxu0 0
    %6339 = vmatpush2.bf16.msra.mxu0 %v6249
    %6340 = vmatprep.subr.bf16.mxu0 0
    %6341 = vmatpush2.bf16.msra.mxu0 %v6248
    %6342 = vmatprep.subr.bf16.mxu0 0
    %6343 = vmatpush2.bf16.msra.mxu0 %v6247
    %6344 = vmatprep.subr.bf16.mxu0 0
    %6345 = vmatpush2.bf16.msra.mxu0 %v6246
    %6346 = vmatprep.subr.bf16.mxu0 0
    %6347 = vmatpush2.bf16.msra.mxu0 %v6245
    %6348 = vmatprep.subr.bf16.mxu0 0
    %6349 = vmatpush2.bf16.msra.mxu0 %v6244
    %6350 = vmatprep.subr.bf16.mxu0 0
    %6351 = vmatpush2.bf16.msra.mxu0 %v6243
    %6352 = vmatprep.subr.bf16.mxu0 0
    %6353 = vmatpush2.bf16.msra.mxu0 %v6242
    %6354 = vmatprep.mubr.bf16.mxu0 %v6018
    %6355 = vmatmul.mubr.bf16.gmra.mxu0 %v6017
    %v6356 = vpop.f32.mrf.mxu0
    %v6357 = vadd.f32 %v6317, %v6356
    %v6358 = vpop.f32.mrf.mxu0
    %v6359 = vpop.f32.mrf.mxu0
    %v6360 = vpop.f32.mrf.mxu0
    %6361 = vdwg.mxu0
    %v6362 = vxor.u32 %v6357, 2147483648
    %v6363 = vmul.f32 %v6362, 1.442695
    %v6364 = vpow.pop %v6363
    %v6365 = vadd.f32 %v6364, 1.0
    %v6366 = vrcp.pop %v6365
    %v6367 = vmul.f32 1.0, %v6366
    %6368 = vst [vmem:[#allocation2] sm:$0x3] %v6367
    // Predicated region
    $region22: #{cnn_forward.3} parent=1 // pred_check
      _
    $region23: #{cnn_forward.3} parent=1 // pred_check_branch
      %6370 = sbr.rel (0) target = $region25
    $region24: #{cnn_forward.3} parent=1 // pred_region
      %s6372 = ssub.s32 32, 32
      %6373 = vsyncadd [#allocation3], %s6372
      %s6375 = sshll.u32 [#allocation2], 4
      %s6376 = int_to_ptr.vmem [resolvable:$true] %s6375
      %6378 = dma.vmem_to_hbm [thread:$0]  %s6376, 32, %s5, [#allocation3]
    $region25: #{cnn_forward.3} parent=1 // pred_fallthru
      _
    // Predicated region
    $region26: #{cnn_forward.3} parent=1 // pred_check
      _
    $region27: #{cnn_forward.3} parent=1 // pred_check_branch
      %6380 = sbr.rel (0) target = $region29
    $region28: #{cnn_forward.3} parent=1 // pred_region
      %6381 = dma.done [#allocation3], 32
    $region29: #{cnn_forward.3} parent=1 // pred_fallthru
      _
    %6382 = vsyncpa [#allocation3], 1

</llo_original>
